<compile_context>
chip_gen: v6e
topology: v6e:2x2x1
jax: 0.10.0
libtpu: 0.0.40
codegen_flags: <defaults>
</compile_context>

<pallas_src>
import functools

import numpy as np
import jax
import jax.numpy as jnp
from jax import lax
from jax.experimental import pallas as pl
from jax.experimental.pallas import tpu as pltpu


# ----------------------------------------------------------------------------
# Pallas kernels (hot path)
# ----------------------------------------------------------------------------

def _linear_kernel(x_ref, w_ref, b_ref, o_ref):
    # y = x @ W + b     x:[M,K]  W:[K,N]  b:[1,N]
    o_ref[...] = (jnp.dot(x_ref[...], w_ref[...],
                          preferred_element_type=jnp.float32) + b_ref[...])


def pallas_linear(x2d, w, b):
    # Small single-block call (embedding / decode projections).  TODO(synk): add a
    # row grid (tile 256-512) if M = B*T grows to the real model's size.
    M = x2d.shape[0]
    N = w.shape[1]
    return pl.pallas_call(
        _linear_kernel,
        out_shape=jax.ShapeDtypeStruct((M, N), jnp.float32),
    )(x2d, w, b)


def _encoder_layer_kernel(x_ref, qkv_w_ref, qkv_b_ref, fc_w_ref, fc_b_ref,
                          w1_ref, b1_ref, w2_ref, b2_ref,
                          g1_ref, bln1_ref, g2_ref, bln2_ref,
                          o_ref, *, n_head, d_k, d_v, eps, scale):
    """One full post-LN transformer encoder layer for one batch element."""
    x = x_ref[0]                                    # [T, D]
    T, D = x.shape

    # --- fused QKV projection (single lane-dense matmul) ---------------------
    qkv = jnp.dot(x, qkv_w_ref[...],
                  preferred_element_type=jnp.float32) + qkv_b_ref[...]
    hdk = n_head * d_k

    # --- multi-head attention (all heads in this one kernel) -----------------
    fc_w = fc_w_ref[...]                            # [H*dv, D]
    attn_out = None
    for h in range(n_head):                         # static unroll (tiny H)
        qh = qkv[:, h * d_k:(h + 1) * d_k]                          # [T, dk]
        kh = qkv[:, hdk + h * d_k:hdk + (h + 1) * d_k]              # [T, dk]
        vh = qkv[:, 2 * hdk + h * d_v:2 * hdk + (h + 1) * d_v]      # [T, dv]
        s = lax.dot_general(qh, kh, (((1,), (1,)), ((), ())),
                            preferred_element_type=jnp.float32) * scale
        s = s - jnp.max(s, axis=-1, keepdims=True)
        p_ = jnp.exp(s)
        p_ = p_ * pl.reciprocal(jnp.sum(p_, axis=-1, keepdims=True), approx=True)
        head = jnp.dot(p_, vh, preferred_element_type=jnp.float32)  # [T, dv]
        # fold the output projection per head: concat(heads) @ fc_w == sum_h head_h @ fc_w[h]
        part = jnp.dot(head, fc_w[h * d_v:(h + 1) * d_v, :],
                       preferred_element_type=jnp.float32)          # [T, D]
        attn_out = part if attn_out is None else attn_out + part
    o = attn_out + fc_b_ref[...]

    # --- residual + (conditional) LayerNorm 1 --------------------------------
    h1 = o + x
    mu = jnp.mean(h1, axis=-1, keepdims=True)
    var = jnp.mean((h1 - mu) ** 2, axis=-1, keepdims=True)
    h1 = (h1 - mu) * lax.rsqrt(var + eps) * g1_ref[0] + bln1_ref[0]

    # --- position-wise FFN ----------------------------------------------------
    f = jnp.dot(h1, w1_ref[...], preferred_element_type=jnp.float32) + b1_ref[...]
    f = jnp.maximum(f, 0.0)
    f = jnp.dot(f, w2_ref[...], preferred_element_type=jnp.float32) + b2_ref[...]

    # --- residual + (conditional) LayerNorm 2 --------------------------------
    h2 = f + h1
    mu2 = jnp.mean(h2, axis=-1, keepdims=True)
    var2 = jnp.mean((h2 - mu2) ** 2, axis=-1, keepdims=True)
    o_ref[0] = (h2 - mu2) * lax.rsqrt(var2 + eps) * g2_ref[0] + bln2_ref[0]


def fused_encoder_layer(x, g1, b1, g2, b2, qkv_w, qkv_b, fc_w, fc_b,
                        w1, w1_b, w2, w2_b, n_head, d_k, d_v, eps=1e-6):
    """x: [B, T, D], gamma/beta: [B, D] (per-batch conditional LN parameters)."""
    B, T, D = x.shape
    wqkv = qkv_w.shape[1]
    d_inner = w1.shape[1]
    hdv = n_head * d_v
    scale = 1.0 / float(np.sqrt(d_k))
    kernel = functools.partial(_encoder_layer_kernel, n_head=n_head, d_k=d_k,
                               d_v=d_v, eps=eps, scale=scale)
    g1 = g1.reshape(B, 1, D)
    b1 = b1.reshape(B, 1, D)
    g2 = g2.reshape(B, 1, D)
    b2 = b2.reshape(B, 1, D)
    return pl.pallas_call(
        kernel,
        out_shape=jax.ShapeDtypeStruct((B, T, D), jnp.float32),
        grid=(B,),
        in_specs=[
            pl.BlockSpec((1, T, D), lambda i: (i, 0, 0)),       # x
            pl.BlockSpec((D, wqkv), lambda i: (0, 0)),          # qkv_w (resident)
            pl.BlockSpec((1, wqkv), lambda i: (0, 0)),          # qkv_b
            pl.BlockSpec((hdv, D), lambda i: (0, 0)),           # fc_w
            pl.BlockSpec((1, D), lambda i: (0, 0)),             # fc_b
            pl.BlockSpec((D, d_inner), lambda i: (0, 0)),       # w1
            pl.BlockSpec((1, d_inner), lambda i: (0, 0)),       # b1
            pl.BlockSpec((d_inner, D), lambda i: (0, 0)),       # w2
            pl.BlockSpec((1, D), lambda i: (0, 0)),             # b2
            pl.BlockSpec((1, 1, D), lambda i: (i, 0, 0)),       # ln1 gamma  [B,1,D]
            pl.BlockSpec((1, 1, D), lambda i: (i, 0, 0)),       # ln1 beta
            pl.BlockSpec((1, 1, D), lambda i: (i, 0, 0)),       # ln2 gamma
            pl.BlockSpec((1, 1, D), lambda i: (i, 0, 0)),       # ln2 beta
        ],
        out_specs=pl.BlockSpec((1, T, D), lambda i: (i, 0, 0)),
        compiler_params=pltpu.CompilerParams(dimension_semantics=("parallel",)),
    )(x, qkv_w, qkv_b, fc_w, fc_b, w1, w1_b, w2, w2_b, g1, b1, g2, b2)


# ----------------------------------------------------------------------------
# Parameter initialisation (deterministic, synthetic)
# ----------------------------------------------------------------------------

def _init_linear(key, d_in, d_out, std=0.02):
    return {"w": jax.random.normal(key, (d_in, d_out), jnp.float32) * std,
            "b": jnp.zeros((1, d_out), jnp.float32)}


def get_sinusoid_encoding_table(n_position, d_hid, padding_idx=None):
    pos = np.arange(n_position)[:, None].astype(np.float64)
    i = np.arange(d_hid)[None, :]
    angle = pos / np.power(10000.0, 2.0 * (i // 2) / d_hid)
    table = np.zeros((n_position, d_hid), dtype=np.float64)
    table[:, 0::2] = np.sin(angle[:, 0::2])
    table[:, 1::2] = np.cos(angle[:, 1::2])
    if padding_idx is not None:
        table[padding_idx] = 0.0
    return jnp.asarray(table, jnp.float32)


def init_encoder_layer(key, d_model, d_inner, n_head, d_k, d_v,
                       d_condition=None, std=0.02):
    ks = jax.random.split(key, 10)
    wq = jax.random.normal(ks[0], (d_model, n_head * d_k), jnp.float32) * std
    wk = jax.random.normal(ks[1], (d_model, n_head * d_k), jnp.float32) * std
    wv = jax.random.normal(ks[2], (d_model, n_head * d_v), jnp.float32) * std
    p = {
        "qkv_w": jnp.concatenate([wq, wk, wv], axis=1),
        "qkv_b": jnp.zeros((1, 2 * n_head * d_k + n_head * d_v), jnp.float32),
        "fc": _init_linear(ks[3], n_head * d_v, d_model, std),
        "w1": _init_linear(ks[4], d_model, d_inner, std),
        "w2": _init_linear(ks[5], d_inner, d_model, std),
        "ln1_g": jnp.ones((1, d_model), jnp.float32),
        "ln1_b": jnp.zeros((1, d_model), jnp.float32),
        "ln2_g": jnp.ones((1, d_model), jnp.float32),
        "ln2_b": jnp.zeros((1, d_model), jnp.float32),
    }
    if d_condition is not None:
        # conditional layer-norm ('cln' fusion): gamma/beta modulated by condition
        p["cln1_g"] = _init_linear(ks[6], d_condition, d_model, std)
        p["cln1_b"] = _init_linear(ks[7], d_condition, d_model, std)
        p["cln2_g"] = _init_linear(ks[8], d_condition, d_model, std)
        p["cln2_b"] = _init_linear(ks[9], d_condition, d_model, std)
    return p


def init_music_encoder(key, input_size, d_model, n_layers, n_head, d_k, d_v,
                       d_inner, max_seq_len=100, std=0.02):
    ks = jax.random.split(key, n_layers + 1)
    # NOTE: no static ints stored in the param pytree (they would become tracers
    # under jit) — head/dim config comes from `args`.
    return {
        "src_emb": _init_linear(ks[0], input_size, d_model, std),
        "pos_table": get_sinusoid_encoding_table(max_seq_len + 1, d_model, padding_idx=0),
        "layers": [init_encoder_layer(ks[i + 1], d_model, d_inner, n_head, d_k, d_v,
                                      None, std) for i in range(n_layers)],
    }


def init_dance_model(key, args):
    k0, k1, k2, k3, k4, k5, k6 = jax.random.split(key, 7)
    p = {}
    if args.use_music:
        p["music_encoder"] = init_music_encoder(
            k0, args.music_dim, args.music_d_model, args.music_n_layers,
            args.music_n_head, args.music_d_k, args.music_d_v, args.music_d_inner,
            std=args.initializer_range)
        p["music_linear"] = _init_linear(k1, args.music_d_model, args.d_model,
                                         args.initializer_range)
        music_f_dim = args.d_model
    else:
        music_f_dim = None
    p["src_emb"] = _init_linear(k2, args.node_n, args.d_model, args.initializer_range)
    p["pos_table"] = get_sinusoid_encoding_table(100, args.d_model, padding_idx=0)
    p["padding_embedding"] = (jax.random.normal(k3, (4, args.d_model), jnp.float32)
                              * args.initializer_range)
    p["layer_stack"] = [
        init_encoder_layer(jax.random.fold_in(k4, i), args.d_model, args.hidden_feature,
                           args.n_head, args.d_k, args.d_v, music_f_dim,
                           args.initializer_range)
        for i in range(args.num_stage)]
    if args.use_style:
        p["style_stack"] = [
            init_encoder_layer(jax.random.fold_in(k5, i), args.d_model,
                               args.hidden_feature, args.n_head, args.d_k, args.d_v,
                               None, args.initializer_range)
            for i in range(3)]
    p["pose_decode"] = _init_linear(k6, args.d_model, args.node_n, args.initializer_range)
    return p


# ----------------------------------------------------------------------------
# Forward pass
# ----------------------------------------------------------------------------

def encoder_layer_fwd(p, x, n_head, d_k, d_v, condition=None):
    """Post-LN transformer encoder layer (+ conditional LN), fully fused in Pallas."""
    B, T, D = x.shape
    if condition is not None and "cln1_g" in p:
        # tiny [B, d_cond] matmuls — plain JAX (per review feedback)
        dg1 = condition @ p["cln1_g"]["w"] + p["cln1_g"]["b"]
        db1 = condition @ p["cln1_b"]["w"] + p["cln1_b"]["b"]
        dg2 = condition @ p["cln2_g"]["w"] + p["cln2_g"]["b"]
        db2 = condition @ p["cln2_b"]["w"] + p["cln2_b"]["b"]
        g1 = p["ln1_g"] + dg1
        b1 = p["ln1_b"] + db1
        g2 = p["ln2_g"] + dg2
        b2 = p["ln2_b"] + db2
    else:
        g1 = jnp.broadcast_to(p["ln1_g"], (B, D))
        b1 = jnp.broadcast_to(p["ln1_b"], (B, D))
        g2 = jnp.broadcast_to(p["ln2_g"], (B, D))
        b2 = jnp.broadcast_to(p["ln2_b"], (B, D))
    return fused_encoder_layer(
        x, g1, b1, g2, b2,
        p["qkv_w"], p["qkv_b"], p["fc"]["w"], p["fc"]["b"],
        p["w1"]["w"], p["w1"]["b"], p["w2"]["w"], p["w2"]["b"],
        n_head, d_k, d_v)


def music_encoder_fwd(p, args, src_seq):
    B, T, F = src_seq.shape
    e = pallas_linear(src_seq.reshape(B * T, F),
                      p["src_emb"]["w"], p["src_emb"]["b"]).reshape(B, T, -1)
    e = e + p["pos_table"][jnp.arange(T)][None]
    for layer in p["layers"]:
        e = encoder_layer_fwd(layer, e, args.music_n_head, args.music_d_k,
                              args.music_d_v, condition=None)
    return e


def dance_run(p, args, x, music, style):
    B = x.shape[0]
    cond = None
    if args.use_music:
        mf = music_encoder_fwd(p["music_encoder"], args, music)[:, 0, :]
        mf = pallas_linear(mf, p["music_linear"]["w"], p["music_linear"]["b"])
        cond = mf
    if args.use_style:
        Ts = style.shape[1]
        s = pallas_linear(style.reshape(B * Ts, args.node_n),
                          p["src_emb"]["w"], p["src_emb"]["b"]).reshape(B, Ts, args.d_model)
        s = s + p["pos_table"][jnp.arange(Ts)][None]
        for layer in p["style_stack"]:
            s = encoder_layer_fwd(layer, s, args.n_head, args.d_k, args.d_v, condition=None)
        s0 = s[:, 0, :]
        cond = s0 if cond is None else cond + s0

    T = args.input_n + args.output_n
    pos_embed = p["pos_table"][jnp.arange(T)]
    pad_idx = jnp.array([0] * args.input_n + [1] * args.output_n, jnp.int32)
    pad_embed = p["padding_embedding"][pad_idx]
    e = pallas_linear(x.reshape(B * T, args.node_n),
                      p["src_emb"]["w"], p["src_emb"]["b"]).reshape(B, T, args.d_model)
    e = e + pos_embed[None] + pad_embed[None]
    for layer in p["layer_stack"]:
        e = encoder_layer_fwd(layer, e, args.n_head, args.d_k, args.d_v, condition=cond)
    pose = pallas_linear(e.reshape(B * T, args.d_model),
                         p["pose_decode"]["w"], p["pose_decode"]["b"]).reshape(B, T, args.node_n)
    return pose[:, -args.output_n:, :]


def input_padding(args, input_pose):
    i_idx = jnp.array([args.input_n - 1] * args.output_n, jnp.int32)
    padding = input_pose[:, i_idx, :]
    return jnp.concatenate([input_pose, padding], axis=1)


def compute_loss(pred, target):
    l2_loss = jnp.mean((pred[:, :, 3:-2] - target[:, :, 3:-2]) ** 2)
    root_loss = jnp.mean((pred[:, :, :3] - target[:, :, :3]) ** 2)
    contact_loss = jnp.mean((pred[:, :, -2:] - target[:, :, -2:]) ** 2)
    loss = l2_loss + root_loss * 0.2 + contact_loss * 0.02
    return {"l2_loss": l2_loss, "root_loss": root_loss,
            "contact_loss": contact_loss, "loss": loss}


def dance_rollout(p, music, targets, styles, *, args, mask, total_cir):
    """Whole autoregressive rollout; traced into a single jit (mask is static numpy)."""
    input_n, output_n = args.input_n, args.output_n
    music_input_length = input_n * 2
    total_loss = {}
    input_pose = None
    pred_pose = None
    for i in range(total_cir):
        target_pose = targets[:, i + input_n:i + input_n + output_n, :]
        music_input = music[:, i:i + music_input_length, :]
        if mask[i] == 1 or i == 0:
            input_pose = targets[:, i:i + input_n, :]
        else:
            input_pose = jnp.concatenate(
                [input_pose[:, 1:, :], lax.stop_gradient(pred_pose[:, :1, :])], axis=1)
        input_pose_padding = input_padding(args, input_pose)
        pred_pose = dance_run(p, args, input_pose_padding, music_input, styles)
        loss = compute_loss(pred_pose, target_pose)
        for k_, v in loss.items():
            total_loss[k_] = total_loss.get(k_, 0.0) + v / total_cir
    return total_loss


def dance_forward(p, args, music, targets, styles, epoch=1):
    input_n = args.input_n
    music_input_length = input_n * 2
    seq_len = targets.shape[1]
    gt_mask = np.ones((seq_len, args.condition_step))
    pred_mask = np.zeros((seq_len, int(epoch * args.lambda_v)))
    mask = np.concatenate([pred_mask, gt_mask], axis=1).reshape(-1)[:seq_len]
    total_cir = args.total_len - music_input_length + 1
    rollout = jax.jit(functools.partial(
        dance_rollout, args=args, mask=mask, total_cir=total_cir))
    return rollout(p, music, targets, styles)


# ----------------------------------------------------------------------------
# Main
# ----------------------------------------------------------------------------

if __name__ == "__main__":
    class Args:
        pass

    args = Args()
    # scaled-down versions of the module's default hyperparameters
    args.d_model = 64
    args.d_k = 16
    args.d_v = 16
    args.n_head = 4
    args.hidden_feature = 128
    args.p_dropout = 0.0          # dropout = identity (inference)
    args.num_stage = 2
    args.node_n = 32
    args.use_music = True
    args.use_style = True
    args.condition_step = 10
    args.lambda_v = 0.03
    args.initializer_range = 0.02
    args.input_n = 4
    args.output_n = 4
    args.total_len = 10
    # scaled-down MusicEncoder (original hardcodes 35 -> 200, 3 layers, 8 heads)
    args.music_dim = 16
    args.music_d_model = 48
    args.music_n_layers = 2
    args.music_n_head = 4
    args.music_d_k = 12
    args.music_d_v = 12
    args.music_d_inner = 96

    key = jax.random.PRNGKey(0)
    kp, km, kt, ks = jax.random.split(key, 4)
    params = init_dance_model(kp, args)

    B = 2
    style_len = 40   # the torch run() hardcodes 40 style positions
    music = jax.random.normal(km, (B, args.total_len, args.music_dim), jnp.float32)
    targets = jax.random.normal(kt, (B, args.total_len, args.node_n), jnp.float32)
    styles = jax.random.normal(ks, (B, style_len, args.node_n), jnp.float32)

    losses = dance_forward(params, args, music, targets, styles, epoch=1)
    losses = jax.block_until_ready(losses)
    assert np.isfinite(float(losses["loss"])), "non-finite loss"
    print("KERNEL_OK")
</pallas_src>

<mosaic_0001>
module attributes {stable_mosaic.version = 11 : i64} {
  func.func @_linear_kernel(%arg0: memref<16x16xf32, #tpu.memory_space<vmem>>, %arg1: memref<16x48xf32, #tpu.memory_space<vmem>>, %arg2: memref<1x48xf32, #tpu.memory_space<vmem>>, %arg3: memref<16x48xf32, #tpu.memory_space<vmem>>) attributes {dimension_semantics = [], scalar_prefetch = 0 : i64, scratch_operands = 0 : i64, tpu.core_type = #tpu.core_type<tc>} {
    %c0 = arith.constant 0 : index
    %c0_0 = arith.constant 0 : index
    %0 = vector.load %arg0[%c0, %c0_0] : memref<16x16xf32, #tpu.memory_space<vmem>>, vector<16x16xf32>
    %c0_1 = arith.constant 0 : index
    %c0_2 = arith.constant 0 : index
    %1 = vector.load %arg1[%c0_1, %c0_2] : memref<16x48xf32, #tpu.memory_space<vmem>>, vector<16x48xf32>
    %cst = arith.constant dense<0.000000e+00> : vector<16x48xf32>
    %2 = tpu.matmul %0, %1, %cst {dimension_numbers = #tpu.dot_dimension_numbers<[1], [0], [0], [1], [0, 0, 1, 1], [], []>} : vector<16x16xf32>, vector<16x48xf32>, vector<16x48xf32> -> vector<16x48xf32>
    %c0_3 = arith.constant 0 : index
    %c0_4 = arith.constant 0 : index
    %3 = vector.load %arg2[%c0_3, %c0_4] : memref<1x48xf32, #tpu.memory_space<vmem>>, vector<1x48xf32>
    %4 = vector.broadcast %3 : vector<1x48xf32> to vector<16x48xf32>
    %5 = arith.addf %2, %4 : vector<16x48xf32>
    %c0_5 = arith.constant 0 : index
    %c0_6 = arith.constant 0 : index
    %6 = vector.load %arg3[%c0_5, %c0_6] : memref<16x48xf32, #tpu.memory_space<vmem>>, vector<16x48xf32>
    tpu.vector_store %arg3[%c0_5, %c0_6], %5 {strides = array<i32>} : memref<16x48xf32, #tpu.memory_space<vmem>>, vector<16x48xf32>,
    return
  }
}

module attributes {stable_mosaic.version = 11 : i64} {
  func.func @_linear_kernel(%arg0: memref<2x48xf32, #tpu.memory_space<vmem>>, %arg1: memref<48x64xf32, #tpu.memory_space<vmem>>, %arg2: memref<1x64xf32, #tpu.memory_space<vmem>>, %arg3: memref<2x64xf32, #tpu.memory_space<vmem>>) attributes {dimension_semantics = [], scalar_prefetch = 0 : i64, scratch_operands = 0 : i64, tpu.core_type = #tpu.core_type<tc>} {
    %c0 = arith.constant 0 : index
    %c0_0 = arith.constant 0 : index
    %0 = vector.load %arg0[%c0, %c0_0] : memref<2x48xf32, #tpu.memory_space<vmem>>, vector<2x48xf32>
    %c0_1 = arith.constant 0 : index
    %c0_2 = arith.constant 0 : index
    %1 = vector.load %arg1[%c0_1, %c0_2] : memref<48x64xf32, #tpu.memory_space<vmem>>, vector<48x64xf32>
    %cst = arith.constant dense<0.000000e+00> : vector<2x64xf32>
    %2 = tpu.matmul %0, %1, %cst {dimension_numbers = #tpu.dot_dimension_numbers<[1], [0], [0], [1], [0, 0, 1, 1], [], []>} : vector<2x48xf32>, vector<48x64xf32>, vector<2x64xf32> -> vector<2x64xf32>
    %c0_3 = arith.constant 0 : index
    %c0_4 = arith.constant 0 : index
    %3 = vector.load %arg2[%c0_3, %c0_4] : memref<1x64xf32, #tpu.memory_space<vmem>>, vector<1x64xf32>
    %4 = vector.broadcast %3 : vector<1x64xf32> to vector<2x64xf32>
    %5 = arith.addf %2, %4 : vector<2x64xf32>
    %c0_5 = arith.constant 0 : index
    %c0_6 = arith.constant 0 : index
    %6 = vector.load %arg3[%c0_5, %c0_6] : memref<2x64xf32, #tpu.memory_space<vmem>>, vector<2x64xf32>
    tpu.vector_store %arg3[%c0_5, %c0_6], %5 {strides = array<i32>} : memref<2x64xf32, #tpu.memory_space<vmem>>, vector<2x64xf32>,
    return
  }
}

module attributes {stable_mosaic.version = 11 : i64} {
  func.func @_encoder_layer_kernel(%arg0: i32, %arg1: memref<1x8x48xf32, #tpu.memory_space<vmem>>, %arg2: memref<48x144xf32, #tpu.memory_space<vmem>>, %arg3: memref<1x144xf32, #tpu.memory_space<vmem>>, %arg4: memref<48x48xf32, #tpu.memory_space<vmem>>, %arg5: memref<1x48xf32, #tpu.memory_space<vmem>>, %arg6: memref<48x96xf32, #tpu.memory_space<vmem>>, %arg7: memref<1x96xf32, #tpu.memory_space<vmem>>, %arg8: memref<96x48xf32, #tpu.memory_space<vmem>>, %arg9: memref<1x48xf32, #tpu.memory_space<vmem>>, %arg10: memref<1x1x48xf32, #tpu.memory_space<vmem>>, %arg11: memref<1x1x48xf32, #tpu.memory_space<vmem>>, %arg12: memref<1x1x48xf32, #tpu.memory_space<vmem>>, %arg13: memref<1x1x48xf32, #tpu.memory_space<vmem>>, %arg14: memref<1x8x48xf32, #tpu.memory_space<vmem>>) attributes {dimension_semantics = [#tpu.dimension_semantics<parallel>], iteration_bounds = array<i64: 2>, scalar_prefetch = 0 : i64, scratch_operands = 0 : i64, tpu.core_type = #tpu.core_type<tc>, window_params = [{transform_indices = @transform_0, window_bounds = array<i64: 1, 8, 48>}, {pipeline_mode = #tpu.pipeline_mode<synchronous>, transform_indices = @transform_1, window_bounds = array<i64: 48, 144>}, {pipeline_mode = #tpu.pipeline_mode<synchronous>, transform_indices = @transform_2, window_bounds = array<i64: 1, 144>}, {pipeline_mode = #tpu.pipeline_mode<synchronous>, transform_indices = @transform_3, window_bounds = array<i64: 48, 48>}, {pipeline_mode = #tpu.pipeline_mode<synchronous>, transform_indices = @transform_4, window_bounds = array<i64: 1, 48>}, {pipeline_mode = #tpu.pipeline_mode<synchronous>, transform_indices = @transform_5, window_bounds = array<i64: 48, 96>}, {pipeline_mode = #tpu.pipeline_mode<synchronous>, transform_indices = @transform_6, window_bounds = array<i64: 1, 96>}, {pipeline_mode = #tpu.pipeline_mode<synchronous>, transform_indices = @transform_7, window_bounds = array<i64: 96, 48>}, {pipeline_mode = #tpu.pipeline_mode<synchronous>, transform_indices = @transform_8, window_bounds = array<i64: 1, 48>}, {transform_indices = @transform_9, window_bounds = array<i64: 1, 1, 48>}, {transform_indices = @transform_10, window_bounds = array<i64: 1, 1, 48>}, {transform_indices = @transform_11, window_bounds = array<i64: 1, 1, 48>}, {transform_indices = @transform_12, window_bounds = array<i64: 1, 1, 48>}, {transform_indices = @transform_13, window_bounds = array<i64: 1, 8, 48>}]} {
    %c0 = arith.constant 0 : index
    %c0_0 = arith.constant 0 : index
    %c0_1 = arith.constant 0 : index
    %0 = vector.load %arg1[%c0, %c0_0, %c0_1] : memref<1x8x48xf32, #tpu.memory_space<vmem>>, vector<1x8x48xf32>
    %1 = vector.shape_cast %0 : vector<1x8x48xf32> to vector<8x48xf32>
    %c0_2 = arith.constant 0 : index
    %c0_3 = arith.constant 0 : index
    %2 = vector.load %arg2[%c0_2, %c0_3] : memref<48x144xf32, #tpu.memory_space<vmem>>, vector<48x144xf32>
    %cst = arith.constant dense<0.000000e+00> : vector<8x144xf32>
    %3 = tpu.matmul %1, %2, %cst {dimension_numbers = #tpu.dot_dimension_numbers<[1], [0], [0], [1], [0, 0, 1, 1], [], []>} : vector<8x48xf32>, vector<48x144xf32>, vector<8x144xf32> -> vector<8x144xf32>
    %c0_4 = arith.constant 0 : index
    %c0_5 = arith.constant 0 : index
    %4 = vector.load %arg3[%c0_4, %c0_5] : memref<1x144xf32, #tpu.memory_space<vmem>>, vector<1x144xf32>
    %5 = vector.broadcast %4 : vector<1x144xf32> to vector<8x144xf32>
    %6 = arith.addf %3, %5 : vector<8x144xf32>
    %c0_6 = arith.constant 0 : index
    %c0_7 = arith.constant 0 : index
    %7 = vector.load %arg4[%c0_6, %c0_7] : memref<48x48xf32, #tpu.memory_space<vmem>>, vector<48x48xf32>
    %8 = vector.extract_strided_slice %6 {offsets = [0, 0], sizes = [8, 12], strides = [1, 1]} : vector<8x144xf32> to vector<8x12xf32>
    %9 = vector.extract_strided_slice %6 {offsets = [0, 48], sizes = [8, 12], strides = [1, 1]} : vector<8x144xf32> to vector<8x12xf32>
    %10 = vector.extract_strided_slice %6 {offsets = [0, 96], sizes = [8, 12], strides = [1, 1]} : vector<8x144xf32> to vector<8x12xf32>
    %cst_8 = arith.constant dense<0.000000e+00> : vector<8x8xf32>
    %11 = tpu.matmul %8, %9, %cst_8 {dimension_numbers = #tpu.dot_dimension_numbers<[1], [1], [0], [0], [0, 0, 1, 0], [], []>} : vector<8x12xf32>, vector<8x12xf32>, vector<8x8xf32> -> vector<8x8xf32>
    %cst_9 = arith.constant 0.288675129 : f32
    %12 = vector.broadcast %cst_9 : f32 to vector<8x8xf32>
    %13 = arith.mulf %11, %12 : vector<8x8xf32>
    %cst_10 = arith.constant dense<0xFF800000> : vector<8xf32>
    %14 = vector.multi_reduction <maximumf>, %13, %cst_10 [1] : vector<8x8xf32> to vector<8xf32>
    %15 = vector.shape_cast %14 : vector<8xf32> to vector<8x1xf32>
    %16 = vector.broadcast %15 : vector<8x1xf32> to vector<8x8xf32>
    %17 = arith.subf %13, %16 : vector<8x8xf32>
    %18 = math.exp %17 : vector<8x8xf32>
    %cst_11 = arith.constant dense<0.000000e+00> : vector<8xf32>
    %19 = vector.multi_reduction <add>, %18, %cst_11 [1] : vector<8x8xf32> to vector<8xf32>
    %20 = vector.shape_cast %19 : vector<8xf32> to vector<8x1xf32>
    %21 = tpu.reciprocal %20 {approx = true} : vector<8x1xf32> -> vector<8x1xf32>
    %22 = vector.broadcast %21 : vector<8x1xf32> to vector<8x8xf32>
    %23 = arith.mulf %18, %22 : vector<8x8xf32>
    %cst_12 = arith.constant dense<0.000000e+00> : vector<8x12xf32>
    %24 = tpu.matmul %23, %10, %cst_12 {dimension_numbers = #tpu.dot_dimension_numbers<[1], [0], [0], [1], [0, 0, 1, 1], [], []>} : vector<8x8xf32>, vector<8x12xf32>, vector<8x12xf32> -> vector<8x12xf32>
    %25 = vector.extract_strided_slice %7 {offsets = [0, 0], sizes = [12, 48], strides = [1, 1]} : vector<48x48xf32> to vector<12x48xf32>
    %cst_13 = arith.constant dense<0.000000e+00> : vector<8x48xf32>
    %26 = tpu.matmul %24, %25, %cst_13 {dimension_numbers = #tpu.dot_dimension_numbers<[1], [0], [0], [1], [0, 0, 1, 1], [], []>} : vector<8x12xf32>, vector<12x48xf32>, vector<8x48xf32> -> vector<8x48xf32>
    %27 = vector.extract_strided_slice %6 {offsets = [0, 12], sizes = [8, 12], strides = [1, 1]} : vector<8x144xf32> to vector<8x12xf32>
    %28 = vector.extract_strided_slice %6 {offsets = [0, 60], sizes = [8, 12], strides = [1, 1]} : vector<8x144xf32> to vector<8x12xf32>
    %29 = vector.extract_strided_slice %6 {offsets = [0, 108], sizes = [8, 12], strides = [1, 1]} : vector<8x144xf32> to vector<8x12xf32>
    %cst_14 = arith.constant dense<0.000000e+00> : vector<8x8xf32>
    %30 = tpu.matmul %27, %28, %cst_14 {dimension_numbers = #tpu.dot_dimension_numbers<[1], [1], [0], [0], [0, 0, 1, 0], [], []>} : vector<8x12xf32>, vector<8x12xf32>, vector<8x8xf32> -> vector<8x8xf32>
    %cst_15 = arith.constant 0.288675129 : f32
    %31 = vector.broadcast %cst_15 : f32 to vector<8x8xf32>
    %32 = arith.mulf %30, %31 : vector<8x8xf32>
    %cst_16 = arith.constant dense<0xFF800000> : vector<8xf32>
    %33 = vector.multi_reduction <maximumf>, %32, %cst_16 [1] : vector<8x8xf32> to vector<8xf32>
    %34 = vector.shape_cast %33 : vector<8xf32> to vector<8x1xf32>
    %35 = vector.broadcast %34 : vector<8x1xf32> to vector<8x8xf32>
    %36 = arith.subf %32, %35 : vector<8x8xf32>
    %37 = math.exp %36 : vector<8x8xf32>
    %cst_17 = arith.constant dense<0.000000e+00> : vector<8xf32>
    %38 = vector.multi_reduction <add>, %37, %cst_17 [1] : vector<8x8xf32> to vector<8xf32>
    %39 = vector.shape_cast %38 : vector<8xf32> to vector<8x1xf32>
    %40 = tpu.reciprocal %39 {approx = true} : vector<8x1xf32> -> vector<8x1xf32>
    %41 = vector.broadcast %40 : vector<8x1xf32> to vector<8x8xf32>
    %42 = arith.mulf %37, %41 : vector<8x8xf32>
    %cst_18 = arith.constant dense<0.000000e+00> : vector<8x12xf32>
    %43 = tpu.matmul %42, %29, %cst_18 {dimension_numbers = #tpu.dot_dimension_numbers<[1], [0], [0], [1], [0, 0, 1, 1], [], []>} : vector<8x8xf32>, vector<8x12xf32>, vector<8x12xf32> -> vector<8x12xf32>
    %44 = vector.extract_strided_slice %7 {offsets = [12, 0], sizes = [12, 48], strides = [1, 1]} : vector<48x48xf32> to vector<12x48xf32>
    %cst_19 = arith.constant dense<0.000000e+00> : vector<8x48xf32>
    %45 = tpu.matmul %43, %44, %cst_19 {dimension_numbers = #tpu.dot_dimension_numbers<[1], [0], [0], [1], [0, 0, 1, 1], [], []>} : vector<8x12xf32>, vector<12x48xf32>, vector<8x48xf32> -> vector<8x48xf32>
    %46 = arith.addf %26, %45 : vector<8x48xf32>
    %47 = vector.extract_strided_slice %6 {offsets = [0, 24], sizes = [8, 12], strides = [1, 1]} : vector<8x144xf32> to vector<8x12xf32>
    %48 = vector.extract_strided_slice %6 {offsets = [0, 72], sizes = [8, 12], strides = [1, 1]} : vector<8x144xf32> to vector<8x12xf32>
    %49 = vector.extract_strided_slice %6 {offsets = [0, 120], sizes = [8, 12], strides = [1, 1]} : vector<8x144xf32> to vector<8x12xf32>
    %cst_20 = arith.constant dense<0.000000e+00> : vector<8x8xf32>
    %50 = tpu.matmul %47, %48, %cst_20 {dimension_numbers = #tpu.dot_dimension_numbers<[1], [1], [0], [0], [0, 0, 1, 0], [], []>} : vector<8x12xf32>, vector<8x12xf32>, vector<8x8xf32> -> vector<8x8xf32>
    %cst_21 = arith.constant 0.288675129 : f32
    %51 = vector.broadcast %cst_21 : f32 to vector<8x8xf32>
    %52 = arith.mulf %50, %51 : vector<8x8xf32>
    %cst_22 = arith.constant dense<0xFF800000> : vector<8xf32>
    %53 = vector.multi_reduction <maximumf>, %52, %cst_22 [1] : vector<8x8xf32> to vector<8xf32>
    %54 = vector.shape_cast %53 : vector<8xf32> to vector<8x1xf32>
    %55 = vector.broadcast %54 : vector<8x1xf32> to vector<8x8xf32>
    %56 = arith.subf %52, %55 : vector<8x8xf32>
    %57 = math.exp %56 : vector<8x8xf32>
    %cst_23 = arith.constant dense<0.000000e+00> : vector<8xf32>
    %58 = vector.multi_reduction <add>, %57, %cst_23 [1] : vector<8x8xf32> to vector<8xf32>
    %59 = vector.shape_cast %58 : vector<8xf32> to vector<8x1xf32>
    %60 = tpu.reciprocal %59 {approx = true} : vector<8x1xf32> -> vector<8x1xf32>
    %61 = vector.broadcast %60 : vector<8x1xf32> to vector<8x8xf32>
    %62 = arith.mulf %57, %61 : vector<8x8xf32>
    %cst_24 = arith.constant dense<0.000000e+00> : vector<8x12xf32>
    %63 = tpu.matmul %62, %49, %cst_24 {dimension_numbers = #tpu.dot_dimension_numbers<[1], [0], [0], [1], [0, 0, 1, 1], [], []>} : vector<8x8xf32>, vector<8x12xf32>, vector<8x12xf32> -> vector<8x12xf32>
    %64 = vector.extract_strided_slice %7 {offsets = [24, 0], sizes = [12, 48], strides = [1, 1]} : vector<48x48xf32> to vector<12x48xf32>
    %cst_25 = arith.constant dense<0.000000e+00> : vector<8x48xf32>
    %65 = tpu.matmul %63, %64, %cst_25 {dimension_numbers = #tpu.dot_dimension_numbers<[1], [0], [0], [1], [0, 0, 1, 1], [], []>} : vector<8x12xf32>, vector<12x48xf32>, vector<8x48xf32> -> vector<8x48xf32>
    %66 = arith.addf %46, %65 : vector<8x48xf32>
    %67 = vector.extract_strided_slice %6 {offsets = [0, 36], sizes = [8, 12], strides = [1, 1]} : vector<8x144xf32> to vector<8x12xf32>
    %68 = vector.extract_strided_slice %6 {offsets = [0, 84], sizes = [8, 12], strides = [1, 1]} : vector<8x144xf32> to vector<8x12xf32>
    %69 = vector.extract_strided_slice %6 {offsets = [0, 132], sizes = [8, 12], strides = [1, 1]} : vector<8x144xf32> to vector<8x12xf32>
    %cst_26 = arith.constant dense<0.000000e+00> : vector<8x8xf32>
    %70 = tpu.matmul %67, %68, %cst_26 {dimension_numbers = #tpu.dot_dimension_numbers<[1], [1], [0], [0], [0, 0, 1, 0], [], []>} : vector<8x12xf32>, vector<8x12xf32>, vector<8x8xf32> -> vector<8x8xf32>
    %cst_27 = arith.constant 0.288675129 : f32
    %71 = vector.broadcast %cst_27 : f32 to vector<8x8xf32>
    %72 = arith.mulf %70, %71 : vector<8x8xf32>
    %cst_28 = arith.constant dense<0xFF800000> : vector<8xf32>
    %73 = vector.multi_reduction <maximumf>, %72, %cst_28 [1] : vector<8x8xf32> to vector<8xf32>
    %74 = vector.shape_cast %73 : vector<8xf32> to vector<8x1xf32>
    %75 = vector.broadcast %74 : vector<8x1xf32> to vector<8x8xf32>
    %76 = arith.subf %72, %75 : vector<8x8xf32>
    %77 = math.exp %76 : vector<8x8xf32>
    %cst_29 = arith.constant dense<0.000000e+00> : vector<8xf32>
    %78 = vector.multi_reduction <add>, %77, %cst_29 [1] : vector<8x8xf32> to vector<8xf32>
    %79 = vector.shape_cast %78 : vector<8xf32> to vector<8x1xf32>
    %80 = tpu.reciprocal %79 {approx = true} : vector<8x1xf32> -> vector<8x1xf32>
    %81 = vector.broadcast %80 : vector<8x1xf32> to vector<8x8xf32>
    %82 = arith.mulf %77, %81 : vector<8x8xf32>
    %cst_30 = arith.constant dense<0.000000e+00> : vector<8x12xf32>
    %83 = tpu.matmul %82, %69, %cst_30 {dimension_numbers = #tpu.dot_dimension_numbers<[1], [0], [0], [1], [0, 0, 1, 1], [], []>} : vector<8x8xf32>, vector<8x12xf32>, vector<8x12xf32> -> vector<8x12xf32>
    %84 = vector.extract_strided_slice %7 {offsets = [36, 0], sizes = [12, 48], strides = [1, 1]} : vector<48x48xf32> to vector<12x48xf32>
    %cst_31 = arith.constant dense<0.000000e+00> : vector<8x48xf32>
    %85 = tpu.matmul %83, %84, %cst_31 {dimension_numbers = #tpu.dot_dimension_numbers<[1], [0], [0], [1], [0, 0, 1, 1], [], []>} : vector<8x12xf32>, vector<12x48xf32>, vector<8x48xf32> -> vector<8x48xf32>
    %86 = arith.addf %66, %85 : vector<8x48xf32>
    %c0_32 = arith.constant 0 : index
    %c0_33 = arith.constant 0 : index
    %87 = vector.load %arg5[%c0_32, %c0_33] : memref<1x48xf32, #tpu.memory_space<vmem>>, vector<1x48xf32>
    %88 = vector.broadcast %87 : vector<1x48xf32> to vector<8x48xf32>
    %89 = arith.addf %86, %88 : vector<8x48xf32>
    %90 = arith.addf %89, %1 : vector<8x48xf32>
    %cst_34 = arith.constant dense<0.000000e+00> : vector<8xf32>
    %91 = vector.multi_reduction <add>, %90, %cst_34 [1] : vector<8x48xf32> to vector<8xf32>
    %92 = vector.shape_cast %91 : vector<8xf32> to vector<8x1xf32>
    %cst_35 = arith.constant 4.800000e+01 : f32
    %93 = vector.broadcast %cst_35 : f32 to vector<8x1xf32>
    %94 = arith.divf %92, %93 : vector<8x1xf32>
    %95 = vector.broadcast %94 : vector<8x1xf32> to vector<8x48xf32>
    %96 = arith.subf %90, %95 : vector<8x48xf32>
    %97 = arith.mulf %96, %96 : vector<8x48xf32>
    %cst_36 = arith.constant dense<0.000000e+00> : vector<8xf32>
    %98 = vector.multi_reduction <add>, %97, %cst_36 [1] : vector<8x48xf32> to vector<8xf32>
    %99 = vector.shape_cast %98 : vector<8xf32> to vector<8x1xf32>
    %cst_37 = arith.constant 4.800000e+01 : f32
    %100 = vector.broadcast %cst_37 : f32 to vector<8x1xf32>
    %101 = arith.divf %99, %100 : vector<8x1xf32>
    %102 = vector.broadcast %94 : vector<8x1xf32> to vector<8x48xf32>
    %103 = arith.subf %90, %102 : vector<8x48xf32>
    %cst_38 = arith.constant 9.99999997E-7 : f32
    %104 = vector.broadcast %cst_38 : f32 to vector<8x1xf32>
    %105 = arith.addf %101, %104 : vector<8x1xf32>
    %106 = math.rsqrt %105 : vector<8x1xf32>
    %107 = vector.broadcast %106 : vector<8x1xf32> to vector<8x48xf32>
    %108 = arith.mulf %103, %107 : vector<8x48xf32>
    %c0_39 = arith.constant 0 : index
    %c0_40 = arith.constant 0 : index
    %c0_41 = arith.constant 0 : index
    %109 = vector.load %arg10[%c0_39, %c0_40, %c0_41] : memref<1x1x48xf32, #tpu.memory_space<vmem>>, vector<1x1x48xf32>
    %110 = vector.shape_cast %109 : vector<1x1x48xf32> to vector<1x48xf32>
    %111 = vector.broadcast %110 : vector<1x48xf32> to vector<8x48xf32>
    %112 = arith.mulf %108, %111 : vector<8x48xf32>
    %c0_42 = arith.constant 0 : index
    %c0_43 = arith.constant 0 : index
    %c0_44 = arith.constant 0 : index
    %113 = vector.load %arg11[%c0_42, %c0_43, %c0_44] : memref<1x1x48xf32, #tpu.memory_space<vmem>>, vector<1x1x48xf32>
    %114 = vector.shape_cast %113 : vector<1x1x48xf32> to vector<1x48xf32>
    %115 = vector.broadcast %114 : vector<1x48xf32> to vector<8x48xf32>
    %116 = arith.addf %112, %115 : vector<8x48xf32>
    %c0_45 = arith.constant 0 : index
    %c0_46 = arith.constant 0 : index
    %117 = vector.load %arg6[%c0_45, %c0_46] : memref<48x96xf32, #tpu.memory_space<vmem>>, vector<48x96xf32>
    %cst_47 = arith.constant dense<0.000000e+00> : vector<8x96xf32>
    %118 = tpu.matmul %116, %117, %cst_47 {dimension_numbers = #tpu.dot_dimension_numbers<[1], [0], [0], [1], [0, 0, 1, 1], [], []>} : vector<8x48xf32>, vector<48x96xf32>, vector<8x96xf32> -> vector<8x96xf32>
    %c0_48 = arith.constant 0 : index
    %c0_49 = arith.constant 0 : index
    %119 = vector.load %arg7[%c0_48, %c0_49] : memref<1x96xf32, #tpu.memory_space<vmem>>, vector<1x96xf32>
    %120 = vector.broadcast %119 : vector<1x96xf32> to vector<8x96xf32>
    %121 = arith.addf %118, %120 : vector<8x96xf32>
    %cst_50 = arith.constant 0.000000e+00 : f32
    %122 = vector.broadcast %cst_50 : f32 to vector<8x96xf32>
    %123 = arith.maximumf %121, %122 : vector<8x96xf32>
    %c0_51 = arith.constant 0 : index
    %c0_52 = arith.constant 0 : index
    %124 = vector.load %arg8[%c0_51, %c0_52] : memref<96x48xf32, #tpu.memory_space<vmem>>, vector<96x48xf32>
    %cst_53 = arith.constant dense<0.000000e+00> : vector<8x48xf32>
    %125 = tpu.matmul %123, %124, %cst_53 {dimension_numbers = #tpu.dot_dimension_numbers<[1], [0], [0], [1], [0, 0, 1, 1], [], []>} : vector<8x96xf32>, vector<96x48xf32>, vector<8x48xf32> -> vector<8x48xf32>
    %c0_54 = arith.constant 0 : index
    %c0_55 = arith.constant 0 : index
    %126 = vector.load %arg9[%c0_54, %c0_55] : memref<1x48xf32, #tpu.memory_space<vmem>>, vector<1x48xf32>
    %127 = vector.broadcast %126 : vector<1x48xf32> to vector<8x48xf32>
    %128 = arith.addf %125, %127 : vector<8x48xf32>
    %129 = arith.addf %128, %116 : vector<8x48xf32>
    %cst_56 = arith.constant dense<0.000000e+00> : vector<8xf32>
    %130 = vector.multi_reduction <add>, %129, %cst_56 [1] : vector<8x48xf32> to vector<8xf32>
    %131 = vector.shape_cast %130 : vector<8xf32> to vector<8x1xf32>
    %cst_57 = arith.constant 4.800000e+01 : f32
    %132 = vector.broadcast %cst_57 : f32 to vector<8x1xf32>
    %133 = arith.divf %131, %132 : vector<8x1xf32>
    %134 = vector.broadcast %133 : vector<8x1xf32> to vector<8x48xf32>
    %135 = arith.subf %129, %134 : vector<8x48xf32>
    %136 = arith.mulf %135, %135 : vector<8x48xf32>
    %cst_58 = arith.constant dense<0.000000e+00> : vector<8xf32>
    %137 = vector.multi_reduction <add>, %136, %cst_58 [1] : vector<8x48xf32> to vector<8xf32>
    %138 = vector.shape_cast %137 : vector<8xf32> to vector<8x1xf32>
    %cst_59 = arith.constant 4.800000e+01 : f32
    %139 = vector.broadcast %cst_59 : f32 to vector<8x1xf32>
    %140 = arith.divf %138, %139 : vector<8x1xf32>
    %141 = vector.broadcast %133 : vector<8x1xf32> to vector<8x48xf32>
    %142 = arith.subf %129, %141 : vector<8x48xf32>
    %cst_60 = arith.constant 9.99999997E-7 : f32
    %143 = vector.broadcast %cst_60 : f32 to vector<8x1xf32>
    %144 = arith.addf %140, %143 : vector<8x1xf32>
    %145 = math.rsqrt %144 : vector<8x1xf32>
    %146 = vector.broadcast %145 : vector<8x1xf32> to vector<8x48xf32>
    %147 = arith.mulf %142, %146 : vector<8x48xf32>
    %c0_61 = arith.constant 0 : index
    %c0_62 = arith.constant 0 : index
    %c0_63 = arith.constant 0 : index
    %148 = vector.load %arg12[%c0_61, %c0_62, %c0_63] : memref<1x1x48xf32, #tpu.memory_space<vmem>>, vector<1x1x48xf32>
    %149 = vector.shape_cast %148 : vector<1x1x48xf32> to vector<1x48xf32>
    %150 = vector.broadcast %149 : vector<1x48xf32> to vector<8x48xf32>
    %151 = arith.mulf %147, %150 : vector<8x48xf32>
    %c0_64 = arith.constant 0 : index
    %c0_65 = arith.constant 0 : index
    %c0_66 = arith.constant 0 : index
    %152 = vector.load %arg13[%c0_64, %c0_65, %c0_66] : memref<1x1x48xf32, #tpu.memory_space<vmem>>, vector<1x1x48xf32>
    %153 = vector.shape_cast %152 : vector<1x1x48xf32> to vector<1x48xf32>
    %154 = vector.broadcast %153 : vector<1x48xf32> to vector<8x48xf32>
    %155 = arith.addf %151, %154 : vector<8x48xf32>
    %c0_67 = arith.constant 0 : index
    %c0_68 = arith.constant 0 : index
    %c0_69 = arith.constant 0 : index
    %156 = vector.load %arg14[%c0_67, %c0_68, %c0_69] : memref<1x8x48xf32, #tpu.memory_space<vmem>>, vector<1x8x48xf32>
    %157 = vector.shape_cast %156 : vector<1x8x48xf32> to vector<8x48xf32>
    %158 = vector.shape_cast %155 : vector<8x48xf32> to vector<1x8x48xf32>
    tpu.vector_store %arg14[%c0_67, %c0_68, %c0_69], %158 {strides = array<i32>} : memref<1x8x48xf32, #tpu.memory_space<vmem>>, vector<1x8x48xf32>,
    return
  }
  func.func @transform_0(%arg0: i32) -> (i32, i32, i32) {
    %c0_i32 = arith.constant 0 : i32
    %c0_i32_0 = arith.constant 0 : i32
    %c0_i32_1 = arith.constant 0 : i32
    return %arg0, %c0_i32, %c0_i32_0 : i32, i32, i32
  }
  func.func @transform_1(%arg0: i32) -> (i32, i32) {
    %c0_i32 = arith.constant 0 : i32
    %c0_i32_0 = arith.constant 0 : i32
    %c0_i32_1 = arith.constant 0 : i32
    return %c0_i32, %c0_i32_0 : i32, i32
  }
  func.func @transform_2(%arg0: i32) -> (i32, i32) {
    %c0_i32 = arith.constant 0 : i32
    %c0_i32_0 = arith.constant 0 : i32
    %c0_i32_1 = arith.constant 0 : i32
    return %c0_i32, %c0_i32_0 : i32, i32
  }
  func.func @transform_3(%arg0: i32) -> (i32, i32) {
    %c0_i32 = arith.constant 0 : i32
    %c0_i32_0 = arith.constant 0 : i32
    %c0_i32_1 = arith.constant 0 : i32
    return %c0_i32, %c0_i32_0 : i32, i32
  }
  func.func @transform_4(%arg0: i32) -> (i32, i32) {
    %c0_i32 = arith.constant 0 : i32
    %c0_i32_0 = arith.constant 0 : i32
    %c0_i32_1 = arith.constant 0 : i32
    return %c0_i32, %c0_i32_0 : i32, i32
  }
  func.func @transform_5(%arg0: i32) -> (i32, i32) {
    %c0_i32 = arith.constant 0 : i32
    %c0_i32_0 = arith.constant 0 : i32
    %c0_i32_1 = arith.constant 0 : i32
    return %c0_i32, %c0_i32_0 : i32, i32
  }
  func.func @transform_6(%arg0: i32) -> (i32, i32) {
    %c0_i32 = arith.constant 0 : i32
    %c0_i32_0 = arith.constant 0 : i32
    %c0_i32_1 = arith.constant 0 : i32
    return %c0_i32, %c0_i32_0 : i32, i32
  }
  func.func @transform_7(%arg0: i32) -> (i32, i32) {
    %c0_i32 = arith.constant 0 : i32
    %c0_i32_0 = arith.constant 0 : i32
    %c0_i32_1 = arith.constant 0 : i32
    return %c0_i32, %c0_i32_0 : i32, i32
  }
  func.func @transform_8(%arg0: i32) -> (i32, i32) {
    %c0_i32 = arith.constant 0 : i32
    %c0_i32_0 = arith.constant 0 : i32
    %c0_i32_1 = arith.constant 0 : i32
    return %c0_i32, %c0_i32_0 : i32, i32
  }
  func.func @transform_9(%arg0: i32) -> (i32, i32, i32) {
    %c0_i32 = arith.constant 0 : i32
    %c0_i32_0 = arith.constant 0 : i32
    %c0_i32_1 = arith.constant 0 : i32
    return %arg0, %c0_i32, %c0_i32_0 : i32, i32, i32
  }
  func.func @transform_10(%arg0: i32) -> (i32, i32, i32) {
    %c0_i32 = arith.constant 0 : i32
    %c0_i32_0 = arith.constant 0 : i32
    %c0_i32_1 = arith.constant 0 : i32
    return %arg0, %c0_i32, %c0_i32_0 : i32, i32, i32
  }
  func.func @transform_11(%arg0: i32) -> (i32, i32, i32) {
    %c0_i32 = arith.constant 0 : i32
    %c0_i32_0 = arith.constant 0 : i32
    %c0_i32_1 = arith.constant 0 : i32
    return %arg0, %c0_i32, %c0_i32_0 : i32, i32, i32
  }
  func.func @transform_12(%arg0: i32) -> (i32, i32, i32) {
    %c0_i32 = arith.constant 0 : i32
    %c0_i32_0 = arith.constant 0 : i32
    %c0_i32_1 = arith.constant 0 : i32
    return %arg0, %c0_i32, %c0_i32_0 : i32, i32, i32
  }
  func.func @transform_13(%arg0: i32) -> (i32, i32, i32) {
    %c0_i32 = arith.constant 0 : i32
    %c0_i32_0 = arith.constant 0 : i32
    %c0_i32_1 = arith.constant 0 : i32
    return %arg0, %c0_i32, %c0_i32_0 : i32, i32, i32
  }
}

module attributes {stable_mosaic.version = 11 : i64} {
  func.func @_linear_kernel(%arg0: memref<80x32xf32, #tpu.memory_space<vmem>>, %arg1: memref<32x64xf32, #tpu.memory_space<vmem>>, %arg2: memref<1x64xf32, #tpu.memory_space<vmem>>, %arg3: memref<80x64xf32, #tpu.memory_space<vmem>>) attributes {dimension_semantics = [], scalar_prefetch = 0 : i64, scratch_operands = 0 : i64, tpu.core_type = #tpu.core_type<tc>} {
    %c0 = arith.constant 0 : index
    %c0_0 = arith.constant 0 : index
    %0 = vector.load %arg0[%c0, %c0_0] : memref<80x32xf32, #tpu.memory_space<vmem>>, vector<80x32xf32>
    %c0_1 = arith.constant 0 : index
    %c0_2 = arith.constant 0 : index
    %1 = vector.load %arg1[%c0_1, %c0_2] : memref<32x64xf32, #tpu.memory_space<vmem>>, vector<32x64xf32>
    %cst = arith.constant dense<0.000000e+00> : vector<80x64xf32>
    %2 = tpu.matmul %0, %1, %cst {dimension_numbers = #tpu.dot_dimension_numbers<[1], [0], [0], [1], [0, 0, 1, 1], [], []>} : vector<80x32xf32>, vector<32x64xf32>, vector<80x64xf32> -> vector<80x64xf32>
    %c0_3 = arith.constant 0 : index
    %c0_4 = arith.constant 0 : index
    %3 = vector.load %arg2[%c0_3, %c0_4] : memref<1x64xf32, #tpu.memory_space<vmem>>, vector<1x64xf32>
    %4 = vector.broadcast %3 : vector<1x64xf32> to vector<80x64xf32>
    %5 = arith.addf %2, %4 : vector<80x64xf32>
    %c0_5 = arith.constant 0 : index
    %c0_6 = arith.constant 0 : index
    %6 = vector.load %arg3[%c0_5, %c0_6] : memref<80x64xf32, #tpu.memory_space<vmem>>, vector<80x64xf32>
    tpu.vector_store %arg3[%c0_5, %c0_6], %5 {strides = array<i32>} : memref<80x64xf32, #tpu.memory_space<vmem>>, vector<80x64xf32>,
    return
  }
}

module attributes {stable_mosaic.version = 11 : i64} {
  func.func @_encoder_layer_kernel(%arg0: i32, %arg1: memref<1x40x64xf32, #tpu.memory_space<vmem>>, %arg2: memref<64x192xf32, #tpu.memory_space<vmem>>, %arg3: memref<1x192xf32, #tpu.memory_space<vmem>>, %arg4: memref<64x64xf32, #tpu.memory_space<vmem>>, %arg5: memref<1x64xf32, #tpu.memory_space<vmem>>, %arg6: memref<64x128xf32, #tpu.memory_space<vmem>>, %arg7: memref<1x128xf32, #tpu.memory_space<vmem>>, %arg8: memref<128x64xf32, #tpu.memory_space<vmem>>, %arg9: memref<1x64xf32, #tpu.memory_space<vmem>>, %arg10: memref<1x1x64xf32, #tpu.memory_space<vmem>>, %arg11: memref<1x1x64xf32, #tpu.memory_space<vmem>>, %arg12: memref<1x1x64xf32, #tpu.memory_space<vmem>>, %arg13: memref<1x1x64xf32, #tpu.memory_space<vmem>>, %arg14: memref<1x40x64xf32, #tpu.memory_space<vmem>>) attributes {dimension_semantics = [#tpu.dimension_semantics<parallel>], iteration_bounds = array<i64: 2>, scalar_prefetch = 0 : i64, scratch_operands = 0 : i64, tpu.core_type = #tpu.core_type<tc>, window_params = [{transform_indices = @transform_0, window_bounds = array<i64: 1, 40, 64>}, {pipeline_mode = #tpu.pipeline_mode<synchronous>, transform_indices = @transform_1, window_bounds = array<i64: 64, 192>}, {pipeline_mode = #tpu.pipeline_mode<synchronous>, transform_indices = @transform_2, window_bounds = array<i64: 1, 192>}, {pipeline_mode = #tpu.pipeline_mode<synchronous>, transform_indices = @transform_3, window_bounds = array<i64: 64, 64>}, {pipeline_mode = #tpu.pipeline_mode<synchronous>, transform_indices = @transform_4, window_bounds = array<i64: 1, 64>}, {pipeline_mode = #tpu.pipeline_mode<synchronous>, transform_indices = @transform_5, window_bounds = array<i64: 64, 128>}, {pipeline_mode = #tpu.pipeline_mode<synchronous>, transform_indices = @transform_6, window_bounds = array<i64: 1, 128>}, {pipeline_mode = #tpu.pipeline_mode<synchronous>, transform_indices = @transform_7, window_bounds = array<i64: 128, 64>}, {pipeline_mode = #tpu.pipeline_mode<synchronous>, transform_indices = @transform_8, window_bounds = array<i64: 1, 64>}, {transform_indices = @transform_9, window_bounds = array<i64: 1, 1, 64>}, {transform_indices = @transform_10, window_bounds = array<i64: 1, 1, 64>}, {transform_indices = @transform_11, window_bounds = array<i64: 1, 1, 64>}, {transform_indices = @transform_12, window_bounds = array<i64: 1, 1, 64>}, {transform_indices = @transform_13, window_bounds = array<i64: 1, 40, 64>}]} {
    %c0 = arith.constant 0 : index
    %c0_0 = arith.constant 0 : index
    %c0_1 = arith.constant 0 : index
    %0 = vector.load %arg1[%c0, %c0_0, %c0_1] : memref<1x40x64xf32, #tpu.memory_space<vmem>>, vector<1x40x64xf32>
    %1 = vector.shape_cast %0 : vector<1x40x64xf32> to vector<40x64xf32>
    %c0_2 = arith.constant 0 : index
    %c0_3 = arith.constant 0 : index
    %2 = vector.load %arg2[%c0_2, %c0_3] : memref<64x192xf32, #tpu.memory_space<vmem>>, vector<64x192xf32>
    %cst = arith.constant dense<0.000000e+00> : vector<40x192xf32>
    %3 = tpu.matmul %1, %2, %cst {dimension_numbers = #tpu.dot_dimension_numbers<[1], [0], [0], [1], [0, 0, 1, 1], [], []>} : vector<40x64xf32>, vector<64x192xf32>, vector<40x192xf32> -> vector<40x192xf32>
    %c0_4 = arith.constant 0 : index
    %c0_5 = arith.constant 0 : index
    %4 = vector.load %arg3[%c0_4, %c0_5] : memref<1x192xf32, #tpu.memory_space<vmem>>, vector<1x192xf32>
    %5 = vector.broadcast %4 : vector<1x192xf32> to vector<40x192xf32>
    %6 = arith.addf %3, %5 : vector<40x192xf32>
    %c0_6 = arith.constant 0 : index
    %c0_7 = arith.constant 0 : index
    %7 = vector.load %arg4[%c0_6, %c0_7] : memref<64x64xf32, #tpu.memory_space<vmem>>, vector<64x64xf32>
    %8 = vector.extract_strided_slice %6 {offsets = [0, 0], sizes = [40, 16], strides = [1, 1]} : vector<40x192xf32> to vector<40x16xf32>
    %9 = vector.extract_strided_slice %6 {offsets = [0, 64], sizes = [40, 16], strides = [1, 1]} : vector<40x192xf32> to vector<40x16xf32>
    %10 = vector.extract_strided_slice %6 {offsets = [0, 128], sizes = [40, 16], strides = [1, 1]} : vector<40x192xf32> to vector<40x16xf32>
    %cst_8 = arith.constant dense<0.000000e+00> : vector<40x40xf32>
    %11 = tpu.matmul %8, %9, %cst_8 {dimension_numbers = #tpu.dot_dimension_numbers<[1], [1], [0], [0], [0, 0, 1, 0], [], []>} : vector<40x16xf32>, vector<40x16xf32>, vector<40x40xf32> -> vector<40x40xf32>
    %cst_9 = arith.constant 2.500000e-01 : f32
    %12 = vector.broadcast %cst_9 : f32 to vector<40x40xf32>
    %13 = arith.mulf %11, %12 : vector<40x40xf32>
    %cst_10 = arith.constant dense<0xFF800000> : vector<40xf32>
    %14 = vector.multi_reduction <maximumf>, %13, %cst_10 [1] : vector<40x40xf32> to vector<40xf32>
    %15 = vector.shape_cast %14 : vector<40xf32> to vector<40x1xf32>
    %16 = vector.broadcast %15 : vector<40x1xf32> to vector<40x40xf32>
    %17 = arith.subf %13, %16 : vector<40x40xf32>
    %18 = math.exp %17 : vector<40x40xf32>
    %cst_11 = arith.constant dense<0.000000e+00> : vector<40xf32>
    %19 = vector.multi_reduction <add>, %18, %cst_11 [1] : vector<40x40xf32> to vector<40xf32>
    %20 = vector.shape_cast %19 : vector<40xf32> to vector<40x1xf32>
    %21 = tpu.reciprocal %20 {approx = true} : vector<40x1xf32> -> vector<40x1xf32>
    %22 = vector.broadcast %21 : vector<40x1xf32> to vector<40x40xf32>
    %23 = arith.mulf %18, %22 : vector<40x40xf32>
    %cst_12 = arith.constant dense<0.000000e+00> : vector<40x16xf32>
    %24 = tpu.matmul %23, %10, %cst_12 {dimension_numbers = #tpu.dot_dimension_numbers<[1], [0], [0], [1], [0, 0, 1, 1], [], []>} : vector<40x40xf32>, vector<40x16xf32>, vector<40x16xf32> -> vector<40x16xf32>
    %25 = vector.extract_strided_slice %7 {offsets = [0, 0], sizes = [16, 64], strides = [1, 1]} : vector<64x64xf32> to vector<16x64xf32>
    %cst_13 = arith.constant dense<0.000000e+00> : vector<40x64xf32>
    %26 = tpu.matmul %24, %25, %cst_13 {dimension_numbers = #tpu.dot_dimension_numbers<[1], [0], [0], [1], [0, 0, 1, 1], [], []>} : vector<40x16xf32>, vector<16x64xf32>, vector<40x64xf32> -> vector<40x64xf32>
    %27 = vector.extract_strided_slice %6 {offsets = [0, 16], sizes = [40, 16], strides = [1, 1]} : vector<40x192xf32> to vector<40x16xf32>
    %28 = vector.extract_strided_slice %6 {offsets = [0, 80], sizes = [40, 16], strides = [1, 1]} : vector<40x192xf32> to vector<40x16xf32>
    %29 = vector.extract_strided_slice %6 {offsets = [0, 144], sizes = [40, 16], strides = [1, 1]} : vector<40x192xf32> to vector<40x16xf32>
    %cst_14 = arith.constant dense<0.000000e+00> : vector<40x40xf32>
    %30 = tpu.matmul %27, %28, %cst_14 {dimension_numbers = #tpu.dot_dimension_numbers<[1], [1], [0], [0], [0, 0, 1, 0], [], []>} : vector<40x16xf32>, vector<40x16xf32>, vector<40x40xf32> -> vector<40x40xf32>
    %cst_15 = arith.constant 2.500000e-01 : f32
    %31 = vector.broadcast %cst_15 : f32 to vector<40x40xf32>
    %32 = arith.mulf %30, %31 : vector<40x40xf32>
    %cst_16 = arith.constant dense<0xFF800000> : vector<40xf32>
    %33 = vector.multi_reduction <maximumf>, %32, %cst_16 [1] : vector<40x40xf32> to vector<40xf32>
    %34 = vector.shape_cast %33 : vector<40xf32> to vector<40x1xf32>
    %35 = vector.broadcast %34 : vector<40x1xf32> to vector<40x40xf32>
    %36 = arith.subf %32, %35 : vector<40x40xf32>
    %37 = math.exp %36 : vector<40x40xf32>
    %cst_17 = arith.constant dense<0.000000e+00> : vector<40xf32>
    %38 = vector.multi_reduction <add>, %37, %cst_17 [1] : vector<40x40xf32> to vector<40xf32>
    %39 = vector.shape_cast %38 : vector<40xf32> to vector<40x1xf32>
    %40 = tpu.reciprocal %39 {approx = true} : vector<40x1xf32> -> vector<40x1xf32>
    %41 = vector.broadcast %40 : vector<40x1xf32> to vector<40x40xf32>
    %42 = arith.mulf %37, %41 : vector<40x40xf32>
    %cst_18 = arith.constant dense<0.000000e+00> : vector<40x16xf32>
    %43 = tpu.matmul %42, %29, %cst_18 {dimension_numbers = #tpu.dot_dimension_numbers<[1], [0], [0], [1], [0, 0, 1, 1], [], []>} : vector<40x40xf32>, vector<40x16xf32>, vector<40x16xf32> -> vector<40x16xf32>
    %44 = vector.extract_strided_slice %7 {offsets = [16, 0], sizes = [16, 64], strides = [1, 1]} : vector<64x64xf32> to vector<16x64xf32>
    %cst_19 = arith.constant dense<0.000000e+00> : vector<40x64xf32>
    %45 = tpu.matmul %43, %44, %cst_19 {dimension_numbers = #tpu.dot_dimension_numbers<[1], [0], [0], [1], [0, 0, 1, 1], [], []>} : vector<40x16xf32>, vector<16x64xf32>, vector<40x64xf32> -> vector<40x64xf32>
    %46 = arith.addf %26, %45 : vector<40x64xf32>
    %47 = vector.extract_strided_slice %6 {offsets = [0, 32], sizes = [40, 16], strides = [1, 1]} : vector<40x192xf32> to vector<40x16xf32>
    %48 = vector.extract_strided_slice %6 {offsets = [0, 96], sizes = [40, 16], strides = [1, 1]} : vector<40x192xf32> to vector<40x16xf32>
    %49 = vector.extract_strided_slice %6 {offsets = [0, 160], sizes = [40, 16], strides = [1, 1]} : vector<40x192xf32> to vector<40x16xf32>
    %cst_20 = arith.constant dense<0.000000e+00> : vector<40x40xf32>
    %50 = tpu.matmul %47, %48, %cst_20 {dimension_numbers = #tpu.dot_dimension_numbers<[1], [1], [0], [0], [0, 0, 1, 0], [], []>} : vector<40x16xf32>, vector<40x16xf32>, vector<40x40xf32> -> vector<40x40xf32>
    %cst_21 = arith.constant 2.500000e-01 : f32
    %51 = vector.broadcast %cst_21 : f32 to vector<40x40xf32>
    %52 = arith.mulf %50, %51 : vector<40x40xf32>
    %cst_22 = arith.constant dense<0xFF800000> : vector<40xf32>
    %53 = vector.multi_reduction <maximumf>, %52, %cst_22 [1] : vector<40x40xf32> to vector<40xf32>
    %54 = vector.shape_cast %53 : vector<40xf32> to vector<40x1xf32>
    %55 = vector.broadcast %54 : vector<40x1xf32> to vector<40x40xf32>
    %56 = arith.subf %52, %55 : vector<40x40xf32>
    %57 = math.exp %56 : vector<40x40xf32>
    %cst_23 = arith.constant dense<0.000000e+00> : vector<40xf32>
    %58 = vector.multi_reduction <add>, %57, %cst_23 [1] : vector<40x40xf32> to vector<40xf32>
    %59 = vector.shape_cast %58 : vector<40xf32> to vector<40x1xf32>
    %60 = tpu.reciprocal %59 {approx = true} : vector<40x1xf32> -> vector<40x1xf32>
    %61 = vector.broadcast %60 : vector<40x1xf32> to vector<40x40xf32>
    %62 = arith.mulf %57, %61 : vector<40x40xf32>
    %cst_24 = arith.constant dense<0.000000e+00> : vector<40x16xf32>
    %63 = tpu.matmul %62, %49, %cst_24 {dimension_numbers = #tpu.dot_dimension_numbers<[1], [0], [0], [1], [0, 0, 1, 1], [], []>} : vector<40x40xf32>, vector<40x16xf32>, vector<40x16xf32> -> vector<40x16xf32>
    %64 = vector.extract_strided_slice %7 {offsets = [32, 0], sizes = [16, 64], strides = [1, 1]} : vector<64x64xf32> to vector<16x64xf32>
    %cst_25 = arith.constant dense<0.000000e+00> : vector<40x64xf32>
    %65 = tpu.matmul %63, %64, %cst_25 {dimension_numbers = #tpu.dot_dimension_numbers<[1], [0], [0], [1], [0, 0, 1, 1], [], []>} : vector<40x16xf32>, vector<16x64xf32>, vector<40x64xf32> -> vector<40x64xf32>
    %66 = arith.addf %46, %65 : vector<40x64xf32>
    %67 = vector.extract_strided_slice %6 {offsets = [0, 48], sizes = [40, 16], strides = [1, 1]} : vector<40x192xf32> to vector<40x16xf32>
    %68 = vector.extract_strided_slice %6 {offsets = [0, 112], sizes = [40, 16], strides = [1, 1]} : vector<40x192xf32> to vector<40x16xf32>
    %69 = vector.extract_strided_slice %6 {offsets = [0, 176], sizes = [40, 16], strides = [1, 1]} : vector<40x192xf32> to vector<40x16xf32>
    %cst_26 = arith.constant dense<0.000000e+00> : vector<40x40xf32>
    %70 = tpu.matmul %67, %68, %cst_26 {dimension_numbers = #tpu.dot_dimension_numbers<[1], [1], [0], [0], [0, 0, 1, 0], [], []>} : vector<40x16xf32>, vector<40x16xf32>, vector<40x40xf32> -> vector<40x40xf32>
    %cst_27 = arith.constant 2.500000e-01 : f32
    %71 = vector.broadcast %cst_27 : f32 to vector<40x40xf32>
    %72 = arith.mulf %70, %71 : vector<40x40xf32>
    %cst_28 = arith.constant dense<0xFF800000> : vector<40xf32>
    %73 = vector.multi_reduction <maximumf>, %72, %cst_28 [1] : vector<40x40xf32> to vector<40xf32>
    %74 = vector.shape_cast %73 : vector<40xf32> to vector<40x1xf32>
    %75 = vector.broadcast %74 : vector<40x1xf32> to vector<40x40xf32>
    %76 = arith.subf %72, %75 : vector<40x40xf32>
    %77 = math.exp %76 : vector<40x40xf32>
    %cst_29 = arith.constant dense<0.000000e+00> : vector<40xf32>
    %78 = vector.multi_reduction <add>, %77, %cst_29 [1] : vector<40x40xf32> to vector<40xf32>
    %79 = vector.shape_cast %78 : vector<40xf32> to vector<40x1xf32>
    %80 = tpu.reciprocal %79 {approx = true} : vector<40x1xf32> -> vector<40x1xf32>
    %81 = vector.broadcast %80 : vector<40x1xf32> to vector<40x40xf32>
    %82 = arith.mulf %77, %81 : vector<40x40xf32>
    %cst_30 = arith.constant dense<0.000000e+00> : vector<40x16xf32>
    %83 = tpu.matmul %82, %69, %cst_30 {dimension_numbers = #tpu.dot_dimension_numbers<[1], [0], [0], [1], [0, 0, 1, 1], [], []>} : vector<40x40xf32>, vector<40x16xf32>, vector<40x16xf32> -> vector<40x16xf32>
    %84 = vector.extract_strided_slice %7 {offsets = [48, 0], sizes = [16, 64], strides = [1, 1]} : vector<64x64xf32> to vector<16x64xf32>
    %cst_31 = arith.constant dense<0.000000e+00> : vector<40x64xf32>
    %85 = tpu.matmul %83, %84, %cst_31 {dimension_numbers = #tpu.dot_dimension_numbers<[1], [0], [0], [1], [0, 0, 1, 1], [], []>} : vector<40x16xf32>, vector<16x64xf32>, vector<40x64xf32> -> vector<40x64xf32>
    %86 = arith.addf %66, %85 : vector<40x64xf32>
    %c0_32 = arith.constant 0 : index
    %c0_33 = arith.constant 0 : index
    %87 = vector.load %arg5[%c0_32, %c0_33] : memref<1x64xf32, #tpu.memory_space<vmem>>, vector<1x64xf32>
    %88 = vector.broadcast %87 : vector<1x64xf32> to vector<40x64xf32>
    %89 = arith.addf %86, %88 : vector<40x64xf32>
    %90 = arith.addf %89, %1 : vector<40x64xf32>
    %cst_34 = arith.constant dense<0.000000e+00> : vector<40xf32>
    %91 = vector.multi_reduction <add>, %90, %cst_34 [1] : vector<40x64xf32> to vector<40xf32>
    %92 = vector.shape_cast %91 : vector<40xf32> to vector<40x1xf32>
    %cst_35 = arith.constant 6.400000e+01 : f32
    %93 = vector.broadcast %cst_35 : f32 to vector<40x1xf32>
    %94 = arith.divf %92, %93 : vector<40x1xf32>
    %95 = vector.broadcast %94 : vector<40x1xf32> to vector<40x64xf32>
    %96 = arith.subf %90, %95 : vector<40x64xf32>
    %97 = arith.mulf %96, %96 : vector<40x64xf32>
    %cst_36 = arith.constant dense<0.000000e+00> : vector<40xf32>
    %98 = vector.multi_reduction <add>, %97, %cst_36 [1] : vector<40x64xf32> to vector<40xf32>
    %99 = vector.shape_cast %98 : vector<40xf32> to vector<40x1xf32>
    %cst_37 = arith.constant 6.400000e+01 : f32
    %100 = vector.broadcast %cst_37 : f32 to vector<40x1xf32>
    %101 = arith.divf %99, %100 : vector<40x1xf32>
    %102 = vector.broadcast %94 : vector<40x1xf32> to vector<40x64xf32>
    %103 = arith.subf %90, %102 : vector<40x64xf32>
    %cst_38 = arith.constant 9.99999997E-7 : f32
    %104 = vector.broadcast %cst_38 : f32 to vector<40x1xf32>
    %105 = arith.addf %101, %104 : vector<40x1xf32>
    %106 = math.rsqrt %105 : vector<40x1xf32>
    %107 = vector.broadcast %106 : vector<40x1xf32> to vector<40x64xf32>
    %108 = arith.mulf %103, %107 : vector<40x64xf32>
    %c0_39 = arith.constant 0 : index
    %c0_40 = arith.constant 0 : index
    %c0_41 = arith.constant 0 : index
    %109 = vector.load %arg10[%c0_39, %c0_40, %c0_41] : memref<1x1x64xf32, #tpu.memory_space<vmem>>, vector<1x1x64xf32>
    %110 = vector.shape_cast %109 : vector<1x1x64xf32> to vector<1x64xf32>
    %111 = vector.broadcast %110 : vector<1x64xf32> to vector<40x64xf32>
    %112 = arith.mulf %108, %111 : vector<40x64xf32>
    %c0_42 = arith.constant 0 : index
    %c0_43 = arith.constant 0 : index
    %c0_44 = arith.constant 0 : index
    %113 = vector.load %arg11[%c0_42, %c0_43, %c0_44] : memref<1x1x64xf32, #tpu.memory_space<vmem>>, vector<1x1x64xf32>
    %114 = vector.shape_cast %113 : vector<1x1x64xf32> to vector<1x64xf32>
    %115 = vector.broadcast %114 : vector<1x64xf32> to vector<40x64xf32>
    %116 = arith.addf %112, %115 : vector<40x64xf32>
    %c0_45 = arith.constant 0 : index
    %c0_46 = arith.constant 0 : index
    %117 = vector.load %arg6[%c0_45, %c0_46] : memref<64x128xf32, #tpu.memory_space<vmem>>, vector<64x128xf32>
    %cst_47 = arith.constant dense<0.000000e+00> : vector<40x128xf32>
    %118 = tpu.matmul %116, %117, %cst_47 {dimension_numbers = #tpu.dot_dimension_numbers<[1], [0], [0], [1], [0, 0, 1, 1], [], []>} : vector<40x64xf32>, vector<64x128xf32>, vector<40x128xf32> -> vector<40x128xf32>
    %c0_48 = arith.constant 0 : index
    %c0_49 = arith.constant 0 : index
    %119 = vector.load %arg7[%c0_48, %c0_49] : memref<1x128xf32, #tpu.memory_space<vmem>>, vector<1x128xf32>
    %120 = vector.broadcast %119 : vector<1x128xf32> to vector<40x128xf32>
    %121 = arith.addf %118, %120 : vector<40x128xf32>
    %cst_50 = arith.constant 0.000000e+00 : f32
    %122 = vector.broadcast %cst_50 : f32 to vector<40x128xf32>
    %123 = arith.maximumf %121, %122 : vector<40x128xf32>
    %c0_51 = arith.constant 0 : index
    %c0_52 = arith.constant 0 : index
    %124 = vector.load %arg8[%c0_51, %c0_52] : memref<128x64xf32, #tpu.memory_space<vmem>>, vector<128x64xf32>
    %cst_53 = arith.constant dense<0.000000e+00> : vector<40x64xf32>
    %125 = tpu.matmul %123, %124, %cst_53 {dimension_numbers = #tpu.dot_dimension_numbers<[1], [0], [0], [1], [0, 0, 1, 1], [], []>} : vector<40x128xf32>, vector<128x64xf32>, vector<40x64xf32> -> vector<40x64xf32>
    %c0_54 = arith.constant 0 : index
    %c0_55 = arith.constant 0 : index
    %126 = vector.load %arg9[%c0_54, %c0_55] : memref<1x64xf32, #tpu.memory_space<vmem>>, vector<1x64xf32>
    %127 = vector.broadcast %126 : vector<1x64xf32> to vector<40x64xf32>
    %128 = arith.addf %125, %127 : vector<40x64xf32>
    %129 = arith.addf %128, %116 : vector<40x64xf32>
    %cst_56 = arith.constant dense<0.000000e+00> : vector<40xf32>
    %130 = vector.multi_reduction <add>, %129, %cst_56 [1] : vector<40x64xf32> to vector<40xf32>
    %131 = vector.shape_cast %130 : vector<40xf32> to vector<40x1xf32>
    %cst_57 = arith.constant 6.400000e+01 : f32
    %132 = vector.broadcast %cst_57 : f32 to vector<40x1xf32>
    %133 = arith.divf %131, %132 : vector<40x1xf32>
    %134 = vector.broadcast %133 : vector<40x1xf32> to vector<40x64xf32>
    %135 = arith.subf %129, %134 : vector<40x64xf32>
    %136 = arith.mulf %135, %135 : vector<40x64xf32>
    %cst_58 = arith.constant dense<0.000000e+00> : vector<40xf32>
    %137 = vector.multi_reduction <add>, %136, %cst_58 [1] : vector<40x64xf32> to vector<40xf32>
    %138 = vector.shape_cast %137 : vector<40xf32> to vector<40x1xf32>
    %cst_59 = arith.constant 6.400000e+01 : f32
    %139 = vector.broadcast %cst_59 : f32 to vector<40x1xf32>
    %140 = arith.divf %138, %139 : vector<40x1xf32>
    %141 = vector.broadcast %133 : vector<40x1xf32> to vector<40x64xf32>
    %142 = arith.subf %129, %141 : vector<40x64xf32>
    %cst_60 = arith.constant 9.99999997E-7 : f32
    %143 = vector.broadcast %cst_60 : f32 to vector<40x1xf32>
    %144 = arith.addf %140, %143 : vector<40x1xf32>
    %145 = math.rsqrt %144 : vector<40x1xf32>
    %146 = vector.broadcast %145 : vector<40x1xf32> to vector<40x64xf32>
    %147 = arith.mulf %142, %146 : vector<40x64xf32>
    %c0_61 = arith.constant 0 : index
    %c0_62 = arith.constant 0 : index
    %c0_63 = arith.constant 0 : index
    %148 = vector.load %arg12[%c0_61, %c0_62, %c0_63] : memref<1x1x64xf32, #tpu.memory_space<vmem>>, vector<1x1x64xf32>
    %149 = vector.shape_cast %148 : vector<1x1x64xf32> to vector<1x64xf32>
    %150 = vector.broadcast %149 : vector<1x64xf32> to vector<40x64xf32>
    %151 = arith.mulf %147, %150 : vector<40x64xf32>
    %c0_64 = arith.constant 0 : index
    %c0_65 = arith.constant 0 : index
    %c0_66 = arith.constant 0 : index
    %152 = vector.load %arg13[%c0_64, %c0_65, %c0_66] : memref<1x1x64xf32, #tpu.memory_space<vmem>>, vector<1x1x64xf32>
    %153 = vector.shape_cast %152 : vector<1x1x64xf32> to vector<1x64xf32>
    %154 = vector.broadcast %153 : vector<1x64xf32> to vector<40x64xf32>
    %155 = arith.addf %151, %154 : vector<40x64xf32>
    %c0_67 = arith.constant 0 : index
    %c0_68 = arith.constant 0 : index
    %c0_69 = arith.constant 0 : index
    %156 = vector.load %arg14[%c0_67, %c0_68, %c0_69] : memref<1x40x64xf32, #tpu.memory_space<vmem>>, vector<1x40x64xf32>
    %157 = vector.shape_cast %156 : vector<1x40x64xf32> to vector<40x64xf32>
    %158 = vector.shape_cast %155 : vector<40x64xf32> to vector<1x40x64xf32>
    tpu.vector_store %arg14[%c0_67, %c0_68, %c0_69], %158 {strides = array<i32>} : memref<1x40x64xf32, #tpu.memory_space<vmem>>, vector<1x40x64xf32>,
    return
  }
  func.func @transform_0(%arg0: i32) -> (i32, i32, i32) {
    %c0_i32 = arith.constant 0 : i32
    %c0_i32_0 = arith.constant 0 : i32
    %c0_i32_1 = arith.constant 0 : i32
    return %arg0, %c0_i32, %c0_i32_0 : i32, i32, i32
  }
  func.func @transform_1(%arg0: i32) -> (i32, i32) {
    %c0_i32 = arith.constant 0 : i32
    %c0_i32_0 = arith.constant 0 : i32
    %c0_i32_1 = arith.constant 0 : i32
    return %c0_i32, %c0_i32_0 : i32, i32
  }
  func.func @transform_2(%arg0: i32) -> (i32, i32) {
    %c0_i32 = arith.constant 0 : i32
    %c0_i32_0 = arith.constant 0 : i32
    %c0_i32_1 = arith.constant 0 : i32
    return %c0_i32, %c0_i32_0 : i32, i32
  }
  func.func @transform_3(%arg0: i32) -> (i32, i32) {
    %c0_i32 = arith.constant 0 : i32
    %c0_i32_0 = arith.constant 0 : i32
    %c0_i32_1 = arith.constant 0 : i32
    return %c0_i32, %c0_i32_0 : i32, i32
  }
  func.func @transform_4(%arg0: i32) -> (i32, i32) {
    %c0_i32 = arith.constant 0 : i32
    %c0_i32_0 = arith.constant 0 : i32
    %c0_i32_1 = arith.constant 0 : i32
    return %c0_i32, %c0_i32_0 : i32, i32
  }
  func.func @transform_5(%arg0: i32) -> (i32, i32) {
    %c0_i32 = arith.constant 0 : i32
    %c0_i32_0 = arith.constant 0 : i32
    %c0_i32_1 = arith.constant 0 : i32
    return %c0_i32, %c0_i32_0 : i32, i32
  }
  func.func @transform_6(%arg0: i32) -> (i32, i32) {
    %c0_i32 = arith.constant 0 : i32
    %c0_i32_0 = arith.constant 0 : i32
    %c0_i32_1 = arith.constant 0 : i32
    return %c0_i32, %c0_i32_0 : i32, i32
  }
  func.func @transform_7(%arg0: i32) -> (i32, i32) {
    %c0_i32 = arith.constant 0 : i32
    %c0_i32_0 = arith.constant 0 : i32
    %c0_i32_1 = arith.constant 0 : i32
    return %c0_i32, %c0_i32_0 : i32, i32
  }
  func.func @transform_8(%arg0: i32) -> (i32, i32) {
    %c0_i32 = arith.constant 0 : i32
    %c0_i32_0 = arith.constant 0 : i32
    %c0_i32_1 = arith.constant 0 : i32
    return %c0_i32, %c0_i32_0 : i32, i32
  }
  func.func @transform_9(%arg0: i32) -> (i32, i32, i32) {
    %c0_i32 = arith.constant 0 : i32
    %c0_i32_0 = arith.constant 0 : i32
    %c0_i32_1 = arith.constant 0 : i32
    return %arg0, %c0_i32, %c0_i32_0 : i32, i32, i32
  }
  func.func @transform_10(%arg0: i32) -> (i32, i32, i32) {
    %c0_i32 = arith.constant 0 : i32
    %c0_i32_0 = arith.constant 0 : i32
    %c0_i32_1 = arith.constant 0 : i32
    return %arg0, %c0_i32, %c0_i32_0 : i32, i32, i32
  }
  func.func @transform_11(%arg0: i32) -> (i32, i32, i32) {
    %c0_i32 = arith.constant 0 : i32
    %c0_i32_0 = arith.constant 0 : i32
    %c0_i32_1 = arith.constant 0 : i32
    return %arg0, %c0_i32, %c0_i32_0 : i32, i32, i32
  }
  func.func @transform_12(%arg0: i32) -> (i32, i32, i32) {
    %c0_i32 = arith.constant 0 : i32
    %c0_i32_0 = arith.constant 0 : i32
    %c0_i32_1 = arith.constant 0 : i32
    return %arg0, %c0_i32, %c0_i32_0 : i32, i32, i32
  }
  func.func @transform_13(%arg0: i32) -> (i32, i32, i32) {
    %c0_i32 = arith.constant 0 : i32
    %c0_i32_0 = arith.constant 0 : i32
    %c0_i32_1 = arith.constant 0 : i32
    return %arg0, %c0_i32, %c0_i32_0 : i32, i32, i32
  }
}

module attributes {stable_mosaic.version = 11 : i64} {
  func.func @_linear_kernel(%arg0: memref<16x32xf32, #tpu.memory_space<vmem>>, %arg1: memref<32x64xf32, #tpu.memory_space<vmem>>, %arg2: memref<1x64xf32, #tpu.memory_space<vmem>>, %arg3: memref<16x64xf32, #tpu.memory_space<vmem>>) attributes {dimension_semantics = [], scalar_prefetch = 0 : i64, scratch_operands = 0 : i64, tpu.core_type = #tpu.core_type<tc>} {
    %c0 = arith.constant 0 : index
    %c0_0 = arith.constant 0 : index
    %0 = vector.load %arg0[%c0, %c0_0] : memref<16x32xf32, #tpu.memory_space<vmem>>, vector<16x32xf32>
    %c0_1 = arith.constant 0 : index
    %c0_2 = arith.constant 0 : index
    %1 = vector.load %arg1[%c0_1, %c0_2] : memref<32x64xf32, #tpu.memory_space<vmem>>, vector<32x64xf32>
    %cst = arith.constant dense<0.000000e+00> : vector<16x64xf32>
    %2 = tpu.matmul %0, %1, %cst {dimension_numbers = #tpu.dot_dimension_numbers<[1], [0], [0], [1], [0, 0, 1, 1], [], []>} : vector<16x32xf32>, vector<32x64xf32>, vector<16x64xf32> -> vector<16x64xf32>
    %c0_3 = arith.constant 0 : index
    %c0_4 = arith.constant 0 : index
    %3 = vector.load %arg2[%c0_3, %c0_4] : memref<1x64xf32, #tpu.memory_space<vmem>>, vector<1x64xf32>
    %4 = vector.broadcast %3 : vector<1x64xf32> to vector<16x64xf32>
    %5 = arith.addf %2, %4 : vector<16x64xf32>
    %c0_5 = arith.constant 0 : index
    %c0_6 = arith.constant 0 : index
    %6 = vector.load %arg3[%c0_5, %c0_6] : memref<16x64xf32, #tpu.memory_space<vmem>>, vector<16x64xf32>
    tpu.vector_store %arg3[%c0_5, %c0_6], %5 {strides = array<i32>} : memref<16x64xf32, #tpu.memory_space<vmem>>, vector<16x64xf32>,
    return
  }
}

module attributes {stable_mosaic.version = 11 : i64} {
  func.func @_encoder_layer_kernel(%arg0: i32, %arg1: memref<1x8x64xf32, #tpu.memory_space<vmem>>, %arg2: memref<64x192xf32, #tpu.memory_space<vmem>>, %arg3: memref<1x192xf32, #tpu.memory_space<vmem>>, %arg4: memref<64x64xf32, #tpu.memory_space<vmem>>, %arg5: memref<1x64xf32, #tpu.memory_space<vmem>>, %arg6: memref<64x128xf32, #tpu.memory_space<vmem>>, %arg7: memref<1x128xf32, #tpu.memory_space<vmem>>, %arg8: memref<128x64xf32, #tpu.memory_space<vmem>>, %arg9: memref<1x64xf32, #tpu.memory_space<vmem>>, %arg10: memref<1x1x64xf32, #tpu.memory_space<vmem>>, %arg11: memref<1x1x64xf32, #tpu.memory_space<vmem>>, %arg12: memref<1x1x64xf32, #tpu.memory_space<vmem>>, %arg13: memref<1x1x64xf32, #tpu.memory_space<vmem>>, %arg14: memref<1x8x64xf32, #tpu.memory_space<vmem>>) attributes {dimension_semantics = [#tpu.dimension_semantics<parallel>], iteration_bounds = array<i64: 2>, scalar_prefetch = 0 : i64, scratch_operands = 0 : i64, tpu.core_type = #tpu.core_type<tc>, window_params = [{transform_indices = @transform_0, window_bounds = array<i64: 1, 8, 64>}, {pipeline_mode = #tpu.pipeline_mode<synchronous>, transform_indices = @transform_1, window_bounds = array<i64: 64, 192>}, {pipeline_mode = #tpu.pipeline_mode<synchronous>, transform_indices = @transform_2, window_bounds = array<i64: 1, 192>}, {pipeline_mode = #tpu.pipeline_mode<synchronous>, transform_indices = @transform_3, window_bounds = array<i64: 64, 64>}, {pipeline_mode = #tpu.pipeline_mode<synchronous>, transform_indices = @transform_4, window_bounds = array<i64: 1, 64>}, {pipeline_mode = #tpu.pipeline_mode<synchronous>, transform_indices = @transform_5, window_bounds = array<i64: 64, 128>}, {pipeline_mode = #tpu.pipeline_mode<synchronous>, transform_indices = @transform_6, window_bounds = array<i64: 1, 128>}, {pipeline_mode = #tpu.pipeline_mode<synchronous>, transform_indices = @transform_7, window_bounds = array<i64: 128, 64>}, {pipeline_mode = #tpu.pipeline_mode<synchronous>, transform_indices = @transform_8, window_bounds = array<i64: 1, 64>}, {transform_indices = @transform_9, window_bounds = array<i64: 1, 1, 64>}, {transform_indices = @transform_10, window_bounds = array<i64: 1, 1, 64>}, {transform_indices = @transform_11, window_bounds = array<i64: 1, 1, 64>}, {transform_indices = @transform_12, window_bounds = array<i64: 1, 1, 64>}, {transform_indices = @transform_13, window_bounds = array<i64: 1, 8, 64>}]} {
    %c0 = arith.constant 0 : index
    %c0_0 = arith.constant 0 : index
    %c0_1 = arith.constant 0 : index
    %0 = vector.load %arg1[%c0, %c0_0, %c0_1] : memref<1x8x64xf32, #tpu.memory_space<vmem>>, vector<1x8x64xf32>
    %1 = vector.shape_cast %0 : vector<1x8x64xf32> to vector<8x64xf32>
    %c0_2 = arith.constant 0 : index
    %c0_3 = arith.constant 0 : index
    %2 = vector.load %arg2[%c0_2, %c0_3] : memref<64x192xf32, #tpu.memory_space<vmem>>, vector<64x192xf32>
    %cst = arith.constant dense<0.000000e+00> : vector<8x192xf32>
    %3 = tpu.matmul %1, %2, %cst {dimension_numbers = #tpu.dot_dimension_numbers<[1], [0], [0], [1], [0, 0, 1, 1], [], []>} : vector<8x64xf32>, vector<64x192xf32>, vector<8x192xf32> -> vector<8x192xf32>
    %c0_4 = arith.constant 0 : index
    %c0_5 = arith.constant 0 : index
    %4 = vector.load %arg3[%c0_4, %c0_5] : memref<1x192xf32, #tpu.memory_space<vmem>>, vector<1x192xf32>
    %5 = vector.broadcast %4 : vector<1x192xf32> to vector<8x192xf32>
    %6 = arith.addf %3, %5 : vector<8x192xf32>
    %c0_6 = arith.constant 0 : index
    %c0_7 = arith.constant 0 : index
    %7 = vector.load %arg4[%c0_6, %c0_7] : memref<64x64xf32, #tpu.memory_space<vmem>>, vector<64x64xf32>
    %8 = vector.extract_strided_slice %6 {offsets = [0, 0], sizes = [8, 16], strides = [1, 1]} : vector<8x192xf32> to vector<8x16xf32>
    %9 = vector.extract_strided_slice %6 {offsets = [0, 64], sizes = [8, 16], strides = [1, 1]} : vector<8x192xf32> to vector<8x16xf32>
    %10 = vector.extract_strided_slice %6 {offsets = [0, 128], sizes = [8, 16], strides = [1, 1]} : vector<8x192xf32> to vector<8x16xf32>
    %cst_8 = arith.constant dense<0.000000e+00> : vector<8x8xf32>
    %11 = tpu.matmul %8, %9, %cst_8 {dimension_numbers = #tpu.dot_dimension_numbers<[1], [1], [0], [0], [0, 0, 1, 0], [], []>} : vector<8x16xf32>, vector<8x16xf32>, vector<8x8xf32> -> vector<8x8xf32>
    %cst_9 = arith.constant 2.500000e-01 : f32
    %12 = vector.broadcast %cst_9 : f32 to vector<8x8xf32>
    %13 = arith.mulf %11, %12 : vector<8x8xf32>
    %cst_10 = arith.constant dense<0xFF800000> : vector<8xf32>
    %14 = vector.multi_reduction <maximumf>, %13, %cst_10 [1] : vector<8x8xf32> to vector<8xf32>
    %15 = vector.shape_cast %14 : vector<8xf32> to vector<8x1xf32>
    %16 = vector.broadcast %15 : vector<8x1xf32> to vector<8x8xf32>
    %17 = arith.subf %13, %16 : vector<8x8xf32>
    %18 = math.exp %17 : vector<8x8xf32>
    %cst_11 = arith.constant dense<0.000000e+00> : vector<8xf32>
    %19 = vector.multi_reduction <add>, %18, %cst_11 [1] : vector<8x8xf32> to vector<8xf32>
    %20 = vector.shape_cast %19 : vector<8xf32> to vector<8x1xf32>
    %21 = tpu.reciprocal %20 {approx = true} : vector<8x1xf32> -> vector<8x1xf32>
    %22 = vector.broadcast %21 : vector<8x1xf32> to vector<8x8xf32>
    %23 = arith.mulf %18, %22 : vector<8x8xf32>
    %cst_12 = arith.constant dense<0.000000e+00> : vector<8x16xf32>
    %24 = tpu.matmul %23, %10, %cst_12 {dimension_numbers = #tpu.dot_dimension_numbers<[1], [0], [0], [1], [0, 0, 1, 1], [], []>} : vector<8x8xf32>, vector<8x16xf32>, vector<8x16xf32> -> vector<8x16xf32>
    %25 = vector.extract_strided_slice %7 {offsets = [0, 0], sizes = [16, 64], strides = [1, 1]} : vector<64x64xf32> to vector<16x64xf32>
    %cst_13 = arith.constant dense<0.000000e+00> : vector<8x64xf32>
    %26 = tpu.matmul %24, %25, %cst_13 {dimension_numbers = #tpu.dot_dimension_numbers<[1], [0], [0], [1], [0, 0, 1, 1], [], []>} : vector<8x16xf32>, vector<16x64xf32>, vector<8x64xf32> -> vector<8x64xf32>
    %27 = vector.extract_strided_slice %6 {offsets = [0, 16], sizes = [8, 16], strides = [1, 1]} : vector<8x192xf32> to vector<8x16xf32>
    %28 = vector.extract_strided_slice %6 {offsets = [0, 80], sizes = [8, 16], strides = [1, 1]} : vector<8x192xf32> to vector<8x16xf32>
    %29 = vector.extract_strided_slice %6 {offsets = [0, 144], sizes = [8, 16], strides = [1, 1]} : vector<8x192xf32> to vector<8x16xf32>
    %cst_14 = arith.constant dense<0.000000e+00> : vector<8x8xf32>
    %30 = tpu.matmul %27, %28, %cst_14 {dimension_numbers = #tpu.dot_dimension_numbers<[1], [1], [0], [0], [0, 0, 1, 0], [], []>} : vector<8x16xf32>, vector<8x16xf32>, vector<8x8xf32> -> vector<8x8xf32>
    %cst_15 = arith.constant 2.500000e-01 : f32
    %31 = vector.broadcast %cst_15 : f32 to vector<8x8xf32>
    %32 = arith.mulf %30, %31 : vector<8x8xf32>
    %cst_16 = arith.constant dense<0xFF800000> : vector<8xf32>
    %33 = vector.multi_reduction <maximumf>, %32, %cst_16 [1] : vector<8x8xf32> to vector<8xf32>
    %34 = vector.shape_cast %33 : vector<8xf32> to vector<8x1xf32>
    %35 = vector.broadcast %34 : vector<8x1xf32> to vector<8x8xf32>
    %36 = arith.subf %32, %35 : vector<8x8xf32>
    %37 = math.exp %36 : vector<8x8xf32>
    %cst_17 = arith.constant dense<0.000000e+00> : vector<8xf32>
    %38 = vector.multi_reduction <add>, %37, %cst_17 [1] : vector<8x8xf32> to vector<8xf32>
    %39 = vector.shape_cast %38 : vector<8xf32> to vector<8x1xf32>
    %40 = tpu.reciprocal %39 {approx = true} : vector<8x1xf32> -> vector<8x1xf32>
    %41 = vector.broadcast %40 : vector<8x1xf32> to vector<8x8xf32>
    %42 = arith.mulf %37, %41 : vector<8x8xf32>
    %cst_18 = arith.constant dense<0.000000e+00> : vector<8x16xf32>
    %43 = tpu.matmul %42, %29, %cst_18 {dimension_numbers = #tpu.dot_dimension_numbers<[1], [0], [0], [1], [0, 0, 1, 1], [], []>} : vector<8x8xf32>, vector<8x16xf32>, vector<8x16xf32> -> vector<8x16xf32>
    %44 = vector.extract_strided_slice %7 {offsets = [16, 0], sizes = [16, 64], strides = [1, 1]} : vector<64x64xf32> to vector<16x64xf32>
    %cst_19 = arith.constant dense<0.000000e+00> : vector<8x64xf32>
    %45 = tpu.matmul %43, %44, %cst_19 {dimension_numbers = #tpu.dot_dimension_numbers<[1], [0], [0], [1], [0, 0, 1, 1], [], []>} : vector<8x16xf32>, vector<16x64xf32>, vector<8x64xf32> -> vector<8x64xf32>
    %46 = arith.addf %26, %45 : vector<8x64xf32>
    %47 = vector.extract_strided_slice %6 {offsets = [0, 32], sizes = [8, 16], strides = [1, 1]} : vector<8x192xf32> to vector<8x16xf32>
    %48 = vector.extract_strided_slice %6 {offsets = [0, 96], sizes = [8, 16], strides = [1, 1]} : vector<8x192xf32> to vector<8x16xf32>
    %49 = vector.extract_strided_slice %6 {offsets = [0, 160], sizes = [8, 16], strides = [1, 1]} : vector<8x192xf32> to vector<8x16xf32>
    %cst_20 = arith.constant dense<0.000000e+00> : vector<8x8xf32>
    %50 = tpu.matmul %47, %48, %cst_20 {dimension_numbers = #tpu.dot_dimension_numbers<[1], [1], [0], [0], [0, 0, 1, 0], [], []>} : vector<8x16xf32>, vector<8x16xf32>, vector<8x8xf32> -> vector<8x8xf32>
    %cst_21 = arith.constant 2.500000e-01 : f32
    %51 = vector.broadcast %cst_21 : f32 to vector<8x8xf32>
    %52 = arith.mulf %50, %51 : vector<8x8xf32>
    %cst_22 = arith.constant dense<0xFF800000> : vector<8xf32>
    %53 = vector.multi_reduction <maximumf>, %52, %cst_22 [1] : vector<8x8xf32> to vector<8xf32>
    %54 = vector.shape_cast %53 : vector<8xf32> to vector<8x1xf32>
    %55 = vector.broadcast %54 : vector<8x1xf32> to vector<8x8xf32>
    %56 = arith.subf %52, %55 : vector<8x8xf32>
    %57 = math.exp %56 : vector<8x8xf32>
    %cst_23 = arith.constant dense<0.000000e+00> : vector<8xf32>
    %58 = vector.multi_reduction <add>, %57, %cst_23 [1] : vector<8x8xf32> to vector<8xf32>
    %59 = vector.shape_cast %58 : vector<8xf32> to vector<8x1xf32>
    %60 = tpu.reciprocal %59 {approx = true} : vector<8x1xf32> -> vector<8x1xf32>
    %61 = vector.broadcast %60 : vector<8x1xf32> to vector<8x8xf32>
    %62 = arith.mulf %57, %61 : vector<8x8xf32>
    %cst_24 = arith.constant dense<0.000000e+00> : vector<8x16xf32>
    %63 = tpu.matmul %62, %49, %cst_24 {dimension_numbers = #tpu.dot_dimension_numbers<[1], [0], [0], [1], [0, 0, 1, 1], [], []>} : vector<8x8xf32>, vector<8x16xf32>, vector<8x16xf32> -> vector<8x16xf32>
    %64 = vector.extract_strided_slice %7 {offsets = [32, 0], sizes = [16, 64], strides = [1, 1]} : vector<64x64xf32> to vector<16x64xf32>
    %cst_25 = arith.constant dense<0.000000e+00> : vector<8x64xf32>
    %65 = tpu.matmul %63, %64, %cst_25 {dimension_numbers = #tpu.dot_dimension_numbers<[1], [0], [0], [1], [0, 0, 1, 1], [], []>} : vector<8x16xf32>, vector<16x64xf32>, vector<8x64xf32> -> vector<8x64xf32>
    %66 = arith.addf %46, %65 : vector<8x64xf32>
    %67 = vector.extract_strided_slice %6 {offsets = [0, 48], sizes = [8, 16], strides = [1, 1]} : vector<8x192xf32> to vector<8x16xf32>
    %68 = vector.extract_strided_slice %6 {offsets = [0, 112], sizes = [8, 16], strides = [1, 1]} : vector<8x192xf32> to vector<8x16xf32>
    %69 = vector.extract_strided_slice %6 {offsets = [0, 176], sizes = [8, 16], strides = [1, 1]} : vector<8x192xf32> to vector<8x16xf32>
    %cst_26 = arith.constant dense<0.000000e+00> : vector<8x8xf32>
    %70 = tpu.matmul %67, %68, %cst_26 {dimension_numbers = #tpu.dot_dimension_numbers<[1], [1], [0], [0], [0, 0, 1, 0], [], []>} : vector<8x16xf32>, vector<8x16xf32>, vector<8x8xf32> -> vector<8x8xf32>
    %cst_27 = arith.constant 2.500000e-01 : f32
    %71 = vector.broadcast %cst_27 : f32 to vector<8x8xf32>
    %72 = arith.mulf %70, %71 : vector<8x8xf32>
    %cst_28 = arith.constant dense<0xFF800000> : vector<8xf32>
    %73 = vector.multi_reduction <maximumf>, %72, %cst_28 [1] : vector<8x8xf32> to vector<8xf32>
    %74 = vector.shape_cast %73 : vector<8xf32> to vector<8x1xf32>
    %75 = vector.broadcast %74 : vector<8x1xf32> to vector<8x8xf32>
    %76 = arith.subf %72, %75 : vector<8x8xf32>
    %77 = math.exp %76 : vector<8x8xf32>
    %cst_29 = arith.constant dense<0.000000e+00> : vector<8xf32>
    %78 = vector.multi_reduction <add>, %77, %cst_29 [1] : vector<8x8xf32> to vector<8xf32>
    %79 = vector.shape_cast %78 : vector<8xf32> to vector<8x1xf32>
    %80 = tpu.reciprocal %79 {approx = true} : vector<8x1xf32> -> vector<8x1xf32>
    %81 = vector.broadcast %80 : vector<8x1xf32> to vector<8x8xf32>
    %82 = arith.mulf %77, %81 : vector<8x8xf32>
    %cst_30 = arith.constant dense<0.000000e+00> : vector<8x16xf32>
    %83 = tpu.matmul %82, %69, %cst_30 {dimension_numbers = #tpu.dot_dimension_numbers<[1], [0], [0], [1], [0, 0, 1, 1], [], []>} : vector<8x8xf32>, vector<8x16xf32>, vector<8x16xf32> -> vector<8x16xf32>
    %84 = vector.extract_strided_slice %7 {offsets = [48, 0], sizes = [16, 64], strides = [1, 1]} : vector<64x64xf32> to vector<16x64xf32>
    %cst_31 = arith.constant dense<0.000000e+00> : vector<8x64xf32>
    %85 = tpu.matmul %83, %84, %cst_31 {dimension_numbers = #tpu.dot_dimension_numbers<[1], [0], [0], [1], [0, 0, 1, 1], [], []>} : vector<8x16xf32>, vector<16x64xf32>, vector<8x64xf32> -> vector<8x64xf32>
    %86 = arith.addf %66, %85 : vector<8x64xf32>
    %c0_32 = arith.constant 0 : index
    %c0_33 = arith.constant 0 : index
    %87 = vector.load %arg5[%c0_32, %c0_33] : memref<1x64xf32, #tpu.memory_space<vmem>>, vector<1x64xf32>
    %88 = vector.broadcast %87 : vector<1x64xf32> to vector<8x64xf32>
    %89 = arith.addf %86, %88 : vector<8x64xf32>
    %90 = arith.addf %89, %1 : vector<8x64xf32>
    %cst_34 = arith.constant dense<0.000000e+00> : vector<8xf32>
    %91 = vector.multi_reduction <add>, %90, %cst_34 [1] : vector<8x64xf32> to vector<8xf32>
    %92 = vector.shape_cast %91 : vector<8xf32> to vector<8x1xf32>
    %cst_35 = arith.constant 6.400000e+01 : f32
    %93 = vector.broadcast %cst_35 : f32 to vector<8x1xf32>
    %94 = arith.divf %92, %93 : vector<8x1xf32>
    %95 = vector.broadcast %94 : vector<8x1xf32> to vector<8x64xf32>
    %96 = arith.subf %90, %95 : vector<8x64xf32>
    %97 = arith.mulf %96, %96 : vector<8x64xf32>
    %cst_36 = arith.constant dense<0.000000e+00> : vector<8xf32>
    %98 = vector.multi_reduction <add>, %97, %cst_36 [1] : vector<8x64xf32> to vector<8xf32>
    %99 = vector.shape_cast %98 : vector<8xf32> to vector<8x1xf32>
    %cst_37 = arith.constant 6.400000e+01 : f32
    %100 = vector.broadcast %cst_37 : f32 to vector<8x1xf32>
    %101 = arith.divf %99, %100 : vector<8x1xf32>
    %102 = vector.broadcast %94 : vector<8x1xf32> to vector<8x64xf32>
    %103 = arith.subf %90, %102 : vector<8x64xf32>
    %cst_38 = arith.constant 9.99999997E-7 : f32
    %104 = vector.broadcast %cst_38 : f32 to vector<8x1xf32>
    %105 = arith.addf %101, %104 : vector<8x1xf32>
    %106 = math.rsqrt %105 : vector<8x1xf32>
    %107 = vector.broadcast %106 : vector<8x1xf32> to vector<8x64xf32>
    %108 = arith.mulf %103, %107 : vector<8x64xf32>
    %c0_39 = arith.constant 0 : index
    %c0_40 = arith.constant 0 : index
    %c0_41 = arith.constant 0 : index
    %109 = vector.load %arg10[%c0_39, %c0_40, %c0_41] : memref<1x1x64xf32, #tpu.memory_space<vmem>>, vector<1x1x64xf32>
    %110 = vector.shape_cast %109 : vector<1x1x64xf32> to vector<1x64xf32>
    %111 = vector.broadcast %110 : vector<1x64xf32> to vector<8x64xf32>
    %112 = arith.mulf %108, %111 : vector<8x64xf32>
    %c0_42 = arith.constant 0 : index
    %c0_43 = arith.constant 0 : index
    %c0_44 = arith.constant 0 : index
    %113 = vector.load %arg11[%c0_42, %c0_43, %c0_44] : memref<1x1x64xf32, #tpu.memory_space<vmem>>, vector<1x1x64xf32>
    %114 = vector.shape_cast %113 : vector<1x1x64xf32> to vector<1x64xf32>
    %115 = vector.broadcast %114 : vector<1x64xf32> to vector<8x64xf32>
    %116 = arith.addf %112, %115 : vector<8x64xf32>
    %c0_45 = arith.constant 0 : index
    %c0_46 = arith.constant 0 : index
    %117 = vector.load %arg6[%c0_45, %c0_46] : memref<64x128xf32, #tpu.memory_space<vmem>>, vector<64x128xf32>
    %cst_47 = arith.constant dense<0.000000e+00> : vector<8x128xf32>
    %118 = tpu.matmul %116, %117, %cst_47 {dimension_numbers = #tpu.dot_dimension_numbers<[1], [0], [0], [1], [0, 0, 1, 1], [], []>} : vector<8x64xf32>, vector<64x128xf32>, vector<8x128xf32> -> vector<8x128xf32>
    %c0_48 = arith.constant 0 : index
    %c0_49 = arith.constant 0 : index
    %119 = vector.load %arg7[%c0_48, %c0_49] : memref<1x128xf32, #tpu.memory_space<vmem>>, vector<1x128xf32>
    %120 = vector.broadcast %119 : vector<1x128xf32> to vector<8x128xf32>
    %121 = arith.addf %118, %120 : vector<8x128xf32>
    %cst_50 = arith.constant 0.000000e+00 : f32
    %122 = vector.broadcast %cst_50 : f32 to vector<8x128xf32>
    %123 = arith.maximumf %121, %122 : vector<8x128xf32>
    %c0_51 = arith.constant 0 : index
    %c0_52 = arith.constant 0 : index
    %124 = vector.load %arg8[%c0_51, %c0_52] : memref<128x64xf32, #tpu.memory_space<vmem>>, vector<128x64xf32>
    %cst_53 = arith.constant dense<0.000000e+00> : vector<8x64xf32>
    %125 = tpu.matmul %123, %124, %cst_53 {dimension_numbers = #tpu.dot_dimension_numbers<[1], [0], [0], [1], [0, 0, 1, 1], [], []>} : vector<8x128xf32>, vector<128x64xf32>, vector<8x64xf32> -> vector<8x64xf32>
    %c0_54 = arith.constant 0 : index
    %c0_55 = arith.constant 0 : index
    %126 = vector.load %arg9[%c0_54, %c0_55] : memref<1x64xf32, #tpu.memory_space<vmem>>, vector<1x64xf32>
    %127 = vector.broadcast %126 : vector<1x64xf32> to vector<8x64xf32>
    %128 = arith.addf %125, %127 : vector<8x64xf32>
    %129 = arith.addf %128, %116 : vector<8x64xf32>
    %cst_56 = arith.constant dense<0.000000e+00> : vector<8xf32>
    %130 = vector.multi_reduction <add>, %129, %cst_56 [1] : vector<8x64xf32> to vector<8xf32>
    %131 = vector.shape_cast %130 : vector<8xf32> to vector<8x1xf32>
    %cst_57 = arith.constant 6.400000e+01 : f32
    %132 = vector.broadcast %cst_57 : f32 to vector<8x1xf32>
    %133 = arith.divf %131, %132 : vector<8x1xf32>
    %134 = vector.broadcast %133 : vector<8x1xf32> to vector<8x64xf32>
    %135 = arith.subf %129, %134 : vector<8x64xf32>
    %136 = arith.mulf %135, %135 : vector<8x64xf32>
    %cst_58 = arith.constant dense<0.000000e+00> : vector<8xf32>
    %137 = vector.multi_reduction <add>, %136, %cst_58 [1] : vector<8x64xf32> to vector<8xf32>
    %138 = vector.shape_cast %137 : vector<8xf32> to vector<8x1xf32>
    %cst_59 = arith.constant 6.400000e+01 : f32
    %139 = vector.broadcast %cst_59 : f32 to vector<8x1xf32>
    %140 = arith.divf %138, %139 : vector<8x1xf32>
    %141 = vector.broadcast %133 : vector<8x1xf32> to vector<8x64xf32>
    %142 = arith.subf %129, %141 : vector<8x64xf32>
    %cst_60 = arith.constant 9.99999997E-7 : f32
    %143 = vector.broadcast %cst_60 : f32 to vector<8x1xf32>
    %144 = arith.addf %140, %143 : vector<8x1xf32>
    %145 = math.rsqrt %144 : vector<8x1xf32>
    %146 = vector.broadcast %145 : vector<8x1xf32> to vector<8x64xf32>
    %147 = arith.mulf %142, %146 : vector<8x64xf32>
    %c0_61 = arith.constant 0 : index
    %c0_62 = arith.constant 0 : index
    %c0_63 = arith.constant 0 : index
    %148 = vector.load %arg12[%c0_61, %c0_62, %c0_63] : memref<1x1x64xf32, #tpu.memory_space<vmem>>, vector<1x1x64xf32>
    %149 = vector.shape_cast %148 : vector<1x1x64xf32> to vector<1x64xf32>
    %150 = vector.broadcast %149 : vector<1x64xf32> to vector<8x64xf32>
    %151 = arith.mulf %147, %150 : vector<8x64xf32>
    %c0_64 = arith.constant 0 : index
    %c0_65 = arith.constant 0 : index
    %c0_66 = arith.constant 0 : index
    %152 = vector.load %arg13[%c0_64, %c0_65, %c0_66] : memref<1x1x64xf32, #tpu.memory_space<vmem>>, vector<1x1x64xf32>
    %153 = vector.shape_cast %152 : vector<1x1x64xf32> to vector<1x64xf32>
    %154 = vector.broadcast %153 : vector<1x64xf32> to vector<8x64xf32>
    %155 = arith.addf %151, %154 : vector<8x64xf32>
    %c0_67 = arith.constant 0 : index
    %c0_68 = arith.constant 0 : index
    %c0_69 = arith.constant 0 : index
    %156 = vector.load %arg14[%c0_67, %c0_68, %c0_69] : memref<1x8x64xf32, #tpu.memory_space<vmem>>, vector<1x8x64xf32>
    %157 = vector.shape_cast %156 : vector<1x8x64xf32> to vector<8x64xf32>
    %158 = vector.shape_cast %155 : vector<8x64xf32> to vector<1x8x64xf32>
    tpu.vector_store %arg14[%c0_67, %c0_68, %c0_69], %158 {strides = array<i32>} : memref<1x8x64xf32, #tpu.memory_space<vmem>>, vector<1x8x64xf32>,
    return
  }
  func.func @transform_0(%arg0: i32) -> (i32, i32, i32) {
    %c0_i32 = arith.constant 0 : i32
    %c0_i32_0 = arith.constant 0 : i32
    %c0_i32_1 = arith.constant 0 : i32
    return %arg0, %c0_i32, %c0_i32_0 : i32, i32, i32
  }
  func.func @transform_1(%arg0: i32) -> (i32, i32) {
    %c0_i32 = arith.constant 0 : i32
    %c0_i32_0 = arith.constant 0 : i32
    %c0_i32_1 = arith.constant 0 : i32
    return %c0_i32, %c0_i32_0 : i32, i32
  }
  func.func @transform_2(%arg0: i32) -> (i32, i32) {
    %c0_i32 = arith.constant 0 : i32
    %c0_i32_0 = arith.constant 0 : i32
    %c0_i32_1 = arith.constant 0 : i32
    return %c0_i32, %c0_i32_0 : i32, i32
  }
  func.func @transform_3(%arg0: i32) -> (i32, i32) {
    %c0_i32 = arith.constant 0 : i32
    %c0_i32_0 = arith.constant 0 : i32
    %c0_i32_1 = arith.constant 0 : i32
    return %c0_i32, %c0_i32_0 : i32, i32
  }
  func.func @transform_4(%arg0: i32) -> (i32, i32) {
    %c0_i32 = arith.constant 0 : i32
    %c0_i32_0 = arith.constant 0 : i32
    %c0_i32_1 = arith.constant 0 : i32
    return %c0_i32, %c0_i32_0 : i32, i32
  }
  func.func @transform_5(%arg0: i32) -> (i32, i32) {
    %c0_i32 = arith.constant 0 : i32
    %c0_i32_0 = arith.constant 0 : i32
    %c0_i32_1 = arith.constant 0 : i32
    return %c0_i32, %c0_i32_0 : i32, i32
  }
  func.func @transform_6(%arg0: i32) -> (i32, i32) {
    %c0_i32 = arith.constant 0 : i32
    %c0_i32_0 = arith.constant 0 : i32
    %c0_i32_1 = arith.constant 0 : i32
    return %c0_i32, %c0_i32_0 : i32, i32
  }
  func.func @transform_7(%arg0: i32) -> (i32, i32) {
    %c0_i32 = arith.constant 0 : i32
    %c0_i32_0 = arith.constant 0 : i32
    %c0_i32_1 = arith.constant 0 : i32
    return %c0_i32, %c0_i32_0 : i32, i32
  }
  func.func @transform_8(%arg0: i32) -> (i32, i32) {
    %c0_i32 = arith.constant 0 : i32
    %c0_i32_0 = arith.constant 0 : i32
    %c0_i32_1 = arith.constant 0 : i32
    return %c0_i32, %c0_i32_0 : i32, i32
  }
  func.func @transform_9(%arg0: i32) -> (i32, i32, i32) {
    %c0_i32 = arith.constant 0 : i32
    %c0_i32_0 = arith.constant 0 : i32
    %c0_i32_1 = arith.constant 0 : i32
    return %arg0, %c0_i32, %c0_i32_0 : i32, i32, i32
  }
  func.func @transform_10(%arg0: i32) -> (i32, i32, i32) {
    %c0_i32 = arith.constant 0 : i32
    %c0_i32_0 = arith.constant 0 : i32
    %c0_i32_1 = arith.constant 0 : i32
    return %arg0, %c0_i32, %c0_i32_0 : i32, i32, i32
  }
  func.func @transform_11(%arg0: i32) -> (i32, i32, i32) {
    %c0_i32 = arith.constant 0 : i32
    %c0_i32_0 = arith.constant 0 : i32
    %c0_i32_1 = arith.constant 0 : i32
    return %arg0, %c0_i32, %c0_i32_0 : i32, i32, i32
  }
  func.func @transform_12(%arg0: i32) -> (i32, i32, i32) {
    %c0_i32 = arith.constant 0 : i32
    %c0_i32_0 = arith.constant 0 : i32
    %c0_i32_1 = arith.constant 0 : i32
    return %arg0, %c0_i32, %c0_i32_0 : i32, i32, i32
  }
  func.func @transform_13(%arg0: i32) -> (i32, i32, i32) {
    %c0_i32 = arith.constant 0 : i32
    %c0_i32_0 = arith.constant 0 : i32
    %c0_i32_1 = arith.constant 0 : i32
    return %arg0, %c0_i32, %c0_i32_0 : i32, i32, i32
  }
}

module attributes {stable_mosaic.version = 11 : i64} {
  func.func @_linear_kernel(%arg0: memref<16x64xf32, #tpu.memory_space<vmem>>, %arg1: memref<64x32xf32, #tpu.memory_space<vmem>>, %arg2: memref<1x32xf32, #tpu.memory_space<vmem>>, %arg3: memref<16x32xf32, #tpu.memory_space<vmem>>) attributes {dimension_semantics = [], scalar_prefetch = 0 : i64, scratch_operands = 0 : i64, tpu.core_type = #tpu.core_type<tc>} {
    %c0 = arith.constant 0 : index
    %c0_0 = arith.constant 0 : index
    %0 = vector.load %arg0[%c0, %c0_0] : memref<16x64xf32, #tpu.memory_space<vmem>>, vector<16x64xf32>
    %c0_1 = arith.constant 0 : index
    %c0_2 = arith.constant 0 : index
    %1 = vector.load %arg1[%c0_1, %c0_2] : memref<64x32xf32, #tpu.memory_space<vmem>>, vector<64x32xf32>
    %cst = arith.constant dense<0.000000e+00> : vector<16x32xf32>
    %2 = tpu.matmul %0, %1, %cst {dimension_numbers = #tpu.dot_dimension_numbers<[1], [0], [0], [1], [0, 0, 1, 1], [], []>} : vector<16x64xf32>, vector<64x32xf32>, vector<16x32xf32> -> vector<16x32xf32>
    %c0_3 = arith.constant 0 : index
    %c0_4 = arith.constant 0 : index
    %3 = vector.load %arg2[%c0_3, %c0_4] : memref<1x32xf32, #tpu.memory_space<vmem>>, vector<1x32xf32>
    %4 = vector.broadcast %3 : vector<1x32xf32> to vector<16x32xf32>
    %5 = arith.addf %2, %4 : vector<16x32xf32>
    %c0_5 = arith.constant 0 : index
    %c0_6 = arith.constant 0 : index
    %6 = vector.load %arg3[%c0_5, %c0_6] : memref<16x32xf32, #tpu.memory_space<vmem>>, vector<16x32xf32>
    tpu.vector_store %arg3[%c0_5, %c0_6], %5 {strides = array<i32>} : memref<16x32xf32, #tpu.memory_space<vmem>>, vector<16x32xf32>,
    return
  }
}

</mosaic_0001>

<llo_original>
// kernel: dance_rollout.48
$region0: #{dance_rollout.48}
  #allocation0 [shape = 'u32[]', space=smem, size = 0x4, offset = 0x4, fixed_abs, tag = 'smem constant byte address 0x4 - core index']
  #allocation1 [shape = 'u32[144,128]{1,0:T(1,128)}', space=vmem, size = 0x12000, scoped, tag = 'internal scratch']
  %s0 = inlined_call_operand.vmem [shape: f32[16,16], index: 0, kind: input, shape index: {}]
  %s1 = inlined_call_operand.vmem [shape: f32[16,48], index: 1, kind: input, shape index: {}]
  %s2 = inlined_call_operand.vmem [shape: f32[1,48], index: 2, kind: input, shape index: {}]
  %s3 = inlined_call_operand.vmem [shape: f32[16,48], index: 3, kind: output, shape index: {}]
  %s4 = sld [smem:[#allocation0]]
  $region22: #{dance_rollout.48} parent=0
    _
  %s6 = ssub.s32 1, %s4
  %s7 = scalar_select 0, %s6, %s4
  // Predicated region
  $region2: #{dance_rollout.48} parent=0 // pred_check
    _
  $region3: #{dance_rollout.48} parent=0 // pred_check_branch
    %9 = sbr.rel (0) target = $region5
  $region4: #{dance_rollout.48} parent=0 // pred_region
    _
  $region5: #{dance_rollout.48} parent=0 // pred_fallthru
    _
  // Predicated region
  $region6: #{dance_rollout.48} parent=0 // pred_check
    _
  $region7: #{dance_rollout.48} parent=0 // pred_check_branch
    %11 = sbr.rel (0) target = $region9
  $region8: #{dance_rollout.48} parent=0 // pred_region
    _
  $region9: #{dance_rollout.48} parent=0 // pred_fallthru
    _
  // Predicated region
  $region10: #{dance_rollout.48} parent=0 // pred_check
    _
  $region11: #{dance_rollout.48} parent=0 // pred_check_branch
    %13 = sbr.rel (0) target = $region13
  $region12: #{dance_rollout.48} parent=0 // pred_region
    _
  $region13: #{dance_rollout.48} parent=0 // pred_fallthru
    _
  %v14 = vld [vmem:[%s0] sm:$0xff]
  %v15 = vld [vmem:[%s0 + $0x8] sm:$0xff]
  %v16 = vld [vmem:[%s1] sm:$0xff]
  %v17 = vld [vmem:[%s1 + $0x8] sm:$0xff]
  %v18 = vld [vmem:[%s2] sm:$0x1]
  %v20 = vlaneseq
  %v21 = vshrl.u32 %v20, 7
  %v22 = vsub.s32 0, %v21
  %v23 = vrot.slane %v18, %v22
  %vm25 = vcmask 130048
  %v27 = vsel %vm25, %v14, 0
  %v30 = vsel %vm25, %v15, 0
  %32 = vmatprep.subr.mxu0 0.0
  %33 = vmatpush1.msra.mxu0 0.0
  %34 = vmatprep.subr.mxu0 0.0
  %35 = vmatpush1.msra.mxu0 0.0
  %36 = vmatprep.subr.mxu0 0.0
  %37 = vmatpush1.msra.mxu0 0.0
  %38 = vmatprep.subr.mxu0 0.0
  %39 = vmatpush1.msra.mxu0 0.0
  %40 = vmatprep.subr.mxu0 0.0
  %41 = vmatpush1.msra.mxu0 0.0
  %42 = vmatprep.subr.mxu0 0.0
  %43 = vmatpush1.msra.mxu0 0.0
  %44 = vmatprep.subr.mxu0 0.0
  %45 = vmatpush1.msra.mxu0 0.0
  %46 = vmatprep.subr.mxu0 0.0
  %47 = vmatpush1.msra.mxu0 0.0
  %48 = vmatprep.subr.mxu0 0.0
  %49 = vmatpush1.msra.mxu0 0.0
  %50 = vmatprep.subr.mxu0 0.0
  %51 = vmatpush1.msra.mxu0 0.0
  %52 = vmatprep.subr.mxu0 0.0
  %53 = vmatpush1.msra.mxu0 0.0
  %54 = vmatprep.subr.mxu0 0.0
  %55 = vmatpush1.msra.mxu0 0.0
  %56 = vmatprep.subr.mxu0 0.0
  %57 = vmatpush1.msra.mxu0 0.0
  %58 = vmatprep.subr.mxu0 0.0
  %59 = vmatpush1.msra.mxu0 0.0
  %60 = vmatprep.subr.mxu0 0.0
  %61 = vmatpush1.msra.mxu0 %v17
  %62 = vmatprep.subr.mxu0 0.0
  %63 = vmatpush1.msra.mxu0 %v16
  %64 = vmatprep.subr.mxu0 0.0
  %65 = vmatpush2.msra.mxu0 0.0
  %66 = vmatprep.subr.mxu0 0.0
  %67 = vmatpush2.msra.mxu0 0.0
  %68 = vmatprep.subr.mxu0 0.0
  %69 = vmatpush2.msra.mxu0 0.0
  %70 = vmatprep.subr.mxu0 0.0
  %71 = vmatpush2.msra.mxu0 0.0
  %72 = vmatprep.subr.mxu0 0.0
  %73 = vmatpush2.msra.mxu0 0.0
  %74 = vmatprep.subr.mxu0 0.0
  %75 = vmatpush2.msra.mxu0 0.0
  %76 = vmatprep.subr.mxu0 0.0
  %77 = vmatpush2.msra.mxu0 0.0
  %78 = vmatprep.subr.mxu0 0.0
  %79 = vmatpush2.msra.mxu0 0.0
  %80 = vmatprep.subr.mxu0 0.0
  %81 = vmatpush2.msra.mxu0 0.0
  %82 = vmatprep.subr.mxu0 0.0
  %83 = vmatpush2.msra.mxu0 0.0
  %84 = vmatprep.subr.mxu0 0.0
  %85 = vmatpush2.msra.mxu0 0.0
  %86 = vmatprep.subr.mxu0 0.0
  %87 = vmatpush2.msra.mxu0 0.0
  %88 = vmatprep.subr.mxu0 0.0
  %89 = vmatpush2.msra.mxu0 0.0
  %90 = vmatprep.subr.mxu0 0.0
  %91 = vmatpush2.msra.mxu0 0.0
  %92 = vmatprep.subr.mxu0 0.0
  %93 = vmatpush2.msra.mxu0 0.0
  %94 = vmatprep.subr.mxu0 0.0
  %95 = vmatpush2.msra.mxu0 0.0
  %96 = vmatprep.mubr.f32.mxu0 0.0
  %97 = vmatmul.mubr.f32.gmra.mxu0 %v27
  %v98 = vpop.f32.mrf.mxu0
  %v99 = vadd.f32 %v23, %v98
  %v100 = vpop.f32.mrf.mxu0
  %101 = vmatprep.mubr.f32.mxu0 0.0
  %102 = vmatmul.mubr.f32.gmra.mxu0 %v30
  %v103 = vpop.f32.mrf.mxu0
  %v104 = vadd.f32 %v23, %v103
  %v105 = vpop.f32.mrf.mxu0
  %106 = vdwg.mxu0
  %vm107 = vcmask 392192
  %108 = vst.msk [vmem:[%s3] sm:$0xff] %vm107, %v99
  %109 = vst.msk [vmem:[%s3 + $0x8] sm:$0xff] %vm107, %v104
  // Predicated region
  $region14: #{dance_rollout.48} parent=0 // pred_check
    _
  $region15: #{dance_rollout.48} parent=0 // pred_check_branch
    %111 = sbr.rel (0) target = $region17
  $region16: #{dance_rollout.48} parent=0 // pred_region
    _
  $region17: #{dance_rollout.48} parent=0 // pred_fallthru
    _
  // Predicated region
  $region18: #{dance_rollout.48} parent=0 // pred_check
    _
  $region19: #{dance_rollout.48} parent=0 // pred_check_branch
    %113 = sbr.rel (0) target = $region21
  $region20: #{dance_rollout.48} parent=0 // pred_region
    _
  $region21: #{dance_rollout.48} parent=0 // pred_fallthru
    _

// kernel: dance_rollout.51
$region0: #{dance_rollout.51}
  #allocation0 [shape = 'u32[]', space=smem, size = 0x4, offset = 0x4, fixed_abs, tag = 'smem constant byte address 0x4 - core index']
  #allocation1 [shape = 'u32[144,128]{1,0:T(1,128)}', space=vmem, size = 0x12000, scoped, tag = 'internal scratch']
  %s0 = inlined_call_operand.vmem [shape: f32[2,48], index: 0, kind: input, shape index: {}]
  %s1 = inlined_call_operand.vmem [shape: f32[48,64], index: 1, kind: input, shape index: {}]
  %s2 = inlined_call_operand.vmem [shape: f32[1,64], index: 2, kind: input, shape index: {}]
  %s3 = inlined_call_operand.vmem [shape: f32[2,64], index: 3, kind: output, shape index: {}]
  %s4 = sld [smem:[#allocation0]]
  $region22: #{dance_rollout.51} parent=0
    _
  %s6 = ssub.s32 1, %s4
  %s7 = scalar_select 0, %s6, %s4
  // Predicated region
  $region2: #{dance_rollout.51} parent=0 // pred_check
    _
  $region3: #{dance_rollout.51} parent=0 // pred_check_branch
    %9 = sbr.rel (0) target = $region5
  $region4: #{dance_rollout.51} parent=0 // pred_region
    _
  $region5: #{dance_rollout.51} parent=0 // pred_fallthru
    _
  // Predicated region
  $region6: #{dance_rollout.51} parent=0 // pred_check
    _
  $region7: #{dance_rollout.51} parent=0 // pred_check_branch
    %11 = sbr.rel (0) target = $region9
  $region8: #{dance_rollout.51} parent=0 // pred_region
    _
  $region9: #{dance_rollout.51} parent=0 // pred_fallthru
    _
  // Predicated region
  $region10: #{dance_rollout.51} parent=0 // pred_check
    _
  $region11: #{dance_rollout.51} parent=0 // pred_check_branch
    %13 = sbr.rel (0) target = $region13
  $region12: #{dance_rollout.51} parent=0 // pred_region
    _
  $region13: #{dance_rollout.51} parent=0 // pred_fallthru
    _
  %v14 = vld [vmem:[%s0] sm:$0x3]
  %v15 = vld [vmem:[%s1] sm:$0xff]
  %v16 = vld [vmem:[%s1 + $0x8] sm:$0xff]
  %v17 = vld [vmem:[%s1 + $0x10] sm:$0xff]
  %v18 = vld [vmem:[%s1 + $0x18] sm:$0xff]
  %v19 = vld [vmem:[%s1 + $0x20] sm:$0xff]
  %v20 = vld [vmem:[%s1 + $0x28] sm:$0xff]
  %v21 = vld [vmem:[%s2] sm:$0x1]
  %v23 = vlaneseq
  %v24 = vshrl.u32 %v23, 7
  %v25 = vsub.s32 0, %v24
  %v26 = vrot.slane %v21, %v25
  %vm28 = vcmask 392192
  %v30 = vsel %vm28, %v14, 0
  %32 = vmatprep.subr.mxu0 0.0
  %33 = vmatpush1.msra.mxu0 0.0
  %34 = vmatprep.subr.mxu0 0.0
  %35 = vmatpush1.msra.mxu0 0.0
  %36 = vmatprep.subr.mxu0 0.0
  %37 = vmatpush1.msra.mxu0 0.0
  %38 = vmatprep.subr.mxu0 0.0
  %39 = vmatpush1.msra.mxu0 0.0
  %40 = vmatprep.subr.mxu0 0.0
  %41 = vmatpush1.msra.mxu0 0.0
  %42 = vmatprep.subr.mxu0 0.0
  %43 = vmatpush1.msra.mxu0 0.0
  %44 = vmatprep.subr.mxu0 0.0
  %45 = vmatpush1.msra.mxu0 0.0
  %46 = vmatprep.subr.mxu0 0.0
  %47 = vmatpush1.msra.mxu0 0.0
  %48 = vmatprep.subr.mxu0 0.0
  %49 = vmatpush1.msra.mxu0 0.0
  %50 = vmatprep.subr.mxu0 0.0
  %51 = vmatpush1.msra.mxu0 0.0
  %52 = vmatprep.subr.mxu0 0.0
  %53 = vmatpush1.msra.mxu0 %v20
  %54 = vmatprep.subr.mxu0 0.0
  %55 = vmatpush1.msra.mxu0 %v19
  %56 = vmatprep.subr.mxu0 0.0
  %57 = vmatpush1.msra.mxu0 %v18
  %58 = vmatprep.subr.mxu0 0.0
  %59 = vmatpush1.msra.mxu0 %v17
  %60 = vmatprep.subr.mxu0 0.0
  %61 = vmatpush1.msra.mxu0 %v16
  %62 = vmatprep.subr.mxu0 0.0
  %63 = vmatpush1.msra.mxu0 %v15
  %64 = vmatprep.subr.mxu0 0.0
  %65 = vmatpush2.msra.mxu0 0.0
  %66 = vmatprep.subr.mxu0 0.0
  %67 = vmatpush2.msra.mxu0 0.0
  %68 = vmatprep.subr.mxu0 0.0
  %69 = vmatpush2.msra.mxu0 0.0
  %70 = vmatprep.subr.mxu0 0.0
  %71 = vmatpush2.msra.mxu0 0.0
  %72 = vmatprep.subr.mxu0 0.0
  %73 = vmatpush2.msra.mxu0 0.0
  %74 = vmatprep.subr.mxu0 0.0
  %75 = vmatpush2.msra.mxu0 0.0
  %76 = vmatprep.subr.mxu0 0.0
  %77 = vmatpush2.msra.mxu0 0.0
  %78 = vmatprep.subr.mxu0 0.0
  %79 = vmatpush2.msra.mxu0 0.0
  %80 = vmatprep.subr.mxu0 0.0
  %81 = vmatpush2.msra.mxu0 0.0
  %82 = vmatprep.subr.mxu0 0.0
  %83 = vmatpush2.msra.mxu0 0.0
  %84 = vmatprep.subr.mxu0 0.0
  %85 = vmatpush2.msra.mxu0 0.0
  %86 = vmatprep.subr.mxu0 0.0
  %87 = vmatpush2.msra.mxu0 0.0
  %88 = vmatprep.subr.mxu0 0.0
  %89 = vmatpush2.msra.mxu0 0.0
  %90 = vmatprep.subr.mxu0 0.0
  %91 = vmatpush2.msra.mxu0 0.0
  %92 = vmatprep.subr.mxu0 0.0
  %93 = vmatpush2.msra.mxu0 0.0
  %94 = vmatprep.subr.mxu0 0.0
  %95 = vmatpush2.msra.mxu0 0.0
  %96 = vmatprep.mubr.f32.mxu0 0.0
  %97 = vmatmul.mubr.f32.gmra.mxu0 %v30
  %v98 = vpop.f32.mrf.mxu0
  %v99 = vadd.f32 %v26, %v98
  %v100 = vpop.f32.mrf.mxu0
  %101 = vdwg.mxu0
  %vm102 = vcmask 517120
  %103 = vst.msk [vmem:[%s3] sm:$0x3] %vm102, %v99
  // Predicated region
  $region14: #{dance_rollout.51} parent=0 // pred_check
    _
  $region15: #{dance_rollout.51} parent=0 // pred_check_branch
    %105 = sbr.rel (0) target = $region17
  $region16: #{dance_rollout.51} parent=0 // pred_region
    _
  $region17: #{dance_rollout.51} parent=0 // pred_fallthru
    _
  // Predicated region
  $region18: #{dance_rollout.51} parent=0 // pred_check
    _
  $region19: #{dance_rollout.51} parent=0 // pred_check_branch
    %107 = sbr.rel (0) target = $region21
  $region20: #{dance_rollout.51} parent=0 // pred_region
    _
  $region21: #{dance_rollout.51} parent=0 // pred_fallthru
    _

// kernel: dance_rollout.40
$region0: #{dance_rollout.40}
  #allocation0 [shape = 'u32[]', space=smem, size = 0x4, offset = 0x4, fixed_abs, tag = 'smem constant byte address 0x4 - core index']
  #allocation1 [shape = 'u32[144,128]{1,0:T(1,128)}', space=vmem, size = 0x12000, scoped, tag = 'internal scratch']
  %s0 = inlined_call_operand.vmem [shape: f32[80,32], index: 0, kind: input, shape index: {}]
  %s1 = inlined_call_operand.vmem [shape: f32[32,64], index: 1, kind: input, shape index: {}]
  %s2 = inlined_call_operand.vmem [shape: f32[1,64], index: 2, kind: input, shape index: {}]
  %s3 = inlined_call_operand.vmem [shape: f32[80,64], index: 3, kind: output, shape index: {}]
  %s4 = sld [smem:[#allocation0]]
  $region22: #{dance_rollout.40} parent=0
    _
  %s6 = ssub.s32 1, %s4
  %s7 = scalar_select 0, %s6, %s4
  // Predicated region
  $region2: #{dance_rollout.40} parent=0 // pred_check
    _
  $region3: #{dance_rollout.40} parent=0 // pred_check_branch
    %9 = sbr.rel (0) target = $region5
  $region4: #{dance_rollout.40} parent=0 // pred_region
    _
  $region5: #{dance_rollout.40} parent=0 // pred_fallthru
    _
  // Predicated region
  $region6: #{dance_rollout.40} parent=0 // pred_check
    _
  $region7: #{dance_rollout.40} parent=0 // pred_check_branch
    %11 = sbr.rel (0) target = $region9
  $region8: #{dance_rollout.40} parent=0 // pred_region
    _
  $region9: #{dance_rollout.40} parent=0 // pred_fallthru
    _
  // Predicated region
  $region10: #{dance_rollout.40} parent=0 // pred_check
    _
  $region11: #{dance_rollout.40} parent=0 // pred_check_branch
    %13 = sbr.rel (0) target = $region13
  $region12: #{dance_rollout.40} parent=0 // pred_region
    _
  $region13: #{dance_rollout.40} parent=0 // pred_fallthru
    _
  %v14 = vld [vmem:[%s0] sm:$0xff]
  %v15 = vld [vmem:[%s0 + $0x8] sm:$0xff]
  %v16 = vld [vmem:[%s0 + $0x10] sm:$0xff]
  %v17 = vld [vmem:[%s0 + $0x18] sm:$0xff]
  %v18 = vld [vmem:[%s0 + $0x20] sm:$0xff]
  %v19 = vld [vmem:[%s0 + $0x28] sm:$0xff]
  %v20 = vld [vmem:[%s0 + $0x30] sm:$0xff]
  %v21 = vld [vmem:[%s0 + $0x38] sm:$0xff]
  %v22 = vld [vmem:[%s0 + $0x40] sm:$0xff]
  %v23 = vld [vmem:[%s0 + $0x48] sm:$0xff]
  %v24 = vld [vmem:[%s1] sm:$0xff]
  %v25 = vld [vmem:[%s1 + $0x8] sm:$0xff]
  %v26 = vld [vmem:[%s1 + $0x10] sm:$0xff]
  %v27 = vld [vmem:[%s1 + $0x18] sm:$0xff]
  %v28 = vld [vmem:[%s2] sm:$0x1]
  %v30 = vlaneseq
  %v31 = vshrl.u32 %v30, 7
  %v32 = vsub.s32 0, %v31
  %v33 = vrot.slane %v28, %v32
  %vm35 = vcmask 261120
  %v37 = vsel %vm35, %v14, 0
  %v40 = vsel %vm35, %v15, 0
  %v43 = vsel %vm35, %v16, 0
  %v46 = vsel %vm35, %v17, 0
  %v49 = vsel %vm35, %v18, 0
  %v52 = vsel %vm35, %v19, 0
  %v55 = vsel %vm35, %v20, 0
  %v58 = vsel %vm35, %v21, 0
  %v61 = vsel %vm35, %v22, 0
  %v64 = vsel %vm35, %v23, 0
  %66 = vmatprep.subr.mxu0 0.0
  %67 = vmatpush1.msra.mxu0 0.0
  %68 = vmatprep.subr.mxu0 0.0
  %69 = vmatpush1.msra.mxu0 0.0
  %70 = vmatprep.subr.mxu0 0.0
  %71 = vmatpush1.msra.mxu0 0.0
  %72 = vmatprep.subr.mxu0 0.0
  %73 = vmatpush1.msra.mxu0 0.0
  %74 = vmatprep.subr.mxu0 0.0
  %75 = vmatpush1.msra.mxu0 0.0
  %76 = vmatprep.subr.mxu0 0.0
  %77 = vmatpush1.msra.mxu0 0.0
  %78 = vmatprep.subr.mxu0 0.0
  %79 = vmatpush1.msra.mxu0 0.0
  %80 = vmatprep.subr.mxu0 0.0
  %81 = vmatpush1.msra.mxu0 0.0
  %82 = vmatprep.subr.mxu0 0.0
  %83 = vmatpush1.msra.mxu0 0.0
  %84 = vmatprep.subr.mxu0 0.0
  %85 = vmatpush1.msra.mxu0 0.0
  %86 = vmatprep.subr.mxu0 0.0
  %87 = vmatpush1.msra.mxu0 0.0
  %88 = vmatprep.subr.mxu0 0.0
  %89 = vmatpush1.msra.mxu0 0.0
  %90 = vmatprep.subr.mxu0 0.0
  %91 = vmatpush1.msra.mxu0 %v27
  %92 = vmatprep.subr.mxu0 0.0
  %93 = vmatpush1.msra.mxu0 %v26
  %94 = vmatprep.subr.mxu0 0.0
  %95 = vmatpush1.msra.mxu0 %v25
  %96 = vmatprep.subr.mxu0 0.0
  %97 = vmatpush1.msra.mxu0 %v24
  %98 = vmatprep.subr.mxu0 0.0
  %99 = vmatpush2.msra.mxu0 0.0
  %100 = vmatprep.subr.mxu0 0.0
  %101 = vmatpush2.msra.mxu0 0.0
  %102 = vmatprep.subr.mxu0 0.0
  %103 = vmatpush2.msra.mxu0 0.0
  %104 = vmatprep.subr.mxu0 0.0
  %105 = vmatpush2.msra.mxu0 0.0
  %106 = vmatprep.subr.mxu0 0.0
  %107 = vmatpush2.msra.mxu0 0.0
  %108 = vmatprep.subr.mxu0 0.0
  %109 = vmatpush2.msra.mxu0 0.0
  %110 = vmatprep.subr.mxu0 0.0
  %111 = vmatpush2.msra.mxu0 0.0
  %112 = vmatprep.subr.mxu0 0.0
  %113 = vmatpush2.msra.mxu0 0.0
  %114 = vmatprep.subr.mxu0 0.0
  %115 = vmatpush2.msra.mxu0 0.0
  %116 = vmatprep.subr.mxu0 0.0
  %117 = vmatpush2.msra.mxu0 0.0
  %118 = vmatprep.subr.mxu0 0.0
  %119 = vmatpush2.msra.mxu0 0.0
  %120 = vmatprep.subr.mxu0 0.0
  %121 = vmatpush2.msra.mxu0 0.0
  %122 = vmatprep.subr.mxu0 0.0
  %123 = vmatpush2.msra.mxu0 0.0
  %124 = vmatprep.subr.mxu0 0.0
  %125 = vmatpush2.msra.mxu0 0.0
  %126 = vmatprep.subr.mxu0 0.0
  %127 = vmatpush2.msra.mxu0 0.0
  %128 = vmatprep.subr.mxu0 0.0
  %129 = vmatpush2.msra.mxu0 0.0
  %130 = vmatprep.mubr.f32.mxu0 0.0
  %131 = vmatmul.mubr.f32.gmra.mxu0 %v37
  %v132 = vpop.f32.mrf.mxu0
  %v133 = vadd.f32 %v33, %v132
  %v134 = vpop.f32.mrf.mxu0
  %135 = vmatprep.mubr.f32.mxu0 0.0
  %136 = vmatmul.mubr.f32.gmra.mxu0 %v40
  %v137 = vpop.f32.mrf.mxu0
  %v138 = vadd.f32 %v33, %v137
  %v139 = vpop.f32.mrf.mxu0
  %140 = vmatprep.mubr.f32.mxu0 0.0
  %141 = vmatmul.mubr.f32.gmra.mxu0 %v43
  %v142 = vpop.f32.mrf.mxu0
  %v143 = vadd.f32 %v33, %v142
  %v144 = vpop.f32.mrf.mxu0
  %145 = vmatprep.mubr.f32.mxu0 0.0
  %146 = vmatmul.mubr.f32.gmra.mxu0 %v46
  %v147 = vpop.f32.mrf.mxu0
  %v148 = vadd.f32 %v33, %v147
  %v149 = vpop.f32.mrf.mxu0
  %150 = vmatprep.mubr.f32.mxu0 0.0
  %151 = vmatmul.mubr.f32.gmra.mxu0 %v49
  %v152 = vpop.f32.mrf.mxu0
  %v153 = vadd.f32 %v33, %v152
  %v154 = vpop.f32.mrf.mxu0
  %155 = vmatprep.mubr.f32.mxu0 0.0
  %156 = vmatmul.mubr.f32.gmra.mxu0 %v52
  %v157 = vpop.f32.mrf.mxu0
  %v158 = vadd.f32 %v33, %v157
  %v159 = vpop.f32.mrf.mxu0
  %160 = vmatprep.mubr.f32.mxu0 0.0
  %161 = vmatmul.mubr.f32.gmra.mxu0 %v55
  %v162 = vpop.f32.mrf.mxu0
  %v163 = vadd.f32 %v33, %v162
  %v164 = vpop.f32.mrf.mxu0
  %165 = vmatprep.mubr.f32.mxu0 0.0
  %166 = vmatmul.mubr.f32.gmra.mxu0 %v58
  %v167 = vpop.f32.mrf.mxu0
  %v168 = vadd.f32 %v33, %v167
  %v169 = vpop.f32.mrf.mxu0
  %170 = vmatprep.mubr.f32.mxu0 0.0
  %171 = vmatmul.mubr.f32.gmra.mxu0 %v61
  %v172 = vpop.f32.mrf.mxu0
  %v173 = vadd.f32 %v33, %v172
  %v174 = vpop.f32.mrf.mxu0
  %175 = vmatprep.mubr.f32.mxu0 0.0
  %176 = vmatmul.mubr.f32.gmra.mxu0 %v64
  %v177 = vpop.f32.mrf.mxu0
  %v178 = vadd.f32 %v33, %v177
  %v179 = vpop.f32.mrf.mxu0
  %180 = vdwg.mxu0
  %vm181 = vcmask 523264
  %182 = vst.msk [vmem:[%s3] sm:$0xff] %vm181, %v133
  %183 = vst.msk [vmem:[%s3 + $0x8] sm:$0xff] %vm181, %v138
  %184 = vst.msk [vmem:[%s3 + $0x10] sm:$0xff] %vm181, %v143
  %185 = vst.msk [vmem:[%s3 + $0x18] sm:$0xff] %vm181, %v148
  %186 = vst.msk [vmem:[%s3 + $0x20] sm:$0xff] %vm181, %v153
  %187 = vst.msk [vmem:[%s3 + $0x28] sm:$0xff] %vm181, %v158
  %188 = vst.msk [vmem:[%s3 + $0x30] sm:$0xff] %vm181, %v163
  %189 = vst.msk [vmem:[%s3 + $0x38] sm:$0xff] %vm181, %v168
  %190 = vst.msk [vmem:[%s3 + $0x40] sm:$0xff] %vm181, %v173
  %191 = vst.msk [vmem:[%s3 + $0x48] sm:$0xff] %vm181, %v178
  // Predicated region
  $region14: #{dance_rollout.40} parent=0 // pred_check
    _
  $region15: #{dance_rollout.40} parent=0 // pred_check_branch
    %193 = sbr.rel (0) target = $region17
  $region16: #{dance_rollout.40} parent=0 // pred_region
    _
  $region17: #{dance_rollout.40} parent=0 // pred_fallthru
    _
  // Predicated region
  $region18: #{dance_rollout.40} parent=0 // pred_check
    _
  $region19: #{dance_rollout.40} parent=0 // pred_check_branch
    %195 = sbr.rel (0) target = $region21
  $region20: #{dance_rollout.40} parent=0 // pred_region
    _
  $region21: #{dance_rollout.40} parent=0 // pred_fallthru
    _

// kernel: dance_rollout.49
$region0: #{dance_rollout.49}
  #allocation0 [shape = 'u32[]', space=smem, size = 0x4, offset = 0x4, fixed_abs, tag = 'smem constant byte address 0x4 - core index']
  #allocation1 [shape = 'u32[144,128]{1,0:T(1,128)}', space=vmem, size = 0x12000, scoped, tag = 'internal scratch']
  %s0 = inlined_call_operand.vmem [shape: f32[2,8,48], index: 0, kind: input, shape index: {}]
  %s1 = inlined_call_operand.vmem [shape: f32[48,144], index: 1, kind: input, shape index: {}]
  %s2 = inlined_call_operand.vmem [shape: f32[1,144], index: 2, kind: input, shape index: {}]
  %s3 = inlined_call_operand.vmem [shape: f32[48,48], index: 3, kind: input, shape index: {}]
  %s4 = inlined_call_operand.vmem [shape: f32[1,48], index: 4, kind: input, shape index: {}]
  %s5 = inlined_call_operand.vmem [shape: f32[48,96], index: 5, kind: input, shape index: {}]
  %s6 = inlined_call_operand.vmem [shape: f32[1,96], index: 6, kind: input, shape index: {}]
  %s7 = inlined_call_operand.vmem [shape: f32[96,48], index: 7, kind: input, shape index: {}]
  %s8 = inlined_call_operand.vmem [shape: f32[1,48], index: 8, kind: input, shape index: {}]
  %s9 = inlined_call_operand.vmem [shape: f32[2,1,48], index: 9, kind: input, shape index: {}]
  %s10 = inlined_call_operand.vmem [shape: f32[2,1,48], index: 10, kind: input, shape index: {}]
  %s11 = inlined_call_operand.vmem [shape: f32[2,1,48], index: 11, kind: input, shape index: {}]
  %s12 = inlined_call_operand.vmem [shape: f32[2,1,48], index: 12, kind: input, shape index: {}]
  %s13 = inlined_call_operand.vmem [shape: f32[2,8,48], index: 13, kind: output, shape index: {}]
  %s14 = sld [smem:[#allocation0]]
  $region85: #{dance_rollout.49} parent=0
    _
  %s16 = ssub.s32 1, %s14
  %s17 = scalar_select 0, %s16, %s14
  loop: start=0, step=1, limit=4
  $region2: #{dance_rollout.49} parent=0 // loop_pre_header
    _
  $region3: #{dance_rollout.49} parent=0 // loop_header
    %s19 = sphi 0, %s23
    %p20 = scmp.ge.s32.totalorder %s19, 4
    %s29 = sphi 0, %s31
    %s32 = sphi 0, %s29
    %s33 = sphi 0, %s32
    %s49 = sphi 0, %s33
    %s53 = sphi 0, %s53
    %s55 = sphi 0, %s53
    %s56 = sphi 0, %s55
    %s70 = sphi 0, %s56
    %s74 = sphi 0, %s74
    %s76 = sphi 0, %s74
    %s77 = sphi 0, %s76
    %s91 = sphi 0, %s77
    %s95 = sphi 0, %s95
    %s97 = sphi 0, %s95
    %s98 = sphi 0, %s97
    %s112 = sphi 0, %s98
    %s116 = sphi 0, %s116
    %s118 = sphi 0, %s116
    %s119 = sphi 0, %s118
    %s133 = sphi 0, %s119
    %s137 = sphi 0, %s137
    %s139 = sphi 0, %s137
    %s140 = sphi 0, %s139
    %s154 = sphi 0, %s140
    %s158 = sphi 0, %s158
    %s160 = sphi 0, %s158
    %s161 = sphi 0, %s160
    %s175 = sphi 0, %s161
    %s179 = sphi 0, %s179
    %s181 = sphi 0, %s179
    %s182 = sphi 0, %s181
    %s196 = sphi 0, %s182
    %s200 = sphi 0, %s200
    %s202 = sphi 0, %s200
    %s203 = sphi 0, %s202
    %s217 = sphi 0, %s203
    %s223 = sphi 0, %s225
    %s226 = sphi 0, %s223
    %s227 = sphi 0, %s226
    %s243 = sphi 0, %s227
    %s249 = sphi 0, %s251
    %s252 = sphi 0, %s249
    %s253 = sphi 0, %s252
    %s269 = sphi 0, %s253
    %s275 = sphi 0, %s277
    %s278 = sphi 0, %s275
    %s279 = sphi 0, %s278
    %s295 = sphi 0, %s279
    %s301 = sphi 0, %s303
    %s304 = sphi 0, %s301
    %s305 = sphi 0, %s304
    %s321 = sphi 0, %s305
    %s327 = sphi 0, %s329
    %s330 = sphi 0, %s327
    %s331 = sphi 0, %s330
    %s347 = sphi 0, %s331
  $region4: #{dance_rollout.49} parent=0 // loop_header_branch
    %22 = sbr.rel (%p20) target = $region8
  $region5: #{dance_rollout.49} parent=0 // loop_body
    %s24 = ssub.s32 %s19, 1
    %s25 = ssub.s32 %s19, 2
    %s26 = sadd.s32 %s19, 1
    %s27 = ssub.s32 %s19, %s26
    %p28 = scmp.eq.s32.totalorder %s27, 0
    %s30 = sadd.s32 %s29, 1
    %s31 = scalar_select %p28, %s29, %s30
    %p34 = pneg %p28
    %p35 = scmp.eq.s32.totalorder %s19, 1
    %p36 = por %p34, %p35
    %p37 = scmp.ne.s32.totalorder %s29, %s32
    %p38 = scmp.eq.s32.totalorder %s19, 0
    %p39 = por %p37, %p38
    %p40 = scmp.ne.s32.totalorder %s29, %s32
    %p41 = scmp.eq.s32.totalorder %s24, 1
    %p42 = por %p40, %p41
    %p43 = scmp.ne.s32.totalorder %s32, %s33
    %p44 = scmp.eq.s32.totalorder %s24, 0
    %p45 = por %p43, %p44
    %p46 = scmp.ne.s32.totalorder %s32, %s33
    %p47 = scmp.eq.s32.totalorder %s25, 1
    %p48 = por %p46, %p47
    %p50 = scmp.ne.s32.totalorder %s33, %s49
    %p51 = scmp.eq.s32.totalorder %s25, 0
    %p52 = por %p50, %p51
    %s54 = sadd.s32 %s53, 1
    %p57 = scmp.eq.s32.totalorder %s19, 1
    %p58 = scmp.ne.s32.totalorder %s53, %s55
    %p59 = scmp.eq.s32.totalorder %s19, 0
    %p60 = por %p58, %p59
    %p61 = scmp.ne.s32.totalorder %s53, %s55
    %p62 = scmp.eq.s32.totalorder %s24, 1
    %p63 = por %p61, %p62
    %p64 = scmp.ne.s32.totalorder %s55, %s56
    %p65 = scmp.eq.s32.totalorder %s24, 0
    %p66 = por %p64, %p65
    %p67 = scmp.ne.s32.totalorder %s55, %s56
    %p68 = scmp.eq.s32.totalorder %s25, 1
    %p69 = por %p67, %p68
    %p71 = scmp.ne.s32.totalorder %s56, %s70
    %p72 = scmp.eq.s32.totalorder %s25, 0
    %p73 = por %p71, %p72
    %s75 = sadd.s32 %s74, 1
    %p78 = scmp.eq.s32.totalorder %s19, 1
    %p79 = scmp.ne.s32.totalorder %s74, %s76
    %p80 = scmp.eq.s32.totalorder %s19, 0
    %p81 = por %p79, %p80
    %p82 = scmp.ne.s32.totalorder %s74, %s76
    %p83 = scmp.eq.s32.totalorder %s24, 1
    %p84 = por %p82, %p83
    %p85 = scmp.ne.s32.totalorder %s76, %s77
    %p86 = scmp.eq.s32.totalorder %s24, 0
    %p87 = por %p85, %p86
    %p88 = scmp.ne.s32.totalorder %s76, %s77
    %p89 = scmp.eq.s32.totalorder %s25, 1
    %p90 = por %p88, %p89
    %p92 = scmp.ne.s32.totalorder %s77, %s91
    %p93 = scmp.eq.s32.totalorder %s25, 0
    %p94 = por %p92, %p93
    %s96 = sadd.s32 %s95, 1
    %p99 = scmp.eq.s32.totalorder %s19, 1
    %p100 = scmp.ne.s32.totalorder %s95, %s97
    %p101 = scmp.eq.s32.totalorder %s19, 0
    %p102 = por %p100, %p101
    %p103 = scmp.ne.s32.totalorder %s95, %s97
    %p104 = scmp.eq.s32.totalorder %s24, 1
    %p105 = por %p103, %p104
    %p106 = scmp.ne.s32.totalorder %s97, %s98
    %p107 = scmp.eq.s32.totalorder %s24, 0
    %p108 = por %p106, %p107
    %p109 = scmp.ne.s32.totalorder %s97, %s98
    %p110 = scmp.eq.s32.totalorder %s25, 1
    %p111 = por %p109, %p110
    %p113 = scmp.ne.s32.totalorder %s98, %s112
    %p114 = scmp.eq.s32.totalorder %s25, 0
    %p115 = por %p113, %p114
    %s117 = sadd.s32 %s116, 1
    %p120 = scmp.eq.s32.totalorder %s19, 1
    %p121 = scmp.ne.s32.totalorder %s116, %s118
    %p122 = scmp.eq.s32.totalorder %s19, 0
    %p123 = por %p121, %p122
    %p124 = scmp.ne.s32.totalorder %s116, %s118
    %p125 = scmp.eq.s32.totalorder %s24, 1
    %p126 = por %p124, %p125
    %p127 = scmp.ne.s32.totalorder %s118, %s119
    %p128 = scmp.eq.s32.totalorder %s24, 0
    %p129 = por %p127, %p128
    %p130 = scmp.ne.s32.totalorder %s118, %s119
    %p131 = scmp.eq.s32.totalorder %s25, 1
    %p132 = por %p130, %p131
    %p134 = scmp.ne.s32.totalorder %s119, %s133
    %p135 = scmp.eq.s32.totalorder %s25, 0
    %p136 = por %p134, %p135
    %s138 = sadd.s32 %s137, 1
    %p141 = scmp.eq.s32.totalorder %s19, 1
    %p142 = scmp.ne.s32.totalorder %s137, %s139
    %p143 = scmp.eq.s32.totalorder %s19, 0
    %p144 = por %p142, %p143
    %p145 = scmp.ne.s32.totalorder %s137, %s139
    %p146 = scmp.eq.s32.totalorder %s24, 1
    %p147 = por %p145, %p146
    %p148 = scmp.ne.s32.totalorder %s139, %s140
    %p149 = scmp.eq.s32.totalorder %s24, 0
    %p150 = por %p148, %p149
    %p151 = scmp.ne.s32.totalorder %s139, %s140
    %p152 = scmp.eq.s32.totalorder %s25, 1
    %p153 = por %p151, %p152
    %p155 = scmp.ne.s32.totalorder %s140, %s154
    %p156 = scmp.eq.s32.totalorder %s25, 0
    %p157 = por %p155, %p156
    %s159 = sadd.s32 %s158, 1
    %p162 = scmp.eq.s32.totalorder %s19, 1
    %p163 = scmp.ne.s32.totalorder %s158, %s160
    %p164 = scmp.eq.s32.totalorder %s19, 0
    %p165 = por %p163, %p164
    %p166 = scmp.ne.s32.totalorder %s158, %s160
    %p167 = scmp.eq.s32.totalorder %s24, 1
    %p168 = por %p166, %p167
    %p169 = scmp.ne.s32.totalorder %s160, %s161
    %p170 = scmp.eq.s32.totalorder %s24, 0
    %p171 = por %p169, %p170
    %p172 = scmp.ne.s32.totalorder %s160, %s161
    %p173 = scmp.eq.s32.totalorder %s25, 1
    %p174 = por %p172, %p173
    %p176 = scmp.ne.s32.totalorder %s161, %s175
    %p177 = scmp.eq.s32.totalorder %s25, 0
    %p178 = por %p176, %p177
    %s180 = sadd.s32 %s179, 1
    %p183 = scmp.eq.s32.totalorder %s19, 1
    %p184 = scmp.ne.s32.totalorder %s179, %s181
    %p185 = scmp.eq.s32.totalorder %s19, 0
    %p186 = por %p184, %p185
    %p187 = scmp.ne.s32.totalorder %s179, %s181
    %p188 = scmp.eq.s32.totalorder %s24, 1
    %p189 = por %p187, %p188
    %p190 = scmp.ne.s32.totalorder %s181, %s182
    %p191 = scmp.eq.s32.totalorder %s24, 0
    %p192 = por %p190, %p191
    %p193 = scmp.ne.s32.totalorder %s181, %s182
    %p194 = scmp.eq.s32.totalorder %s25, 1
    %p195 = por %p193, %p194
    %p197 = scmp.ne.s32.totalorder %s182, %s196
    %p198 = scmp.eq.s32.totalorder %s25, 0
    %p199 = por %p197, %p198
    %s201 = sadd.s32 %s200, 1
    %p204 = scmp.eq.s32.totalorder %s19, 1
    %p205 = scmp.ne.s32.totalorder %s200, %s202
    %p206 = scmp.eq.s32.totalorder %s19, 0
    %p207 = por %p205, %p206
    %p208 = scmp.ne.s32.totalorder %s200, %s202
    %p209 = scmp.eq.s32.totalorder %s24, 1
    %p210 = por %p208, %p209
    %p211 = scmp.ne.s32.totalorder %s202, %s203
    %p212 = scmp.eq.s32.totalorder %s24, 0
    %p213 = por %p211, %p212
    %p214 = scmp.ne.s32.totalorder %s202, %s203
    %p215 = scmp.eq.s32.totalorder %s25, 1
    %p216 = por %p214, %p215
    %p218 = scmp.ne.s32.totalorder %s203, %s217
    %p219 = scmp.eq.s32.totalorder %s25, 0
    %p220 = por %p218, %p219
    %s221 = ssub.s32 %s19, %s26
    %p222 = scmp.eq.s32.totalorder %s221, 0
    %s224 = sadd.s32 %s223, 1
    %s225 = scalar_select %p222, %s223, %s224
    %p228 = pneg %p222
    %p229 = scmp.eq.s32.totalorder %s19, 1
    %p230 = por %p228, %p229
    %p231 = scmp.ne.s32.totalorder %s223, %s226
    %p232 = scmp.eq.s32.totalorder %s19, 0
    %p233 = por %p231, %p232
    %p234 = scmp.ne.s32.totalorder %s223, %s226
    %p235 = scmp.eq.s32.totalorder %s24, 1
    %p236 = por %p234, %p235
    %p237 = scmp.ne.s32.totalorder %s226, %s227
    %p238 = scmp.eq.s32.totalorder %s24, 0
    %p239 = por %p237, %p238
    %p240 = scmp.ne.s32.totalorder %s226, %s227
    %p241 = scmp.eq.s32.totalorder %s25, 1
    %p242 = por %p240, %p241
    %p244 = scmp.ne.s32.totalorder %s227, %s243
    %p245 = scmp.eq.s32.totalorder %s25, 0
    %p246 = por %p244, %p245
    %s247 = ssub.s32 %s19, %s26
    %p248 = scmp.eq.s32.totalorder %s247, 0
    %s250 = sadd.s32 %s249, 1
    %s251 = scalar_select %p248, %s249, %s250
    %p254 = pneg %p248
    %p255 = scmp.eq.s32.totalorder %s19, 1
    %p256 = por %p254, %p255
    %p257 = scmp.ne.s32.totalorder %s249, %s252
    %p258 = scmp.eq.s32.totalorder %s19, 0
    %p259 = por %p257, %p258
    %p260 = scmp.ne.s32.totalorder %s249, %s252
    %p261 = scmp.eq.s32.totalorder %s24, 1
    %p262 = por %p260, %p261
    %p263 = scmp.ne.s32.totalorder %s252, %s253
    %p264 = scmp.eq.s32.totalorder %s24, 0
    %p265 = por %p263, %p264
    %p266 = scmp.ne.s32.totalorder %s252, %s253
    %p267 = scmp.eq.s32.totalorder %s25, 1
    %p268 = por %p266, %p267
    %p270 = scmp.ne.s32.totalorder %s253, %s269
    %p271 = scmp.eq.s32.totalorder %s25, 0
    %p272 = por %p270, %p271
    %s273 = ssub.s32 %s19, %s26
    %p274 = scmp.eq.s32.totalorder %s273, 0
    %s276 = sadd.s32 %s275, 1
    %s277 = scalar_select %p274, %s275, %s276
    %p280 = pneg %p274
    %p281 = scmp.eq.s32.totalorder %s19, 1
    %p282 = por %p280, %p281
    %p283 = scmp.ne.s32.totalorder %s275, %s278
    %p284 = scmp.eq.s32.totalorder %s19, 0
    %p285 = por %p283, %p284
    %p286 = scmp.ne.s32.totalorder %s275, %s278
    %p287 = scmp.eq.s32.totalorder %s24, 1
    %p288 = por %p286, %p287
    %p289 = scmp.ne.s32.totalorder %s278, %s279
    %p290 = scmp.eq.s32.totalorder %s24, 0
    %p291 = por %p289, %p290
    %p292 = scmp.ne.s32.totalorder %s278, %s279
    %p293 = scmp.eq.s32.totalorder %s25, 1
    %p294 = por %p292, %p293
    %p296 = scmp.ne.s32.totalorder %s279, %s295
    %p297 = scmp.eq.s32.totalorder %s25, 0
    %p298 = por %p296, %p297
    %s299 = ssub.s32 %s19, %s26
    %p300 = scmp.eq.s32.totalorder %s299, 0
    %s302 = sadd.s32 %s301, 1
    %s303 = scalar_select %p300, %s301, %s302
    %p306 = pneg %p300
    %p307 = scmp.eq.s32.totalorder %s19, 1
    %p308 = por %p306, %p307
    %p309 = scmp.ne.s32.totalorder %s301, %s304
    %p310 = scmp.eq.s32.totalorder %s19, 0
    %p311 = por %p309, %p310
    %p312 = scmp.ne.s32.totalorder %s301, %s304
    %p313 = scmp.eq.s32.totalorder %s24, 1
    %p314 = por %p312, %p313
    %p315 = scmp.ne.s32.totalorder %s304, %s305
    %p316 = scmp.eq.s32.totalorder %s24, 0
    %p317 = por %p315, %p316
    %p318 = scmp.ne.s32.totalorder %s304, %s305
    %p319 = scmp.eq.s32.totalorder %s25, 1
    %p320 = por %p318, %p319
    %p322 = scmp.ne.s32.totalorder %s305, %s321
    %p323 = scmp.eq.s32.totalorder %s25, 0
    %p324 = por %p322, %p323
    %s325 = ssub.s32 %s19, %s26
    %p326 = scmp.eq.s32.totalorder %s325, 0
    %s328 = sadd.s32 %s327, 1
    %s329 = scalar_select %p326, %s327, %s328
    %p332 = pneg %p326
    %p333 = scmp.eq.s32.totalorder %s19, 1
    %p334 = por %p332, %p333
    %p335 = scmp.ne.s32.totalorder %s327, %s330
    %p336 = scmp.eq.s32.totalorder %s19, 0
    %p337 = por %p335, %p336
    %p338 = scmp.ne.s32.totalorder %s327, %s330
    %p339 = scmp.eq.s32.totalorder %s24, 1
    %p340 = por %p338, %p339
    %p341 = scmp.ne.s32.totalorder %s330, %s331
    %p342 = scmp.eq.s32.totalorder %s24, 0
    %p343 = por %p341, %p342
    %p344 = scmp.ne.s32.totalorder %s330, %s331
    %p345 = scmp.eq.s32.totalorder %s25, 1
    %p346 = por %p344, %p345
    %p348 = scmp.ne.s32.totalorder %s331, %s347
    %p349 = scmp.eq.s32.totalorder %s25, 0
    %p350 = por %p348, %p349
    %p351 = scmp.le.s32.totalorder 1, %s19
    %p352 = scmp.lt.s32.totalorder %s19, 3
    %p353 = pnand %p351, %p352
    %p354 = pneg %p353
    // Predicated region
    $region9: #{dance_rollout.49} parent=5 // pred_check
      _
    $region10: #{dance_rollout.49} parent=5 // pred_check_branch
      %356 = sbr.rel (%p353) target = $region12
    $region11: #{dance_rollout.49} parent=5 // pred_region
      %s357 = ssub.s32 %s19, 1
      // Predicated region
      $region13: #{dance_rollout.49} parent=11 // pred_check
        %p358 = pneg %p66
      $region14: #{dance_rollout.49} parent=11 // pred_check_branch
        %360 = sbr.rel (%p358) target = $region16
      $region15: #{dance_rollout.49} parent=11 // pred_region
        _
      $region16: #{dance_rollout.49} parent=11 // pred_fallthru
        _
      // Predicated region
      $region17: #{dance_rollout.49} parent=11 // pred_check
        %p361 = pneg %p87
      $region18: #{dance_rollout.49} parent=11 // pred_check_branch
        %363 = sbr.rel (%p361) target = $region20
      $region19: #{dance_rollout.49} parent=11 // pred_region
        _
      $region20: #{dance_rollout.49} parent=11 // pred_fallthru
        _
      // Predicated region
      $region21: #{dance_rollout.49} parent=11 // pred_check
        %p364 = pneg %p108
      $region22: #{dance_rollout.49} parent=11 // pred_check_branch
        %366 = sbr.rel (%p364) target = $region24
      $region23: #{dance_rollout.49} parent=11 // pred_region
        _
      $region24: #{dance_rollout.49} parent=11 // pred_fallthru
        _
      // Predicated region
      $region25: #{dance_rollout.49} parent=11 // pred_check
        %p367 = pneg %p129
      $region26: #{dance_rollout.49} parent=11 // pred_check_branch
        %369 = sbr.rel (%p367) target = $region28
      $region27: #{dance_rollout.49} parent=11 // pred_region
        _
      $region28: #{dance_rollout.49} parent=11 // pred_fallthru
        _
      // Predicated region
      $region29: #{dance_rollout.49} parent=11 // pred_check
        %p370 = pneg %p150
      $region30: #{dance_rollout.49} parent=11 // pred_check_branch
        %372 = sbr.rel (%p370) target = $region32
      $region31: #{dance_rollout.49} parent=11 // pred_region
        _
      $region32: #{dance_rollout.49} parent=11 // pred_fallthru
        _
      // Predicated region
      $region33: #{dance_rollout.49} parent=11 // pred_check
        %p373 = pneg %p171
      $region34: #{dance_rollout.49} parent=11 // pred_check_branch
        %375 = sbr.rel (%p373) target = $region36
      $region35: #{dance_rollout.49} parent=11 // pred_region
        _
      $region36: #{dance_rollout.49} parent=11 // pred_fallthru
        _
      // Predicated region
      $region37: #{dance_rollout.49} parent=11 // pred_check
        %p376 = pneg %p192
      $region38: #{dance_rollout.49} parent=11 // pred_check_branch
        %378 = sbr.rel (%p376) target = $region40
      $region39: #{dance_rollout.49} parent=11 // pred_region
        _
      $region40: #{dance_rollout.49} parent=11 // pred_fallthru
        _
      // Predicated region
      $region41: #{dance_rollout.49} parent=11 // pred_check
        %p379 = pneg %p213
      $region42: #{dance_rollout.49} parent=11 // pred_check_branch
        %381 = sbr.rel (%p379) target = $region44
      $region43: #{dance_rollout.49} parent=11 // pred_region
        _
      $region44: #{dance_rollout.49} parent=11 // pred_fallthru
        _
    $region12: #{dance_rollout.49} parent=5 // pred_fallthru
      _
    %p382 = scmp.lt.s32.totalorder %s19, 2
    // Predicated region
    $region45: #{dance_rollout.49} parent=5 // pred_check
      %p383 = pneg %p382
    $region46: #{dance_rollout.49} parent=5 // pred_check_branch
      %385 = sbr.rel (%p383) target = $region48
    $region47: #{dance_rollout.49} parent=5 // pred_region
      // Predicated region
      $region49: #{dance_rollout.49} parent=47 // pred_check
        %p386 = pneg %p39
      $region50: #{dance_rollout.49} parent=47 // pred_check_branch
        %388 = sbr.rel (%p386) target = $region52
      $region51: #{dance_rollout.49} parent=47 // pred_region
        %p389 = scmp.lt.s32.totalorder %s19, 1
        %s390 = scalar_select %p389, %s19, 1
        %s391 = smul.addr %s390, 8
        %s392 = scalar_lea.vmem %s0, %s391
      $region52: #{dance_rollout.49} parent=47 // pred_fallthru
        _
      // Predicated region
      $region53: #{dance_rollout.49} parent=47 // pred_check
        %p393 = pneg %p233
      $region54: #{dance_rollout.49} parent=47 // pred_check_branch
        %395 = sbr.rel (%p393) target = $region56
      $region55: #{dance_rollout.49} parent=47 // pred_region
        %p396 = scmp.lt.s32.totalorder %s19, 1
        %s397 = scalar_select %p396, %s19, 1
        %s398 = scalar_lea.vmem %s9, %s397
      $region56: #{dance_rollout.49} parent=47 // pred_fallthru
        _
      // Predicated region
      $region57: #{dance_rollout.49} parent=47 // pred_check
        %p399 = pneg %p259
      $region58: #{dance_rollout.49} parent=47 // pred_check_branch
        %401 = sbr.rel (%p399) target = $region60
      $region59: #{dance_rollout.49} parent=47 // pred_region
        %p402 = scmp.lt.s32.totalorder %s19, 1
        %s403 = scalar_select %p402, %s19, 1
        %s404 = scalar_lea.vmem %s10, %s403
      $region60: #{dance_rollout.49} parent=47 // pred_fallthru
        _
      // Predicated region
      $region61: #{dance_rollout.49} parent=47 // pred_check
        %p405 = pneg %p285
      $region62: #{dance_rollout.49} parent=47 // pred_check_branch
        %407 = sbr.rel (%p405) target = $region64
      $region63: #{dance_rollout.49} parent=47 // pred_region
        %p408 = scmp.lt.s32.totalorder %s19, 1
        %s409 = scalar_select %p408, %s19, 1
        %s410 = scalar_lea.vmem %s11, %s409
      $region64: #{dance_rollout.49} parent=47 // pred_fallthru
        _
      // Predicated region
      $region65: #{dance_rollout.49} parent=47 // pred_check
        %p411 = pneg %p311
      $region66: #{dance_rollout.49} parent=47 // pred_check_branch
        %413 = sbr.rel (%p411) target = $region68
      $region67: #{dance_rollout.49} parent=47 // pred_region
        %p414 = scmp.lt.s32.totalorder %s19, 1
        %s415 = scalar_select %p414, %s19, 1
        %s416 = scalar_lea.vmem %s12, %s415
      $region68: #{dance_rollout.49} parent=47 // pred_fallthru
        _
    $region48: #{dance_rollout.49} parent=5 // pred_fallthru
      _
    %p417 = scmp.le.s32.totalorder 1, %s19
    %p418 = scmp.lt.s32.totalorder %s19, 3
    %p419 = pnand %p417, %p418
    %p420 = pneg %p419
    // Predicated region
    $region69: #{dance_rollout.49} parent=5 // pred_check
      _
    $region70: #{dance_rollout.49} parent=5 // pred_check_branch
      %422 = sbr.rel (%p419) target = $region72
    $region71: #{dance_rollout.49} parent=5 // pred_region
      %s423 = ssub.s32 %s19, 1
      %p424 = scmp.lt.s32.totalorder %s24, 1
      %s425 = scalar_select %p424, %s24, 1
      %s426 = smul.addr %s425, 8
      %s427 = scalar_lea.vmem %s0, %s426
      %p428 = pneg %p45
      %p429 = pneg %p42
      %p430 = pneg %p66
      %p431 = pneg %p63
      %p432 = pneg %p87
      %p433 = pneg %p84
      %p434 = pneg %p108
      %p435 = pneg %p105
      %p436 = pneg %p129
      %p437 = pneg %p126
      %p438 = pneg %p150
      %p439 = pneg %p147
      %p440 = pneg %p171
      %p441 = pneg %p168
      %p442 = pneg %p192
      %p443 = pneg %p189
      %p444 = pneg %p213
      %p445 = pneg %p210
      %p446 = scmp.lt.s32.totalorder %s24, 1
      %s447 = scalar_select %p446, %s24, 1
      %s448 = scalar_lea.vmem %s9, %s447
      %p449 = pneg %p239
      %p450 = pneg %p236
      %p451 = scmp.lt.s32.totalorder %s24, 1
      %s452 = scalar_select %p451, %s24, 1
      %s453 = scalar_lea.vmem %s10, %s452
      %p454 = pneg %p265
      %p455 = pneg %p262
      %p456 = scmp.lt.s32.totalorder %s24, 1
      %s457 = scalar_select %p456, %s24, 1
      %s458 = scalar_lea.vmem %s11, %s457
      %p459 = pneg %p291
      %p460 = pneg %p288
      %p461 = scmp.lt.s32.totalorder %s24, 1
      %s462 = scalar_select %p461, %s24, 1
      %s463 = scalar_lea.vmem %s12, %s462
      %p464 = pneg %p317
      %p465 = pneg %p314
      %p466 = pneg %p343
      %p467 = pneg %p340
      %p468 = scmp.lt.s32.totalorder %s24, 1
      %s469 = scalar_select %p468, %s24, 1
      %s470 = smul.addr %s469, 8
      %s471 = scalar_lea.vmem %s13, %s470
      %p472 = scmp.lt.s32.totalorder %s24, 1
      %s473 = scalar_select %p472, %s24, 1
      %s474 = smul.addr %s473, 8
      %s475 = scalar_lea.vmem %s0, %s474
      %p476 = scmp.lt.s32.totalorder %s24, 1
      %s477 = scalar_select %p476, %s24, 1
      %s478 = scalar_lea.vmem %s9, %s477
      %p479 = scmp.lt.s32.totalorder %s24, 1
      %s480 = scalar_select %p479, %s24, 1
      %s481 = scalar_lea.vmem %s10, %s480
      %p482 = scmp.lt.s32.totalorder %s24, 1
      %s483 = scalar_select %p482, %s24, 1
      %s484 = scalar_lea.vmem %s11, %s483
      %p485 = scmp.lt.s32.totalorder %s24, 1
      %s486 = scalar_select %p485, %s24, 1
      %s487 = scalar_lea.vmem %s12, %s486
      %p488 = scmp.lt.s32.totalorder %s24, 1
      %s489 = scalar_select %p488, %s24, 1
      %s490 = smul.addr %s489, 8
      %s491 = scalar_lea.vmem %s13, %s490
      %v492 = vld [vmem:[%s475] sm:$0xff]
      %v493 = vld [vmem:[%s1] sm:$0xff]
      %v494 = vld [vmem:[%s1 + $0x8] sm:$0xff]
      %v495 = vld [vmem:[%s1 + $0x10] sm:$0xff]
      %v496 = vld [vmem:[%s1 + $0x18] sm:$0xff]
      %v497 = vld [vmem:[%s1 + $0x20] sm:$0xff]
      %v498 = vld [vmem:[%s1 + $0x28] sm:$0xff]
      %v499 = vld [vmem:[%s1 + $0x30] sm:$0xff]
      %v500 = vld [vmem:[%s1 + $0x38] sm:$0xff]
      %v501 = vld [vmem:[%s1 + $0x40] sm:$0xff]
      %v502 = vld [vmem:[%s1 + $0x48] sm:$0xff]
      %v503 = vld [vmem:[%s1 + $0x50] sm:$0xff]
      %v504 = vld [vmem:[%s1 + $0x58] sm:$0xff]
      %v505 = vld [vmem:[%s2] sm:$0x3]
      %v507 = vlaneseq
      %v508 = vshrl.u32 %v507, 7
      %v509 = vsub.s32 0, %v508
      %v510 = vrot.slane %v505, %v509
      %v511 = vlaneseq
      %v512 = vshrl.u32 %v511, 7
      %v513 = vsub.s32 1, %v512
      %v514 = vrot.slane %v505, %v513
      %vm517 = vcmask 392192
      %v519 = vsel %vm517, %v492, 0
      %521 = vmatprep.subr.mxu0 0.0
      %522 = vmatpush1.msra.mxu0 0.0
      %523 = vmatprep.subr.mxu0 0.0
      %524 = vmatpush1.msra.mxu0 0.0
      %525 = vmatprep.subr.mxu0 0.0
      %526 = vmatpush1.msra.mxu0 0.0
      %527 = vmatprep.subr.mxu0 0.0
      %528 = vmatpush1.msra.mxu0 0.0
      %529 = vmatprep.subr.mxu0 0.0
      %530 = vmatpush1.msra.mxu0 0.0
      %531 = vmatprep.subr.mxu0 0.0
      %532 = vmatpush1.msra.mxu0 0.0
      %533 = vmatprep.subr.mxu0 0.0
      %534 = vmatpush1.msra.mxu0 0.0
      %535 = vmatprep.subr.mxu0 0.0
      %536 = vmatpush1.msra.mxu0 0.0
      %537 = vmatprep.subr.mxu0 0.0
      %538 = vmatpush1.msra.mxu0 0.0
      %539 = vmatprep.subr.mxu0 0.0
      %540 = vmatpush1.msra.mxu0 0.0
      %541 = vmatprep.subr.mxu0 %v504
      %542 = vmatpush1.msra.mxu0 %v503
      %543 = vmatprep.subr.mxu0 %v502
      %544 = vmatpush1.msra.mxu0 %v501
      %545 = vmatprep.subr.mxu0 %v500
      %546 = vmatpush1.msra.mxu0 %v499
      %547 = vmatprep.subr.mxu0 %v498
      %548 = vmatpush1.msra.mxu0 %v497
      %549 = vmatprep.subr.mxu0 %v496
      %550 = vmatpush1.msra.mxu0 %v495
      %551 = vmatprep.subr.mxu0 %v494
      %552 = vmatpush1.msra.mxu0 %v493
      %553 = vmatprep.subr.mxu0 0.0
      %554 = vmatpush2.msra.mxu0 0.0
      %555 = vmatprep.subr.mxu0 0.0
      %556 = vmatpush2.msra.mxu0 0.0
      %557 = vmatprep.subr.mxu0 0.0
      %558 = vmatpush2.msra.mxu0 0.0
      %559 = vmatprep.subr.mxu0 0.0
      %560 = vmatpush2.msra.mxu0 0.0
      %561 = vmatprep.subr.mxu0 0.0
      %562 = vmatpush2.msra.mxu0 0.0
      %563 = vmatprep.subr.mxu0 0.0
      %564 = vmatpush2.msra.mxu0 0.0
      %565 = vmatprep.subr.mxu0 0.0
      %566 = vmatpush2.msra.mxu0 0.0
      %567 = vmatprep.subr.mxu0 0.0
      %568 = vmatpush2.msra.mxu0 0.0
      %569 = vmatprep.subr.mxu0 0.0
      %570 = vmatpush2.msra.mxu0 0.0
      %571 = vmatprep.subr.mxu0 0.0
      %572 = vmatpush2.msra.mxu0 0.0
      %573 = vmatprep.subr.mxu0 0.0
      %574 = vmatpush2.msra.mxu0 0.0
      %575 = vmatprep.subr.mxu0 0.0
      %576 = vmatpush2.msra.mxu0 0.0
      %577 = vmatprep.subr.mxu0 0.0
      %578 = vmatpush2.msra.mxu0 0.0
      %579 = vmatprep.subr.mxu0 0.0
      %580 = vmatpush2.msra.mxu0 0.0
      %581 = vmatprep.subr.mxu0 0.0
      %582 = vmatpush2.msra.mxu0 0.0
      %583 = vmatprep.subr.mxu0 0.0
      %584 = vmatpush2.msra.mxu0 0.0
      %585 = vmatprep.mubr.f32.mxu0 0.0
      %586 = vmatmul.mubr.f32.gmra.mxu0 %v519
      %v587 = vpop.f32.mrf.mxu0
      %v588 = vadd.f32 %v510, %v587
      %v589 = vpop.f32.mrf.mxu0
      %v590 = vadd.f32 %v514, %v589
      %591 = vdwg.mxu0
      %v592 = vld [vmem:[%s3] sm:$0xff]
      %v593 = vld [vmem:[%s3 + $0x8] sm:$0xff]
      %v594 = vld [vmem:[%s3 + $0x10] sm:$0xff]
      %v595 = vld [vmem:[%s3 + $0x18] sm:$0xff]
      %v596 = vld [vmem:[%s3 + $0x20] sm:$0xff]
      %v597 = vld [vmem:[%s3 + $0x28] sm:$0xff]
      %599 = vrot.lane.b32.xlu0 %v588, 80
      %v600 = vpop.permute.xlu0 %599
      %vm601 = vcmask 97280
      %v602 = vsel %vm601, %v588, 0
      %v604 = vsel %vm601, %v600, 0
      %606 = vmatprep.subr.mxu0 0.0
      %607 = vmatpush1.xpose.msra.mxu0 0.0
      %608 = vmatprep.subr.mxu0 0.0
      %609 = vmatpush1.xpose.msra.mxu0 0.0
      %610 = vmatprep.subr.mxu0 0.0
      %611 = vmatpush1.xpose.msra.mxu0 0.0
      %612 = vmatprep.subr.mxu0 0.0
      %613 = vmatpush1.xpose.msra.mxu0 0.0
      %614 = vmatprep.subr.mxu0 0.0
      %615 = vmatpush1.xpose.msra.mxu0 0.0
      %616 = vmatprep.subr.mxu0 0.0
      %617 = vmatpush1.xpose.msra.mxu0 0.0
      %618 = vmatprep.subr.mxu0 0.0
      %619 = vmatpush1.xpose.msra.mxu0 0.0
      %620 = vmatprep.subr.mxu0 0.0
      %621 = vmatpush1.xpose.msra.mxu0 0.0
      %622 = vmatprep.subr.mxu0 0.0
      %623 = vmatpush1.xpose.msra.mxu0 0.0
      %624 = vmatprep.subr.mxu0 0.0
      %625 = vmatpush1.xpose.msra.mxu0 0.0
      %626 = vmatprep.subr.mxu0 0.0
      %627 = vmatpush1.xpose.msra.mxu0 0.0
      %628 = vmatprep.subr.mxu0 0.0
      %629 = vmatpush1.xpose.msra.mxu0 0.0
      %630 = vmatprep.subr.mxu0 0.0
      %631 = vmatpush1.xpose.msra.mxu0 0.0
      %632 = vmatprep.subr.mxu0 0.0
      %633 = vmatpush1.xpose.msra.mxu0 0.0
      %634 = vmatprep.subr.mxu0 0.0
      %635 = vmatpush1.xpose.msra.mxu0 0.0
      %636 = vmatprep.subr.mxu0 0.0
      %637 = vmatpush1.xpose.msra.mxu0 %v604
      %638 = vmatprep.subr.mxu0 0.0
      %639 = vmatpush2.xpose.msra.mxu0 0.0
      %640 = vmatprep.subr.mxu0 0.0
      %641 = vmatpush2.xpose.msra.mxu0 0.0
      %642 = vmatprep.subr.mxu0 0.0
      %643 = vmatpush2.xpose.msra.mxu0 0.0
      %644 = vmatprep.subr.mxu0 0.0
      %645 = vmatpush2.xpose.msra.mxu0 0.0
      %646 = vmatprep.subr.mxu0 0.0
      %647 = vmatpush2.xpose.msra.mxu0 0.0
      %648 = vmatprep.subr.mxu0 0.0
      %649 = vmatpush2.xpose.msra.mxu0 0.0
      %650 = vmatprep.subr.mxu0 0.0
      %651 = vmatpush2.xpose.msra.mxu0 0.0
      %652 = vmatprep.subr.mxu0 0.0
      %653 = vmatpush2.xpose.msra.mxu0 0.0
      %654 = vmatprep.subr.mxu0 0.0
      %655 = vmatpush2.xpose.msra.mxu0 0.0
      %656 = vmatprep.subr.mxu0 0.0
      %657 = vmatpush2.xpose.msra.mxu0 0.0
      %658 = vmatprep.subr.mxu0 0.0
      %659 = vmatpush2.xpose.msra.mxu0 0.0
      %660 = vmatprep.subr.mxu0 0.0
      %661 = vmatpush2.xpose.msra.mxu0 0.0
      %662 = vmatprep.subr.mxu0 0.0
      %663 = vmatpush2.xpose.msra.mxu0 0.0
      %664 = vmatprep.subr.mxu0 0.0
      %665 = vmatpush2.xpose.msra.mxu0 0.0
      %666 = vmatprep.subr.mxu0 0.0
      %667 = vmatpush2.xpose.msra.mxu0 0.0
      %668 = vmatprep.subr.mxu0 0.0
      %669 = vmatpush2.xpose.msra.mxu0 0.0
      %670 = vmatprep.mubr.f32.mxu0 0.0
      %671 = vmatmul.mubr.f32.gmra.mxu0 %v602
      %v672 = vpop.f32.mrf.mxu0
      %v673 = vadd.f32 0.0, %v672
      %v674 = vpop.f32.mrf.mxu0
      %675 = vdwg.mxu0
      %v676 = vmul.f32 %v673, 0.28867513
      %vm677 = vcmask 64512
      %v678 = vsel %vm677, %v676, -inf
      %679 = vmax.xlane.f32.xlu0 %v678
      %v680 = vpop.xlane.xlu0 %679
      %v681 = vsub.f32 %v676, %v680
      %v682 = vmul.f32 %v681, 1.442695
      %v683 = vpow.pop %v682
      %v684 = vsel %vm677, %v683, 0.0
      %685 = vadd.xlane.f32.xlu0 %v684
      %v686 = vpop.xlane.xlu0 %685
      %v687 = vrcp.pop %v686
      %v688 = vmul.f32 %v683, %v687
      %689 = vrot.lane.b32.xlu0 %v588, 32
      %v690 = vpop.permute.xlu0 %689
      %v693 = vsel %vm677, %v688, 0
      %695 = vmatprep.subr.mxu0 0.0
      %696 = vmatpush1.msra.mxu0 0.0
      %697 = vmatprep.subr.mxu0 0.0
      %698 = vmatpush1.msra.mxu0 0.0
      %699 = vmatprep.subr.mxu0 0.0
      %700 = vmatpush1.msra.mxu0 0.0
      %701 = vmatprep.subr.mxu0 0.0
      %702 = vmatpush1.msra.mxu0 0.0
      %703 = vmatprep.subr.mxu0 0.0
      %704 = vmatpush1.msra.mxu0 0.0
      %705 = vmatprep.subr.mxu0 0.0
      %706 = vmatpush1.msra.mxu0 0.0
      %707 = vmatprep.subr.mxu0 0.0
      %708 = vmatpush1.msra.mxu0 0.0
      %709 = vmatprep.subr.mxu0 0.0
      %710 = vmatpush1.msra.mxu0 0.0
      %711 = vmatprep.subr.mxu0 0.0
      %712 = vmatpush1.msra.mxu0 0.0
      %713 = vmatprep.subr.mxu0 0.0
      %714 = vmatpush1.msra.mxu0 0.0
      %715 = vmatprep.subr.mxu0 0.0
      %716 = vmatpush1.msra.mxu0 0.0
      %717 = vmatprep.subr.mxu0 0.0
      %718 = vmatpush1.msra.mxu0 0.0
      %719 = vmatprep.subr.mxu0 0.0
      %720 = vmatpush1.msra.mxu0 0.0
      %721 = vmatprep.subr.mxu0 0.0
      %722 = vmatpush1.msra.mxu0 0.0
      %723 = vmatprep.subr.mxu0 0.0
      %724 = vmatpush1.msra.mxu0 0.0
      %725 = vmatprep.subr.mxu0 0.0
      %726 = vmatpush1.msra.mxu0 %v690
      %727 = vmatprep.subr.mxu0 0.0
      %728 = vmatpush2.msra.mxu0 0.0
      %729 = vmatprep.subr.mxu0 0.0
      %730 = vmatpush2.msra.mxu0 0.0
      %731 = vmatprep.subr.mxu0 0.0
      %732 = vmatpush2.msra.mxu0 0.0
      %733 = vmatprep.subr.mxu0 0.0
      %734 = vmatpush2.msra.mxu0 0.0
      %735 = vmatprep.subr.mxu0 0.0
      %736 = vmatpush2.msra.mxu0 0.0
      %737 = vmatprep.subr.mxu0 0.0
      %738 = vmatpush2.msra.mxu0 0.0
      %739 = vmatprep.subr.mxu0 0.0
      %740 = vmatpush2.msra.mxu0 0.0
      %741 = vmatprep.subr.mxu0 0.0
      %742 = vmatpush2.msra.mxu0 0.0
      %743 = vmatprep.subr.mxu0 0.0
      %744 = vmatpush2.msra.mxu0 0.0
      %745 = vmatprep.subr.mxu0 0.0
      %746 = vmatpush2.msra.mxu0 0.0
      %747 = vmatprep.subr.mxu0 0.0
      %748 = vmatpush2.msra.mxu0 0.0
      %749 = vmatprep.subr.mxu0 0.0
      %750 = vmatpush2.msra.mxu0 0.0
      %751 = vmatprep.subr.mxu0 0.0
      %752 = vmatpush2.msra.mxu0 0.0
      %753 = vmatprep.subr.mxu0 0.0
      %754 = vmatpush2.msra.mxu0 0.0
      %755 = vmatprep.subr.mxu0 0.0
      %756 = vmatpush2.msra.mxu0 0.0
      %757 = vmatprep.subr.mxu0 0.0
      %758 = vmatpush2.msra.mxu0 0.0
      %759 = vmatprep.mubr.f32.mxu0 0.0
      %760 = vmatmul.mubr.f32.gmra.mxu0 %v693
      %v761 = vpop.f32.mrf.mxu0
      %v762 = vadd.f32 0.0, %v761
      %v763 = vpop.f32.mrf.mxu0
      %764 = vdwg.mxu0
      %765 = vrot.lane.b32.xlu0 %v588, 116
      %v766 = vpop.permute.xlu0 %765
      %767 = vrot.lane.b32.xlu0 %v588, 68
      %v768 = vpop.permute.xlu0 %767
      %v769 = vsel %vm601, %v766, 0
      %v771 = vsel %vm601, %v768, 0
      %773 = vmatprep.subr.mxu0 0.0
      %774 = vmatpush1.xpose.msra.mxu0 0.0
      %775 = vmatprep.subr.mxu0 0.0
      %776 = vmatpush1.xpose.msra.mxu0 0.0
      %777 = vmatprep.subr.mxu0 0.0
      %778 = vmatpush1.xpose.msra.mxu0 0.0
      %779 = vmatprep.subr.mxu0 0.0
      %780 = vmatpush1.xpose.msra.mxu0 0.0
      %781 = vmatprep.subr.mxu0 0.0
      %782 = vmatpush1.xpose.msra.mxu0 0.0
      %783 = vmatprep.subr.mxu0 0.0
      %784 = vmatpush1.xpose.msra.mxu0 0.0
      %785 = vmatprep.subr.mxu0 0.0
      %786 = vmatpush1.xpose.msra.mxu0 0.0
      %787 = vmatprep.subr.mxu0 0.0
      %788 = vmatpush1.xpose.msra.mxu0 0.0
      %789 = vmatprep.subr.mxu0 0.0
      %790 = vmatpush1.xpose.msra.mxu0 0.0
      %791 = vmatprep.subr.mxu0 0.0
      %792 = vmatpush1.xpose.msra.mxu0 0.0
      %793 = vmatprep.subr.mxu0 0.0
      %794 = vmatpush1.xpose.msra.mxu0 0.0
      %795 = vmatprep.subr.mxu0 0.0
      %796 = vmatpush1.xpose.msra.mxu0 0.0
      %797 = vmatprep.subr.mxu0 0.0
      %798 = vmatpush1.xpose.msra.mxu0 0.0
      %799 = vmatprep.subr.mxu0 0.0
      %800 = vmatpush1.xpose.msra.mxu0 0.0
      %801 = vmatprep.subr.mxu0 0.0
      %802 = vmatpush1.xpose.msra.mxu0 0.0
      %803 = vmatprep.subr.mxu0 0.0
      %804 = vmatpush1.xpose.msra.mxu0 %v771
      %805 = vmatprep.subr.mxu0 0.0
      %806 = vmatpush2.xpose.msra.mxu0 0.0
      %807 = vmatprep.subr.mxu0 0.0
      %808 = vmatpush2.xpose.msra.mxu0 0.0
      %809 = vmatprep.subr.mxu0 0.0
      %810 = vmatpush2.xpose.msra.mxu0 0.0
      %811 = vmatprep.subr.mxu0 0.0
      %812 = vmatpush2.xpose.msra.mxu0 0.0
      %813 = vmatprep.subr.mxu0 0.0
      %814 = vmatpush2.xpose.msra.mxu0 0.0
      %815 = vmatprep.subr.mxu0 0.0
      %816 = vmatpush2.xpose.msra.mxu0 0.0
      %817 = vmatprep.subr.mxu0 0.0
      %818 = vmatpush2.xpose.msra.mxu0 0.0
      %819 = vmatprep.subr.mxu0 0.0
      %820 = vmatpush2.xpose.msra.mxu0 0.0
      %821 = vmatprep.subr.mxu0 0.0
      %822 = vmatpush2.xpose.msra.mxu0 0.0
      %823 = vmatprep.subr.mxu0 0.0
      %824 = vmatpush2.xpose.msra.mxu0 0.0
      %825 = vmatprep.subr.mxu0 0.0
      %826 = vmatpush2.xpose.msra.mxu0 0.0
      %827 = vmatprep.subr.mxu0 0.0
      %828 = vmatpush2.xpose.msra.mxu0 0.0
      %829 = vmatprep.subr.mxu0 0.0
      %830 = vmatpush2.xpose.msra.mxu0 0.0
      %831 = vmatprep.subr.mxu0 0.0
      %832 = vmatpush2.xpose.msra.mxu0 0.0
      %833 = vmatprep.subr.mxu0 0.0
      %834 = vmatpush2.xpose.msra.mxu0 0.0
      %835 = vmatprep.subr.mxu0 0.0
      %836 = vmatpush2.xpose.msra.mxu0 0.0
      %837 = vmatprep.mubr.f32.mxu0 0.0
      %838 = vmatmul.mubr.f32.gmra.mxu0 %v769
      %v839 = vpop.f32.mrf.mxu0
      %v840 = vadd.f32 0.0, %v839
      %v841 = vpop.f32.mrf.mxu0
      %842 = vdwg.mxu0
      %v843 = vmul.f32 %v840, 0.28867513
      %v844 = vsel %vm677, %v843, -inf
      %845 = vmax.xlane.f32.xlu0 %v844
      %v846 = vpop.xlane.xlu0 %845
      %v847 = vsub.f32 %v843, %v846
      %v848 = vmul.f32 %v847, 1.442695
      %v849 = vpow.pop %v848
      %v850 = vsel %vm677, %v849, 0.0
      %851 = vadd.xlane.f32.xlu0 %v850
      %v852 = vpop.xlane.xlu0 %851
      %v853 = vrcp.pop %v852
      %v854 = vmul.f32 %v849, %v853
      %855 = vrot.lane.b32.xlu0 %v588, 20
      %v856 = vpop.permute.xlu0 %855
      %v859 = vsel %vm677, %v854, 0
      %861 = vmatprep.subr.mxu0 0.0
      %862 = vmatpush1.msra.mxu0 0.0
      %863 = vmatprep.subr.mxu0 0.0
      %864 = vmatpush1.msra.mxu0 0.0
      %865 = vmatprep.subr.mxu0 0.0
      %866 = vmatpush1.msra.mxu0 0.0
      %867 = vmatprep.subr.mxu0 0.0
      %868 = vmatpush1.msra.mxu0 0.0
      %869 = vmatprep.subr.mxu0 0.0
      %870 = vmatpush1.msra.mxu0 0.0
      %871 = vmatprep.subr.mxu0 0.0
      %872 = vmatpush1.msra.mxu0 0.0
      %873 = vmatprep.subr.mxu0 0.0
      %874 = vmatpush1.msra.mxu0 0.0
      %875 = vmatprep.subr.mxu0 0.0
      %876 = vmatpush1.msra.mxu0 0.0
      %877 = vmatprep.subr.mxu0 0.0
      %878 = vmatpush1.msra.mxu0 0.0
      %879 = vmatprep.subr.mxu0 0.0
      %880 = vmatpush1.msra.mxu0 0.0
      %881 = vmatprep.subr.mxu0 0.0
      %882 = vmatpush1.msra.mxu0 0.0
      %883 = vmatprep.subr.mxu0 0.0
      %884 = vmatpush1.msra.mxu0 0.0
      %885 = vmatprep.subr.mxu0 0.0
      %886 = vmatpush1.msra.mxu0 0.0
      %887 = vmatprep.subr.mxu0 0.0
      %888 = vmatpush1.msra.mxu0 0.0
      %889 = vmatprep.subr.mxu0 0.0
      %890 = vmatpush1.msra.mxu0 0.0
      %891 = vmatprep.subr.mxu0 0.0
      %892 = vmatpush1.msra.mxu0 %v856
      %893 = vmatprep.subr.mxu0 0.0
      %894 = vmatpush2.msra.mxu0 0.0
      %895 = vmatprep.subr.mxu0 0.0
      %896 = vmatpush2.msra.mxu0 0.0
      %897 = vmatprep.subr.mxu0 0.0
      %898 = vmatpush2.msra.mxu0 0.0
      %899 = vmatprep.subr.mxu0 0.0
      %900 = vmatpush2.msra.mxu0 0.0
      %901 = vmatprep.subr.mxu0 0.0
      %902 = vmatpush2.msra.mxu0 0.0
      %903 = vmatprep.subr.mxu0 0.0
      %904 = vmatpush2.msra.mxu0 0.0
      %905 = vmatprep.subr.mxu0 0.0
      %906 = vmatpush2.msra.mxu0 0.0
      %907 = vmatprep.subr.mxu0 0.0
      %908 = vmatpush2.msra.mxu0 0.0
      %909 = vmatprep.subr.mxu0 0.0
      %910 = vmatpush2.msra.mxu0 0.0
      %911 = vmatprep.subr.mxu0 0.0
      %912 = vmatpush2.msra.mxu0 0.0
      %913 = vmatprep.subr.mxu0 0.0
      %914 = vmatpush2.msra.mxu0 0.0
      %915 = vmatprep.subr.mxu0 0.0
      %916 = vmatpush2.msra.mxu0 0.0
      %917 = vmatprep.subr.mxu0 0.0
      %918 = vmatpush2.msra.mxu0 0.0
      %919 = vmatprep.subr.mxu0 0.0
      %920 = vmatpush2.msra.mxu0 0.0
      %921 = vmatprep.subr.mxu0 0.0
      %922 = vmatpush2.msra.mxu0 0.0
      %923 = vmatprep.subr.mxu0 0.0
      %924 = vmatpush2.msra.mxu0 0.0
      %925 = vmatprep.mubr.f32.mxu0 0.0
      %926 = vmatmul.mubr.f32.gmra.mxu0 %v859
      %v927 = vpop.f32.mrf.mxu0
      %v928 = vadd.f32 0.0, %v927
      %v929 = vpop.f32.mrf.mxu0
      %930 = vdwg.mxu0
      %vm933 = vcmask 1043456
      %v934 = vrot.slane %v593, 4
      %v935 = vrot.slane %v594, 4
      %v936 = vsel %vm933, %v934, %v935
      %v939 = vsel %vm601, %v928, 0
      %v941 = vsel %vm933, %v935, 0
      %943 = vmatprep.subr.mxu0 0.0
      %944 = vmatpush1.msra.mxu0 0.0
      %945 = vmatprep.subr.mxu0 0.0
      %946 = vmatpush1.msra.mxu0 0.0
      %947 = vmatprep.subr.mxu0 0.0
      %948 = vmatpush1.msra.mxu0 0.0
      %949 = vmatprep.subr.mxu0 0.0
      %950 = vmatpush1.msra.mxu0 0.0
      %951 = vmatprep.subr.mxu0 0.0
      %952 = vmatpush1.msra.mxu0 0.0
      %953 = vmatprep.subr.mxu0 0.0
      %954 = vmatpush1.msra.mxu0 0.0
      %955 = vmatprep.subr.mxu0 0.0
      %956 = vmatpush1.msra.mxu0 0.0
      %957 = vmatprep.subr.mxu0 0.0
      %958 = vmatpush1.msra.mxu0 0.0
      %959 = vmatprep.subr.mxu0 0.0
      %960 = vmatpush1.msra.mxu0 0.0
      %961 = vmatprep.subr.mxu0 0.0
      %962 = vmatpush1.msra.mxu0 0.0
      %963 = vmatprep.subr.mxu0 0.0
      %964 = vmatpush1.msra.mxu0 0.0
      %965 = vmatprep.subr.mxu0 0.0
      %966 = vmatpush1.msra.mxu0 0.0
      %967 = vmatprep.subr.mxu0 0.0
      %968 = vmatpush1.msra.mxu0 0.0
      %969 = vmatprep.subr.mxu0 0.0
      %970 = vmatpush1.msra.mxu0 0.0
      %971 = vmatprep.subr.mxu0 0.0
      %972 = vmatpush1.msra.mxu0 %v941
      %973 = vmatprep.subr.mxu0 0.0
      %974 = vmatpush1.msra.mxu0 %v936
      %975 = vmatprep.subr.mxu0 0.0
      %976 = vmatpush2.msra.mxu0 0.0
      %977 = vmatprep.subr.mxu0 0.0
      %978 = vmatpush2.msra.mxu0 0.0
      %979 = vmatprep.subr.mxu0 0.0
      %980 = vmatpush2.msra.mxu0 0.0
      %981 = vmatprep.subr.mxu0 0.0
      %982 = vmatpush2.msra.mxu0 0.0
      %983 = vmatprep.subr.mxu0 0.0
      %984 = vmatpush2.msra.mxu0 0.0
      %985 = vmatprep.subr.mxu0 0.0
      %986 = vmatpush2.msra.mxu0 0.0
      %987 = vmatprep.subr.mxu0 0.0
      %988 = vmatpush2.msra.mxu0 0.0
      %989 = vmatprep.subr.mxu0 0.0
      %990 = vmatpush2.msra.mxu0 0.0
      %991 = vmatprep.subr.mxu0 0.0
      %992 = vmatpush2.msra.mxu0 0.0
      %993 = vmatprep.subr.mxu0 0.0
      %994 = vmatpush2.msra.mxu0 0.0
      %995 = vmatprep.subr.mxu0 0.0
      %996 = vmatpush2.msra.mxu0 0.0
      %997 = vmatprep.subr.mxu0 0.0
      %998 = vmatpush2.msra.mxu0 0.0
      %999 = vmatprep.subr.mxu0 0.0
      %1000 = vmatpush2.msra.mxu0 0.0
      %1001 = vmatprep.subr.mxu0 0.0
      %1002 = vmatpush2.msra.mxu0 0.0
      %1003 = vmatprep.subr.mxu0 0.0
      %1004 = vmatpush2.msra.mxu0 0.0
      %1005 = vmatprep.subr.mxu0 0.0
      %1006 = vmatpush2.msra.mxu0 0.0
      %1007 = vmatprep.mubr.f32.mxu0 0.0
      %1008 = vmatmul.mubr.f32.gmra.mxu0 %v939
      %v1009 = vpop.f32.mrf.mxu0
      %v1010 = vadd.f32 0.0, %v1009
      %v1011 = vpop.f32.mrf.mxu0
      %1012 = vdwg.mxu0
      %v1014 = vsel %vm601, %v762, 0
      %v1016 = vsel %vm933, %v593, 0
      %1018 = vmatprep.subr.mxu0 0.0
      %1019 = vmatpush1.msra.mxu0 0.0
      %1020 = vmatprep.subr.mxu0 0.0
      %1021 = vmatpush1.msra.mxu0 0.0
      %1022 = vmatprep.subr.mxu0 0.0
      %1023 = vmatpush1.msra.mxu0 0.0
      %1024 = vmatprep.subr.mxu0 0.0
      %1025 = vmatpush1.msra.mxu0 0.0
      %1026 = vmatprep.subr.mxu0 0.0
      %1027 = vmatpush1.msra.mxu0 0.0
      %1028 = vmatprep.subr.mxu0 0.0
      %1029 = vmatpush1.msra.mxu0 0.0
      %1030 = vmatprep.subr.mxu0 0.0
      %1031 = vmatpush1.msra.mxu0 0.0
      %1032 = vmatprep.subr.mxu0 0.0
      %1033 = vmatpush1.msra.mxu0 0.0
      %1034 = vmatprep.subr.mxu0 0.0
      %1035 = vmatpush1.msra.mxu0 0.0
      %1036 = vmatprep.subr.mxu0 0.0
      %1037 = vmatpush1.msra.mxu0 0.0
      %1038 = vmatprep.subr.mxu0 0.0
      %1039 = vmatpush1.msra.mxu0 0.0
      %1040 = vmatprep.subr.mxu0 0.0
      %1041 = vmatpush1.msra.mxu0 0.0
      %1042 = vmatprep.subr.mxu0 0.0
      %1043 = vmatpush1.msra.mxu0 0.0
      %1044 = vmatprep.subr.mxu0 0.0
      %1045 = vmatpush1.msra.mxu0 0.0
      %1046 = vmatprep.subr.mxu0 0.0
      %1047 = vmatpush1.msra.mxu0 %v1016
      %1048 = vmatprep.subr.mxu0 0.0
      %1049 = vmatpush1.msra.mxu0 %v592
      %1050 = vmatprep.subr.mxu0 0.0
      %1051 = vmatpush2.msra.mxu0 0.0
      %1052 = vmatprep.subr.mxu0 0.0
      %1053 = vmatpush2.msra.mxu0 0.0
      %1054 = vmatprep.subr.mxu0 0.0
      %1055 = vmatpush2.msra.mxu0 0.0
      %1056 = vmatprep.subr.mxu0 0.0
      %1057 = vmatpush2.msra.mxu0 0.0
      %1058 = vmatprep.subr.mxu0 0.0
      %1059 = vmatpush2.msra.mxu0 0.0
      %1060 = vmatprep.subr.mxu0 0.0
      %1061 = vmatpush2.msra.mxu0 0.0
      %1062 = vmatprep.subr.mxu0 0.0
      %1063 = vmatpush2.msra.mxu0 0.0
      %1064 = vmatprep.subr.mxu0 0.0
      %1065 = vmatpush2.msra.mxu0 0.0
      %1066 = vmatprep.subr.mxu0 0.0
      %1067 = vmatpush2.msra.mxu0 0.0
      %1068 = vmatprep.subr.mxu0 0.0
      %1069 = vmatpush2.msra.mxu0 0.0
      %1070 = vmatprep.subr.mxu0 0.0
      %1071 = vmatpush2.msra.mxu0 0.0
      %1072 = vmatprep.subr.mxu0 0.0
      %1073 = vmatpush2.msra.mxu0 0.0
      %1074 = vmatprep.subr.mxu0 0.0
      %1075 = vmatpush2.msra.mxu0 0.0
      %1076 = vmatprep.subr.mxu0 0.0
      %1077 = vmatpush2.msra.mxu0 0.0
      %1078 = vmatprep.subr.mxu0 0.0
      %1079 = vmatpush2.msra.mxu0 0.0
      %1080 = vmatprep.subr.mxu0 0.0
      %1081 = vmatpush2.msra.mxu0 0.0
      %1082 = vmatprep.mubr.f32.mxu0 0.0
      %1083 = vmatmul.mubr.f32.gmra.mxu0 %v1014
      %v1084 = vpop.f32.mrf.mxu0
      %v1085 = vadd.f32 %v1010, %v1084
      %v1086 = vpop.f32.mrf.mxu0
      %1087 = vdwg.mxu0
      %1088 = vrot.lane.b32.xlu0 %v588, 104
      %v1089 = vpop.permute.xlu0 %1088
      %1090 = vrot.lane.b32.xlu0 %v588, 56
      %v1091 = vpop.permute.xlu0 %1090
      %v1092 = vsel %vm601, %v1089, 0
      %v1094 = vsel %vm601, %v1091, 0
      %1096 = vmatprep.subr.mxu0 0.0
      %1097 = vmatpush1.xpose.msra.mxu0 0.0
      %1098 = vmatprep.subr.mxu0 0.0
      %1099 = vmatpush1.xpose.msra.mxu0 0.0
      %1100 = vmatprep.subr.mxu0 0.0
      %1101 = vmatpush1.xpose.msra.mxu0 0.0
      %1102 = vmatprep.subr.mxu0 0.0
      %1103 = vmatpush1.xpose.msra.mxu0 0.0
      %1104 = vmatprep.subr.mxu0 0.0
      %1105 = vmatpush1.xpose.msra.mxu0 0.0
      %1106 = vmatprep.subr.mxu0 0.0
      %1107 = vmatpush1.xpose.msra.mxu0 0.0
      %1108 = vmatprep.subr.mxu0 0.0
      %1109 = vmatpush1.xpose.msra.mxu0 0.0
      %1110 = vmatprep.subr.mxu0 0.0
      %1111 = vmatpush1.xpose.msra.mxu0 0.0
      %1112 = vmatprep.subr.mxu0 0.0
      %1113 = vmatpush1.xpose.msra.mxu0 0.0
      %1114 = vmatprep.subr.mxu0 0.0
      %1115 = vmatpush1.xpose.msra.mxu0 0.0
      %1116 = vmatprep.subr.mxu0 0.0
      %1117 = vmatpush1.xpose.msra.mxu0 0.0
      %1118 = vmatprep.subr.mxu0 0.0
      %1119 = vmatpush1.xpose.msra.mxu0 0.0
      %1120 = vmatprep.subr.mxu0 0.0
      %1121 = vmatpush1.xpose.msra.mxu0 0.0
      %1122 = vmatprep.subr.mxu0 0.0
      %1123 = vmatpush1.xpose.msra.mxu0 0.0
      %1124 = vmatprep.subr.mxu0 0.0
      %1125 = vmatpush1.xpose.msra.mxu0 0.0
      %1126 = vmatprep.subr.mxu0 0.0
      %1127 = vmatpush1.xpose.msra.mxu0 %v1094
      %1128 = vmatprep.subr.mxu0 0.0
      %1129 = vmatpush2.xpose.msra.mxu0 0.0
      %1130 = vmatprep.subr.mxu0 0.0
      %1131 = vmatpush2.xpose.msra.mxu0 0.0
      %1132 = vmatprep.subr.mxu0 0.0
      %1133 = vmatpush2.xpose.msra.mxu0 0.0
      %1134 = vmatprep.subr.mxu0 0.0
      %1135 = vmatpush2.xpose.msra.mxu0 0.0
      %1136 = vmatprep.subr.mxu0 0.0
      %1137 = vmatpush2.xpose.msra.mxu0 0.0
      %1138 = vmatprep.subr.mxu0 0.0
      %1139 = vmatpush2.xpose.msra.mxu0 0.0
      %1140 = vmatprep.subr.mxu0 0.0
      %1141 = vmatpush2.xpose.msra.mxu0 0.0
      %1142 = vmatprep.subr.mxu0 0.0
      %1143 = vmatpush2.xpose.msra.mxu0 0.0
      %1144 = vmatprep.subr.mxu0 0.0
      %1145 = vmatpush2.xpose.msra.mxu0 0.0
      %1146 = vmatprep.subr.mxu0 0.0
      %1147 = vmatpush2.xpose.msra.mxu0 0.0
      %1148 = vmatprep.subr.mxu0 0.0
      %1149 = vmatpush2.xpose.msra.mxu0 0.0
      %1150 = vmatprep.subr.mxu0 0.0
      %1151 = vmatpush2.xpose.msra.mxu0 0.0
      %1152 = vmatprep.subr.mxu0 0.0
      %1153 = vmatpush2.xpose.msra.mxu0 0.0
      %1154 = vmatprep.subr.mxu0 0.0
      %1155 = vmatpush2.xpose.msra.mxu0 0.0
      %1156 = vmatprep.subr.mxu0 0.0
      %1157 = vmatpush2.xpose.msra.mxu0 0.0
      %1158 = vmatprep.subr.mxu0 0.0
      %1159 = vmatpush2.xpose.msra.mxu0 0.0
      %1160 = vmatprep.mubr.f32.mxu0 0.0
      %1161 = vmatmul.mubr.f32.gmra.mxu0 %v1092
      %v1162 = vpop.f32.mrf.mxu0
      %v1163 = vadd.f32 0.0, %v1162
      %v1164 = vpop.f32.mrf.mxu0
      %1165 = vdwg.mxu0
      %v1166 = vmul.f32 %v1163, 0.28867513
      %v1167 = vsel %vm677, %v1166, -inf
      %1168 = vmax.xlane.f32.xlu0 %v1167
      %v1169 = vpop.xlane.xlu0 %1168
      %v1170 = vsub.f32 %v1166, %v1169
      %v1171 = vmul.f32 %v1170, 1.442695
      %v1172 = vpow.pop %v1171
      %v1173 = vsel %vm677, %v1172, 0.0
      %1174 = vadd.xlane.f32.xlu0 %v1173
      %v1175 = vpop.xlane.xlu0 %1174
      %v1176 = vrcp.pop %v1175
      %v1177 = vmul.f32 %v1172, %v1176
      %1179 = vrot.lane.b32.xlu0 %v588, 8
      %v1180 = vpop.permute.xlu0 %1179
      %1181 = vrot.lane.b32.xlu0 %v590, 8
      %v1182 = vpop.permute.xlu0 %1181
      %v1183 = vsel %vm677, %v1180, %v1182
      %v1186 = vsel %vm677, %v1177, 0
      %1188 = vmatprep.subr.mxu0 0.0
      %1189 = vmatpush1.msra.mxu0 0.0
      %1190 = vmatprep.subr.mxu0 0.0
      %1191 = vmatpush1.msra.mxu0 0.0
      %1192 = vmatprep.subr.mxu0 0.0
      %1193 = vmatpush1.msra.mxu0 0.0
      %1194 = vmatprep.subr.mxu0 0.0
      %1195 = vmatpush1.msra.mxu0 0.0
      %1196 = vmatprep.subr.mxu0 0.0
      %1197 = vmatpush1.msra.mxu0 0.0
      %1198 = vmatprep.subr.mxu0 0.0
      %1199 = vmatpush1.msra.mxu0 0.0
      %1200 = vmatprep.subr.mxu0 0.0
      %1201 = vmatpush1.msra.mxu0 0.0
      %1202 = vmatprep.subr.mxu0 0.0
      %1203 = vmatpush1.msra.mxu0 0.0
      %1204 = vmatprep.subr.mxu0 0.0
      %1205 = vmatpush1.msra.mxu0 0.0
      %1206 = vmatprep.subr.mxu0 0.0
      %1207 = vmatpush1.msra.mxu0 0.0
      %1208 = vmatprep.subr.mxu0 0.0
      %1209 = vmatpush1.msra.mxu0 0.0
      %1210 = vmatprep.subr.mxu0 0.0
      %1211 = vmatpush1.msra.mxu0 0.0
      %1212 = vmatprep.subr.mxu0 0.0
      %1213 = vmatpush1.msra.mxu0 0.0
      %1214 = vmatprep.subr.mxu0 0.0
      %1215 = vmatpush1.msra.mxu0 0.0
      %1216 = vmatprep.subr.mxu0 0.0
      %1217 = vmatpush1.msra.mxu0 0.0
      %1218 = vmatprep.subr.mxu0 0.0
      %1219 = vmatpush1.msra.mxu0 %v1183
      %1220 = vmatprep.subr.mxu0 0.0
      %1221 = vmatpush2.msra.mxu0 0.0
      %1222 = vmatprep.subr.mxu0 0.0
      %1223 = vmatpush2.msra.mxu0 0.0
      %1224 = vmatprep.subr.mxu0 0.0
      %1225 = vmatpush2.msra.mxu0 0.0
      %1226 = vmatprep.subr.mxu0 0.0
      %1227 = vmatpush2.msra.mxu0 0.0
      %1228 = vmatprep.subr.mxu0 0.0
      %1229 = vmatpush2.msra.mxu0 0.0
      %1230 = vmatprep.subr.mxu0 0.0
      %1231 = vmatpush2.msra.mxu0 0.0
      %1232 = vmatprep.subr.mxu0 0.0
      %1233 = vmatpush2.msra.mxu0 0.0
      %1234 = vmatprep.subr.mxu0 0.0
      %1235 = vmatpush2.msra.mxu0 0.0
      %1236 = vmatprep.subr.mxu0 0.0
      %1237 = vmatpush2.msra.mxu0 0.0
      %1238 = vmatprep.subr.mxu0 0.0
      %1239 = vmatpush2.msra.mxu0 0.0
      %1240 = vmatprep.subr.mxu0 0.0
      %1241 = vmatpush2.msra.mxu0 0.0
      %1242 = vmatprep.subr.mxu0 0.0
      %1243 = vmatpush2.msra.mxu0 0.0
      %1244 = vmatprep.subr.mxu0 0.0
      %1245 = vmatpush2.msra.mxu0 0.0
      %1246 = vmatprep.subr.mxu0 0.0
      %1247 = vmatpush2.msra.mxu0 0.0
      %1248 = vmatprep.subr.mxu0 0.0
      %1249 = vmatpush2.msra.mxu0 0.0
      %1250 = vmatprep.subr.mxu0 0.0
      %1251 = vmatpush2.msra.mxu0 0.0
      %1252 = vmatprep.mubr.f32.mxu0 0.0
      %1253 = vmatmul.mubr.f32.gmra.mxu0 %v1186
      %v1254 = vpop.f32.mrf.mxu0
      %v1255 = vadd.f32 0.0, %v1254
      %v1256 = vpop.f32.mrf.mxu0
      %1257 = vdwg.mxu0
      %v1259 = vsel %vm601, %v1255, 0
      %v1262 = vsel %vm933, %v596, 0
      %1264 = vmatprep.subr.mxu0 0.0
      %1265 = vmatpush1.msra.mxu0 0.0
      %1266 = vmatprep.subr.mxu0 0.0
      %1267 = vmatpush1.msra.mxu0 0.0
      %1268 = vmatprep.subr.mxu0 0.0
      %1269 = vmatpush1.msra.mxu0 0.0
      %1270 = vmatprep.subr.mxu0 0.0
      %1271 = vmatpush1.msra.mxu0 0.0
      %1272 = vmatprep.subr.mxu0 0.0
      %1273 = vmatpush1.msra.mxu0 0.0
      %1274 = vmatprep.subr.mxu0 0.0
      %1275 = vmatpush1.msra.mxu0 0.0
      %1276 = vmatprep.subr.mxu0 0.0
      %1277 = vmatpush1.msra.mxu0 0.0
      %1278 = vmatprep.subr.mxu0 0.0
      %1279 = vmatpush1.msra.mxu0 0.0
      %1280 = vmatprep.subr.mxu0 0.0
      %1281 = vmatpush1.msra.mxu0 0.0
      %1282 = vmatprep.subr.mxu0 0.0
      %1283 = vmatpush1.msra.mxu0 0.0
      %1284 = vmatprep.subr.mxu0 0.0
      %1285 = vmatpush1.msra.mxu0 0.0
      %1286 = vmatprep.subr.mxu0 0.0
      %1287 = vmatpush1.msra.mxu0 0.0
      %1288 = vmatprep.subr.mxu0 0.0
      %1289 = vmatpush1.msra.mxu0 0.0
      %1290 = vmatprep.subr.mxu0 0.0
      %1291 = vmatpush1.msra.mxu0 0.0
      %1292 = vmatprep.subr.mxu0 0.0
      %1293 = vmatpush1.msra.mxu0 %v1262
      %1294 = vmatprep.subr.mxu0 0.0
      %1295 = vmatpush1.msra.mxu0 %v595
      %1296 = vmatprep.subr.mxu0 0.0
      %1297 = vmatpush2.msra.mxu0 0.0
      %1298 = vmatprep.subr.mxu0 0.0
      %1299 = vmatpush2.msra.mxu0 0.0
      %1300 = vmatprep.subr.mxu0 0.0
      %1301 = vmatpush2.msra.mxu0 0.0
      %1302 = vmatprep.subr.mxu0 0.0
      %1303 = vmatpush2.msra.mxu0 0.0
      %1304 = vmatprep.subr.mxu0 0.0
      %1305 = vmatpush2.msra.mxu0 0.0
      %1306 = vmatprep.subr.mxu0 0.0
      %1307 = vmatpush2.msra.mxu0 0.0
      %1308 = vmatprep.subr.mxu0 0.0
      %1309 = vmatpush2.msra.mxu0 0.0
      %1310 = vmatprep.subr.mxu0 0.0
      %1311 = vmatpush2.msra.mxu0 0.0
      %1312 = vmatprep.subr.mxu0 0.0
      %1313 = vmatpush2.msra.mxu0 0.0
      %1314 = vmatprep.subr.mxu0 0.0
      %1315 = vmatpush2.msra.mxu0 0.0
      %1316 = vmatprep.subr.mxu0 0.0
      %1317 = vmatpush2.msra.mxu0 0.0
      %1318 = vmatprep.subr.mxu0 0.0
      %1319 = vmatpush2.msra.mxu0 0.0
      %1320 = vmatprep.subr.mxu0 0.0
      %1321 = vmatpush2.msra.mxu0 0.0
      %1322 = vmatprep.subr.mxu0 0.0
      %1323 = vmatpush2.msra.mxu0 0.0
      %1324 = vmatprep.subr.mxu0 0.0
      %1325 = vmatpush2.msra.mxu0 0.0
      %1326 = vmatprep.subr.mxu0 0.0
      %1327 = vmatpush2.msra.mxu0 0.0
      %1328 = vmatprep.mubr.f32.mxu0 0.0
      %1329 = vmatmul.mubr.f32.gmra.mxu0 %v1259
      %v1330 = vpop.f32.mrf.mxu0
      %v1331 = vadd.f32 0.0, %v1330
      %v1332 = vpop.f32.mrf.mxu0
      %1333 = vdwg.mxu0
      %v1334 = vadd.f32 %v1085, %v1331
      %1335 = vrot.lane.b32.xlu0 %v588, 92
      %v1336 = vpop.permute.xlu0 %1335
      %1337 = vrot.lane.b32.xlu0 %v588, 44
      %v1338 = vpop.permute.xlu0 %1337
      %v1339 = vsel %vm601, %v1336, 0
      %v1341 = vsel %vm601, %v1338, 0
      %1343 = vmatprep.subr.mxu0 0.0
      %1344 = vmatpush1.xpose.msra.mxu0 0.0
      %1345 = vmatprep.subr.mxu0 0.0
      %1346 = vmatpush1.xpose.msra.mxu0 0.0
      %1347 = vmatprep.subr.mxu0 0.0
      %1348 = vmatpush1.xpose.msra.mxu0 0.0
      %1349 = vmatprep.subr.mxu0 0.0
      %1350 = vmatpush1.xpose.msra.mxu0 0.0
      %1351 = vmatprep.subr.mxu0 0.0
      %1352 = vmatpush1.xpose.msra.mxu0 0.0
      %1353 = vmatprep.subr.mxu0 0.0
      %1354 = vmatpush1.xpose.msra.mxu0 0.0
      %1355 = vmatprep.subr.mxu0 0.0
      %1356 = vmatpush1.xpose.msra.mxu0 0.0
      %1357 = vmatprep.subr.mxu0 0.0
      %1358 = vmatpush1.xpose.msra.mxu0 0.0
      %1359 = vmatprep.subr.mxu0 0.0
      %1360 = vmatpush1.xpose.msra.mxu0 0.0
      %1361 = vmatprep.subr.mxu0 0.0
      %1362 = vmatpush1.xpose.msra.mxu0 0.0
      %1363 = vmatprep.subr.mxu0 0.0
      %1364 = vmatpush1.xpose.msra.mxu0 0.0
      %1365 = vmatprep.subr.mxu0 0.0
      %1366 = vmatpush1.xpose.msra.mxu0 0.0
      %1367 = vmatprep.subr.mxu0 0.0
      %1368 = vmatpush1.xpose.msra.mxu0 0.0
      %1369 = vmatprep.subr.mxu0 0.0
      %1370 = vmatpush1.xpose.msra.mxu0 0.0
      %1371 = vmatprep.subr.mxu0 0.0
      %1372 = vmatpush1.xpose.msra.mxu0 0.0
      %1373 = vmatprep.subr.mxu0 0.0
      %1374 = vmatpush1.xpose.msra.mxu0 %v1341
      %1375 = vmatprep.subr.mxu0 0.0
      %1376 = vmatpush2.xpose.msra.mxu0 0.0
      %1377 = vmatprep.subr.mxu0 0.0
      %1378 = vmatpush2.xpose.msra.mxu0 0.0
      %1379 = vmatprep.subr.mxu0 0.0
      %1380 = vmatpush2.xpose.msra.mxu0 0.0
      %1381 = vmatprep.subr.mxu0 0.0
      %1382 = vmatpush2.xpose.msra.mxu0 0.0
      %1383 = vmatprep.subr.mxu0 0.0
      %1384 = vmatpush2.xpose.msra.mxu0 0.0
      %1385 = vmatprep.subr.mxu0 0.0
      %1386 = vmatpush2.xpose.msra.mxu0 0.0
      %1387 = vmatprep.subr.mxu0 0.0
      %1388 = vmatpush2.xpose.msra.mxu0 0.0
      %1389 = vmatprep.subr.mxu0 0.0
      %1390 = vmatpush2.xpose.msra.mxu0 0.0
      %1391 = vmatprep.subr.mxu0 0.0
      %1392 = vmatpush2.xpose.msra.mxu0 0.0
      %1393 = vmatprep.subr.mxu0 0.0
      %1394 = vmatpush2.xpose.msra.mxu0 0.0
      %1395 = vmatprep.subr.mxu0 0.0
      %1396 = vmatpush2.xpose.msra.mxu0 0.0
      %1397 = vmatprep.subr.mxu0 0.0
      %1398 = vmatpush2.xpose.msra.mxu0 0.0
      %1399 = vmatprep.subr.mxu0 0.0
      %1400 = vmatpush2.xpose.msra.mxu0 0.0
      %1401 = vmatprep.subr.mxu0 0.0
      %1402 = vmatpush2.xpose.msra.mxu0 0.0
      %1403 = vmatprep.subr.mxu0 0.0
      %1404 = vmatpush2.xpose.msra.mxu0 0.0
      %1405 = vmatprep.subr.mxu0 0.0
      %1406 = vmatpush2.xpose.msra.mxu0 0.0
      %1407 = vmatprep.mubr.f32.mxu0 0.0
      %1408 = vmatmul.mubr.f32.gmra.mxu0 %v1339
      %v1409 = vpop.f32.mrf.mxu0
      %v1410 = vadd.f32 0.0, %v1409
      %v1411 = vpop.f32.mrf.mxu0
      %1412 = vdwg.mxu0
      %v1413 = vmul.f32 %v1410, 0.28867513
      %v1414 = vsel %vm677, %v1413, -inf
      %1415 = vmax.xlane.f32.xlu0 %v1414
      %v1416 = vpop.xlane.xlu0 %1415
      %v1417 = vsub.f32 %v1413, %v1416
      %v1418 = vmul.f32 %v1417, 1.442695
      %v1419 = vpow.pop %v1418
      %v1420 = vsel %vm677, %v1419, 0.0
      %1421 = vadd.xlane.f32.xlu0 %v1420
      %v1422 = vpop.xlane.xlu0 %1421
      %v1423 = vrcp.pop %v1422
      %v1424 = vmul.f32 %v1419, %v1423
      %1425 = vrot.lane.b32.xlu0 %v590, 124
      %v1426 = vpop.permute.xlu0 %1425
      %v1429 = vsel %vm677, %v1424, 0
      %1431 = vmatprep.subr.mxu0 0.0
      %1432 = vmatpush1.msra.mxu0 0.0
      %1433 = vmatprep.subr.mxu0 0.0
      %1434 = vmatpush1.msra.mxu0 0.0
      %1435 = vmatprep.subr.mxu0 0.0
      %1436 = vmatpush1.msra.mxu0 0.0
      %1437 = vmatprep.subr.mxu0 0.0
      %1438 = vmatpush1.msra.mxu0 0.0
      %1439 = vmatprep.subr.mxu0 0.0
      %1440 = vmatpush1.msra.mxu0 0.0
      %1441 = vmatprep.subr.mxu0 0.0
      %1442 = vmatpush1.msra.mxu0 0.0
      %1443 = vmatprep.subr.mxu0 0.0
      %1444 = vmatpush1.msra.mxu0 0.0
      %1445 = vmatprep.subr.mxu0 0.0
      %1446 = vmatpush1.msra.mxu0 0.0
      %1447 = vmatprep.subr.mxu0 0.0
      %1448 = vmatpush1.msra.mxu0 0.0
      %1449 = vmatprep.subr.mxu0 0.0
      %1450 = vmatpush1.msra.mxu0 0.0
      %1451 = vmatprep.subr.mxu0 0.0
      %1452 = vmatpush1.msra.mxu0 0.0
      %1453 = vmatprep.subr.mxu0 0.0
      %1454 = vmatpush1.msra.mxu0 0.0
      %1455 = vmatprep.subr.mxu0 0.0
      %1456 = vmatpush1.msra.mxu0 0.0
      %1457 = vmatprep.subr.mxu0 0.0
      %1458 = vmatpush1.msra.mxu0 0.0
      %1459 = vmatprep.subr.mxu0 0.0
      %1460 = vmatpush1.msra.mxu0 0.0
      %1461 = vmatprep.subr.mxu0 0.0
      %1462 = vmatpush1.msra.mxu0 %v1426
      %1463 = vmatprep.subr.mxu0 0.0
      %1464 = vmatpush2.msra.mxu0 0.0
      %1465 = vmatprep.subr.mxu0 0.0
      %1466 = vmatpush2.msra.mxu0 0.0
      %1467 = vmatprep.subr.mxu0 0.0
      %1468 = vmatpush2.msra.mxu0 0.0
      %1469 = vmatprep.subr.mxu0 0.0
      %1470 = vmatpush2.msra.mxu0 0.0
      %1471 = vmatprep.subr.mxu0 0.0
      %1472 = vmatpush2.msra.mxu0 0.0
      %1473 = vmatprep.subr.mxu0 0.0
      %1474 = vmatpush2.msra.mxu0 0.0
      %1475 = vmatprep.subr.mxu0 0.0
      %1476 = vmatpush2.msra.mxu0 0.0
      %1477 = vmatprep.subr.mxu0 0.0
      %1478 = vmatpush2.msra.mxu0 0.0
      %1479 = vmatprep.subr.mxu0 0.0
      %1480 = vmatpush2.msra.mxu0 0.0
      %1481 = vmatprep.subr.mxu0 0.0
      %1482 = vmatpush2.msra.mxu0 0.0
      %1483 = vmatprep.subr.mxu0 0.0
      %1484 = vmatpush2.msra.mxu0 0.0
      %1485 = vmatprep.subr.mxu0 0.0
      %1486 = vmatpush2.msra.mxu0 0.0
      %1487 = vmatprep.subr.mxu0 0.0
      %1488 = vmatpush2.msra.mxu0 0.0
      %1489 = vmatprep.subr.mxu0 0.0
      %1490 = vmatpush2.msra.mxu0 0.0
      %1491 = vmatprep.subr.mxu0 0.0
      %1492 = vmatpush2.msra.mxu0 0.0
      %1493 = vmatprep.subr.mxu0 0.0
      %1494 = vmatpush2.msra.mxu0 0.0
      %1495 = vmatprep.mubr.f32.mxu0 0.0
      %1496 = vmatmul.mubr.f32.gmra.mxu0 %v1429
      %v1497 = vpop.f32.mrf.mxu0
      %v1498 = vadd.f32 0.0, %v1497
      %v1499 = vpop.f32.mrf.mxu0
      %1500 = vdwg.mxu0
      %v1502 = vrot.slane %v596, 4
      %v1503 = vrot.slane %v597, 4
      %v1504 = vsel %vm933, %v1502, %v1503
      %v1507 = vsel %vm601, %v1498, 0
      %v1509 = vsel %vm933, %v1503, 0
      %1511 = vmatprep.subr.mxu0 0.0
      %1512 = vmatpush1.msra.mxu0 0.0
      %1513 = vmatprep.subr.mxu0 0.0
      %1514 = vmatpush1.msra.mxu0 0.0
      %1515 = vmatprep.subr.mxu0 0.0
      %1516 = vmatpush1.msra.mxu0 0.0
      %1517 = vmatprep.subr.mxu0 0.0
      %1518 = vmatpush1.msra.mxu0 0.0
      %1519 = vmatprep.subr.mxu0 0.0
      %1520 = vmatpush1.msra.mxu0 0.0
      %1521 = vmatprep.subr.mxu0 0.0
      %1522 = vmatpush1.msra.mxu0 0.0
      %1523 = vmatprep.subr.mxu0 0.0
      %1524 = vmatpush1.msra.mxu0 0.0
      %1525 = vmatprep.subr.mxu0 0.0
      %1526 = vmatpush1.msra.mxu0 0.0
      %1527 = vmatprep.subr.mxu0 0.0
      %1528 = vmatpush1.msra.mxu0 0.0
      %1529 = vmatprep.subr.mxu0 0.0
      %1530 = vmatpush1.msra.mxu0 0.0
      %1531 = vmatprep.subr.mxu0 0.0
      %1532 = vmatpush1.msra.mxu0 0.0
      %1533 = vmatprep.subr.mxu0 0.0
      %1534 = vmatpush1.msra.mxu0 0.0
      %1535 = vmatprep.subr.mxu0 0.0
      %1536 = vmatpush1.msra.mxu0 0.0
      %1537 = vmatprep.subr.mxu0 0.0
      %1538 = vmatpush1.msra.mxu0 0.0
      %1539 = vmatprep.subr.mxu0 0.0
      %1540 = vmatpush1.msra.mxu0 %v1509
      %1541 = vmatprep.subr.mxu0 0.0
      %1542 = vmatpush1.msra.mxu0 %v1504
      %1543 = vmatprep.subr.mxu0 0.0
      %1544 = vmatpush2.msra.mxu0 0.0
      %1545 = vmatprep.subr.mxu0 0.0
      %1546 = vmatpush2.msra.mxu0 0.0
      %1547 = vmatprep.subr.mxu0 0.0
      %1548 = vmatpush2.msra.mxu0 0.0
      %1549 = vmatprep.subr.mxu0 0.0
      %1550 = vmatpush2.msra.mxu0 0.0
      %1551 = vmatprep.subr.mxu0 0.0
      %1552 = vmatpush2.msra.mxu0 0.0
      %1553 = vmatprep.subr.mxu0 0.0
      %1554 = vmatpush2.msra.mxu0 0.0
      %1555 = vmatprep.subr.mxu0 0.0
      %1556 = vmatpush2.msra.mxu0 0.0
      %1557 = vmatprep.subr.mxu0 0.0
      %1558 = vmatpush2.msra.mxu0 0.0
      %1559 = vmatprep.subr.mxu0 0.0
      %1560 = vmatpush2.msra.mxu0 0.0
      %1561 = vmatprep.subr.mxu0 0.0
      %1562 = vmatpush2.msra.mxu0 0.0
      %1563 = vmatprep.subr.mxu0 0.0
      %1564 = vmatpush2.msra.mxu0 0.0
      %1565 = vmatprep.subr.mxu0 0.0
      %1566 = vmatpush2.msra.mxu0 0.0
      %1567 = vmatprep.subr.mxu0 0.0
      %1568 = vmatpush2.msra.mxu0 0.0
      %1569 = vmatprep.subr.mxu0 0.0
      %1570 = vmatpush2.msra.mxu0 0.0
      %1571 = vmatprep.subr.mxu0 0.0
      %1572 = vmatpush2.msra.mxu0 0.0
      %1573 = vmatprep.subr.mxu0 0.0
      %1574 = vmatpush2.msra.mxu0 0.0
      %1575 = vmatprep.mubr.f32.mxu0 0.0
      %1576 = vmatmul.mubr.f32.gmra.mxu0 %v1507
      %v1577 = vpop.f32.mrf.mxu0
      %v1578 = vadd.f32 0.0, %v1577
      %v1579 = vpop.f32.mrf.mxu0
      %1580 = vdwg.mxu0
      %v1581 = vadd.f32 %v1334, %v1578
      %v1582 = vld [vmem:[%s4] sm:$0x1]
      %v1584 = vlaneseq
      %v1585 = vshrl.u32 %v1584, 7
      %v1586 = vsub.s32 0, %v1585
      %v1587 = vrot.slane %v1582, %v1586
      %v1589 = vadd.f32 %v1581, %v1587
      %v1590 = vadd.f32 %v1589, %v492
      %v1591 = vsel %vm517, %v1590, 0.0
      %1592 = vadd.xlane.f32.xlu0 %v1591
      %v1593 = vpop.xlane.xlu0 %1592
      %v1594 = vrcp.pop 48.0
      %v1595 = vmul.f32 %v1593, %v1594
      %v1596 = vsub.f32 %v1590, %v1595
      %v1597 = vmul.f32 %v1596, %v1596
      %v1598 = vsel %vm517, %v1597, 0.0
      %1599 = vadd.xlane.f32.xlu0 %v1598
      %v1600 = vpop.xlane.xlu0 %1599
      %v1601 = vmul.f32 %v1600, %v1594
      %v1602 = vadd.f32 %v1601, 1e-06
      %v1603 = vrsqrt.pop %v1602
      %v1604 = vmul.f32 %v1596, %v1603
      %v1605 = vld [vmem:[%s478] sm:$0x1]
      %v1607 = vlaneseq
      %v1608 = vshrl.u32 %v1607, 7
      %v1609 = vsub.s32 0, %v1608
      %v1610 = vrot.slane %v1605, %v1609
      %v1612 = vmul.f32 %v1604, %v1610
      %v1613 = vld [vmem:[%s481] sm:$0x1]
      %v1615 = vlaneseq
      %v1616 = vshrl.u32 %v1615, 7
      %v1617 = vsub.s32 0, %v1616
      %v1618 = vrot.slane %v1613, %v1617
      %v1620 = vadd.f32 %v1612, %v1618
      %v1621 = vld [vmem:[%s5] sm:$0xff]
      %v1622 = vld [vmem:[%s5 + $0x8] sm:$0xff]
      %v1623 = vld [vmem:[%s5 + $0x10] sm:$0xff]
      %v1624 = vld [vmem:[%s5 + $0x18] sm:$0xff]
      %v1625 = vld [vmem:[%s5 + $0x20] sm:$0xff]
      %v1626 = vld [vmem:[%s5 + $0x28] sm:$0xff]
      %v1627 = vld [vmem:[%s6] sm:$0x1]
      %v1629 = vlaneseq
      %v1630 = vshrl.u32 %v1629, 7
      %v1631 = vsub.s32 0, %v1630
      %v1632 = vrot.slane %v1627, %v1631
      %v1635 = vsel %vm517, %v1620, 0
      %1637 = vmatprep.subr.mxu0 0.0
      %1638 = vmatpush1.msra.mxu0 0.0
      %1639 = vmatprep.subr.mxu0 0.0
      %1640 = vmatpush1.msra.mxu0 0.0
      %1641 = vmatprep.subr.mxu0 0.0
      %1642 = vmatpush1.msra.mxu0 0.0
      %1643 = vmatprep.subr.mxu0 0.0
      %1644 = vmatpush1.msra.mxu0 0.0
      %1645 = vmatprep.subr.mxu0 0.0
      %1646 = vmatpush1.msra.mxu0 0.0
      %1647 = vmatprep.subr.mxu0 0.0
      %1648 = vmatpush1.msra.mxu0 0.0
      %1649 = vmatprep.subr.mxu0 0.0
      %1650 = vmatpush1.msra.mxu0 0.0
      %1651 = vmatprep.subr.mxu0 0.0
      %1652 = vmatpush1.msra.mxu0 0.0
      %1653 = vmatprep.subr.mxu0 0.0
      %1654 = vmatpush1.msra.mxu0 0.0
      %1655 = vmatprep.subr.mxu0 0.0
      %1656 = vmatpush1.msra.mxu0 0.0
      %1657 = vmatprep.subr.mxu0 0.0
      %1658 = vmatpush1.msra.mxu0 %v1626
      %1659 = vmatprep.subr.mxu0 0.0
      %1660 = vmatpush1.msra.mxu0 %v1625
      %1661 = vmatprep.subr.mxu0 0.0
      %1662 = vmatpush1.msra.mxu0 %v1624
      %1663 = vmatprep.subr.mxu0 0.0
      %1664 = vmatpush1.msra.mxu0 %v1623
      %1665 = vmatprep.subr.mxu0 0.0
      %1666 = vmatpush1.msra.mxu0 %v1622
      %1667 = vmatprep.subr.mxu0 0.0
      %1668 = vmatpush1.msra.mxu0 %v1621
      %1669 = vmatprep.subr.mxu0 0.0
      %1670 = vmatpush2.msra.mxu0 0.0
      %1671 = vmatprep.subr.mxu0 0.0
      %1672 = vmatpush2.msra.mxu0 0.0
      %1673 = vmatprep.subr.mxu0 0.0
      %1674 = vmatpush2.msra.mxu0 0.0
      %1675 = vmatprep.subr.mxu0 0.0
      %1676 = vmatpush2.msra.mxu0 0.0
      %1677 = vmatprep.subr.mxu0 0.0
      %1678 = vmatpush2.msra.mxu0 0.0
      %1679 = vmatprep.subr.mxu0 0.0
      %1680 = vmatpush2.msra.mxu0 0.0
      %1681 = vmatprep.subr.mxu0 0.0
      %1682 = vmatpush2.msra.mxu0 0.0
      %1683 = vmatprep.subr.mxu0 0.0
      %1684 = vmatpush2.msra.mxu0 0.0
      %1685 = vmatprep.subr.mxu0 0.0
      %1686 = vmatpush2.msra.mxu0 0.0
      %1687 = vmatprep.subr.mxu0 0.0
      %1688 = vmatpush2.msra.mxu0 0.0
      %1689 = vmatprep.subr.mxu0 0.0
      %1690 = vmatpush2.msra.mxu0 0.0
      %1691 = vmatprep.subr.mxu0 0.0
      %1692 = vmatpush2.msra.mxu0 0.0
      %1693 = vmatprep.subr.mxu0 0.0
      %1694 = vmatpush2.msra.mxu0 0.0
      %1695 = vmatprep.subr.mxu0 0.0
      %1696 = vmatpush2.msra.mxu0 0.0
      %1697 = vmatprep.subr.mxu0 0.0
      %1698 = vmatpush2.msra.mxu0 0.0
      %1699 = vmatprep.subr.mxu0 0.0
      %1700 = vmatpush2.msra.mxu0 0.0
      %1701 = vmatprep.mubr.f32.mxu0 0.0
      %1702 = vmatmul.mubr.f32.gmra.mxu0 %v1635
      %v1703 = vpop.f32.mrf.mxu0
      %v1704 = vadd.f32 %v1632, %v1703
      %v1705 = vpop.f32.mrf.mxu0
      %1706 = vdwg.mxu0
      %v1707 = vmax.f32 %v1704, 0.0
      %v1708 = vld [vmem:[%s7] sm:$0xff]
      %v1709 = vld [vmem:[%s7 + $0x8] sm:$0xff]
      %v1710 = vld [vmem:[%s7 + $0x10] sm:$0xff]
      %v1711 = vld [vmem:[%s7 + $0x18] sm:$0xff]
      %v1712 = vld [vmem:[%s7 + $0x20] sm:$0xff]
      %v1713 = vld [vmem:[%s7 + $0x28] sm:$0xff]
      %v1714 = vld [vmem:[%s7 + $0x30] sm:$0xff]
      %v1715 = vld [vmem:[%s7 + $0x38] sm:$0xff]
      %v1716 = vld [vmem:[%s7 + $0x40] sm:$0xff]
      %v1717 = vld [vmem:[%s7 + $0x48] sm:$0xff]
      %v1718 = vld [vmem:[%s7 + $0x50] sm:$0xff]
      %v1719 = vld [vmem:[%s7 + $0x58] sm:$0xff]
      %v1720 = vld [vmem:[%s8] sm:$0x1]
      %v1722 = vlaneseq
      %v1723 = vshrl.u32 %v1722, 7
      %v1724 = vsub.s32 0, %v1723
      %v1725 = vrot.slane %v1720, %v1724
      %vm1727 = vcmask 785408
      %v1729 = vsel %vm1727, %v1707, 0
      %1731 = vmatprep.subr.mxu0 0.0
      %1732 = vmatpush1.msra.mxu0 0.0
      %1733 = vmatprep.subr.mxu0 0.0
      %1734 = vmatpush1.msra.mxu0 0.0
      %1735 = vmatprep.subr.mxu0 0.0
      %1736 = vmatpush1.msra.mxu0 0.0
      %1737 = vmatprep.subr.mxu0 0.0
      %1738 = vmatpush1.msra.mxu0 0.0
      %1739 = vmatprep.subr.mxu0 0.0
      %1740 = vmatpush1.msra.mxu0 %v1719
      %1741 = vmatprep.subr.mxu0 0.0
      %1742 = vmatpush1.msra.mxu0 %v1718
      %1743 = vmatprep.subr.mxu0 0.0
      %1744 = vmatpush1.msra.mxu0 %v1717
      %1745 = vmatprep.subr.mxu0 0.0
      %1746 = vmatpush1.msra.mxu0 %v1716
      %1747 = vmatprep.subr.mxu0 0.0
      %1748 = vmatpush1.msra.mxu0 %v1715
      %1749 = vmatprep.subr.mxu0 0.0
      %1750 = vmatpush1.msra.mxu0 %v1714
      %1751 = vmatprep.subr.mxu0 0.0
      %1752 = vmatpush1.msra.mxu0 %v1713
      %1753 = vmatprep.subr.mxu0 0.0
      %1754 = vmatpush1.msra.mxu0 %v1712
      %1755 = vmatprep.subr.mxu0 0.0
      %1756 = vmatpush1.msra.mxu0 %v1711
      %1757 = vmatprep.subr.mxu0 0.0
      %1758 = vmatpush1.msra.mxu0 %v1710
      %1759 = vmatprep.subr.mxu0 0.0
      %1760 = vmatpush1.msra.mxu0 %v1709
      %1761 = vmatprep.subr.mxu0 0.0
      %1762 = vmatpush1.msra.mxu0 %v1708
      %1763 = vmatprep.subr.mxu0 0.0
      %1764 = vmatpush2.msra.mxu0 0.0
      %1765 = vmatprep.subr.mxu0 0.0
      %1766 = vmatpush2.msra.mxu0 0.0
      %1767 = vmatprep.subr.mxu0 0.0
      %1768 = vmatpush2.msra.mxu0 0.0
      %1769 = vmatprep.subr.mxu0 0.0
      %1770 = vmatpush2.msra.mxu0 0.0
      %1771 = vmatprep.subr.mxu0 0.0
      %1772 = vmatpush2.msra.mxu0 0.0
      %1773 = vmatprep.subr.mxu0 0.0
      %1774 = vmatpush2.msra.mxu0 0.0
      %1775 = vmatprep.subr.mxu0 0.0
      %1776 = vmatpush2.msra.mxu0 0.0
      %1777 = vmatprep.subr.mxu0 0.0
      %1778 = vmatpush2.msra.mxu0 0.0
      %1779 = vmatprep.subr.mxu0 0.0
      %1780 = vmatpush2.msra.mxu0 0.0
      %1781 = vmatprep.subr.mxu0 0.0
      %1782 = vmatpush2.msra.mxu0 0.0
      %1783 = vmatprep.subr.mxu0 0.0
      %1784 = vmatpush2.msra.mxu0 0.0
      %1785 = vmatprep.subr.mxu0 0.0
      %1786 = vmatpush2.msra.mxu0 0.0
      %1787 = vmatprep.subr.mxu0 0.0
      %1788 = vmatpush2.msra.mxu0 0.0
      %1789 = vmatprep.subr.mxu0 0.0
      %1790 = vmatpush2.msra.mxu0 0.0
      %1791 = vmatprep.subr.mxu0 0.0
      %1792 = vmatpush2.msra.mxu0 0.0
      %1793 = vmatprep.subr.mxu0 0.0
      %1794 = vmatpush2.msra.mxu0 0.0
      %1795 = vmatprep.mubr.f32.mxu0 0.0
      %1796 = vmatmul.mubr.f32.gmra.mxu0 %v1729
      %v1797 = vpop.f32.mrf.mxu0
      %v1798 = vadd.f32 %v1725, %v1797
      %v1799 = vpop.f32.mrf.mxu0
      %1800 = vdwg.mxu0
      %v1801 = vadd.f32 %v1798, %v1620
      %v1802 = vsel %vm517, %v1801, 0.0
      %1803 = vadd.xlane.f32.xlu0 %v1802
      %v1804 = vpop.xlane.xlu0 %1803
      %v1805 = vmul.f32 %v1804, %v1594
      %v1806 = vsub.f32 %v1801, %v1805
      %v1807 = vmul.f32 %v1806, %v1806
      %v1808 = vsel %vm517, %v1807, 0.0
      %1809 = vadd.xlane.f32.xlu0 %v1808
      %v1810 = vpop.xlane.xlu0 %1809
      %v1811 = vmul.f32 %v1810, %v1594
      %v1812 = vadd.f32 %v1811, 1e-06
      %v1813 = vrsqrt.pop %v1812
      %v1814 = vmul.f32 %v1806, %v1813
      %v1815 = vld [vmem:[%s484] sm:$0x1]
      %v1817 = vlaneseq
      %v1818 = vshrl.u32 %v1817, 7
      %v1819 = vsub.s32 0, %v1818
      %v1820 = vrot.slane %v1815, %v1819
      %v1822 = vmul.f32 %v1814, %v1820
      %v1823 = vld [vmem:[%s487] sm:$0x1]
      %v1825 = vlaneseq
      %v1826 = vshrl.u32 %v1825, 7
      %v1827 = vsub.s32 0, %v1826
      %v1828 = vrot.slane %v1823, %v1827
      %v1830 = vadd.f32 %v1822, %v1828
      %1831 = vst.msk [vmem:[%s491] sm:$0xff] %vm517, %v1830
      %p1832 = scmp.lt.s32.totalorder %s24, 1
      %s1833 = scalar_select %p1832, %s24, 1
      %s1834 = smul.addr %s1833, 8
      %s1835 = scalar_lea.vmem %s13, %s1834
      // Predicated region
      $region73: #{dance_rollout.49} parent=71 // pred_check
        %p1836 = pneg %p340
      $region74: #{dance_rollout.49} parent=71 // pred_check_branch
        %1838 = sbr.rel (%p1836) target = $region76
      $region75: #{dance_rollout.49} parent=71 // pred_region
        _
      $region76: #{dance_rollout.49} parent=71 // pred_fallthru
        _
    $region72: #{dance_rollout.49} parent=5 // pred_fallthru
      _
    %p1839 = scmp.le.s32.totalorder 2, %s19
    // Predicated region
    $region77: #{dance_rollout.49} parent=5 // pred_check
      %p1840 = pneg %p1839
    $region78: #{dance_rollout.49} parent=5 // pred_check_branch
      %1842 = sbr.rel (%p1840) target = $region80
    $region79: #{dance_rollout.49} parent=5 // pred_region
      %s1843 = ssub.s32 %s19, 2
      // Predicated region
      $region81: #{dance_rollout.49} parent=79 // pred_check
        %p1844 = pneg %p346
      $region82: #{dance_rollout.49} parent=79 // pred_check_branch
        %1846 = sbr.rel (%p1844) target = $region84
      $region83: #{dance_rollout.49} parent=79 // pred_region
        %p1847 = scmp.lt.s32.totalorder %s25, 1
        %s1848 = scalar_select %p1847, %s25, 1
        %s1849 = smul.addr %s1848, 8
        %s1850 = scalar_lea.vmem %s13, %s1849
      $region84: #{dance_rollout.49} parent=79 // pred_fallthru
        _
    $region80: #{dance_rollout.49} parent=5 // pred_fallthru
      _
  $region6: #{dance_rollout.49} parent=0 // loop_footer
    %s23 = sadd.s32 1, %s19
  $region7: #{dance_rollout.49} parent=0 // loop_footer_branch
    %18 = sbr.rel target = $region3
  $region8: #{dance_rollout.49} parent=0 // loop_exit
    _

// kernel: dance_rollout.52
$region0: #{dance_rollout.52}
  #allocation0 [shape = 'u32[]', space=smem, size = 0x4, offset = 0x4, fixed_abs, tag = 'smem constant byte address 0x4 - core index']
  #allocation1 [shape = 'u32[144,128]{1,0:T(1,128)}', space=vmem, size = 0x12000, scoped, tag = 'internal scratch']
  %s0 = inlined_call_operand.vmem [shape: f32[16,32], index: 0, kind: input, shape index: {}]
  %s1 = inlined_call_operand.vmem [shape: f32[32,64], index: 1, kind: input, shape index: {}]
  %s2 = inlined_call_operand.vmem [shape: f32[1,64], index: 2, kind: input, shape index: {}]
  %s3 = inlined_call_operand.vmem [shape: f32[16,64], index: 3, kind: output, shape index: {}]
  %s4 = sld [smem:[#allocation0]]
  $region22: #{dance_rollout.52} parent=0
    _
  %s6 = ssub.s32 1, %s4
  %s7 = scalar_select 0, %s6, %s4
  // Predicated region
  $region2: #{dance_rollout.52} parent=0 // pred_check
    _
  $region3: #{dance_rollout.52} parent=0 // pred_check_branch
    %9 = sbr.rel (0) target = $region5
  $region4: #{dance_rollout.52} parent=0 // pred_region
    _
  $region5: #{dance_rollout.52} parent=0 // pred_fallthru
    _
  // Predicated region
  $region6: #{dance_rollout.52} parent=0 // pred_check
    _
  $region7: #{dance_rollout.52} parent=0 // pred_check_branch
    %11 = sbr.rel (0) target = $region9
  $region8: #{dance_rollout.52} parent=0 // pred_region
    _
  $region9: #{dance_rollout.52} parent=0 // pred_fallthru
    _
  // Predicated region
  $region10: #{dance_rollout.52} parent=0 // pred_check
    _
  $region11: #{dance_rollout.52} parent=0 // pred_check_branch
    %13 = sbr.rel (0) target = $region13
  $region12: #{dance_rollout.52} parent=0 // pred_region
    _
  $region13: #{dance_rollout.52} parent=0 // pred_fallthru
    _
  %v14 = vld [vmem:[%s0] sm:$0xff]
  %v15 = vld [vmem:[%s0 + $0x8] sm:$0xff]
  %v16 = vld [vmem:[%s1] sm:$0xff]
  %v17 = vld [vmem:[%s1 + $0x8] sm:$0xff]
  %v18 = vld [vmem:[%s1 + $0x10] sm:$0xff]
  %v19 = vld [vmem:[%s1 + $0x18] sm:$0xff]
  %v20 = vld [vmem:[%s2] sm:$0x1]
  %v22 = vlaneseq
  %v23 = vshrl.u32 %v22, 7
  %v24 = vsub.s32 0, %v23
  %v25 = vrot.slane %v20, %v24
  %vm27 = vcmask 261120
  %v29 = vsel %vm27, %v14, 0
  %v32 = vsel %vm27, %v15, 0
  %34 = vmatprep.subr.mxu0 0.0
  %35 = vmatpush1.msra.mxu0 0.0
  %36 = vmatprep.subr.mxu0 0.0
  %37 = vmatpush1.msra.mxu0 0.0
  %38 = vmatprep.subr.mxu0 0.0
  %39 = vmatpush1.msra.mxu0 0.0
  %40 = vmatprep.subr.mxu0 0.0
  %41 = vmatpush1.msra.mxu0 0.0
  %42 = vmatprep.subr.mxu0 0.0
  %43 = vmatpush1.msra.mxu0 0.0
  %44 = vmatprep.subr.mxu0 0.0
  %45 = vmatpush1.msra.mxu0 0.0
  %46 = vmatprep.subr.mxu0 0.0
  %47 = vmatpush1.msra.mxu0 0.0
  %48 = vmatprep.subr.mxu0 0.0
  %49 = vmatpush1.msra.mxu0 0.0
  %50 = vmatprep.subr.mxu0 0.0
  %51 = vmatpush1.msra.mxu0 0.0
  %52 = vmatprep.subr.mxu0 0.0
  %53 = vmatpush1.msra.mxu0 0.0
  %54 = vmatprep.subr.mxu0 0.0
  %55 = vmatpush1.msra.mxu0 0.0
  %56 = vmatprep.subr.mxu0 0.0
  %57 = vmatpush1.msra.mxu0 0.0
  %58 = vmatprep.subr.mxu0 0.0
  %59 = vmatpush1.msra.mxu0 %v19
  %60 = vmatprep.subr.mxu0 0.0
  %61 = vmatpush1.msra.mxu0 %v18
  %62 = vmatprep.subr.mxu0 0.0
  %63 = vmatpush1.msra.mxu0 %v17
  %64 = vmatprep.subr.mxu0 0.0
  %65 = vmatpush1.msra.mxu0 %v16
  %66 = vmatprep.subr.mxu0 0.0
  %67 = vmatpush2.msra.mxu0 0.0
  %68 = vmatprep.subr.mxu0 0.0
  %69 = vmatpush2.msra.mxu0 0.0
  %70 = vmatprep.subr.mxu0 0.0
  %71 = vmatpush2.msra.mxu0 0.0
  %72 = vmatprep.subr.mxu0 0.0
  %73 = vmatpush2.msra.mxu0 0.0
  %74 = vmatprep.subr.mxu0 0.0
  %75 = vmatpush2.msra.mxu0 0.0
  %76 = vmatprep.subr.mxu0 0.0
  %77 = vmatpush2.msra.mxu0 0.0
  %78 = vmatprep.subr.mxu0 0.0
  %79 = vmatpush2.msra.mxu0 0.0
  %80 = vmatprep.subr.mxu0 0.0
  %81 = vmatpush2.msra.mxu0 0.0
  %82 = vmatprep.subr.mxu0 0.0
  %83 = vmatpush2.msra.mxu0 0.0
  %84 = vmatprep.subr.mxu0 0.0
  %85 = vmatpush2.msra.mxu0 0.0
  %86 = vmatprep.subr.mxu0 0.0
  %87 = vmatpush2.msra.mxu0 0.0
  %88 = vmatprep.subr.mxu0 0.0
  %89 = vmatpush2.msra.mxu0 0.0
  %90 = vmatprep.subr.mxu0 0.0
  %91 = vmatpush2.msra.mxu0 0.0
  %92 = vmatprep.subr.mxu0 0.0
  %93 = vmatpush2.msra.mxu0 0.0
  %94 = vmatprep.subr.mxu0 0.0
  %95 = vmatpush2.msra.mxu0 0.0
  %96 = vmatprep.subr.mxu0 0.0
  %97 = vmatpush2.msra.mxu0 0.0
  %98 = vmatprep.mubr.f32.mxu0 0.0
  %99 = vmatmul.mubr.f32.gmra.mxu0 %v29
  %v100 = vpop.f32.mrf.mxu0
  %v101 = vadd.f32 %v25, %v100
  %v102 = vpop.f32.mrf.mxu0
  %103 = vmatprep.mubr.f32.mxu0 0.0
  %104 = vmatmul.mubr.f32.gmra.mxu0 %v32
  %v105 = vpop.f32.mrf.mxu0
  %v106 = vadd.f32 %v25, %v105
  %v107 = vpop.f32.mrf.mxu0
  %108 = vdwg.mxu0
  %vm109 = vcmask 523264
  %110 = vst.msk [vmem:[%s3] sm:$0xff] %vm109, %v101
  %111 = vst.msk [vmem:[%s3 + $0x8] sm:$0xff] %vm109, %v106
  // Predicated region
  $region14: #{dance_rollout.52} parent=0 // pred_check
    _
  $region15: #{dance_rollout.52} parent=0 // pred_check_branch
    %113 = sbr.rel (0) target = $region17
  $region16: #{dance_rollout.52} parent=0 // pred_region
    _
  $region17: #{dance_rollout.52} parent=0 // pred_fallthru
    _
  // Predicated region
  $region18: #{dance_rollout.52} parent=0 // pred_check
    _
  $region19: #{dance_rollout.52} parent=0 // pred_check_branch
    %115 = sbr.rel (0) target = $region21
  $region20: #{dance_rollout.52} parent=0 // pred_region
    _
  $region21: #{dance_rollout.52} parent=0 // pred_fallthru
    _

// kernel: dance_rollout.41
$region0: #{dance_rollout.41}
  #allocation0 [shape = 'u32[]', space=smem, size = 0x4, offset = 0x4, fixed_abs, tag = 'smem constant byte address 0x4 - core index']
  #allocation1 [shape = 'u32[144,128]{1,0:T(1,128)}', space=vmem, size = 0x12000, scoped, tag = 'internal scratch']
  %s0 = inlined_call_operand.vmem [shape: f32[2,40,64], index: 0, kind: input, shape index: {}]
  %s1 = inlined_call_operand.vmem [shape: f32[64,192], index: 1, kind: input, shape index: {}]
  %s2 = inlined_call_operand.vmem [shape: f32[1,192], index: 2, kind: input, shape index: {}]
  %s3 = inlined_call_operand.vmem [shape: f32[64,64], index: 3, kind: input, shape index: {}]
  %s4 = inlined_call_operand.vmem [shape: f32[1,64], index: 4, kind: input, shape index: {}]
  %s5 = inlined_call_operand.vmem [shape: f32[64,128], index: 5, kind: input, shape index: {}]
  %s6 = inlined_call_operand.vmem [shape: f32[1,128], index: 6, kind: input, shape index: {}]
  %s7 = inlined_call_operand.vmem [shape: f32[128,64], index: 7, kind: input, shape index: {}]
  %s8 = inlined_call_operand.vmem [shape: f32[1,64], index: 8, kind: input, shape index: {}]
  %s9 = inlined_call_operand.vmem [shape: f32[2,1,64], index: 9, kind: input, shape index: {}]
  %s10 = inlined_call_operand.vmem [shape: f32[2,1,64], index: 10, kind: input, shape index: {}]
  %s11 = inlined_call_operand.vmem [shape: f32[2,1,64], index: 11, kind: input, shape index: {}]
  %s12 = inlined_call_operand.vmem [shape: f32[2,1,64], index: 12, kind: input, shape index: {}]
  %s13 = inlined_call_operand.vmem [shape: f32[2,40,64], index: 13, kind: output, shape index: {}]
  %s14 = sld [smem:[#allocation0]]
  $region85: #{dance_rollout.41} parent=0
    _
  %s16 = ssub.s32 1, %s14
  %s17 = scalar_select 0, %s16, %s14
  loop: start=0, step=1, limit=4
  $region2: #{dance_rollout.41} parent=0 // loop_pre_header
    _
  $region3: #{dance_rollout.41} parent=0 // loop_header
    %s19 = sphi 0, %s23
    %p20 = scmp.ge.s32.totalorder %s19, 4
    %s29 = sphi 0, %s31
    %s32 = sphi 0, %s29
    %s33 = sphi 0, %s32
    %s49 = sphi 0, %s33
    %s53 = sphi 0, %s53
    %s55 = sphi 0, %s53
    %s56 = sphi 0, %s55
    %s70 = sphi 0, %s56
    %s74 = sphi 0, %s74
    %s76 = sphi 0, %s74
    %s77 = sphi 0, %s76
    %s91 = sphi 0, %s77
    %s95 = sphi 0, %s95
    %s97 = sphi 0, %s95
    %s98 = sphi 0, %s97
    %s112 = sphi 0, %s98
    %s116 = sphi 0, %s116
    %s118 = sphi 0, %s116
    %s119 = sphi 0, %s118
    %s133 = sphi 0, %s119
    %s137 = sphi 0, %s137
    %s139 = sphi 0, %s137
    %s140 = sphi 0, %s139
    %s154 = sphi 0, %s140
    %s158 = sphi 0, %s158
    %s160 = sphi 0, %s158
    %s161 = sphi 0, %s160
    %s175 = sphi 0, %s161
    %s179 = sphi 0, %s179
    %s181 = sphi 0, %s179
    %s182 = sphi 0, %s181
    %s196 = sphi 0, %s182
    %s200 = sphi 0, %s200
    %s202 = sphi 0, %s200
    %s203 = sphi 0, %s202
    %s217 = sphi 0, %s203
    %s223 = sphi 0, %s225
    %s226 = sphi 0, %s223
    %s227 = sphi 0, %s226
    %s243 = sphi 0, %s227
    %s249 = sphi 0, %s251
    %s252 = sphi 0, %s249
    %s253 = sphi 0, %s252
    %s269 = sphi 0, %s253
    %s275 = sphi 0, %s277
    %s278 = sphi 0, %s275
    %s279 = sphi 0, %s278
    %s295 = sphi 0, %s279
    %s301 = sphi 0, %s303
    %s304 = sphi 0, %s301
    %s305 = sphi 0, %s304
    %s321 = sphi 0, %s305
    %s327 = sphi 0, %s329
    %s330 = sphi 0, %s327
    %s331 = sphi 0, %s330
    %s347 = sphi 0, %s331
  $region4: #{dance_rollout.41} parent=0 // loop_header_branch
    %22 = sbr.rel (%p20) target = $region8
  $region5: #{dance_rollout.41} parent=0 // loop_body
    %s24 = ssub.s32 %s19, 1
    %s25 = ssub.s32 %s19, 2
    %s26 = sadd.s32 %s19, 1
    %s27 = ssub.s32 %s19, %s26
    %p28 = scmp.eq.s32.totalorder %s27, 0
    %s30 = sadd.s32 %s29, 1
    %s31 = scalar_select %p28, %s29, %s30
    %p34 = pneg %p28
    %p35 = scmp.eq.s32.totalorder %s19, 1
    %p36 = por %p34, %p35
    %p37 = scmp.ne.s32.totalorder %s29, %s32
    %p38 = scmp.eq.s32.totalorder %s19, 0
    %p39 = por %p37, %p38
    %p40 = scmp.ne.s32.totalorder %s29, %s32
    %p41 = scmp.eq.s32.totalorder %s24, 1
    %p42 = por %p40, %p41
    %p43 = scmp.ne.s32.totalorder %s32, %s33
    %p44 = scmp.eq.s32.totalorder %s24, 0
    %p45 = por %p43, %p44
    %p46 = scmp.ne.s32.totalorder %s32, %s33
    %p47 = scmp.eq.s32.totalorder %s25, 1
    %p48 = por %p46, %p47
    %p50 = scmp.ne.s32.totalorder %s33, %s49
    %p51 = scmp.eq.s32.totalorder %s25, 0
    %p52 = por %p50, %p51
    %s54 = sadd.s32 %s53, 1
    %p57 = scmp.eq.s32.totalorder %s19, 1
    %p58 = scmp.ne.s32.totalorder %s53, %s55
    %p59 = scmp.eq.s32.totalorder %s19, 0
    %p60 = por %p58, %p59
    %p61 = scmp.ne.s32.totalorder %s53, %s55
    %p62 = scmp.eq.s32.totalorder %s24, 1
    %p63 = por %p61, %p62
    %p64 = scmp.ne.s32.totalorder %s55, %s56
    %p65 = scmp.eq.s32.totalorder %s24, 0
    %p66 = por %p64, %p65
    %p67 = scmp.ne.s32.totalorder %s55, %s56
    %p68 = scmp.eq.s32.totalorder %s25, 1
    %p69 = por %p67, %p68
    %p71 = scmp.ne.s32.totalorder %s56, %s70
    %p72 = scmp.eq.s32.totalorder %s25, 0
    %p73 = por %p71, %p72
    %s75 = sadd.s32 %s74, 1
    %p78 = scmp.eq.s32.totalorder %s19, 1
    %p79 = scmp.ne.s32.totalorder %s74, %s76
    %p80 = scmp.eq.s32.totalorder %s19, 0
    %p81 = por %p79, %p80
    %p82 = scmp.ne.s32.totalorder %s74, %s76
    %p83 = scmp.eq.s32.totalorder %s24, 1
    %p84 = por %p82, %p83
    %p85 = scmp.ne.s32.totalorder %s76, %s77
    %p86 = scmp.eq.s32.totalorder %s24, 0
    %p87 = por %p85, %p86
    %p88 = scmp.ne.s32.totalorder %s76, %s77
    %p89 = scmp.eq.s32.totalorder %s25, 1
    %p90 = por %p88, %p89
    %p92 = scmp.ne.s32.totalorder %s77, %s91
    %p93 = scmp.eq.s32.totalorder %s25, 0
    %p94 = por %p92, %p93
    %s96 = sadd.s32 %s95, 1
    %p99 = scmp.eq.s32.totalorder %s19, 1
    %p100 = scmp.ne.s32.totalorder %s95, %s97
    %p101 = scmp.eq.s32.totalorder %s19, 0
    %p102 = por %p100, %p101
    %p103 = scmp.ne.s32.totalorder %s95, %s97
    %p104 = scmp.eq.s32.totalorder %s24, 1
    %p105 = por %p103, %p104
    %p106 = scmp.ne.s32.totalorder %s97, %s98
    %p107 = scmp.eq.s32.totalorder %s24, 0
    %p108 = por %p106, %p107
    %p109 = scmp.ne.s32.totalorder %s97, %s98
    %p110 = scmp.eq.s32.totalorder %s25, 1
    %p111 = por %p109, %p110
    %p113 = scmp.ne.s32.totalorder %s98, %s112
    %p114 = scmp.eq.s32.totalorder %s25, 0
    %p115 = por %p113, %p114
    %s117 = sadd.s32 %s116, 1
    %p120 = scmp.eq.s32.totalorder %s19, 1
    %p121 = scmp.ne.s32.totalorder %s116, %s118
    %p122 = scmp.eq.s32.totalorder %s19, 0
    %p123 = por %p121, %p122
    %p124 = scmp.ne.s32.totalorder %s116, %s118
    %p125 = scmp.eq.s32.totalorder %s24, 1
    %p126 = por %p124, %p125
    %p127 = scmp.ne.s32.totalorder %s118, %s119
    %p128 = scmp.eq.s32.totalorder %s24, 0
    %p129 = por %p127, %p128
    %p130 = scmp.ne.s32.totalorder %s118, %s119
    %p131 = scmp.eq.s32.totalorder %s25, 1
    %p132 = por %p130, %p131
    %p134 = scmp.ne.s32.totalorder %s119, %s133
    %p135 = scmp.eq.s32.totalorder %s25, 0
    %p136 = por %p134, %p135
    %s138 = sadd.s32 %s137, 1
    %p141 = scmp.eq.s32.totalorder %s19, 1
    %p142 = scmp.ne.s32.totalorder %s137, %s139
    %p143 = scmp.eq.s32.totalorder %s19, 0
    %p144 = por %p142, %p143
    %p145 = scmp.ne.s32.totalorder %s137, %s139
    %p146 = scmp.eq.s32.totalorder %s24, 1
    %p147 = por %p145, %p146
    %p148 = scmp.ne.s32.totalorder %s139, %s140
    %p149 = scmp.eq.s32.totalorder %s24, 0
    %p150 = por %p148, %p149
    %p151 = scmp.ne.s32.totalorder %s139, %s140
    %p152 = scmp.eq.s32.totalorder %s25, 1
    %p153 = por %p151, %p152
    %p155 = scmp.ne.s32.totalorder %s140, %s154
    %p156 = scmp.eq.s32.totalorder %s25, 0
    %p157 = por %p155, %p156
    %s159 = sadd.s32 %s158, 1
    %p162 = scmp.eq.s32.totalorder %s19, 1
    %p163 = scmp.ne.s32.totalorder %s158, %s160
    %p164 = scmp.eq.s32.totalorder %s19, 0
    %p165 = por %p163, %p164
    %p166 = scmp.ne.s32.totalorder %s158, %s160
    %p167 = scmp.eq.s32.totalorder %s24, 1
    %p168 = por %p166, %p167
    %p169 = scmp.ne.s32.totalorder %s160, %s161
    %p170 = scmp.eq.s32.totalorder %s24, 0
    %p171 = por %p169, %p170
    %p172 = scmp.ne.s32.totalorder %s160, %s161
    %p173 = scmp.eq.s32.totalorder %s25, 1
    %p174 = por %p172, %p173
    %p176 = scmp.ne.s32.totalorder %s161, %s175
    %p177 = scmp.eq.s32.totalorder %s25, 0
    %p178 = por %p176, %p177
    %s180 = sadd.s32 %s179, 1
    %p183 = scmp.eq.s32.totalorder %s19, 1
    %p184 = scmp.ne.s32.totalorder %s179, %s181
    %p185 = scmp.eq.s32.totalorder %s19, 0
    %p186 = por %p184, %p185
    %p187 = scmp.ne.s32.totalorder %s179, %s181
    %p188 = scmp.eq.s32.totalorder %s24, 1
    %p189 = por %p187, %p188
    %p190 = scmp.ne.s32.totalorder %s181, %s182
    %p191 = scmp.eq.s32.totalorder %s24, 0
    %p192 = por %p190, %p191
    %p193 = scmp.ne.s32.totalorder %s181, %s182
    %p194 = scmp.eq.s32.totalorder %s25, 1
    %p195 = por %p193, %p194
    %p197 = scmp.ne.s32.totalorder %s182, %s196
    %p198 = scmp.eq.s32.totalorder %s25, 0
    %p199 = por %p197, %p198
    %s201 = sadd.s32 %s200, 1
    %p204 = scmp.eq.s32.totalorder %s19, 1
    %p205 = scmp.ne.s32.totalorder %s200, %s202
    %p206 = scmp.eq.s32.totalorder %s19, 0
    %p207 = por %p205, %p206
    %p208 = scmp.ne.s32.totalorder %s200, %s202
    %p209 = scmp.eq.s32.totalorder %s24, 1
    %p210 = por %p208, %p209
    %p211 = scmp.ne.s32.totalorder %s202, %s203
    %p212 = scmp.eq.s32.totalorder %s24, 0
    %p213 = por %p211, %p212
    %p214 = scmp.ne.s32.totalorder %s202, %s203
    %p215 = scmp.eq.s32.totalorder %s25, 1
    %p216 = por %p214, %p215
    %p218 = scmp.ne.s32.totalorder %s203, %s217
    %p219 = scmp.eq.s32.totalorder %s25, 0
    %p220 = por %p218, %p219
    %s221 = ssub.s32 %s19, %s26
    %p222 = scmp.eq.s32.totalorder %s221, 0
    %s224 = sadd.s32 %s223, 1
    %s225 = scalar_select %p222, %s223, %s224
    %p228 = pneg %p222
    %p229 = scmp.eq.s32.totalorder %s19, 1
    %p230 = por %p228, %p229
    %p231 = scmp.ne.s32.totalorder %s223, %s226
    %p232 = scmp.eq.s32.totalorder %s19, 0
    %p233 = por %p231, %p232
    %p234 = scmp.ne.s32.totalorder %s223, %s226
    %p235 = scmp.eq.s32.totalorder %s24, 1
    %p236 = por %p234, %p235
    %p237 = scmp.ne.s32.totalorder %s226, %s227
    %p238 = scmp.eq.s32.totalorder %s24, 0
    %p239 = por %p237, %p238
    %p240 = scmp.ne.s32.totalorder %s226, %s227
    %p241 = scmp.eq.s32.totalorder %s25, 1
    %p242 = por %p240, %p241
    %p244 = scmp.ne.s32.totalorder %s227, %s243
    %p245 = scmp.eq.s32.totalorder %s25, 0
    %p246 = por %p244, %p245
    %s247 = ssub.s32 %s19, %s26
    %p248 = scmp.eq.s32.totalorder %s247, 0
    %s250 = sadd.s32 %s249, 1
    %s251 = scalar_select %p248, %s249, %s250
    %p254 = pneg %p248
    %p255 = scmp.eq.s32.totalorder %s19, 1
    %p256 = por %p254, %p255
    %p257 = scmp.ne.s32.totalorder %s249, %s252
    %p258 = scmp.eq.s32.totalorder %s19, 0
    %p259 = por %p257, %p258
    %p260 = scmp.ne.s32.totalorder %s249, %s252
    %p261 = scmp.eq.s32.totalorder %s24, 1
    %p262 = por %p260, %p261
    %p263 = scmp.ne.s32.totalorder %s252, %s253
    %p264 = scmp.eq.s32.totalorder %s24, 0
    %p265 = por %p263, %p264
    %p266 = scmp.ne.s32.totalorder %s252, %s253
    %p267 = scmp.eq.s32.totalorder %s25, 1
    %p268 = por %p266, %p267
    %p270 = scmp.ne.s32.totalorder %s253, %s269
    %p271 = scmp.eq.s32.totalorder %s25, 0
    %p272 = por %p270, %p271
    %s273 = ssub.s32 %s19, %s26
    %p274 = scmp.eq.s32.totalorder %s273, 0
    %s276 = sadd.s32 %s275, 1
    %s277 = scalar_select %p274, %s275, %s276
    %p280 = pneg %p274
    %p281 = scmp.eq.s32.totalorder %s19, 1
    %p282 = por %p280, %p281
    %p283 = scmp.ne.s32.totalorder %s275, %s278
    %p284 = scmp.eq.s32.totalorder %s19, 0
    %p285 = por %p283, %p284
    %p286 = scmp.ne.s32.totalorder %s275, %s278
    %p287 = scmp.eq.s32.totalorder %s24, 1
    %p288 = por %p286, %p287
    %p289 = scmp.ne.s32.totalorder %s278, %s279
    %p290 = scmp.eq.s32.totalorder %s24, 0
    %p291 = por %p289, %p290
    %p292 = scmp.ne.s32.totalorder %s278, %s279
    %p293 = scmp.eq.s32.totalorder %s25, 1
    %p294 = por %p292, %p293
    %p296 = scmp.ne.s32.totalorder %s279, %s295
    %p297 = scmp.eq.s32.totalorder %s25, 0
    %p298 = por %p296, %p297
    %s299 = ssub.s32 %s19, %s26
    %p300 = scmp.eq.s32.totalorder %s299, 0
    %s302 = sadd.s32 %s301, 1
    %s303 = scalar_select %p300, %s301, %s302
    %p306 = pneg %p300
    %p307 = scmp.eq.s32.totalorder %s19, 1
    %p308 = por %p306, %p307
    %p309 = scmp.ne.s32.totalorder %s301, %s304
    %p310 = scmp.eq.s32.totalorder %s19, 0
    %p311 = por %p309, %p310
    %p312 = scmp.ne.s32.totalorder %s301, %s304
    %p313 = scmp.eq.s32.totalorder %s24, 1
    %p314 = por %p312, %p313
    %p315 = scmp.ne.s32.totalorder %s304, %s305
    %p316 = scmp.eq.s32.totalorder %s24, 0
    %p317 = por %p315, %p316
    %p318 = scmp.ne.s32.totalorder %s304, %s305
    %p319 = scmp.eq.s32.totalorder %s25, 1
    %p320 = por %p318, %p319
    %p322 = scmp.ne.s32.totalorder %s305, %s321
    %p323 = scmp.eq.s32.totalorder %s25, 0
    %p324 = por %p322, %p323
    %s325 = ssub.s32 %s19, %s26
    %p326 = scmp.eq.s32.totalorder %s325, 0
    %s328 = sadd.s32 %s327, 1
    %s329 = scalar_select %p326, %s327, %s328
    %p332 = pneg %p326
    %p333 = scmp.eq.s32.totalorder %s19, 1
    %p334 = por %p332, %p333
    %p335 = scmp.ne.s32.totalorder %s327, %s330
    %p336 = scmp.eq.s32.totalorder %s19, 0
    %p337 = por %p335, %p336
    %p338 = scmp.ne.s32.totalorder %s327, %s330
    %p339 = scmp.eq.s32.totalorder %s24, 1
    %p340 = por %p338, %p339
    %p341 = scmp.ne.s32.totalorder %s330, %s331
    %p342 = scmp.eq.s32.totalorder %s24, 0
    %p343 = por %p341, %p342
    %p344 = scmp.ne.s32.totalorder %s330, %s331
    %p345 = scmp.eq.s32.totalorder %s25, 1
    %p346 = por %p344, %p345
    %p348 = scmp.ne.s32.totalorder %s331, %s347
    %p349 = scmp.eq.s32.totalorder %s25, 0
    %p350 = por %p348, %p349
    %p351 = scmp.le.s32.totalorder 1, %s19
    %p352 = scmp.lt.s32.totalorder %s19, 3
    %p353 = pnand %p351, %p352
    %p354 = pneg %p353
    // Predicated region
    $region9: #{dance_rollout.41} parent=5 // pred_check
      _
    $region10: #{dance_rollout.41} parent=5 // pred_check_branch
      %356 = sbr.rel (%p353) target = $region12
    $region11: #{dance_rollout.41} parent=5 // pred_region
      %s357 = ssub.s32 %s19, 1
      // Predicated region
      $region13: #{dance_rollout.41} parent=11 // pred_check
        %p358 = pneg %p66
      $region14: #{dance_rollout.41} parent=11 // pred_check_branch
        %360 = sbr.rel (%p358) target = $region16
      $region15: #{dance_rollout.41} parent=11 // pred_region
        _
      $region16: #{dance_rollout.41} parent=11 // pred_fallthru
        _
      // Predicated region
      $region17: #{dance_rollout.41} parent=11 // pred_check
        %p361 = pneg %p87
      $region18: #{dance_rollout.41} parent=11 // pred_check_branch
        %363 = sbr.rel (%p361) target = $region20
      $region19: #{dance_rollout.41} parent=11 // pred_region
        _
      $region20: #{dance_rollout.41} parent=11 // pred_fallthru
        _
      // Predicated region
      $region21: #{dance_rollout.41} parent=11 // pred_check
        %p364 = pneg %p108
      $region22: #{dance_rollout.41} parent=11 // pred_check_branch
        %366 = sbr.rel (%p364) target = $region24
      $region23: #{dance_rollout.41} parent=11 // pred_region
        _
      $region24: #{dance_rollout.41} parent=11 // pred_fallthru
        _
      // Predicated region
      $region25: #{dance_rollout.41} parent=11 // pred_check
        %p367 = pneg %p129
      $region26: #{dance_rollout.41} parent=11 // pred_check_branch
        %369 = sbr.rel (%p367) target = $region28
      $region27: #{dance_rollout.41} parent=11 // pred_region
        _
      $region28: #{dance_rollout.41} parent=11 // pred_fallthru
        _
      // Predicated region
      $region29: #{dance_rollout.41} parent=11 // pred_check
        %p370 = pneg %p150
      $region30: #{dance_rollout.41} parent=11 // pred_check_branch
        %372 = sbr.rel (%p370) target = $region32
      $region31: #{dance_rollout.41} parent=11 // pred_region
        _
      $region32: #{dance_rollout.41} parent=11 // pred_fallthru
        _
      // Predicated region
      $region33: #{dance_rollout.41} parent=11 // pred_check
        %p373 = pneg %p171
      $region34: #{dance_rollout.41} parent=11 // pred_check_branch
        %375 = sbr.rel (%p373) target = $region36
      $region35: #{dance_rollout.41} parent=11 // pred_region
        _
      $region36: #{dance_rollout.41} parent=11 // pred_fallthru
        _
      // Predicated region
      $region37: #{dance_rollout.41} parent=11 // pred_check
        %p376 = pneg %p192
      $region38: #{dance_rollout.41} parent=11 // pred_check_branch
        %378 = sbr.rel (%p376) target = $region40
      $region39: #{dance_rollout.41} parent=11 // pred_region
        _
      $region40: #{dance_rollout.41} parent=11 // pred_fallthru
        _
      // Predicated region
      $region41: #{dance_rollout.41} parent=11 // pred_check
        %p379 = pneg %p213
      $region42: #{dance_rollout.41} parent=11 // pred_check_branch
        %381 = sbr.rel (%p379) target = $region44
      $region43: #{dance_rollout.41} parent=11 // pred_region
        _
      $region44: #{dance_rollout.41} parent=11 // pred_fallthru
        _
    $region12: #{dance_rollout.41} parent=5 // pred_fallthru
      _
    %p382 = scmp.lt.s32.totalorder %s19, 2
    // Predicated region
    $region45: #{dance_rollout.41} parent=5 // pred_check
      %p383 = pneg %p382
    $region46: #{dance_rollout.41} parent=5 // pred_check_branch
      %385 = sbr.rel (%p383) target = $region48
    $region47: #{dance_rollout.41} parent=5 // pred_region
      // Predicated region
      $region49: #{dance_rollout.41} parent=47 // pred_check
        %p386 = pneg %p39
      $region50: #{dance_rollout.41} parent=47 // pred_check_branch
        %388 = sbr.rel (%p386) target = $region52
      $region51: #{dance_rollout.41} parent=47 // pred_region
        %p389 = scmp.lt.s32.totalorder %s19, 1
        %s390 = scalar_select %p389, %s19, 1
        %s391 = smul.addr %s390, 5
        %s392 = smul.addr %s391, 8
        %s393 = scalar_lea.vmem %s0, %s392
      $region52: #{dance_rollout.41} parent=47 // pred_fallthru
        _
      // Predicated region
      $region53: #{dance_rollout.41} parent=47 // pred_check
        %p394 = pneg %p233
      $region54: #{dance_rollout.41} parent=47 // pred_check_branch
        %396 = sbr.rel (%p394) target = $region56
      $region55: #{dance_rollout.41} parent=47 // pred_region
        %p397 = scmp.lt.s32.totalorder %s19, 1
        %s398 = scalar_select %p397, %s19, 1
        %s399 = scalar_lea.vmem %s9, %s398
      $region56: #{dance_rollout.41} parent=47 // pred_fallthru
        _
      // Predicated region
      $region57: #{dance_rollout.41} parent=47 // pred_check
        %p400 = pneg %p259
      $region58: #{dance_rollout.41} parent=47 // pred_check_branch
        %402 = sbr.rel (%p400) target = $region60
      $region59: #{dance_rollout.41} parent=47 // pred_region
        %p403 = scmp.lt.s32.totalorder %s19, 1
        %s404 = scalar_select %p403, %s19, 1
        %s405 = scalar_lea.vmem %s10, %s404
      $region60: #{dance_rollout.41} parent=47 // pred_fallthru
        _
      // Predicated region
      $region61: #{dance_rollout.41} parent=47 // pred_check
        %p406 = pneg %p285
      $region62: #{dance_rollout.41} parent=47 // pred_check_branch
        %408 = sbr.rel (%p406) target = $region64
      $region63: #{dance_rollout.41} parent=47 // pred_region
        %p409 = scmp.lt.s32.totalorder %s19, 1
        %s410 = scalar_select %p409, %s19, 1
        %s411 = scalar_lea.vmem %s11, %s410
      $region64: #{dance_rollout.41} parent=47 // pred_fallthru
        _
      // Predicated region
      $region65: #{dance_rollout.41} parent=47 // pred_check
        %p412 = pneg %p311
      $region66: #{dance_rollout.41} parent=47 // pred_check_branch
        %414 = sbr.rel (%p412) target = $region68
      $region67: #{dance_rollout.41} parent=47 // pred_region
        %p415 = scmp.lt.s32.totalorder %s19, 1
        %s416 = scalar_select %p415, %s19, 1
        %s417 = scalar_lea.vmem %s12, %s416
      $region68: #{dance_rollout.41} parent=47 // pred_fallthru
        _
    $region48: #{dance_rollout.41} parent=5 // pred_fallthru
      _
    %p418 = scmp.le.s32.totalorder 1, %s19
    %p419 = scmp.lt.s32.totalorder %s19, 3
    %p420 = pnand %p418, %p419
    %p421 = pneg %p420
    // Predicated region
    $region69: #{dance_rollout.41} parent=5 // pred_check
      _
    $region70: #{dance_rollout.41} parent=5 // pred_check_branch
      %423 = sbr.rel (%p420) target = $region72
    $region71: #{dance_rollout.41} parent=5 // pred_region
      %s424 = ssub.s32 %s19, 1
      %p425 = scmp.lt.s32.totalorder %s24, 1
      %s426 = scalar_select %p425, %s24, 1
      %s427 = smul.addr %s426, 5
      %s428 = smul.addr %s427, 8
      %s429 = scalar_lea.vmem %s0, %s428
      %p430 = pneg %p45
      %p431 = pneg %p42
      %p432 = pneg %p66
      %p433 = pneg %p63
      %p434 = pneg %p87
      %p435 = pneg %p84
      %p436 = pneg %p108
      %p437 = pneg %p105
      %p438 = pneg %p129
      %p439 = pneg %p126
      %p440 = pneg %p150
      %p441 = pneg %p147
      %p442 = pneg %p171
      %p443 = pneg %p168
      %p444 = pneg %p192
      %p445 = pneg %p189
      %p446 = pneg %p213
      %p447 = pneg %p210
      %p448 = scmp.lt.s32.totalorder %s24, 1
      %s449 = scalar_select %p448, %s24, 1
      %s450 = scalar_lea.vmem %s9, %s449
      %p451 = pneg %p239
      %p452 = pneg %p236
      %p453 = scmp.lt.s32.totalorder %s24, 1
      %s454 = scalar_select %p453, %s24, 1
      %s455 = scalar_lea.vmem %s10, %s454
      %p456 = pneg %p265
      %p457 = pneg %p262
      %p458 = scmp.lt.s32.totalorder %s24, 1
      %s459 = scalar_select %p458, %s24, 1
      %s460 = scalar_lea.vmem %s11, %s459
      %p461 = pneg %p291
      %p462 = pneg %p288
      %p463 = scmp.lt.s32.totalorder %s24, 1
      %s464 = scalar_select %p463, %s24, 1
      %s465 = scalar_lea.vmem %s12, %s464
      %p466 = pneg %p317
      %p467 = pneg %p314
      %p468 = pneg %p343
      %p469 = pneg %p340
      %p470 = scmp.lt.s32.totalorder %s24, 1
      %s471 = scalar_select %p470, %s24, 1
      %s472 = smul.addr %s471, 5
      %s473 = smul.addr %s472, 8
      %s474 = scalar_lea.vmem %s13, %s473
      %p475 = scmp.lt.s32.totalorder %s24, 1
      %s476 = scalar_select %p475, %s24, 1
      %s477 = smul.addr %s476, 5
      %s478 = smul.addr %s477, 8
      %s479 = scalar_lea.vmem %s0, %s478
      %p480 = scmp.lt.s32.totalorder %s24, 1
      %s481 = scalar_select %p480, %s24, 1
      %s482 = scalar_lea.vmem %s9, %s481
      %p483 = scmp.lt.s32.totalorder %s24, 1
      %s484 = scalar_select %p483, %s24, 1
      %s485 = scalar_lea.vmem %s10, %s484
      %p486 = scmp.lt.s32.totalorder %s24, 1
      %s487 = scalar_select %p486, %s24, 1
      %s488 = scalar_lea.vmem %s11, %s487
      %p489 = scmp.lt.s32.totalorder %s24, 1
      %s490 = scalar_select %p489, %s24, 1
      %s491 = scalar_lea.vmem %s12, %s490
      %p492 = scmp.lt.s32.totalorder %s24, 1
      %s493 = scalar_select %p492, %s24, 1
      %s494 = smul.addr %s493, 5
      %s495 = smul.addr %s494, 8
      %s496 = scalar_lea.vmem %s13, %s495
      %v497 = vld [vmem:[%s479] sm:$0xff]
      %v498 = vld [vmem:[%s479 + $0x8] sm:$0xff]
      %v499 = vld [vmem:[%s479 + $0x10] sm:$0xff]
      %v500 = vld [vmem:[%s479 + $0x18] sm:$0xff]
      %v501 = vld [vmem:[%s479 + $0x20] sm:$0xff]
      %v502 = vld [vmem:[%s1] sm:$0xff]
      %v503 = vld [vmem:[%s1 + $0x8] sm:$0xff]
      %v504 = vld [vmem:[%s1 + $0x10] sm:$0xff]
      %v505 = vld [vmem:[%s1 + $0x18] sm:$0xff]
      %v506 = vld [vmem:[%s1 + $0x20] sm:$0xff]
      %v507 = vld [vmem:[%s1 + $0x28] sm:$0xff]
      %v508 = vld [vmem:[%s1 + $0x30] sm:$0xff]
      %v509 = vld [vmem:[%s1 + $0x38] sm:$0xff]
      %v510 = vld [vmem:[%s1 + $0x40] sm:$0xff]
      %v511 = vld [vmem:[%s1 + $0x48] sm:$0xff]
      %v512 = vld [vmem:[%s1 + $0x50] sm:$0xff]
      %v513 = vld [vmem:[%s1 + $0x58] sm:$0xff]
      %v514 = vld [vmem:[%s1 + $0x60] sm:$0xff]
      %v515 = vld [vmem:[%s1 + $0x68] sm:$0xff]
      %v516 = vld [vmem:[%s1 + $0x70] sm:$0xff]
      %v517 = vld [vmem:[%s1 + $0x78] sm:$0xff]
      %v518 = vld [vmem:[%s2] sm:$0x3]
      %v520 = vlaneseq
      %v521 = vshrl.u32 %v520, 7
      %v522 = vsub.s32 0, %v521
      %v523 = vrot.slane %v518, %v522
      %v524 = vlaneseq
      %v525 = vshrl.u32 %v524, 7
      %v526 = vsub.s32 1, %v525
      %v527 = vrot.slane %v518, %v526
      %vm530 = vcmask 523264
      %v532 = vsel %vm530, %v497, 0
      %v535 = vsel %vm530, %v498, 0
      %v538 = vsel %vm530, %v499, 0
      %v541 = vsel %vm530, %v500, 0
      %v544 = vsel %vm530, %v501, 0
      %546 = vmatprep.subr.mxu0 0.0
      %547 = vmatpush1.msra.mxu0 0.0
      %548 = vmatprep.subr.mxu0 0.0
      %549 = vmatpush1.msra.mxu0 0.0
      %550 = vmatprep.subr.mxu0 0.0
      %551 = vmatpush1.msra.mxu0 0.0
      %552 = vmatprep.subr.mxu0 0.0
      %553 = vmatpush1.msra.mxu0 0.0
      %554 = vmatprep.subr.mxu0 0.0
      %555 = vmatpush1.msra.mxu0 0.0
      %556 = vmatprep.subr.mxu0 0.0
      %557 = vmatpush1.msra.mxu0 0.0
      %558 = vmatprep.subr.mxu0 0.0
      %559 = vmatpush1.msra.mxu0 0.0
      %560 = vmatprep.subr.mxu0 0.0
      %561 = vmatpush1.msra.mxu0 0.0
      %562 = vmatprep.subr.mxu0 %v517
      %563 = vmatpush1.msra.mxu0 %v516
      %564 = vmatprep.subr.mxu0 %v515
      %565 = vmatpush1.msra.mxu0 %v514
      %566 = vmatprep.subr.mxu0 %v513
      %567 = vmatpush1.msra.mxu0 %v512
      %568 = vmatprep.subr.mxu0 %v511
      %569 = vmatpush1.msra.mxu0 %v510
      %570 = vmatprep.subr.mxu0 %v509
      %571 = vmatpush1.msra.mxu0 %v508
      %572 = vmatprep.subr.mxu0 %v507
      %573 = vmatpush1.msra.mxu0 %v506
      %574 = vmatprep.subr.mxu0 %v505
      %575 = vmatpush1.msra.mxu0 %v504
      %576 = vmatprep.subr.mxu0 %v503
      %577 = vmatpush1.msra.mxu0 %v502
      %578 = vmatprep.subr.mxu0 0.0
      %579 = vmatpush2.msra.mxu0 0.0
      %580 = vmatprep.subr.mxu0 0.0
      %581 = vmatpush2.msra.mxu0 0.0
      %582 = vmatprep.subr.mxu0 0.0
      %583 = vmatpush2.msra.mxu0 0.0
      %584 = vmatprep.subr.mxu0 0.0
      %585 = vmatpush2.msra.mxu0 0.0
      %586 = vmatprep.subr.mxu0 0.0
      %587 = vmatpush2.msra.mxu0 0.0
      %588 = vmatprep.subr.mxu0 0.0
      %589 = vmatpush2.msra.mxu0 0.0
      %590 = vmatprep.subr.mxu0 0.0
      %591 = vmatpush2.msra.mxu0 0.0
      %592 = vmatprep.subr.mxu0 0.0
      %593 = vmatpush2.msra.mxu0 0.0
      %594 = vmatprep.subr.mxu0 0.0
      %595 = vmatpush2.msra.mxu0 0.0
      %596 = vmatprep.subr.mxu0 0.0
      %597 = vmatpush2.msra.mxu0 0.0
      %598 = vmatprep.subr.mxu0 0.0
      %599 = vmatpush2.msra.mxu0 0.0
      %600 = vmatprep.subr.mxu0 0.0
      %601 = vmatpush2.msra.mxu0 0.0
      %602 = vmatprep.subr.mxu0 0.0
      %603 = vmatpush2.msra.mxu0 0.0
      %604 = vmatprep.subr.mxu0 0.0
      %605 = vmatpush2.msra.mxu0 0.0
      %606 = vmatprep.subr.mxu0 0.0
      %607 = vmatpush2.msra.mxu0 0.0
      %608 = vmatprep.subr.mxu0 0.0
      %609 = vmatpush2.msra.mxu0 0.0
      %610 = vmatprep.mubr.f32.mxu0 0.0
      %611 = vmatmul.mubr.f32.gmra.mxu0 %v532
      %v612 = vpop.f32.mrf.mxu0
      %v613 = vadd.f32 %v523, %v612
      %v614 = vpop.f32.mrf.mxu0
      %v615 = vadd.f32 %v527, %v614
      %616 = vmatprep.mubr.f32.mxu0 0.0
      %617 = vmatmul.mubr.f32.gmra.mxu0 %v535
      %v618 = vpop.f32.mrf.mxu0
      %v619 = vadd.f32 %v523, %v618
      %v620 = vpop.f32.mrf.mxu0
      %v621 = vadd.f32 %v527, %v620
      %622 = vmatprep.mubr.f32.mxu0 0.0
      %623 = vmatmul.mubr.f32.gmra.mxu0 %v538
      %v624 = vpop.f32.mrf.mxu0
      %v625 = vadd.f32 %v523, %v624
      %v626 = vpop.f32.mrf.mxu0
      %v627 = vadd.f32 %v527, %v626
      %628 = vmatprep.mubr.f32.mxu0 0.0
      %629 = vmatmul.mubr.f32.gmra.mxu0 %v541
      %v630 = vpop.f32.mrf.mxu0
      %v631 = vadd.f32 %v523, %v630
      %v632 = vpop.f32.mrf.mxu0
      %v633 = vadd.f32 %v527, %v632
      %634 = vmatprep.mubr.f32.mxu0 0.0
      %635 = vmatmul.mubr.f32.gmra.mxu0 %v544
      %v636 = vpop.f32.mrf.mxu0
      %v637 = vadd.f32 %v523, %v636
      %v638 = vpop.f32.mrf.mxu0
      %v639 = vadd.f32 %v527, %v638
      %640 = vdwg.mxu0
      %v641 = vld [vmem:[%s3] sm:$0xff]
      %v642 = vld [vmem:[%s3 + $0x8] sm:$0xff]
      %v643 = vld [vmem:[%s3 + $0x10] sm:$0xff]
      %v644 = vld [vmem:[%s3 + $0x18] sm:$0xff]
      %v645 = vld [vmem:[%s3 + $0x20] sm:$0xff]
      %v646 = vld [vmem:[%s3 + $0x28] sm:$0xff]
      %v647 = vld [vmem:[%s3 + $0x30] sm:$0xff]
      %v648 = vld [vmem:[%s3 + $0x38] sm:$0xff]
      %654 = vrot.lane.b32.xlu0 %v613, 64
      %v655 = vpop.permute.xlu0 %654
      %656 = vrot.lane.b32.xlu0 %v619, 64
      %v657 = vpop.permute.xlu0 %656
      %658 = vrot.lane.b32.xlu0 %v625, 64
      %v659 = vpop.permute.xlu0 %658
      %660 = vrot.lane.b32.xlu0 %v631, 64
      %v661 = vpop.permute.xlu0 %660
      %662 = vrot.lane.b32.xlu0 %v637, 64
      %v663 = vpop.permute.xlu0 %662
      %vm664 = vcmask 130048
      %v665 = vsel %vm664, %v613, 0
      %v667 = vsel %vm664, %v619, 0
      %v669 = vsel %vm664, %v625, 0
      %v671 = vsel %vm664, %v631, 0
      %v673 = vsel %vm664, %v637, 0
      %v675 = vsel %vm664, %v655, 0
      %v677 = vsel %vm664, %v657, 0
      %v679 = vsel %vm664, %v659, 0
      %v681 = vsel %vm664, %v661, 0
      %v683 = vsel %vm664, %v663, 0
      %685 = vmatprep.subr.mxu0 0.0
      %686 = vmatpush1.xpose.msra.mxu0 0.0
      %687 = vmatprep.subr.mxu0 0.0
      %688 = vmatpush1.xpose.msra.mxu0 0.0
      %689 = vmatprep.subr.mxu0 0.0
      %690 = vmatpush1.xpose.msra.mxu0 0.0
      %691 = vmatprep.subr.mxu0 0.0
      %692 = vmatpush1.xpose.msra.mxu0 0.0
      %693 = vmatprep.subr.mxu0 0.0
      %694 = vmatpush1.xpose.msra.mxu0 0.0
      %695 = vmatprep.subr.mxu0 0.0
      %696 = vmatpush1.xpose.msra.mxu0 0.0
      %697 = vmatprep.subr.mxu0 0.0
      %698 = vmatpush1.xpose.msra.mxu0 0.0
      %699 = vmatprep.subr.mxu0 0.0
      %700 = vmatpush1.xpose.msra.mxu0 0.0
      %701 = vmatprep.subr.mxu0 0.0
      %702 = vmatpush1.xpose.msra.mxu0 0.0
      %703 = vmatprep.subr.mxu0 0.0
      %704 = vmatpush1.xpose.msra.mxu0 0.0
      %705 = vmatprep.subr.mxu0 0.0
      %706 = vmatpush1.xpose.msra.mxu0 0.0
      %707 = vmatprep.subr.mxu0 0.0
      %708 = vmatpush1.xpose.msra.mxu0 %v683
      %709 = vmatprep.subr.mxu0 0.0
      %710 = vmatpush1.xpose.msra.mxu0 %v681
      %711 = vmatprep.subr.mxu0 0.0
      %712 = vmatpush1.xpose.msra.mxu0 %v679
      %713 = vmatprep.subr.mxu0 0.0
      %714 = vmatpush1.xpose.msra.mxu0 %v677
      %715 = vmatprep.subr.mxu0 0.0
      %716 = vmatpush1.xpose.msra.mxu0 %v675
      %717 = vmatprep.subr.mxu0 0.0
      %718 = vmatpush2.xpose.msra.mxu0 0.0
      %719 = vmatprep.subr.mxu0 0.0
      %720 = vmatpush2.xpose.msra.mxu0 0.0
      %721 = vmatprep.subr.mxu0 0.0
      %722 = vmatpush2.xpose.msra.mxu0 0.0
      %723 = vmatprep.subr.mxu0 0.0
      %724 = vmatpush2.xpose.msra.mxu0 0.0
      %725 = vmatprep.subr.mxu0 0.0
      %726 = vmatpush2.xpose.msra.mxu0 0.0
      %727 = vmatprep.subr.mxu0 0.0
      %728 = vmatpush2.xpose.msra.mxu0 0.0
      %729 = vmatprep.subr.mxu0 0.0
      %730 = vmatpush2.xpose.msra.mxu0 0.0
      %731 = vmatprep.subr.mxu0 0.0
      %732 = vmatpush2.xpose.msra.mxu0 0.0
      %733 = vmatprep.subr.mxu0 0.0
      %734 = vmatpush2.xpose.msra.mxu0 0.0
      %735 = vmatprep.subr.mxu0 0.0
      %736 = vmatpush2.xpose.msra.mxu0 0.0
      %737 = vmatprep.subr.mxu0 0.0
      %738 = vmatpush2.xpose.msra.mxu0 0.0
      %739 = vmatprep.subr.mxu0 0.0
      %740 = vmatpush2.xpose.msra.mxu0 0.0
      %741 = vmatprep.subr.mxu0 0.0
      %742 = vmatpush2.xpose.msra.mxu0 0.0
      %743 = vmatprep.subr.mxu0 0.0
      %744 = vmatpush2.xpose.msra.mxu0 0.0
      %745 = vmatprep.subr.mxu0 0.0
      %746 = vmatpush2.xpose.msra.mxu0 0.0
      %747 = vmatprep.subr.mxu0 0.0
      %748 = vmatpush2.xpose.msra.mxu0 0.0
      %749 = vmatprep.mubr.f32.mxu0 0.0
      %750 = vmatmul.mubr.f32.gmra.mxu0 %v665
      %v751 = vpop.f32.mrf.mxu0
      %v752 = vadd.f32 0.0, %v751
      %v753 = vpop.f32.mrf.mxu0
      %754 = vmatprep.mubr.f32.mxu0 0.0
      %755 = vmatmul.mubr.f32.gmra.mxu0 %v667
      %v756 = vpop.f32.mrf.mxu0
      %v757 = vadd.f32 0.0, %v756
      %v758 = vpop.f32.mrf.mxu0
      %759 = vmatprep.mubr.f32.mxu0 0.0
      %760 = vmatmul.mubr.f32.gmra.mxu0 %v669
      %v761 = vpop.f32.mrf.mxu0
      %v762 = vadd.f32 0.0, %v761
      %v763 = vpop.f32.mrf.mxu0
      %764 = vmatprep.mubr.f32.mxu0 0.0
      %765 = vmatmul.mubr.f32.gmra.mxu0 %v671
      %v766 = vpop.f32.mrf.mxu0
      %v767 = vadd.f32 0.0, %v766
      %v768 = vpop.f32.mrf.mxu0
      %769 = vmatprep.mubr.f32.mxu0 0.0
      %770 = vmatmul.mubr.f32.gmra.mxu0 %v673
      %v771 = vpop.f32.mrf.mxu0
      %v772 = vadd.f32 0.0, %v771
      %v773 = vpop.f32.mrf.mxu0
      %774 = vdwg.mxu0
      %v775 = vmul.f32 %v752, 0.25
      %v776 = vmul.f32 %v757, 0.25
      %v777 = vmul.f32 %v762, 0.25
      %v778 = vmul.f32 %v767, 0.25
      %v779 = vmul.f32 %v772, 0.25
      %vm780 = vcmask 326656
      %v781 = vsel %vm780, %v775, -inf
      %782 = vmax.xlane.f32.xlu0 %v781
      %v783 = vpop.xlane.xlu0 %782
      %v784 = vsel %vm780, %v776, -inf
      %785 = vmax.xlane.f32.xlu0 %v784
      %v786 = vpop.xlane.xlu0 %785
      %v787 = vsel %vm780, %v777, -inf
      %788 = vmax.xlane.f32.xlu0 %v787
      %v789 = vpop.xlane.xlu0 %788
      %v790 = vsel %vm780, %v778, -inf
      %791 = vmax.xlane.f32.xlu0 %v790
      %v792 = vpop.xlane.xlu0 %791
      %v793 = vsel %vm780, %v779, -inf
      %794 = vmax.xlane.f32.xlu0 %v793
      %v795 = vpop.xlane.xlu0 %794
      %v796 = vsub.f32 %v775, %v783
      %v797 = vsub.f32 %v776, %v786
      %v798 = vsub.f32 %v777, %v789
      %v799 = vsub.f32 %v778, %v792
      %v800 = vsub.f32 %v779, %v795
      %v801 = vmul.f32 %v796, 1.442695
      %v802 = vpow.pop %v801
      %v803 = vmul.f32 %v797, 1.442695
      %v804 = vpow.pop %v803
      %v805 = vmul.f32 %v798, 1.442695
      %v806 = vpow.pop %v805
      %v807 = vmul.f32 %v799, 1.442695
      %v808 = vpow.pop %v807
      %v809 = vmul.f32 %v800, 1.442695
      %v810 = vpow.pop %v809
      %v811 = vsel %vm780, %v802, 0.0
      %812 = vadd.xlane.f32.xlu0 %v811
      %v813 = vpop.xlane.xlu0 %812
      %v814 = vsel %vm780, %v804, 0.0
      %815 = vadd.xlane.f32.xlu0 %v814
      %v816 = vpop.xlane.xlu0 %815
      %v817 = vsel %vm780, %v806, 0.0
      %818 = vadd.xlane.f32.xlu0 %v817
      %v819 = vpop.xlane.xlu0 %818
      %v820 = vsel %vm780, %v808, 0.0
      %821 = vadd.xlane.f32.xlu0 %v820
      %v822 = vpop.xlane.xlu0 %821
      %v823 = vsel %vm780, %v810, 0.0
      %824 = vadd.xlane.f32.xlu0 %v823
      %v825 = vpop.xlane.xlu0 %824
      %v826 = vrcp.pop %v813
      %v827 = vrcp.pop %v816
      %v828 = vrcp.pop %v819
      %v829 = vrcp.pop %v822
      %v830 = vrcp.pop %v825
      %v831 = vmul.f32 %v802, %v826
      %v832 = vmul.f32 %v804, %v827
      %v833 = vmul.f32 %v806, %v828
      %v834 = vmul.f32 %v808, %v829
      %v835 = vmul.f32 %v810, %v830
      %v837 = vsel %vm780, %v831, 0
      %v840 = vsel %vm780, %v832, 0
      %v843 = vsel %vm780, %v833, 0
      %v846 = vsel %vm780, %v834, 0
      %v849 = vsel %vm780, %v835, 0
      %851 = vmatprep.subr.mxu0 0.0
      %852 = vmatpush1.msra.mxu0 0.0
      %853 = vmatprep.subr.mxu0 0.0
      %854 = vmatpush1.msra.mxu0 0.0
      %855 = vmatprep.subr.mxu0 0.0
      %856 = vmatpush1.msra.mxu0 0.0
      %857 = vmatprep.subr.mxu0 0.0
      %858 = vmatpush1.msra.mxu0 0.0
      %859 = vmatprep.subr.mxu0 0.0
      %860 = vmatpush1.msra.mxu0 0.0
      %861 = vmatprep.subr.mxu0 0.0
      %862 = vmatpush1.msra.mxu0 0.0
      %863 = vmatprep.subr.mxu0 0.0
      %864 = vmatpush1.msra.mxu0 0.0
      %865 = vmatprep.subr.mxu0 0.0
      %866 = vmatpush1.msra.mxu0 0.0
      %867 = vmatprep.subr.mxu0 0.0
      %868 = vmatpush1.msra.mxu0 0.0
      %869 = vmatprep.subr.mxu0 0.0
      %870 = vmatpush1.msra.mxu0 0.0
      %871 = vmatprep.subr.mxu0 0.0
      %872 = vmatpush1.msra.mxu0 0.0
      %873 = vmatprep.subr.mxu0 0.0
      %874 = vmatpush1.msra.mxu0 %v639
      %875 = vmatprep.subr.mxu0 0.0
      %876 = vmatpush1.msra.mxu0 %v633
      %877 = vmatprep.subr.mxu0 0.0
      %878 = vmatpush1.msra.mxu0 %v627
      %879 = vmatprep.subr.mxu0 0.0
      %880 = vmatpush1.msra.mxu0 %v621
      %881 = vmatprep.subr.mxu0 0.0
      %882 = vmatpush1.msra.mxu0 %v615
      %883 = vmatprep.subr.mxu0 0.0
      %884 = vmatpush2.msra.mxu0 0.0
      %885 = vmatprep.subr.mxu0 0.0
      %886 = vmatpush2.msra.mxu0 0.0
      %887 = vmatprep.subr.mxu0 0.0
      %888 = vmatpush2.msra.mxu0 0.0
      %889 = vmatprep.subr.mxu0 0.0
      %890 = vmatpush2.msra.mxu0 0.0
      %891 = vmatprep.subr.mxu0 0.0
      %892 = vmatpush2.msra.mxu0 0.0
      %893 = vmatprep.subr.mxu0 0.0
      %894 = vmatpush2.msra.mxu0 0.0
      %895 = vmatprep.subr.mxu0 0.0
      %896 = vmatpush2.msra.mxu0 0.0
      %897 = vmatprep.subr.mxu0 0.0
      %898 = vmatpush2.msra.mxu0 0.0
      %899 = vmatprep.subr.mxu0 0.0
      %900 = vmatpush2.msra.mxu0 0.0
      %901 = vmatprep.subr.mxu0 0.0
      %902 = vmatpush2.msra.mxu0 0.0
      %903 = vmatprep.subr.mxu0 0.0
      %904 = vmatpush2.msra.mxu0 0.0
      %905 = vmatprep.subr.mxu0 0.0
      %906 = vmatpush2.msra.mxu0 0.0
      %907 = vmatprep.subr.mxu0 0.0
      %908 = vmatpush2.msra.mxu0 0.0
      %909 = vmatprep.subr.mxu0 0.0
      %910 = vmatpush2.msra.mxu0 0.0
      %911 = vmatprep.subr.mxu0 0.0
      %912 = vmatpush2.msra.mxu0 0.0
      %913 = vmatprep.subr.mxu0 0.0
      %914 = vmatpush2.msra.mxu0 0.0
      %915 = vmatprep.mubr.f32.mxu0 0.0
      %916 = vmatmul.mubr.f32.gmra.mxu0 %v837
      %v917 = vpop.f32.mrf.mxu0
      %v918 = vadd.f32 0.0, %v917
      %v919 = vpop.f32.mrf.mxu0
      %920 = vmatprep.mubr.f32.mxu0 0.0
      %921 = vmatmul.mubr.f32.gmra.mxu0 %v840
      %v922 = vpop.f32.mrf.mxu0
      %v923 = vadd.f32 0.0, %v922
      %v924 = vpop.f32.mrf.mxu0
      %925 = vmatprep.mubr.f32.mxu0 0.0
      %926 = vmatmul.mubr.f32.gmra.mxu0 %v843
      %v927 = vpop.f32.mrf.mxu0
      %v928 = vadd.f32 0.0, %v927
      %v929 = vpop.f32.mrf.mxu0
      %930 = vmatprep.mubr.f32.mxu0 0.0
      %931 = vmatmul.mubr.f32.gmra.mxu0 %v846
      %v932 = vpop.f32.mrf.mxu0
      %v933 = vadd.f32 0.0, %v932
      %v934 = vpop.f32.mrf.mxu0
      %935 = vmatprep.mubr.f32.mxu0 0.0
      %936 = vmatmul.mubr.f32.gmra.mxu0 %v849
      %v937 = vpop.f32.mrf.mxu0
      %v938 = vadd.f32 0.0, %v937
      %v939 = vpop.f32.mrf.mxu0
      %940 = vdwg.mxu0
      %941 = vrot.lane.b32.xlu0 %v613, 112
      %v942 = vpop.permute.xlu0 %941
      %943 = vrot.lane.b32.xlu0 %v619, 112
      %v944 = vpop.permute.xlu0 %943
      %945 = vrot.lane.b32.xlu0 %v625, 112
      %v946 = vpop.permute.xlu0 %945
      %947 = vrot.lane.b32.xlu0 %v631, 112
      %v948 = vpop.permute.xlu0 %947
      %949 = vrot.lane.b32.xlu0 %v637, 112
      %v950 = vpop.permute.xlu0 %949
      %951 = vrot.lane.b32.xlu0 %v613, 48
      %v952 = vpop.permute.xlu0 %951
      %953 = vrot.lane.b32.xlu0 %v619, 48
      %v954 = vpop.permute.xlu0 %953
      %955 = vrot.lane.b32.xlu0 %v625, 48
      %v956 = vpop.permute.xlu0 %955
      %957 = vrot.lane.b32.xlu0 %v631, 48
      %v958 = vpop.permute.xlu0 %957
      %959 = vrot.lane.b32.xlu0 %v637, 48
      %v960 = vpop.permute.xlu0 %959
      %v961 = vsel %vm664, %v942, 0
      %v963 = vsel %vm664, %v944, 0
      %v965 = vsel %vm664, %v946, 0
      %v967 = vsel %vm664, %v948, 0
      %v969 = vsel %vm664, %v950, 0
      %v971 = vsel %vm664, %v952, 0
      %v973 = vsel %vm664, %v954, 0
      %v975 = vsel %vm664, %v956, 0
      %v977 = vsel %vm664, %v958, 0
      %v979 = vsel %vm664, %v960, 0
      %981 = vmatprep.subr.mxu0 0.0
      %982 = vmatpush1.xpose.msra.mxu0 0.0
      %983 = vmatprep.subr.mxu0 0.0
      %984 = vmatpush1.xpose.msra.mxu0 0.0
      %985 = vmatprep.subr.mxu0 0.0
      %986 = vmatpush1.xpose.msra.mxu0 0.0
      %987 = vmatprep.subr.mxu0 0.0
      %988 = vmatpush1.xpose.msra.mxu0 0.0
      %989 = vmatprep.subr.mxu0 0.0
      %990 = vmatpush1.xpose.msra.mxu0 0.0
      %991 = vmatprep.subr.mxu0 0.0
      %992 = vmatpush1.xpose.msra.mxu0 0.0
      %993 = vmatprep.subr.mxu0 0.0
      %994 = vmatpush1.xpose.msra.mxu0 0.0
      %995 = vmatprep.subr.mxu0 0.0
      %996 = vmatpush1.xpose.msra.mxu0 0.0
      %997 = vmatprep.subr.mxu0 0.0
      %998 = vmatpush1.xpose.msra.mxu0 0.0
      %999 = vmatprep.subr.mxu0 0.0
      %1000 = vmatpush1.xpose.msra.mxu0 0.0
      %1001 = vmatprep.subr.mxu0 0.0
      %1002 = vmatpush1.xpose.msra.mxu0 0.0
      %1003 = vmatprep.subr.mxu0 0.0
      %1004 = vmatpush1.xpose.msra.mxu0 %v979
      %1005 = vmatprep.subr.mxu0 0.0
      %1006 = vmatpush1.xpose.msra.mxu0 %v977
      %1007 = vmatprep.subr.mxu0 0.0
      %1008 = vmatpush1.xpose.msra.mxu0 %v975
      %1009 = vmatprep.subr.mxu0 0.0
      %1010 = vmatpush1.xpose.msra.mxu0 %v973
      %1011 = vmatprep.subr.mxu0 0.0
      %1012 = vmatpush1.xpose.msra.mxu0 %v971
      %1013 = vmatprep.subr.mxu0 0.0
      %1014 = vmatpush2.xpose.msra.mxu0 0.0
      %1015 = vmatprep.subr.mxu0 0.0
      %1016 = vmatpush2.xpose.msra.mxu0 0.0
      %1017 = vmatprep.subr.mxu0 0.0
      %1018 = vmatpush2.xpose.msra.mxu0 0.0
      %1019 = vmatprep.subr.mxu0 0.0
      %1020 = vmatpush2.xpose.msra.mxu0 0.0
      %1021 = vmatprep.subr.mxu0 0.0
      %1022 = vmatpush2.xpose.msra.mxu0 0.0
      %1023 = vmatprep.subr.mxu0 0.0
      %1024 = vmatpush2.xpose.msra.mxu0 0.0
      %1025 = vmatprep.subr.mxu0 0.0
      %1026 = vmatpush2.xpose.msra.mxu0 0.0
      %1027 = vmatprep.subr.mxu0 0.0
      %1028 = vmatpush2.xpose.msra.mxu0 0.0
      %1029 = vmatprep.subr.mxu0 0.0
      %1030 = vmatpush2.xpose.msra.mxu0 0.0
      %1031 = vmatprep.subr.mxu0 0.0
      %1032 = vmatpush2.xpose.msra.mxu0 0.0
      %1033 = vmatprep.subr.mxu0 0.0
      %1034 = vmatpush2.xpose.msra.mxu0 0.0
      %1035 = vmatprep.subr.mxu0 0.0
      %1036 = vmatpush2.xpose.msra.mxu0 0.0
      %1037 = vmatprep.subr.mxu0 0.0
      %1038 = vmatpush2.xpose.msra.mxu0 0.0
      %1039 = vmatprep.subr.mxu0 0.0
      %1040 = vmatpush2.xpose.msra.mxu0 0.0
      %1041 = vmatprep.subr.mxu0 0.0
      %1042 = vmatpush2.xpose.msra.mxu0 0.0
      %1043 = vmatprep.subr.mxu0 0.0
      %1044 = vmatpush2.xpose.msra.mxu0 0.0
      %1045 = vmatprep.mubr.f32.mxu0 0.0
      %1046 = vmatmul.mubr.f32.gmra.mxu0 %v961
      %v1047 = vpop.f32.mrf.mxu0
      %v1048 = vadd.f32 0.0, %v1047
      %v1049 = vpop.f32.mrf.mxu0
      %1050 = vmatprep.mubr.f32.mxu0 0.0
      %1051 = vmatmul.mubr.f32.gmra.mxu0 %v963
      %v1052 = vpop.f32.mrf.mxu0
      %v1053 = vadd.f32 0.0, %v1052
      %v1054 = vpop.f32.mrf.mxu0
      %1055 = vmatprep.mubr.f32.mxu0 0.0
      %1056 = vmatmul.mubr.f32.gmra.mxu0 %v965
      %v1057 = vpop.f32.mrf.mxu0
      %v1058 = vadd.f32 0.0, %v1057
      %v1059 = vpop.f32.mrf.mxu0
      %1060 = vmatprep.mubr.f32.mxu0 0.0
      %1061 = vmatmul.mubr.f32.gmra.mxu0 %v967
      %v1062 = vpop.f32.mrf.mxu0
      %v1063 = vadd.f32 0.0, %v1062
      %v1064 = vpop.f32.mrf.mxu0
      %1065 = vmatprep.mubr.f32.mxu0 0.0
      %1066 = vmatmul.mubr.f32.gmra.mxu0 %v969
      %v1067 = vpop.f32.mrf.mxu0
      %v1068 = vadd.f32 0.0, %v1067
      %v1069 = vpop.f32.mrf.mxu0
      %1070 = vdwg.mxu0
      %v1071 = vmul.f32 %v1048, 0.25
      %v1072 = vmul.f32 %v1053, 0.25
      %v1073 = vmul.f32 %v1058, 0.25
      %v1074 = vmul.f32 %v1063, 0.25
      %v1075 = vmul.f32 %v1068, 0.25
      %v1076 = vsel %vm780, %v1071, -inf
      %1077 = vmax.xlane.f32.xlu0 %v1076
      %v1078 = vpop.xlane.xlu0 %1077
      %v1079 = vsel %vm780, %v1072, -inf
      %1080 = vmax.xlane.f32.xlu0 %v1079
      %v1081 = vpop.xlane.xlu0 %1080
      %v1082 = vsel %vm780, %v1073, -inf
      %1083 = vmax.xlane.f32.xlu0 %v1082
      %v1084 = vpop.xlane.xlu0 %1083
      %v1085 = vsel %vm780, %v1074, -inf
      %1086 = vmax.xlane.f32.xlu0 %v1085
      %v1087 = vpop.xlane.xlu0 %1086
      %v1088 = vsel %vm780, %v1075, -inf
      %1089 = vmax.xlane.f32.xlu0 %v1088
      %v1090 = vpop.xlane.xlu0 %1089
      %v1091 = vsub.f32 %v1071, %v1078
      %v1092 = vsub.f32 %v1072, %v1081
      %v1093 = vsub.f32 %v1073, %v1084
      %v1094 = vsub.f32 %v1074, %v1087
      %v1095 = vsub.f32 %v1075, %v1090
      %v1096 = vmul.f32 %v1091, 1.442695
      %v1097 = vpow.pop %v1096
      %v1098 = vmul.f32 %v1092, 1.442695
      %v1099 = vpow.pop %v1098
      %v1100 = vmul.f32 %v1093, 1.442695
      %v1101 = vpow.pop %v1100
      %v1102 = vmul.f32 %v1094, 1.442695
      %v1103 = vpow.pop %v1102
      %v1104 = vmul.f32 %v1095, 1.442695
      %v1105 = vpow.pop %v1104
      %v1106 = vsel %vm780, %v1097, 0.0
      %1107 = vadd.xlane.f32.xlu0 %v1106
      %v1108 = vpop.xlane.xlu0 %1107
      %v1109 = vsel %vm780, %v1099, 0.0
      %1110 = vadd.xlane.f32.xlu0 %v1109
      %v1111 = vpop.xlane.xlu0 %1110
      %v1112 = vsel %vm780, %v1101, 0.0
      %1113 = vadd.xlane.f32.xlu0 %v1112
      %v1114 = vpop.xlane.xlu0 %1113
      %v1115 = vsel %vm780, %v1103, 0.0
      %1116 = vadd.xlane.f32.xlu0 %v1115
      %v1117 = vpop.xlane.xlu0 %1116
      %v1118 = vsel %vm780, %v1105, 0.0
      %1119 = vadd.xlane.f32.xlu0 %v1118
      %v1120 = vpop.xlane.xlu0 %1119
      %v1121 = vrcp.pop %v1108
      %v1122 = vrcp.pop %v1111
      %v1123 = vrcp.pop %v1114
      %v1124 = vrcp.pop %v1117
      %v1125 = vrcp.pop %v1120
      %v1126 = vmul.f32 %v1097, %v1121
      %v1127 = vmul.f32 %v1099, %v1122
      %v1128 = vmul.f32 %v1101, %v1123
      %v1129 = vmul.f32 %v1103, %v1124
      %v1130 = vmul.f32 %v1105, %v1125
      %1136 = vrot.lane.b32.xlu0 %v615, 112
      %v1137 = vpop.permute.xlu0 %1136
      %1138 = vrot.lane.b32.xlu0 %v621, 112
      %v1139 = vpop.permute.xlu0 %1138
      %1140 = vrot.lane.b32.xlu0 %v627, 112
      %v1141 = vpop.permute.xlu0 %1140
      %1142 = vrot.lane.b32.xlu0 %v633, 112
      %v1143 = vpop.permute.xlu0 %1142
      %1144 = vrot.lane.b32.xlu0 %v639, 112
      %v1145 = vpop.permute.xlu0 %1144
      %v1152 = vsel %vm780, %v1126, 0
      %v1155 = vsel %vm780, %v1127, 0
      %v1158 = vsel %vm780, %v1128, 0
      %v1161 = vsel %vm780, %v1129, 0
      %v1164 = vsel %vm780, %v1130, 0
      %1166 = vmatprep.subr.mxu0 0.0
      %1167 = vmatpush1.msra.mxu0 0.0
      %1168 = vmatprep.subr.mxu0 0.0
      %1169 = vmatpush1.msra.mxu0 0.0
      %1170 = vmatprep.subr.mxu0 0.0
      %1171 = vmatpush1.msra.mxu0 0.0
      %1172 = vmatprep.subr.mxu0 0.0
      %1173 = vmatpush1.msra.mxu0 0.0
      %1174 = vmatprep.subr.mxu0 0.0
      %1175 = vmatpush1.msra.mxu0 0.0
      %1176 = vmatprep.subr.mxu0 0.0
      %1177 = vmatpush1.msra.mxu0 0.0
      %1178 = vmatprep.subr.mxu0 0.0
      %1179 = vmatpush1.msra.mxu0 0.0
      %1180 = vmatprep.subr.mxu0 0.0
      %1181 = vmatpush1.msra.mxu0 0.0
      %1182 = vmatprep.subr.mxu0 0.0
      %1183 = vmatpush1.msra.mxu0 0.0
      %1184 = vmatprep.subr.mxu0 0.0
      %1185 = vmatpush1.msra.mxu0 0.0
      %1186 = vmatprep.subr.mxu0 0.0
      %1187 = vmatpush1.msra.mxu0 0.0
      %1188 = vmatprep.subr.mxu0 0.0
      %1189 = vmatpush1.msra.mxu0 %v1145
      %1190 = vmatprep.subr.mxu0 0.0
      %1191 = vmatpush1.msra.mxu0 %v1143
      %1192 = vmatprep.subr.mxu0 0.0
      %1193 = vmatpush1.msra.mxu0 %v1141
      %1194 = vmatprep.subr.mxu0 0.0
      %1195 = vmatpush1.msra.mxu0 %v1139
      %1196 = vmatprep.subr.mxu0 0.0
      %1197 = vmatpush1.msra.mxu0 %v1137
      %1198 = vmatprep.subr.mxu0 0.0
      %1199 = vmatpush2.msra.mxu0 0.0
      %1200 = vmatprep.subr.mxu0 0.0
      %1201 = vmatpush2.msra.mxu0 0.0
      %1202 = vmatprep.subr.mxu0 0.0
      %1203 = vmatpush2.msra.mxu0 0.0
      %1204 = vmatprep.subr.mxu0 0.0
      %1205 = vmatpush2.msra.mxu0 0.0
      %1206 = vmatprep.subr.mxu0 0.0
      %1207 = vmatpush2.msra.mxu0 0.0
      %1208 = vmatprep.subr.mxu0 0.0
      %1209 = vmatpush2.msra.mxu0 0.0
      %1210 = vmatprep.subr.mxu0 0.0
      %1211 = vmatpush2.msra.mxu0 0.0
      %1212 = vmatprep.subr.mxu0 0.0
      %1213 = vmatpush2.msra.mxu0 0.0
      %1214 = vmatprep.subr.mxu0 0.0
      %1215 = vmatpush2.msra.mxu0 0.0
      %1216 = vmatprep.subr.mxu0 0.0
      %1217 = vmatpush2.msra.mxu0 0.0
      %1218 = vmatprep.subr.mxu0 0.0
      %1219 = vmatpush2.msra.mxu0 0.0
      %1220 = vmatprep.subr.mxu0 0.0
      %1221 = vmatpush2.msra.mxu0 0.0
      %1222 = vmatprep.subr.mxu0 0.0
      %1223 = vmatpush2.msra.mxu0 0.0
      %1224 = vmatprep.subr.mxu0 0.0
      %1225 = vmatpush2.msra.mxu0 0.0
      %1226 = vmatprep.subr.mxu0 0.0
      %1227 = vmatpush2.msra.mxu0 0.0
      %1228 = vmatprep.subr.mxu0 0.0
      %1229 = vmatpush2.msra.mxu0 0.0
      %1230 = vmatprep.mubr.f32.mxu0 0.0
      %1231 = vmatmul.mubr.f32.gmra.mxu0 %v1152
      %v1232 = vpop.f32.mrf.mxu0
      %v1233 = vadd.f32 0.0, %v1232
      %v1234 = vpop.f32.mrf.mxu0
      %1235 = vmatprep.mubr.f32.mxu0 0.0
      %1236 = vmatmul.mubr.f32.gmra.mxu0 %v1155
      %v1237 = vpop.f32.mrf.mxu0
      %v1238 = vadd.f32 0.0, %v1237
      %v1239 = vpop.f32.mrf.mxu0
      %1240 = vmatprep.mubr.f32.mxu0 0.0
      %1241 = vmatmul.mubr.f32.gmra.mxu0 %v1158
      %v1242 = vpop.f32.mrf.mxu0
      %v1243 = vadd.f32 0.0, %v1242
      %v1244 = vpop.f32.mrf.mxu0
      %1245 = vmatprep.mubr.f32.mxu0 0.0
      %1246 = vmatmul.mubr.f32.gmra.mxu0 %v1161
      %v1247 = vpop.f32.mrf.mxu0
      %v1248 = vadd.f32 0.0, %v1247
      %v1249 = vpop.f32.mrf.mxu0
      %1250 = vmatprep.mubr.f32.mxu0 0.0
      %1251 = vmatmul.mubr.f32.gmra.mxu0 %v1164
      %v1252 = vpop.f32.mrf.mxu0
      %v1253 = vadd.f32 0.0, %v1252
      %v1254 = vpop.f32.mrf.mxu0
      %1255 = vdwg.mxu0
      %v1257 = vsel %vm664, %v1233, 0
      %v1260 = vsel %vm664, %v1238, 0
      %v1263 = vsel %vm664, %v1243, 0
      %v1266 = vsel %vm664, %v1248, 0
      %v1269 = vsel %vm664, %v1253, 0
      %1271 = vmatprep.subr.mxu0 0.0
      %1272 = vmatpush1.msra.mxu0 0.0
      %1273 = vmatprep.subr.mxu0 0.0
      %1274 = vmatpush1.msra.mxu0 0.0
      %1275 = vmatprep.subr.mxu0 0.0
      %1276 = vmatpush1.msra.mxu0 0.0
      %1277 = vmatprep.subr.mxu0 0.0
      %1278 = vmatpush1.msra.mxu0 0.0
      %1279 = vmatprep.subr.mxu0 0.0
      %1280 = vmatpush1.msra.mxu0 0.0
      %1281 = vmatprep.subr.mxu0 0.0
      %1282 = vmatpush1.msra.mxu0 0.0
      %1283 = vmatprep.subr.mxu0 0.0
      %1284 = vmatpush1.msra.mxu0 0.0
      %1285 = vmatprep.subr.mxu0 0.0
      %1286 = vmatpush1.msra.mxu0 0.0
      %1287 = vmatprep.subr.mxu0 0.0
      %1288 = vmatpush1.msra.mxu0 0.0
      %1289 = vmatprep.subr.mxu0 0.0
      %1290 = vmatpush1.msra.mxu0 0.0
      %1291 = vmatprep.subr.mxu0 0.0
      %1292 = vmatpush1.msra.mxu0 0.0
      %1293 = vmatprep.subr.mxu0 0.0
      %1294 = vmatpush1.msra.mxu0 0.0
      %1295 = vmatprep.subr.mxu0 0.0
      %1296 = vmatpush1.msra.mxu0 0.0
      %1297 = vmatprep.subr.mxu0 0.0
      %1298 = vmatpush1.msra.mxu0 0.0
      %1299 = vmatprep.subr.mxu0 0.0
      %1300 = vmatpush1.msra.mxu0 %v644
      %1301 = vmatprep.subr.mxu0 0.0
      %1302 = vmatpush1.msra.mxu0 %v643
      %1303 = vmatprep.subr.mxu0 0.0
      %1304 = vmatpush2.msra.mxu0 0.0
      %1305 = vmatprep.subr.mxu0 0.0
      %1306 = vmatpush2.msra.mxu0 0.0
      %1307 = vmatprep.subr.mxu0 0.0
      %1308 = vmatpush2.msra.mxu0 0.0
      %1309 = vmatprep.subr.mxu0 0.0
      %1310 = vmatpush2.msra.mxu0 0.0
      %1311 = vmatprep.subr.mxu0 0.0
      %1312 = vmatpush2.msra.mxu0 0.0
      %1313 = vmatprep.subr.mxu0 0.0
      %1314 = vmatpush2.msra.mxu0 0.0
      %1315 = vmatprep.subr.mxu0 0.0
      %1316 = vmatpush2.msra.mxu0 0.0
      %1317 = vmatprep.subr.mxu0 0.0
      %1318 = vmatpush2.msra.mxu0 0.0
      %1319 = vmatprep.subr.mxu0 0.0
      %1320 = vmatpush2.msra.mxu0 0.0
      %1321 = vmatprep.subr.mxu0 0.0
      %1322 = vmatpush2.msra.mxu0 0.0
      %1323 = vmatprep.subr.mxu0 0.0
      %1324 = vmatpush2.msra.mxu0 0.0
      %1325 = vmatprep.subr.mxu0 0.0
      %1326 = vmatpush2.msra.mxu0 0.0
      %1327 = vmatprep.subr.mxu0 0.0
      %1328 = vmatpush2.msra.mxu0 0.0
      %1329 = vmatprep.subr.mxu0 0.0
      %1330 = vmatpush2.msra.mxu0 0.0
      %1331 = vmatprep.subr.mxu0 0.0
      %1332 = vmatpush2.msra.mxu0 0.0
      %1333 = vmatprep.subr.mxu0 0.0
      %1334 = vmatpush2.msra.mxu0 0.0
      %1335 = vmatprep.mubr.f32.mxu0 0.0
      %1336 = vmatmul.mubr.f32.gmra.mxu0 %v1257
      %v1337 = vpop.f32.mrf.mxu0
      %v1338 = vadd.f32 0.0, %v1337
      %v1339 = vpop.f32.mrf.mxu0
      %1340 = vmatprep.mubr.f32.mxu0 0.0
      %1341 = vmatmul.mubr.f32.gmra.mxu0 %v1260
      %v1342 = vpop.f32.mrf.mxu0
      %v1343 = vadd.f32 0.0, %v1342
      %v1344 = vpop.f32.mrf.mxu0
      %1345 = vmatprep.mubr.f32.mxu0 0.0
      %1346 = vmatmul.mubr.f32.gmra.mxu0 %v1263
      %v1347 = vpop.f32.mrf.mxu0
      %v1348 = vadd.f32 0.0, %v1347
      %v1349 = vpop.f32.mrf.mxu0
      %1350 = vmatprep.mubr.f32.mxu0 0.0
      %1351 = vmatmul.mubr.f32.gmra.mxu0 %v1266
      %v1352 = vpop.f32.mrf.mxu0
      %v1353 = vadd.f32 0.0, %v1352
      %v1354 = vpop.f32.mrf.mxu0
      %1355 = vmatprep.mubr.f32.mxu0 0.0
      %1356 = vmatmul.mubr.f32.gmra.mxu0 %v1269
      %v1357 = vpop.f32.mrf.mxu0
      %v1358 = vadd.f32 0.0, %v1357
      %v1359 = vpop.f32.mrf.mxu0
      %1360 = vdwg.mxu0
      %v1362 = vsel %vm664, %v918, 0
      %v1365 = vsel %vm664, %v923, 0
      %v1368 = vsel %vm664, %v928, 0
      %v1371 = vsel %vm664, %v933, 0
      %v1374 = vsel %vm664, %v938, 0
      %1376 = vmatprep.subr.mxu0 0.0
      %1377 = vmatpush1.msra.mxu0 0.0
      %1378 = vmatprep.subr.mxu0 0.0
      %1379 = vmatpush1.msra.mxu0 0.0
      %1380 = vmatprep.subr.mxu0 0.0
      %1381 = vmatpush1.msra.mxu0 0.0
      %1382 = vmatprep.subr.mxu0 0.0
      %1383 = vmatpush1.msra.mxu0 0.0
      %1384 = vmatprep.subr.mxu0 0.0
      %1385 = vmatpush1.msra.mxu0 0.0
      %1386 = vmatprep.subr.mxu0 0.0
      %1387 = vmatpush1.msra.mxu0 0.0
      %1388 = vmatprep.subr.mxu0 0.0
      %1389 = vmatpush1.msra.mxu0 0.0
      %1390 = vmatprep.subr.mxu0 0.0
      %1391 = vmatpush1.msra.mxu0 0.0
      %1392 = vmatprep.subr.mxu0 0.0
      %1393 = vmatpush1.msra.mxu0 0.0
      %1394 = vmatprep.subr.mxu0 0.0
      %1395 = vmatpush1.msra.mxu0 0.0
      %1396 = vmatprep.subr.mxu0 0.0
      %1397 = vmatpush1.msra.mxu0 0.0
      %1398 = vmatprep.subr.mxu0 0.0
      %1399 = vmatpush1.msra.mxu0 0.0
      %1400 = vmatprep.subr.mxu0 0.0
      %1401 = vmatpush1.msra.mxu0 0.0
      %1402 = vmatprep.subr.mxu0 0.0
      %1403 = vmatpush1.msra.mxu0 0.0
      %1404 = vmatprep.subr.mxu0 0.0
      %1405 = vmatpush1.msra.mxu0 %v642
      %1406 = vmatprep.subr.mxu0 0.0
      %1407 = vmatpush1.msra.mxu0 %v641
      %1408 = vmatprep.subr.mxu0 0.0
      %1409 = vmatpush2.msra.mxu0 0.0
      %1410 = vmatprep.subr.mxu0 0.0
      %1411 = vmatpush2.msra.mxu0 0.0
      %1412 = vmatprep.subr.mxu0 0.0
      %1413 = vmatpush2.msra.mxu0 0.0
      %1414 = vmatprep.subr.mxu0 0.0
      %1415 = vmatpush2.msra.mxu0 0.0
      %1416 = vmatprep.subr.mxu0 0.0
      %1417 = vmatpush2.msra.mxu0 0.0
      %1418 = vmatprep.subr.mxu0 0.0
      %1419 = vmatpush2.msra.mxu0 0.0
      %1420 = vmatprep.subr.mxu0 0.0
      %1421 = vmatpush2.msra.mxu0 0.0
      %1422 = vmatprep.subr.mxu0 0.0
      %1423 = vmatpush2.msra.mxu0 0.0
      %1424 = vmatprep.subr.mxu0 0.0
      %1425 = vmatpush2.msra.mxu0 0.0
      %1426 = vmatprep.subr.mxu0 0.0
      %1427 = vmatpush2.msra.mxu0 0.0
      %1428 = vmatprep.subr.mxu0 0.0
      %1429 = vmatpush2.msra.mxu0 0.0
      %1430 = vmatprep.subr.mxu0 0.0
      %1431 = vmatpush2.msra.mxu0 0.0
      %1432 = vmatprep.subr.mxu0 0.0
      %1433 = vmatpush2.msra.mxu0 0.0
      %1434 = vmatprep.subr.mxu0 0.0
      %1435 = vmatpush2.msra.mxu0 0.0
      %1436 = vmatprep.subr.mxu0 0.0
      %1437 = vmatpush2.msra.mxu0 0.0
      %1438 = vmatprep.subr.mxu0 0.0
      %1439 = vmatpush2.msra.mxu0 0.0
      %1440 = vmatprep.mubr.f32.mxu0 0.0
      %1441 = vmatmul.mubr.f32.gmra.mxu0 %v1362
      %v1442 = vpop.f32.mrf.mxu0
      %v1443 = vadd.f32 %v1338, %v1442
      %v1444 = vpop.f32.mrf.mxu0
      %1445 = vmatprep.mubr.f32.mxu0 0.0
      %1446 = vmatmul.mubr.f32.gmra.mxu0 %v1365
      %v1447 = vpop.f32.mrf.mxu0
      %v1448 = vadd.f32 %v1343, %v1447
      %v1449 = vpop.f32.mrf.mxu0
      %1450 = vmatprep.mubr.f32.mxu0 0.0
      %1451 = vmatmul.mubr.f32.gmra.mxu0 %v1368
      %v1452 = vpop.f32.mrf.mxu0
      %v1453 = vadd.f32 %v1348, %v1452
      %v1454 = vpop.f32.mrf.mxu0
      %1455 = vmatprep.mubr.f32.mxu0 0.0
      %1456 = vmatmul.mubr.f32.gmra.mxu0 %v1371
      %v1457 = vpop.f32.mrf.mxu0
      %v1458 = vadd.f32 %v1353, %v1457
      %v1459 = vpop.f32.mrf.mxu0
      %1460 = vmatprep.mubr.f32.mxu0 0.0
      %1461 = vmatmul.mubr.f32.gmra.mxu0 %v1374
      %v1462 = vpop.f32.mrf.mxu0
      %v1463 = vadd.f32 %v1358, %v1462
      %v1464 = vpop.f32.mrf.mxu0
      %1465 = vdwg.mxu0
      %1466 = vrot.lane.b32.xlu0 %v613, 96
      %v1467 = vpop.permute.xlu0 %1466
      %1468 = vrot.lane.b32.xlu0 %v619, 96
      %v1469 = vpop.permute.xlu0 %1468
      %1470 = vrot.lane.b32.xlu0 %v625, 96
      %v1471 = vpop.permute.xlu0 %1470
      %1472 = vrot.lane.b32.xlu0 %v631, 96
      %v1473 = vpop.permute.xlu0 %1472
      %1474 = vrot.lane.b32.xlu0 %v637, 96
      %v1475 = vpop.permute.xlu0 %1474
      %1476 = vrot.lane.b32.xlu0 %v613, 32
      %v1477 = vpop.permute.xlu0 %1476
      %1478 = vrot.lane.b32.xlu0 %v619, 32
      %v1479 = vpop.permute.xlu0 %1478
      %1480 = vrot.lane.b32.xlu0 %v625, 32
      %v1481 = vpop.permute.xlu0 %1480
      %1482 = vrot.lane.b32.xlu0 %v631, 32
      %v1483 = vpop.permute.xlu0 %1482
      %1484 = vrot.lane.b32.xlu0 %v637, 32
      %v1485 = vpop.permute.xlu0 %1484
      %v1486 = vsel %vm664, %v1467, 0
      %v1488 = vsel %vm664, %v1469, 0
      %v1490 = vsel %vm664, %v1471, 0
      %v1492 = vsel %vm664, %v1473, 0
      %v1494 = vsel %vm664, %v1475, 0
      %v1496 = vsel %vm664, %v1477, 0
      %v1498 = vsel %vm664, %v1479, 0
      %v1500 = vsel %vm664, %v1481, 0
      %v1502 = vsel %vm664, %v1483, 0
      %v1504 = vsel %vm664, %v1485, 0
      %1506 = vmatprep.subr.mxu0 0.0
      %1507 = vmatpush1.xpose.msra.mxu0 0.0
      %1508 = vmatprep.subr.mxu0 0.0
      %1509 = vmatpush1.xpose.msra.mxu0 0.0
      %1510 = vmatprep.subr.mxu0 0.0
      %1511 = vmatpush1.xpose.msra.mxu0 0.0
      %1512 = vmatprep.subr.mxu0 0.0
      %1513 = vmatpush1.xpose.msra.mxu0 0.0
      %1514 = vmatprep.subr.mxu0 0.0
      %1515 = vmatpush1.xpose.msra.mxu0 0.0
      %1516 = vmatprep.subr.mxu0 0.0
      %1517 = vmatpush1.xpose.msra.mxu0 0.0
      %1518 = vmatprep.subr.mxu0 0.0
      %1519 = vmatpush1.xpose.msra.mxu0 0.0
      %1520 = vmatprep.subr.mxu0 0.0
      %1521 = vmatpush1.xpose.msra.mxu0 0.0
      %1522 = vmatprep.subr.mxu0 0.0
      %1523 = vmatpush1.xpose.msra.mxu0 0.0
      %1524 = vmatprep.subr.mxu0 0.0
      %1525 = vmatpush1.xpose.msra.mxu0 0.0
      %1526 = vmatprep.subr.mxu0 0.0
      %1527 = vmatpush1.xpose.msra.mxu0 0.0
      %1528 = vmatprep.subr.mxu0 0.0
      %1529 = vmatpush1.xpose.msra.mxu0 %v1504
      %1530 = vmatprep.subr.mxu0 0.0
      %1531 = vmatpush1.xpose.msra.mxu0 %v1502
      %1532 = vmatprep.subr.mxu0 0.0
      %1533 = vmatpush1.xpose.msra.mxu0 %v1500
      %1534 = vmatprep.subr.mxu0 0.0
      %1535 = vmatpush1.xpose.msra.mxu0 %v1498
      %1536 = vmatprep.subr.mxu0 0.0
      %1537 = vmatpush1.xpose.msra.mxu0 %v1496
      %1538 = vmatprep.subr.mxu0 0.0
      %1539 = vmatpush2.xpose.msra.mxu0 0.0
      %1540 = vmatprep.subr.mxu0 0.0
      %1541 = vmatpush2.xpose.msra.mxu0 0.0
      %1542 = vmatprep.subr.mxu0 0.0
      %1543 = vmatpush2.xpose.msra.mxu0 0.0
      %1544 = vmatprep.subr.mxu0 0.0
      %1545 = vmatpush2.xpose.msra.mxu0 0.0
      %1546 = vmatprep.subr.mxu0 0.0
      %1547 = vmatpush2.xpose.msra.mxu0 0.0
      %1548 = vmatprep.subr.mxu0 0.0
      %1549 = vmatpush2.xpose.msra.mxu0 0.0
      %1550 = vmatprep.subr.mxu0 0.0
      %1551 = vmatpush2.xpose.msra.mxu0 0.0
      %1552 = vmatprep.subr.mxu0 0.0
      %1553 = vmatpush2.xpose.msra.mxu0 0.0
      %1554 = vmatprep.subr.mxu0 0.0
      %1555 = vmatpush2.xpose.msra.mxu0 0.0
      %1556 = vmatprep.subr.mxu0 0.0
      %1557 = vmatpush2.xpose.msra.mxu0 0.0
      %1558 = vmatprep.subr.mxu0 0.0
      %1559 = vmatpush2.xpose.msra.mxu0 0.0
      %1560 = vmatprep.subr.mxu0 0.0
      %1561 = vmatpush2.xpose.msra.mxu0 0.0
      %1562 = vmatprep.subr.mxu0 0.0
      %1563 = vmatpush2.xpose.msra.mxu0 0.0
      %1564 = vmatprep.subr.mxu0 0.0
      %1565 = vmatpush2.xpose.msra.mxu0 0.0
      %1566 = vmatprep.subr.mxu0 0.0
      %1567 = vmatpush2.xpose.msra.mxu0 0.0
      %1568 = vmatprep.subr.mxu0 0.0
      %1569 = vmatpush2.xpose.msra.mxu0 0.0
      %1570 = vmatprep.mubr.f32.mxu0 0.0
      %1571 = vmatmul.mubr.f32.gmra.mxu0 %v1486
      %v1572 = vpop.f32.mrf.mxu0
      %v1573 = vadd.f32 0.0, %v1572
      %v1574 = vpop.f32.mrf.mxu0
      %1575 = vmatprep.mubr.f32.mxu0 0.0
      %1576 = vmatmul.mubr.f32.gmra.mxu0 %v1488
      %v1577 = vpop.f32.mrf.mxu0
      %v1578 = vadd.f32 0.0, %v1577
      %v1579 = vpop.f32.mrf.mxu0
      %1580 = vmatprep.mubr.f32.mxu0 0.0
      %1581 = vmatmul.mubr.f32.gmra.mxu0 %v1490
      %v1582 = vpop.f32.mrf.mxu0
      %v1583 = vadd.f32 0.0, %v1582
      %v1584 = vpop.f32.mrf.mxu0
      %1585 = vmatprep.mubr.f32.mxu0 0.0
      %1586 = vmatmul.mubr.f32.gmra.mxu0 %v1492
      %v1587 = vpop.f32.mrf.mxu0
      %v1588 = vadd.f32 0.0, %v1587
      %v1589 = vpop.f32.mrf.mxu0
      %1590 = vmatprep.mubr.f32.mxu0 0.0
      %1591 = vmatmul.mubr.f32.gmra.mxu0 %v1494
      %v1592 = vpop.f32.mrf.mxu0
      %v1593 = vadd.f32 0.0, %v1592
      %v1594 = vpop.f32.mrf.mxu0
      %1595 = vdwg.mxu0
      %v1596 = vmul.f32 %v1573, 0.25
      %v1597 = vmul.f32 %v1578, 0.25
      %v1598 = vmul.f32 %v1583, 0.25
      %v1599 = vmul.f32 %v1588, 0.25
      %v1600 = vmul.f32 %v1593, 0.25
      %v1601 = vsel %vm780, %v1596, -inf
      %1602 = vmax.xlane.f32.xlu0 %v1601
      %v1603 = vpop.xlane.xlu0 %1602
      %v1604 = vsel %vm780, %v1597, -inf
      %1605 = vmax.xlane.f32.xlu0 %v1604
      %v1606 = vpop.xlane.xlu0 %1605
      %v1607 = vsel %vm780, %v1598, -inf
      %1608 = vmax.xlane.f32.xlu0 %v1607
      %v1609 = vpop.xlane.xlu0 %1608
      %v1610 = vsel %vm780, %v1599, -inf
      %1611 = vmax.xlane.f32.xlu0 %v1610
      %v1612 = vpop.xlane.xlu0 %1611
      %v1613 = vsel %vm780, %v1600, -inf
      %1614 = vmax.xlane.f32.xlu0 %v1613
      %v1615 = vpop.xlane.xlu0 %1614
      %v1616 = vsub.f32 %v1596, %v1603
      %v1617 = vsub.f32 %v1597, %v1606
      %v1618 = vsub.f32 %v1598, %v1609
      %v1619 = vsub.f32 %v1599, %v1612
      %v1620 = vsub.f32 %v1600, %v1615
      %v1621 = vmul.f32 %v1616, 1.442695
      %v1622 = vpow.pop %v1621
      %v1623 = vmul.f32 %v1617, 1.442695
      %v1624 = vpow.pop %v1623
      %v1625 = vmul.f32 %v1618, 1.442695
      %v1626 = vpow.pop %v1625
      %v1627 = vmul.f32 %v1619, 1.442695
      %v1628 = vpow.pop %v1627
      %v1629 = vmul.f32 %v1620, 1.442695
      %v1630 = vpow.pop %v1629
      %v1631 = vsel %vm780, %v1622, 0.0
      %1632 = vadd.xlane.f32.xlu0 %v1631
      %v1633 = vpop.xlane.xlu0 %1632
      %v1634 = vsel %vm780, %v1624, 0.0
      %1635 = vadd.xlane.f32.xlu0 %v1634
      %v1636 = vpop.xlane.xlu0 %1635
      %v1637 = vsel %vm780, %v1626, 0.0
      %1638 = vadd.xlane.f32.xlu0 %v1637
      %v1639 = vpop.xlane.xlu0 %1638
      %v1640 = vsel %vm780, %v1628, 0.0
      %1641 = vadd.xlane.f32.xlu0 %v1640
      %v1642 = vpop.xlane.xlu0 %1641
      %v1643 = vsel %vm780, %v1630, 0.0
      %1644 = vadd.xlane.f32.xlu0 %v1643
      %v1645 = vpop.xlane.xlu0 %1644
      %v1646 = vrcp.pop %v1633
      %v1647 = vrcp.pop %v1636
      %v1648 = vrcp.pop %v1639
      %v1649 = vrcp.pop %v1642
      %v1650 = vrcp.pop %v1645
      %v1651 = vmul.f32 %v1622, %v1646
      %v1652 = vmul.f32 %v1624, %v1647
      %v1653 = vmul.f32 %v1626, %v1648
      %v1654 = vmul.f32 %v1628, %v1649
      %v1655 = vmul.f32 %v1630, %v1650
      %1656 = vrot.lane.b32.xlu0 %v615, 96
      %v1657 = vpop.permute.xlu0 %1656
      %1658 = vrot.lane.b32.xlu0 %v621, 96
      %v1659 = vpop.permute.xlu0 %1658
      %1660 = vrot.lane.b32.xlu0 %v627, 96
      %v1661 = vpop.permute.xlu0 %1660
      %1662 = vrot.lane.b32.xlu0 %v633, 96
      %v1663 = vpop.permute.xlu0 %1662
      %1664 = vrot.lane.b32.xlu0 %v639, 96
      %v1665 = vpop.permute.xlu0 %1664
      %v1672 = vsel %vm780, %v1651, 0
      %v1675 = vsel %vm780, %v1652, 0
      %v1678 = vsel %vm780, %v1653, 0
      %v1681 = vsel %vm780, %v1654, 0
      %v1684 = vsel %vm780, %v1655, 0
      %1686 = vmatprep.subr.mxu0 0.0
      %1687 = vmatpush1.msra.mxu0 0.0
      %1688 = vmatprep.subr.mxu0 0.0
      %1689 = vmatpush1.msra.mxu0 0.0
      %1690 = vmatprep.subr.mxu0 0.0
      %1691 = vmatpush1.msra.mxu0 0.0
      %1692 = vmatprep.subr.mxu0 0.0
      %1693 = vmatpush1.msra.mxu0 0.0
      %1694 = vmatprep.subr.mxu0 0.0
      %1695 = vmatpush1.msra.mxu0 0.0
      %1696 = vmatprep.subr.mxu0 0.0
      %1697 = vmatpush1.msra.mxu0 0.0
      %1698 = vmatprep.subr.mxu0 0.0
      %1699 = vmatpush1.msra.mxu0 0.0
      %1700 = vmatprep.subr.mxu0 0.0
      %1701 = vmatpush1.msra.mxu0 0.0
      %1702 = vmatprep.subr.mxu0 0.0
      %1703 = vmatpush1.msra.mxu0 0.0
      %1704 = vmatprep.subr.mxu0 0.0
      %1705 = vmatpush1.msra.mxu0 0.0
      %1706 = vmatprep.subr.mxu0 0.0
      %1707 = vmatpush1.msra.mxu0 0.0
      %1708 = vmatprep.subr.mxu0 0.0
      %1709 = vmatpush1.msra.mxu0 %v1665
      %1710 = vmatprep.subr.mxu0 0.0
      %1711 = vmatpush1.msra.mxu0 %v1663
      %1712 = vmatprep.subr.mxu0 0.0
      %1713 = vmatpush1.msra.mxu0 %v1661
      %1714 = vmatprep.subr.mxu0 0.0
      %1715 = vmatpush1.msra.mxu0 %v1659
      %1716 = vmatprep.subr.mxu0 0.0
      %1717 = vmatpush1.msra.mxu0 %v1657
      %1718 = vmatprep.subr.mxu0 0.0
      %1719 = vmatpush2.msra.mxu0 0.0
      %1720 = vmatprep.subr.mxu0 0.0
      %1721 = vmatpush2.msra.mxu0 0.0
      %1722 = vmatprep.subr.mxu0 0.0
      %1723 = vmatpush2.msra.mxu0 0.0
      %1724 = vmatprep.subr.mxu0 0.0
      %1725 = vmatpush2.msra.mxu0 0.0
      %1726 = vmatprep.subr.mxu0 0.0
      %1727 = vmatpush2.msra.mxu0 0.0
      %1728 = vmatprep.subr.mxu0 0.0
      %1729 = vmatpush2.msra.mxu0 0.0
      %1730 = vmatprep.subr.mxu0 0.0
      %1731 = vmatpush2.msra.mxu0 0.0
      %1732 = vmatprep.subr.mxu0 0.0
      %1733 = vmatpush2.msra.mxu0 0.0
      %1734 = vmatprep.subr.mxu0 0.0
      %1735 = vmatpush2.msra.mxu0 0.0
      %1736 = vmatprep.subr.mxu0 0.0
      %1737 = vmatpush2.msra.mxu0 0.0
      %1738 = vmatprep.subr.mxu0 0.0
      %1739 = vmatpush2.msra.mxu0 0.0
      %1740 = vmatprep.subr.mxu0 0.0
      %1741 = vmatpush2.msra.mxu0 0.0
      %1742 = vmatprep.subr.mxu0 0.0
      %1743 = vmatpush2.msra.mxu0 0.0
      %1744 = vmatprep.subr.mxu0 0.0
      %1745 = vmatpush2.msra.mxu0 0.0
      %1746 = vmatprep.subr.mxu0 0.0
      %1747 = vmatpush2.msra.mxu0 0.0
      %1748 = vmatprep.subr.mxu0 0.0
      %1749 = vmatpush2.msra.mxu0 0.0
      %1750 = vmatprep.mubr.f32.mxu0 0.0
      %1751 = vmatmul.mubr.f32.gmra.mxu0 %v1672
      %v1752 = vpop.f32.mrf.mxu0
      %v1753 = vadd.f32 0.0, %v1752
      %v1754 = vpop.f32.mrf.mxu0
      %1755 = vmatprep.mubr.f32.mxu0 0.0
      %1756 = vmatmul.mubr.f32.gmra.mxu0 %v1675
      %v1757 = vpop.f32.mrf.mxu0
      %v1758 = vadd.f32 0.0, %v1757
      %v1759 = vpop.f32.mrf.mxu0
      %1760 = vmatprep.mubr.f32.mxu0 0.0
      %1761 = vmatmul.mubr.f32.gmra.mxu0 %v1678
      %v1762 = vpop.f32.mrf.mxu0
      %v1763 = vadd.f32 0.0, %v1762
      %v1764 = vpop.f32.mrf.mxu0
      %1765 = vmatprep.mubr.f32.mxu0 0.0
      %1766 = vmatmul.mubr.f32.gmra.mxu0 %v1681
      %v1767 = vpop.f32.mrf.mxu0
      %v1768 = vadd.f32 0.0, %v1767
      %v1769 = vpop.f32.mrf.mxu0
      %1770 = vmatprep.mubr.f32.mxu0 0.0
      %1771 = vmatmul.mubr.f32.gmra.mxu0 %v1684
      %v1772 = vpop.f32.mrf.mxu0
      %v1773 = vadd.f32 0.0, %v1772
      %v1774 = vpop.f32.mrf.mxu0
      %1775 = vdwg.mxu0
      %v1777 = vsel %vm664, %v1753, 0
      %v1780 = vsel %vm664, %v1758, 0
      %v1783 = vsel %vm664, %v1763, 0
      %v1786 = vsel %vm664, %v1768, 0
      %v1789 = vsel %vm664, %v1773, 0
      %1791 = vmatprep.subr.mxu0 0.0
      %1792 = vmatpush1.msra.mxu0 0.0
      %1793 = vmatprep.subr.mxu0 0.0
      %1794 = vmatpush1.msra.mxu0 0.0
      %1795 = vmatprep.subr.mxu0 0.0
      %1796 = vmatpush1.msra.mxu0 0.0
      %1797 = vmatprep.subr.mxu0 0.0
      %1798 = vmatpush1.msra.mxu0 0.0
      %1799 = vmatprep.subr.mxu0 0.0
      %1800 = vmatpush1.msra.mxu0 0.0
      %1801 = vmatprep.subr.mxu0 0.0
      %1802 = vmatpush1.msra.mxu0 0.0
      %1803 = vmatprep.subr.mxu0 0.0
      %1804 = vmatpush1.msra.mxu0 0.0
      %1805 = vmatprep.subr.mxu0 0.0
      %1806 = vmatpush1.msra.mxu0 0.0
      %1807 = vmatprep.subr.mxu0 0.0
      %1808 = vmatpush1.msra.mxu0 0.0
      %1809 = vmatprep.subr.mxu0 0.0
      %1810 = vmatpush1.msra.mxu0 0.0
      %1811 = vmatprep.subr.mxu0 0.0
      %1812 = vmatpush1.msra.mxu0 0.0
      %1813 = vmatprep.subr.mxu0 0.0
      %1814 = vmatpush1.msra.mxu0 0.0
      %1815 = vmatprep.subr.mxu0 0.0
      %1816 = vmatpush1.msra.mxu0 0.0
      %1817 = vmatprep.subr.mxu0 0.0
      %1818 = vmatpush1.msra.mxu0 0.0
      %1819 = vmatprep.subr.mxu0 0.0
      %1820 = vmatpush1.msra.mxu0 %v646
      %1821 = vmatprep.subr.mxu0 0.0
      %1822 = vmatpush1.msra.mxu0 %v645
      %1823 = vmatprep.subr.mxu0 0.0
      %1824 = vmatpush2.msra.mxu0 0.0
      %1825 = vmatprep.subr.mxu0 0.0
      %1826 = vmatpush2.msra.mxu0 0.0
      %1827 = vmatprep.subr.mxu0 0.0
      %1828 = vmatpush2.msra.mxu0 0.0
      %1829 = vmatprep.subr.mxu0 0.0
      %1830 = vmatpush2.msra.mxu0 0.0
      %1831 = vmatprep.subr.mxu0 0.0
      %1832 = vmatpush2.msra.mxu0 0.0
      %1833 = vmatprep.subr.mxu0 0.0
      %1834 = vmatpush2.msra.mxu0 0.0
      %1835 = vmatprep.subr.mxu0 0.0
      %1836 = vmatpush2.msra.mxu0 0.0
      %1837 = vmatprep.subr.mxu0 0.0
      %1838 = vmatpush2.msra.mxu0 0.0
      %1839 = vmatprep.subr.mxu0 0.0
      %1840 = vmatpush2.msra.mxu0 0.0
      %1841 = vmatprep.subr.mxu0 0.0
      %1842 = vmatpush2.msra.mxu0 0.0
      %1843 = vmatprep.subr.mxu0 0.0
      %1844 = vmatpush2.msra.mxu0 0.0
      %1845 = vmatprep.subr.mxu0 0.0
      %1846 = vmatpush2.msra.mxu0 0.0
      %1847 = vmatprep.subr.mxu0 0.0
      %1848 = vmatpush2.msra.mxu0 0.0
      %1849 = vmatprep.subr.mxu0 0.0
      %1850 = vmatpush2.msra.mxu0 0.0
      %1851 = vmatprep.subr.mxu0 0.0
      %1852 = vmatpush2.msra.mxu0 0.0
      %1853 = vmatprep.subr.mxu0 0.0
      %1854 = vmatpush2.msra.mxu0 0.0
      %1855 = vmatprep.mubr.f32.mxu0 0.0
      %1856 = vmatmul.mubr.f32.gmra.mxu0 %v1777
      %v1857 = vpop.f32.mrf.mxu0
      %v1858 = vadd.f32 0.0, %v1857
      %v1859 = vpop.f32.mrf.mxu0
      %1860 = vmatprep.mubr.f32.mxu0 0.0
      %1861 = vmatmul.mubr.f32.gmra.mxu0 %v1780
      %v1862 = vpop.f32.mrf.mxu0
      %v1863 = vadd.f32 0.0, %v1862
      %v1864 = vpop.f32.mrf.mxu0
      %1865 = vmatprep.mubr.f32.mxu0 0.0
      %1866 = vmatmul.mubr.f32.gmra.mxu0 %v1783
      %v1867 = vpop.f32.mrf.mxu0
      %v1868 = vadd.f32 0.0, %v1867
      %v1869 = vpop.f32.mrf.mxu0
      %1870 = vmatprep.mubr.f32.mxu0 0.0
      %1871 = vmatmul.mubr.f32.gmra.mxu0 %v1786
      %v1872 = vpop.f32.mrf.mxu0
      %v1873 = vadd.f32 0.0, %v1872
      %v1874 = vpop.f32.mrf.mxu0
      %1875 = vmatprep.mubr.f32.mxu0 0.0
      %1876 = vmatmul.mubr.f32.gmra.mxu0 %v1789
      %v1877 = vpop.f32.mrf.mxu0
      %v1878 = vadd.f32 0.0, %v1877
      %v1879 = vpop.f32.mrf.mxu0
      %1880 = vdwg.mxu0
      %v1881 = vadd.f32 %v1443, %v1858
      %v1882 = vadd.f32 %v1448, %v1863
      %v1883 = vadd.f32 %v1453, %v1868
      %v1884 = vadd.f32 %v1458, %v1873
      %v1885 = vadd.f32 %v1463, %v1878
      %1886 = vrot.lane.b32.xlu0 %v613, 80
      %v1887 = vpop.permute.xlu0 %1886
      %1888 = vrot.lane.b32.xlu0 %v619, 80
      %v1889 = vpop.permute.xlu0 %1888
      %1890 = vrot.lane.b32.xlu0 %v625, 80
      %v1891 = vpop.permute.xlu0 %1890
      %1892 = vrot.lane.b32.xlu0 %v631, 80
      %v1893 = vpop.permute.xlu0 %1892
      %1894 = vrot.lane.b32.xlu0 %v637, 80
      %v1895 = vpop.permute.xlu0 %1894
      %1896 = vrot.lane.b32.xlu0 %v613, 16
      %v1897 = vpop.permute.xlu0 %1896
      %1898 = vrot.lane.b32.xlu0 %v619, 16
      %v1899 = vpop.permute.xlu0 %1898
      %1900 = vrot.lane.b32.xlu0 %v625, 16
      %v1901 = vpop.permute.xlu0 %1900
      %1902 = vrot.lane.b32.xlu0 %v631, 16
      %v1903 = vpop.permute.xlu0 %1902
      %1904 = vrot.lane.b32.xlu0 %v637, 16
      %v1905 = vpop.permute.xlu0 %1904
      %v1906 = vsel %vm664, %v1887, 0
      %v1908 = vsel %vm664, %v1889, 0
      %v1910 = vsel %vm664, %v1891, 0
      %v1912 = vsel %vm664, %v1893, 0
      %v1914 = vsel %vm664, %v1895, 0
      %v1916 = vsel %vm664, %v1897, 0
      %v1918 = vsel %vm664, %v1899, 0
      %v1920 = vsel %vm664, %v1901, 0
      %v1922 = vsel %vm664, %v1903, 0
      %v1924 = vsel %vm664, %v1905, 0
      %1926 = vmatprep.subr.mxu0 0.0
      %1927 = vmatpush1.xpose.msra.mxu0 0.0
      %1928 = vmatprep.subr.mxu0 0.0
      %1929 = vmatpush1.xpose.msra.mxu0 0.0
      %1930 = vmatprep.subr.mxu0 0.0
      %1931 = vmatpush1.xpose.msra.mxu0 0.0
      %1932 = vmatprep.subr.mxu0 0.0
      %1933 = vmatpush1.xpose.msra.mxu0 0.0
      %1934 = vmatprep.subr.mxu0 0.0
      %1935 = vmatpush1.xpose.msra.mxu0 0.0
      %1936 = vmatprep.subr.mxu0 0.0
      %1937 = vmatpush1.xpose.msra.mxu0 0.0
      %1938 = vmatprep.subr.mxu0 0.0
      %1939 = vmatpush1.xpose.msra.mxu0 0.0
      %1940 = vmatprep.subr.mxu0 0.0
      %1941 = vmatpush1.xpose.msra.mxu0 0.0
      %1942 = vmatprep.subr.mxu0 0.0
      %1943 = vmatpush1.xpose.msra.mxu0 0.0
      %1944 = vmatprep.subr.mxu0 0.0
      %1945 = vmatpush1.xpose.msra.mxu0 0.0
      %1946 = vmatprep.subr.mxu0 0.0
      %1947 = vmatpush1.xpose.msra.mxu0 0.0
      %1948 = vmatprep.subr.mxu0 0.0
      %1949 = vmatpush1.xpose.msra.mxu0 %v1924
      %1950 = vmatprep.subr.mxu0 0.0
      %1951 = vmatpush1.xpose.msra.mxu0 %v1922
      %1952 = vmatprep.subr.mxu0 0.0
      %1953 = vmatpush1.xpose.msra.mxu0 %v1920
      %1954 = vmatprep.subr.mxu0 0.0
      %1955 = vmatpush1.xpose.msra.mxu0 %v1918
      %1956 = vmatprep.subr.mxu0 0.0
      %1957 = vmatpush1.xpose.msra.mxu0 %v1916
      %1958 = vmatprep.subr.mxu0 0.0
      %1959 = vmatpush2.xpose.msra.mxu0 0.0
      %1960 = vmatprep.subr.mxu0 0.0
      %1961 = vmatpush2.xpose.msra.mxu0 0.0
      %1962 = vmatprep.subr.mxu0 0.0
      %1963 = vmatpush2.xpose.msra.mxu0 0.0
      %1964 = vmatprep.subr.mxu0 0.0
      %1965 = vmatpush2.xpose.msra.mxu0 0.0
      %1966 = vmatprep.subr.mxu0 0.0
      %1967 = vmatpush2.xpose.msra.mxu0 0.0
      %1968 = vmatprep.subr.mxu0 0.0
      %1969 = vmatpush2.xpose.msra.mxu0 0.0
      %1970 = vmatprep.subr.mxu0 0.0
      %1971 = vmatpush2.xpose.msra.mxu0 0.0
      %1972 = vmatprep.subr.mxu0 0.0
      %1973 = vmatpush2.xpose.msra.mxu0 0.0
      %1974 = vmatprep.subr.mxu0 0.0
      %1975 = vmatpush2.xpose.msra.mxu0 0.0
      %1976 = vmatprep.subr.mxu0 0.0
      %1977 = vmatpush2.xpose.msra.mxu0 0.0
      %1978 = vmatprep.subr.mxu0 0.0
      %1979 = vmatpush2.xpose.msra.mxu0 0.0
      %1980 = vmatprep.subr.mxu0 0.0
      %1981 = vmatpush2.xpose.msra.mxu0 0.0
      %1982 = vmatprep.subr.mxu0 0.0
      %1983 = vmatpush2.xpose.msra.mxu0 0.0
      %1984 = vmatprep.subr.mxu0 0.0
      %1985 = vmatpush2.xpose.msra.mxu0 0.0
      %1986 = vmatprep.subr.mxu0 0.0
      %1987 = vmatpush2.xpose.msra.mxu0 0.0
      %1988 = vmatprep.subr.mxu0 0.0
      %1989 = vmatpush2.xpose.msra.mxu0 0.0
      %1990 = vmatprep.mubr.f32.mxu0 0.0
      %1991 = vmatmul.mubr.f32.gmra.mxu0 %v1906
      %v1992 = vpop.f32.mrf.mxu0
      %v1993 = vadd.f32 0.0, %v1992
      %v1994 = vpop.f32.mrf.mxu0
      %1995 = vmatprep.mubr.f32.mxu0 0.0
      %1996 = vmatmul.mubr.f32.gmra.mxu0 %v1908
      %v1997 = vpop.f32.mrf.mxu0
      %v1998 = vadd.f32 0.0, %v1997
      %v1999 = vpop.f32.mrf.mxu0
      %2000 = vmatprep.mubr.f32.mxu0 0.0
      %2001 = vmatmul.mubr.f32.gmra.mxu0 %v1910
      %v2002 = vpop.f32.mrf.mxu0
      %v2003 = vadd.f32 0.0, %v2002
      %v2004 = vpop.f32.mrf.mxu0
      %2005 = vmatprep.mubr.f32.mxu0 0.0
      %2006 = vmatmul.mubr.f32.gmra.mxu0 %v1912
      %v2007 = vpop.f32.mrf.mxu0
      %v2008 = vadd.f32 0.0, %v2007
      %v2009 = vpop.f32.mrf.mxu0
      %2010 = vmatprep.mubr.f32.mxu0 0.0
      %2011 = vmatmul.mubr.f32.gmra.mxu0 %v1914
      %v2012 = vpop.f32.mrf.mxu0
      %v2013 = vadd.f32 0.0, %v2012
      %v2014 = vpop.f32.mrf.mxu0
      %2015 = vdwg.mxu0
      %v2016 = vmul.f32 %v1993, 0.25
      %v2017 = vmul.f32 %v1998, 0.25
      %v2018 = vmul.f32 %v2003, 0.25
      %v2019 = vmul.f32 %v2008, 0.25
      %v2020 = vmul.f32 %v2013, 0.25
      %v2021 = vsel %vm780, %v2016, -inf
      %2022 = vmax.xlane.f32.xlu0 %v2021
      %v2023 = vpop.xlane.xlu0 %2022
      %v2024 = vsel %vm780, %v2017, -inf
      %2025 = vmax.xlane.f32.xlu0 %v2024
      %v2026 = vpop.xlane.xlu0 %2025
      %v2027 = vsel %vm780, %v2018, -inf
      %2028 = vmax.xlane.f32.xlu0 %v2027
      %v2029 = vpop.xlane.xlu0 %2028
      %v2030 = vsel %vm780, %v2019, -inf
      %2031 = vmax.xlane.f32.xlu0 %v2030
      %v2032 = vpop.xlane.xlu0 %2031
      %v2033 = vsel %vm780, %v2020, -inf
      %2034 = vmax.xlane.f32.xlu0 %v2033
      %v2035 = vpop.xlane.xlu0 %2034
      %v2036 = vsub.f32 %v2016, %v2023
      %v2037 = vsub.f32 %v2017, %v2026
      %v2038 = vsub.f32 %v2018, %v2029
      %v2039 = vsub.f32 %v2019, %v2032
      %v2040 = vsub.f32 %v2020, %v2035
      %v2041 = vmul.f32 %v2036, 1.442695
      %v2042 = vpow.pop %v2041
      %v2043 = vmul.f32 %v2037, 1.442695
      %v2044 = vpow.pop %v2043
      %v2045 = vmul.f32 %v2038, 1.442695
      %v2046 = vpow.pop %v2045
      %v2047 = vmul.f32 %v2039, 1.442695
      %v2048 = vpow.pop %v2047
      %v2049 = vmul.f32 %v2040, 1.442695
      %v2050 = vpow.pop %v2049
      %v2051 = vsel %vm780, %v2042, 0.0
      %2052 = vadd.xlane.f32.xlu0 %v2051
      %v2053 = vpop.xlane.xlu0 %2052
      %v2054 = vsel %vm780, %v2044, 0.0
      %2055 = vadd.xlane.f32.xlu0 %v2054
      %v2056 = vpop.xlane.xlu0 %2055
      %v2057 = vsel %vm780, %v2046, 0.0
      %2058 = vadd.xlane.f32.xlu0 %v2057
      %v2059 = vpop.xlane.xlu0 %2058
      %v2060 = vsel %vm780, %v2048, 0.0
      %2061 = vadd.xlane.f32.xlu0 %v2060
      %v2062 = vpop.xlane.xlu0 %2061
      %v2063 = vsel %vm780, %v2050, 0.0
      %2064 = vadd.xlane.f32.xlu0 %v2063
      %v2065 = vpop.xlane.xlu0 %2064
      %v2066 = vrcp.pop %v2053
      %v2067 = vrcp.pop %v2056
      %v2068 = vrcp.pop %v2059
      %v2069 = vrcp.pop %v2062
      %v2070 = vrcp.pop %v2065
      %v2071 = vmul.f32 %v2042, %v2066
      %v2072 = vmul.f32 %v2044, %v2067
      %v2073 = vmul.f32 %v2046, %v2068
      %v2074 = vmul.f32 %v2048, %v2069
      %v2075 = vmul.f32 %v2050, %v2070
      %2076 = vrot.lane.b32.xlu0 %v615, 80
      %v2077 = vpop.permute.xlu0 %2076
      %2078 = vrot.lane.b32.xlu0 %v621, 80
      %v2079 = vpop.permute.xlu0 %2078
      %2080 = vrot.lane.b32.xlu0 %v627, 80
      %v2081 = vpop.permute.xlu0 %2080
      %2082 = vrot.lane.b32.xlu0 %v633, 80
      %v2083 = vpop.permute.xlu0 %2082
      %2084 = vrot.lane.b32.xlu0 %v639, 80
      %v2085 = vpop.permute.xlu0 %2084
      %v2092 = vsel %vm780, %v2071, 0
      %v2095 = vsel %vm780, %v2072, 0
      %v2098 = vsel %vm780, %v2073, 0
      %v2101 = vsel %vm780, %v2074, 0
      %v2104 = vsel %vm780, %v2075, 0
      %2106 = vmatprep.subr.mxu0 0.0
      %2107 = vmatpush1.msra.mxu0 0.0
      %2108 = vmatprep.subr.mxu0 0.0
      %2109 = vmatpush1.msra.mxu0 0.0
      %2110 = vmatprep.subr.mxu0 0.0
      %2111 = vmatpush1.msra.mxu0 0.0
      %2112 = vmatprep.subr.mxu0 0.0
      %2113 = vmatpush1.msra.mxu0 0.0
      %2114 = vmatprep.subr.mxu0 0.0
      %2115 = vmatpush1.msra.mxu0 0.0
      %2116 = vmatprep.subr.mxu0 0.0
      %2117 = vmatpush1.msra.mxu0 0.0
      %2118 = vmatprep.subr.mxu0 0.0
      %2119 = vmatpush1.msra.mxu0 0.0
      %2120 = vmatprep.subr.mxu0 0.0
      %2121 = vmatpush1.msra.mxu0 0.0
      %2122 = vmatprep.subr.mxu0 0.0
      %2123 = vmatpush1.msra.mxu0 0.0
      %2124 = vmatprep.subr.mxu0 0.0
      %2125 = vmatpush1.msra.mxu0 0.0
      %2126 = vmatprep.subr.mxu0 0.0
      %2127 = vmatpush1.msra.mxu0 0.0
      %2128 = vmatprep.subr.mxu0 0.0
      %2129 = vmatpush1.msra.mxu0 %v2085
      %2130 = vmatprep.subr.mxu0 0.0
      %2131 = vmatpush1.msra.mxu0 %v2083
      %2132 = vmatprep.subr.mxu0 0.0
      %2133 = vmatpush1.msra.mxu0 %v2081
      %2134 = vmatprep.subr.mxu0 0.0
      %2135 = vmatpush1.msra.mxu0 %v2079
      %2136 = vmatprep.subr.mxu0 0.0
      %2137 = vmatpush1.msra.mxu0 %v2077
      %2138 = vmatprep.subr.mxu0 0.0
      %2139 = vmatpush2.msra.mxu0 0.0
      %2140 = vmatprep.subr.mxu0 0.0
      %2141 = vmatpush2.msra.mxu0 0.0
      %2142 = vmatprep.subr.mxu0 0.0
      %2143 = vmatpush2.msra.mxu0 0.0
      %2144 = vmatprep.subr.mxu0 0.0
      %2145 = vmatpush2.msra.mxu0 0.0
      %2146 = vmatprep.subr.mxu0 0.0
      %2147 = vmatpush2.msra.mxu0 0.0
      %2148 = vmatprep.subr.mxu0 0.0
      %2149 = vmatpush2.msra.mxu0 0.0
      %2150 = vmatprep.subr.mxu0 0.0
      %2151 = vmatpush2.msra.mxu0 0.0
      %2152 = vmatprep.subr.mxu0 0.0
      %2153 = vmatpush2.msra.mxu0 0.0
      %2154 = vmatprep.subr.mxu0 0.0
      %2155 = vmatpush2.msra.mxu0 0.0
      %2156 = vmatprep.subr.mxu0 0.0
      %2157 = vmatpush2.msra.mxu0 0.0
      %2158 = vmatprep.subr.mxu0 0.0
      %2159 = vmatpush2.msra.mxu0 0.0
      %2160 = vmatprep.subr.mxu0 0.0
      %2161 = vmatpush2.msra.mxu0 0.0
      %2162 = vmatprep.subr.mxu0 0.0
      %2163 = vmatpush2.msra.mxu0 0.0
      %2164 = vmatprep.subr.mxu0 0.0
      %2165 = vmatpush2.msra.mxu0 0.0
      %2166 = vmatprep.subr.mxu0 0.0
      %2167 = vmatpush2.msra.mxu0 0.0
      %2168 = vmatprep.subr.mxu0 0.0
      %2169 = vmatpush2.msra.mxu0 0.0
      %2170 = vmatprep.mubr.f32.mxu0 0.0
      %2171 = vmatmul.mubr.f32.gmra.mxu0 %v2092
      %v2172 = vpop.f32.mrf.mxu0
      %v2173 = vadd.f32 0.0, %v2172
      %v2174 = vpop.f32.mrf.mxu0
      %2175 = vmatprep.mubr.f32.mxu0 0.0
      %2176 = vmatmul.mubr.f32.gmra.mxu0 %v2095
      %v2177 = vpop.f32.mrf.mxu0
      %v2178 = vadd.f32 0.0, %v2177
      %v2179 = vpop.f32.mrf.mxu0
      %2180 = vmatprep.mubr.f32.mxu0 0.0
      %2181 = vmatmul.mubr.f32.gmra.mxu0 %v2098
      %v2182 = vpop.f32.mrf.mxu0
      %v2183 = vadd.f32 0.0, %v2182
      %v2184 = vpop.f32.mrf.mxu0
      %2185 = vmatprep.mubr.f32.mxu0 0.0
      %2186 = vmatmul.mubr.f32.gmra.mxu0 %v2101
      %v2187 = vpop.f32.mrf.mxu0
      %v2188 = vadd.f32 0.0, %v2187
      %v2189 = vpop.f32.mrf.mxu0
      %2190 = vmatprep.mubr.f32.mxu0 0.0
      %2191 = vmatmul.mubr.f32.gmra.mxu0 %v2104
      %v2192 = vpop.f32.mrf.mxu0
      %v2193 = vadd.f32 0.0, %v2192
      %v2194 = vpop.f32.mrf.mxu0
      %2195 = vdwg.mxu0
      %v2197 = vsel %vm664, %v2173, 0
      %v2200 = vsel %vm664, %v2178, 0
      %v2203 = vsel %vm664, %v2183, 0
      %v2206 = vsel %vm664, %v2188, 0
      %v2209 = vsel %vm664, %v2193, 0
      %2211 = vmatprep.subr.mxu0 0.0
      %2212 = vmatpush1.msra.mxu0 0.0
      %2213 = vmatprep.subr.mxu0 0.0
      %2214 = vmatpush1.msra.mxu0 0.0
      %2215 = vmatprep.subr.mxu0 0.0
      %2216 = vmatpush1.msra.mxu0 0.0
      %2217 = vmatprep.subr.mxu0 0.0
      %2218 = vmatpush1.msra.mxu0 0.0
      %2219 = vmatprep.subr.mxu0 0.0
      %2220 = vmatpush1.msra.mxu0 0.0
      %2221 = vmatprep.subr.mxu0 0.0
      %2222 = vmatpush1.msra.mxu0 0.0
      %2223 = vmatprep.subr.mxu0 0.0
      %2224 = vmatpush1.msra.mxu0 0.0
      %2225 = vmatprep.subr.mxu0 0.0
      %2226 = vmatpush1.msra.mxu0 0.0
      %2227 = vmatprep.subr.mxu0 0.0
      %2228 = vmatpush1.msra.mxu0 0.0
      %2229 = vmatprep.subr.mxu0 0.0
      %2230 = vmatpush1.msra.mxu0 0.0
      %2231 = vmatprep.subr.mxu0 0.0
      %2232 = vmatpush1.msra.mxu0 0.0
      %2233 = vmatprep.subr.mxu0 0.0
      %2234 = vmatpush1.msra.mxu0 0.0
      %2235 = vmatprep.subr.mxu0 0.0
      %2236 = vmatpush1.msra.mxu0 0.0
      %2237 = vmatprep.subr.mxu0 0.0
      %2238 = vmatpush1.msra.mxu0 0.0
      %2239 = vmatprep.subr.mxu0 0.0
      %2240 = vmatpush1.msra.mxu0 %v648
      %2241 = vmatprep.subr.mxu0 0.0
      %2242 = vmatpush1.msra.mxu0 %v647
      %2243 = vmatprep.subr.mxu0 0.0
      %2244 = vmatpush2.msra.mxu0 0.0
      %2245 = vmatprep.subr.mxu0 0.0
      %2246 = vmatpush2.msra.mxu0 0.0
      %2247 = vmatprep.subr.mxu0 0.0
      %2248 = vmatpush2.msra.mxu0 0.0
      %2249 = vmatprep.subr.mxu0 0.0
      %2250 = vmatpush2.msra.mxu0 0.0
      %2251 = vmatprep.subr.mxu0 0.0
      %2252 = vmatpush2.msra.mxu0 0.0
      %2253 = vmatprep.subr.mxu0 0.0
      %2254 = vmatpush2.msra.mxu0 0.0
      %2255 = vmatprep.subr.mxu0 0.0
      %2256 = vmatpush2.msra.mxu0 0.0
      %2257 = vmatprep.subr.mxu0 0.0
      %2258 = vmatpush2.msra.mxu0 0.0
      %2259 = vmatprep.subr.mxu0 0.0
      %2260 = vmatpush2.msra.mxu0 0.0
      %2261 = vmatprep.subr.mxu0 0.0
      %2262 = vmatpush2.msra.mxu0 0.0
      %2263 = vmatprep.subr.mxu0 0.0
      %2264 = vmatpush2.msra.mxu0 0.0
      %2265 = vmatprep.subr.mxu0 0.0
      %2266 = vmatpush2.msra.mxu0 0.0
      %2267 = vmatprep.subr.mxu0 0.0
      %2268 = vmatpush2.msra.mxu0 0.0
      %2269 = vmatprep.subr.mxu0 0.0
      %2270 = vmatpush2.msra.mxu0 0.0
      %2271 = vmatprep.subr.mxu0 0.0
      %2272 = vmatpush2.msra.mxu0 0.0
      %2273 = vmatprep.subr.mxu0 0.0
      %2274 = vmatpush2.msra.mxu0 0.0
      %2275 = vmatprep.mubr.f32.mxu0 0.0
      %2276 = vmatmul.mubr.f32.gmra.mxu0 %v2197
      %v2277 = vpop.f32.mrf.mxu0
      %v2278 = vadd.f32 0.0, %v2277
      %v2279 = vpop.f32.mrf.mxu0
      %2280 = vmatprep.mubr.f32.mxu0 0.0
      %2281 = vmatmul.mubr.f32.gmra.mxu0 %v2200
      %v2282 = vpop.f32.mrf.mxu0
      %v2283 = vadd.f32 0.0, %v2282
      %v2284 = vpop.f32.mrf.mxu0
      %2285 = vmatprep.mubr.f32.mxu0 0.0
      %2286 = vmatmul.mubr.f32.gmra.mxu0 %v2203
      %v2287 = vpop.f32.mrf.mxu0
      %v2288 = vadd.f32 0.0, %v2287
      %v2289 = vpop.f32.mrf.mxu0
      %2290 = vmatprep.mubr.f32.mxu0 0.0
      %2291 = vmatmul.mubr.f32.gmra.mxu0 %v2206
      %v2292 = vpop.f32.mrf.mxu0
      %v2293 = vadd.f32 0.0, %v2292
      %v2294 = vpop.f32.mrf.mxu0
      %2295 = vmatprep.mubr.f32.mxu0 0.0
      %2296 = vmatmul.mubr.f32.gmra.mxu0 %v2209
      %v2297 = vpop.f32.mrf.mxu0
      %v2298 = vadd.f32 0.0, %v2297
      %v2299 = vpop.f32.mrf.mxu0
      %2300 = vdwg.mxu0
      %v2301 = vadd.f32 %v1881, %v2278
      %v2302 = vadd.f32 %v1882, %v2283
      %v2303 = vadd.f32 %v1883, %v2288
      %v2304 = vadd.f32 %v1884, %v2293
      %v2305 = vadd.f32 %v1885, %v2298
      %v2306 = vld [vmem:[%s4] sm:$0x1]
      %v2308 = vlaneseq
      %v2309 = vshrl.u32 %v2308, 7
      %v2310 = vsub.s32 0, %v2309
      %v2311 = vrot.slane %v2306, %v2310
      %v2313 = vadd.f32 %v2301, %v2311
      %v2314 = vadd.f32 %v2302, %v2311
      %v2315 = vadd.f32 %v2303, %v2311
      %v2316 = vadd.f32 %v2304, %v2311
      %v2317 = vadd.f32 %v2305, %v2311
      %v2318 = vadd.f32 %v2313, %v497
      %v2319 = vadd.f32 %v2314, %v498
      %v2320 = vadd.f32 %v2315, %v499
      %v2321 = vadd.f32 %v2316, %v500
      %v2322 = vadd.f32 %v2317, %v501
      %v2323 = vsel %vm530, %v2318, 0.0
      %2324 = vadd.xlane.f32.xlu0 %v2323
      %v2325 = vpop.xlane.xlu0 %2324
      %v2326 = vsel %vm530, %v2319, 0.0
      %2327 = vadd.xlane.f32.xlu0 %v2326
      %v2328 = vpop.xlane.xlu0 %2327
      %v2329 = vsel %vm530, %v2320, 0.0
      %2330 = vadd.xlane.f32.xlu0 %v2329
      %v2331 = vpop.xlane.xlu0 %2330
      %v2332 = vsel %vm530, %v2321, 0.0
      %2333 = vadd.xlane.f32.xlu0 %v2332
      %v2334 = vpop.xlane.xlu0 %2333
      %v2335 = vsel %vm530, %v2322, 0.0
      %2336 = vadd.xlane.f32.xlu0 %v2335
      %v2337 = vpop.xlane.xlu0 %2336
      %v2338 = vrcp.pop 64.0
      %v2339 = vmul.f32 %v2325, %v2338
      %v2340 = vmul.f32 %v2328, %v2338
      %v2341 = vmul.f32 %v2331, %v2338
      %v2342 = vmul.f32 %v2334, %v2338
      %v2343 = vmul.f32 %v2337, %v2338
      %v2344 = vsub.f32 %v2318, %v2339
      %v2345 = vsub.f32 %v2319, %v2340
      %v2346 = vsub.f32 %v2320, %v2341
      %v2347 = vsub.f32 %v2321, %v2342
      %v2348 = vsub.f32 %v2322, %v2343
      %v2349 = vmul.f32 %v2344, %v2344
      %v2350 = vmul.f32 %v2345, %v2345
      %v2351 = vmul.f32 %v2346, %v2346
      %v2352 = vmul.f32 %v2347, %v2347
      %v2353 = vmul.f32 %v2348, %v2348
      %v2354 = vsel %vm530, %v2349, 0.0
      %2355 = vadd.xlane.f32.xlu0 %v2354
      %v2356 = vpop.xlane.xlu0 %2355
      %v2357 = vsel %vm530, %v2350, 0.0
      %2358 = vadd.xlane.f32.xlu0 %v2357
      %v2359 = vpop.xlane.xlu0 %2358
      %v2360 = vsel %vm530, %v2351, 0.0
      %2361 = vadd.xlane.f32.xlu0 %v2360
      %v2362 = vpop.xlane.xlu0 %2361
      %v2363 = vsel %vm530, %v2352, 0.0
      %2364 = vadd.xlane.f32.xlu0 %v2363
      %v2365 = vpop.xlane.xlu0 %2364
      %v2366 = vsel %vm530, %v2353, 0.0
      %2367 = vadd.xlane.f32.xlu0 %v2366
      %v2368 = vpop.xlane.xlu0 %2367
      %v2369 = vmul.f32 %v2356, %v2338
      %v2370 = vmul.f32 %v2359, %v2338
      %v2371 = vmul.f32 %v2362, %v2338
      %v2372 = vmul.f32 %v2365, %v2338
      %v2373 = vmul.f32 %v2368, %v2338
      %v2374 = vadd.f32 %v2369, 1e-06
      %v2375 = vadd.f32 %v2370, 1e-06
      %v2376 = vadd.f32 %v2371, 1e-06
      %v2377 = vadd.f32 %v2372, 1e-06
      %v2378 = vadd.f32 %v2373, 1e-06
      %v2379 = vrsqrt.pop %v2374
      %v2380 = vrsqrt.pop %v2375
      %v2381 = vrsqrt.pop %v2376
      %v2382 = vrsqrt.pop %v2377
      %v2383 = vrsqrt.pop %v2378
      %v2384 = vmul.f32 %v2344, %v2379
      %v2385 = vmul.f32 %v2345, %v2380
      %v2386 = vmul.f32 %v2346, %v2381
      %v2387 = vmul.f32 %v2347, %v2382
      %v2388 = vmul.f32 %v2348, %v2383
      %v2389 = vld [vmem:[%s482] sm:$0x1]
      %v2391 = vlaneseq
      %v2392 = vshrl.u32 %v2391, 7
      %v2393 = vsub.s32 0, %v2392
      %v2394 = vrot.slane %v2389, %v2393
      %v2396 = vmul.f32 %v2384, %v2394
      %v2397 = vmul.f32 %v2385, %v2394
      %v2398 = vmul.f32 %v2386, %v2394
      %v2399 = vmul.f32 %v2387, %v2394
      %v2400 = vmul.f32 %v2388, %v2394
      %v2401 = vld [vmem:[%s485] sm:$0x1]
      %v2403 = vlaneseq
      %v2404 = vshrl.u32 %v2403, 7
      %v2405 = vsub.s32 0, %v2404
      %v2406 = vrot.slane %v2401, %v2405
      %v2408 = vadd.f32 %v2396, %v2406
      %v2409 = vadd.f32 %v2397, %v2406
      %v2410 = vadd.f32 %v2398, %v2406
      %v2411 = vadd.f32 %v2399, %v2406
      %v2412 = vadd.f32 %v2400, %v2406
      %v2413 = vld [vmem:[%s5] sm:$0xff]
      %v2414 = vld [vmem:[%s5 + $0x8] sm:$0xff]
      %v2415 = vld [vmem:[%s5 + $0x10] sm:$0xff]
      %v2416 = vld [vmem:[%s5 + $0x18] sm:$0xff]
      %v2417 = vld [vmem:[%s5 + $0x20] sm:$0xff]
      %v2418 = vld [vmem:[%s5 + $0x28] sm:$0xff]
      %v2419 = vld [vmem:[%s5 + $0x30] sm:$0xff]
      %v2420 = vld [vmem:[%s5 + $0x38] sm:$0xff]
      %v2421 = vld [vmem:[%s6] sm:$0x1]
      %v2423 = vlaneseq
      %v2424 = vshrl.u32 %v2423, 7
      %v2425 = vsub.s32 0, %v2424
      %v2426 = vrot.slane %v2421, %v2425
      %v2429 = vsel %vm530, %v2408, 0
      %v2432 = vsel %vm530, %v2409, 0
      %v2435 = vsel %vm530, %v2410, 0
      %v2438 = vsel %vm530, %v2411, 0
      %v2441 = vsel %vm530, %v2412, 0
      %2443 = vmatprep.subr.mxu0 0.0
      %2444 = vmatpush1.msra.mxu0 0.0
      %2445 = vmatprep.subr.mxu0 0.0
      %2446 = vmatpush1.msra.mxu0 0.0
      %2447 = vmatprep.subr.mxu0 0.0
      %2448 = vmatpush1.msra.mxu0 0.0
      %2449 = vmatprep.subr.mxu0 0.0
      %2450 = vmatpush1.msra.mxu0 0.0
      %2451 = vmatprep.subr.mxu0 0.0
      %2452 = vmatpush1.msra.mxu0 0.0
      %2453 = vmatprep.subr.mxu0 0.0
      %2454 = vmatpush1.msra.mxu0 0.0
      %2455 = vmatprep.subr.mxu0 0.0
      %2456 = vmatpush1.msra.mxu0 0.0
      %2457 = vmatprep.subr.mxu0 0.0
      %2458 = vmatpush1.msra.mxu0 0.0
      %2459 = vmatprep.subr.mxu0 0.0
      %2460 = vmatpush1.msra.mxu0 %v2420
      %2461 = vmatprep.subr.mxu0 0.0
      %2462 = vmatpush1.msra.mxu0 %v2419
      %2463 = vmatprep.subr.mxu0 0.0
      %2464 = vmatpush1.msra.mxu0 %v2418
      %2465 = vmatprep.subr.mxu0 0.0
      %2466 = vmatpush1.msra.mxu0 %v2417
      %2467 = vmatprep.subr.mxu0 0.0
      %2468 = vmatpush1.msra.mxu0 %v2416
      %2469 = vmatprep.subr.mxu0 0.0
      %2470 = vmatpush1.msra.mxu0 %v2415
      %2471 = vmatprep.subr.mxu0 0.0
      %2472 = vmatpush1.msra.mxu0 %v2414
      %2473 = vmatprep.subr.mxu0 0.0
      %2474 = vmatpush1.msra.mxu0 %v2413
      %2475 = vmatprep.subr.mxu0 0.0
      %2476 = vmatpush2.msra.mxu0 0.0
      %2477 = vmatprep.subr.mxu0 0.0
      %2478 = vmatpush2.msra.mxu0 0.0
      %2479 = vmatprep.subr.mxu0 0.0
      %2480 = vmatpush2.msra.mxu0 0.0
      %2481 = vmatprep.subr.mxu0 0.0
      %2482 = vmatpush2.msra.mxu0 0.0
      %2483 = vmatprep.subr.mxu0 0.0
      %2484 = vmatpush2.msra.mxu0 0.0
      %2485 = vmatprep.subr.mxu0 0.0
      %2486 = vmatpush2.msra.mxu0 0.0
      %2487 = vmatprep.subr.mxu0 0.0
      %2488 = vmatpush2.msra.mxu0 0.0
      %2489 = vmatprep.subr.mxu0 0.0
      %2490 = vmatpush2.msra.mxu0 0.0
      %2491 = vmatprep.subr.mxu0 0.0
      %2492 = vmatpush2.msra.mxu0 0.0
      %2493 = vmatprep.subr.mxu0 0.0
      %2494 = vmatpush2.msra.mxu0 0.0
      %2495 = vmatprep.subr.mxu0 0.0
      %2496 = vmatpush2.msra.mxu0 0.0
      %2497 = vmatprep.subr.mxu0 0.0
      %2498 = vmatpush2.msra.mxu0 0.0
      %2499 = vmatprep.subr.mxu0 0.0
      %2500 = vmatpush2.msra.mxu0 0.0
      %2501 = vmatprep.subr.mxu0 0.0
      %2502 = vmatpush2.msra.mxu0 0.0
      %2503 = vmatprep.subr.mxu0 0.0
      %2504 = vmatpush2.msra.mxu0 0.0
      %2505 = vmatprep.subr.mxu0 0.0
      %2506 = vmatpush2.msra.mxu0 0.0
      %2507 = vmatprep.mubr.f32.mxu0 0.0
      %2508 = vmatmul.mubr.f32.gmra.mxu0 %v2429
      %v2509 = vpop.f32.mrf.mxu0
      %v2510 = vadd.f32 %v2426, %v2509
      %v2511 = vpop.f32.mrf.mxu0
      %2512 = vmatprep.mubr.f32.mxu0 0.0
      %2513 = vmatmul.mubr.f32.gmra.mxu0 %v2432
      %v2514 = vpop.f32.mrf.mxu0
      %v2515 = vadd.f32 %v2426, %v2514
      %v2516 = vpop.f32.mrf.mxu0
      %2517 = vmatprep.mubr.f32.mxu0 0.0
      %2518 = vmatmul.mubr.f32.gmra.mxu0 %v2435
      %v2519 = vpop.f32.mrf.mxu0
      %v2520 = vadd.f32 %v2426, %v2519
      %v2521 = vpop.f32.mrf.mxu0
      %2522 = vmatprep.mubr.f32.mxu0 0.0
      %2523 = vmatmul.mubr.f32.gmra.mxu0 %v2438
      %v2524 = vpop.f32.mrf.mxu0
      %v2525 = vadd.f32 %v2426, %v2524
      %v2526 = vpop.f32.mrf.mxu0
      %2527 = vmatprep.mubr.f32.mxu0 0.0
      %2528 = vmatmul.mubr.f32.gmra.mxu0 %v2441
      %v2529 = vpop.f32.mrf.mxu0
      %v2530 = vadd.f32 %v2426, %v2529
      %v2531 = vpop.f32.mrf.mxu0
      %2532 = vdwg.mxu0
      %v2533 = vmax.f32 %v2510, 0.0
      %v2534 = vmax.f32 %v2515, 0.0
      %v2535 = vmax.f32 %v2520, 0.0
      %v2536 = vmax.f32 %v2525, 0.0
      %v2537 = vmax.f32 %v2530, 0.0
      %v2538 = vld [vmem:[%s7] sm:$0xff]
      %v2539 = vld [vmem:[%s7 + $0x8] sm:$0xff]
      %v2540 = vld [vmem:[%s7 + $0x10] sm:$0xff]
      %v2541 = vld [vmem:[%s7 + $0x18] sm:$0xff]
      %v2542 = vld [vmem:[%s7 + $0x20] sm:$0xff]
      %v2543 = vld [vmem:[%s7 + $0x28] sm:$0xff]
      %v2544 = vld [vmem:[%s7 + $0x30] sm:$0xff]
      %v2545 = vld [vmem:[%s7 + $0x38] sm:$0xff]
      %v2546 = vld [vmem:[%s7 + $0x40] sm:$0xff]
      %v2547 = vld [vmem:[%s7 + $0x48] sm:$0xff]
      %v2548 = vld [vmem:[%s7 + $0x50] sm:$0xff]
      %v2549 = vld [vmem:[%s7 + $0x58] sm:$0xff]
      %v2550 = vld [vmem:[%s7 + $0x60] sm:$0xff]
      %v2551 = vld [vmem:[%s7 + $0x68] sm:$0xff]
      %v2552 = vld [vmem:[%s7 + $0x70] sm:$0xff]
      %v2553 = vld [vmem:[%s7 + $0x78] sm:$0xff]
      %v2554 = vld [vmem:[%s8] sm:$0x1]
      %v2556 = vlaneseq
      %v2557 = vshrl.u32 %v2556, 7
      %v2558 = vsub.s32 0, %v2557
      %v2559 = vrot.slane %v2554, %v2558
      %2561 = vmatprep.subr.mxu0 0.0
      %2562 = vmatpush1.msra.mxu0 %v2553
      %2563 = vmatprep.subr.mxu0 0.0
      %2564 = vmatpush1.msra.mxu0 %v2552
      %2565 = vmatprep.subr.mxu0 0.0
      %2566 = vmatpush1.msra.mxu0 %v2551
      %2567 = vmatprep.subr.mxu0 0.0
      %2568 = vmatpush1.msra.mxu0 %v2550
      %2569 = vmatprep.subr.mxu0 0.0
      %2570 = vmatpush1.msra.mxu0 %v2549
      %2571 = vmatprep.subr.mxu0 0.0
      %2572 = vmatpush1.msra.mxu0 %v2548
      %2573 = vmatprep.subr.mxu0 0.0
      %2574 = vmatpush1.msra.mxu0 %v2547
      %2575 = vmatprep.subr.mxu0 0.0
      %2576 = vmatpush1.msra.mxu0 %v2546
      %2577 = vmatprep.subr.mxu0 0.0
      %2578 = vmatpush1.msra.mxu0 %v2545
      %2579 = vmatprep.subr.mxu0 0.0
      %2580 = vmatpush1.msra.mxu0 %v2544
      %2581 = vmatprep.subr.mxu0 0.0
      %2582 = vmatpush1.msra.mxu0 %v2543
      %2583 = vmatprep.subr.mxu0 0.0
      %2584 = vmatpush1.msra.mxu0 %v2542
      %2585 = vmatprep.subr.mxu0 0.0
      %2586 = vmatpush1.msra.mxu0 %v2541
      %2587 = vmatprep.subr.mxu0 0.0
      %2588 = vmatpush1.msra.mxu0 %v2540
      %2589 = vmatprep.subr.mxu0 0.0
      %2590 = vmatpush1.msra.mxu0 %v2539
      %2591 = vmatprep.subr.mxu0 0.0
      %2592 = vmatpush1.msra.mxu0 %v2538
      %2593 = vmatprep.subr.mxu0 0.0
      %2594 = vmatpush2.msra.mxu0 0.0
      %2595 = vmatprep.subr.mxu0 0.0
      %2596 = vmatpush2.msra.mxu0 0.0
      %2597 = vmatprep.subr.mxu0 0.0
      %2598 = vmatpush2.msra.mxu0 0.0
      %2599 = vmatprep.subr.mxu0 0.0
      %2600 = vmatpush2.msra.mxu0 0.0
      %2601 = vmatprep.subr.mxu0 0.0
      %2602 = vmatpush2.msra.mxu0 0.0
      %2603 = vmatprep.subr.mxu0 0.0
      %2604 = vmatpush2.msra.mxu0 0.0
      %2605 = vmatprep.subr.mxu0 0.0
      %2606 = vmatpush2.msra.mxu0 0.0
      %2607 = vmatprep.subr.mxu0 0.0
      %2608 = vmatpush2.msra.mxu0 0.0
      %2609 = vmatprep.subr.mxu0 0.0
      %2610 = vmatpush2.msra.mxu0 0.0
      %2611 = vmatprep.subr.mxu0 0.0
      %2612 = vmatpush2.msra.mxu0 0.0
      %2613 = vmatprep.subr.mxu0 0.0
      %2614 = vmatpush2.msra.mxu0 0.0
      %2615 = vmatprep.subr.mxu0 0.0
      %2616 = vmatpush2.msra.mxu0 0.0
      %2617 = vmatprep.subr.mxu0 0.0
      %2618 = vmatpush2.msra.mxu0 0.0
      %2619 = vmatprep.subr.mxu0 0.0
      %2620 = vmatpush2.msra.mxu0 0.0
      %2621 = vmatprep.subr.mxu0 0.0
      %2622 = vmatpush2.msra.mxu0 0.0
      %2623 = vmatprep.subr.mxu0 0.0
      %2624 = vmatpush2.msra.mxu0 0.0
      %2625 = vmatprep.mubr.f32.mxu0 0.0
      %2626 = vmatmul.mubr.f32.gmra.mxu0 %v2533
      %v2627 = vpop.f32.mrf.mxu0
      %v2628 = vadd.f32 %v2559, %v2627
      %v2629 = vpop.f32.mrf.mxu0
      %2630 = vmatprep.mubr.f32.mxu0 0.0
      %2631 = vmatmul.mubr.f32.gmra.mxu0 %v2534
      %v2632 = vpop.f32.mrf.mxu0
      %v2633 = vadd.f32 %v2559, %v2632
      %v2634 = vpop.f32.mrf.mxu0
      %2635 = vmatprep.mubr.f32.mxu0 0.0
      %2636 = vmatmul.mubr.f32.gmra.mxu0 %v2535
      %v2637 = vpop.f32.mrf.mxu0
      %v2638 = vadd.f32 %v2559, %v2637
      %v2639 = vpop.f32.mrf.mxu0
      %2640 = vmatprep.mubr.f32.mxu0 0.0
      %2641 = vmatmul.mubr.f32.gmra.mxu0 %v2536
      %v2642 = vpop.f32.mrf.mxu0
      %v2643 = vadd.f32 %v2559, %v2642
      %v2644 = vpop.f32.mrf.mxu0
      %2645 = vmatprep.mubr.f32.mxu0 0.0
      %2646 = vmatmul.mubr.f32.gmra.mxu0 %v2537
      %v2647 = vpop.f32.mrf.mxu0
      %v2648 = vadd.f32 %v2559, %v2647
      %v2649 = vpop.f32.mrf.mxu0
      %2650 = vdwg.mxu0
      %v2651 = vadd.f32 %v2628, %v2408
      %v2652 = vadd.f32 %v2633, %v2409
      %v2653 = vadd.f32 %v2638, %v2410
      %v2654 = vadd.f32 %v2643, %v2411
      %v2655 = vadd.f32 %v2648, %v2412
      %v2656 = vsel %vm530, %v2651, 0.0
      %2657 = vadd.xlane.f32.xlu0 %v2656
      %v2658 = vpop.xlane.xlu0 %2657
      %v2659 = vsel %vm530, %v2652, 0.0
      %2660 = vadd.xlane.f32.xlu0 %v2659
      %v2661 = vpop.xlane.xlu0 %2660
      %v2662 = vsel %vm530, %v2653, 0.0
      %2663 = vadd.xlane.f32.xlu0 %v2662
      %v2664 = vpop.xlane.xlu0 %2663
      %v2665 = vsel %vm530, %v2654, 0.0
      %2666 = vadd.xlane.f32.xlu0 %v2665
      %v2667 = vpop.xlane.xlu0 %2666
      %v2668 = vsel %vm530, %v2655, 0.0
      %2669 = vadd.xlane.f32.xlu0 %v2668
      %v2670 = vpop.xlane.xlu0 %2669
      %v2671 = vmul.f32 %v2658, %v2338
      %v2672 = vmul.f32 %v2661, %v2338
      %v2673 = vmul.f32 %v2664, %v2338
      %v2674 = vmul.f32 %v2667, %v2338
      %v2675 = vmul.f32 %v2670, %v2338
      %v2676 = vsub.f32 %v2651, %v2671
      %v2677 = vsub.f32 %v2652, %v2672
      %v2678 = vsub.f32 %v2653, %v2673
      %v2679 = vsub.f32 %v2654, %v2674
      %v2680 = vsub.f32 %v2655, %v2675
      %v2681 = vmul.f32 %v2676, %v2676
      %v2682 = vmul.f32 %v2677, %v2677
      %v2683 = vmul.f32 %v2678, %v2678
      %v2684 = vmul.f32 %v2679, %v2679
      %v2685 = vmul.f32 %v2680, %v2680
      %v2686 = vsel %vm530, %v2681, 0.0
      %2687 = vadd.xlane.f32.xlu0 %v2686
      %v2688 = vpop.xlane.xlu0 %2687
      %v2689 = vsel %vm530, %v2682, 0.0
      %2690 = vadd.xlane.f32.xlu0 %v2689
      %v2691 = vpop.xlane.xlu0 %2690
      %v2692 = vsel %vm530, %v2683, 0.0
      %2693 = vadd.xlane.f32.xlu0 %v2692
      %v2694 = vpop.xlane.xlu0 %2693
      %v2695 = vsel %vm530, %v2684, 0.0
      %2696 = vadd.xlane.f32.xlu0 %v2695
      %v2697 = vpop.xlane.xlu0 %2696
      %v2698 = vsel %vm530, %v2685, 0.0
      %2699 = vadd.xlane.f32.xlu0 %v2698
      %v2700 = vpop.xlane.xlu0 %2699
      %v2701 = vmul.f32 %v2688, %v2338
      %v2702 = vmul.f32 %v2691, %v2338
      %v2703 = vmul.f32 %v2694, %v2338
      %v2704 = vmul.f32 %v2697, %v2338
      %v2705 = vmul.f32 %v2700, %v2338
      %v2706 = vadd.f32 %v2701, 1e-06
      %v2707 = vadd.f32 %v2702, 1e-06
      %v2708 = vadd.f32 %v2703, 1e-06
      %v2709 = vadd.f32 %v2704, 1e-06
      %v2710 = vadd.f32 %v2705, 1e-06
      %v2711 = vrsqrt.pop %v2706
      %v2712 = vrsqrt.pop %v2707
      %v2713 = vrsqrt.pop %v2708
      %v2714 = vrsqrt.pop %v2709
      %v2715 = vrsqrt.pop %v2710
      %v2716 = vmul.f32 %v2676, %v2711
      %v2717 = vmul.f32 %v2677, %v2712
      %v2718 = vmul.f32 %v2678, %v2713
      %v2719 = vmul.f32 %v2679, %v2714
      %v2720 = vmul.f32 %v2680, %v2715
      %v2721 = vld [vmem:[%s488] sm:$0x1]
      %v2723 = vlaneseq
      %v2724 = vshrl.u32 %v2723, 7
      %v2725 = vsub.s32 0, %v2724
      %v2726 = vrot.slane %v2721, %v2725
      %v2728 = vmul.f32 %v2716, %v2726
      %v2729 = vmul.f32 %v2717, %v2726
      %v2730 = vmul.f32 %v2718, %v2726
      %v2731 = vmul.f32 %v2719, %v2726
      %v2732 = vmul.f32 %v2720, %v2726
      %v2733 = vld [vmem:[%s491] sm:$0x1]
      %v2735 = vlaneseq
      %v2736 = vshrl.u32 %v2735, 7
      %v2737 = vsub.s32 0, %v2736
      %v2738 = vrot.slane %v2733, %v2737
      %v2740 = vadd.f32 %v2728, %v2738
      %v2741 = vadd.f32 %v2729, %v2738
      %v2742 = vadd.f32 %v2730, %v2738
      %v2743 = vadd.f32 %v2731, %v2738
      %v2744 = vadd.f32 %v2732, %v2738
      %2745 = vst.msk [vmem:[%s496] sm:$0xff] %vm530, %v2740
      %2746 = vst.msk [vmem:[%s496 + $0x8] sm:$0xff] %vm530, %v2741
      %2747 = vst.msk [vmem:[%s496 + $0x10] sm:$0xff] %vm530, %v2742
      %2748 = vst.msk [vmem:[%s496 + $0x18] sm:$0xff] %vm530, %v2743
      %2749 = vst.msk [vmem:[%s496 + $0x20] sm:$0xff] %vm530, %v2744
      %p2750 = scmp.lt.s32.totalorder %s24, 1
      %s2751 = scalar_select %p2750, %s24, 1
      %s2752 = smul.addr %s2751, 5
      %s2753 = smul.addr %s2752, 8
      %s2754 = scalar_lea.vmem %s13, %s2753
      // Predicated region
      $region73: #{dance_rollout.41} parent=71 // pred_check
        %p2755 = pneg %p340
      $region74: #{dance_rollout.41} parent=71 // pred_check_branch
        %2757 = sbr.rel (%p2755) target = $region76
      $region75: #{dance_rollout.41} parent=71 // pred_region
        _
      $region76: #{dance_rollout.41} parent=71 // pred_fallthru
        _
    $region72: #{dance_rollout.41} parent=5 // pred_fallthru
      _
    %p2758 = scmp.le.s32.totalorder 2, %s19
    // Predicated region
    $region77: #{dance_rollout.41} parent=5 // pred_check
      %p2759 = pneg %p2758
    $region78: #{dance_rollout.41} parent=5 // pred_check_branch
      %2761 = sbr.rel (%p2759) target = $region80
    $region79: #{dance_rollout.41} parent=5 // pred_region
      %s2762 = ssub.s32 %s19, 2
      // Predicated region
      $region81: #{dance_rollout.41} parent=79 // pred_check
        %p2763 = pneg %p346
      $region82: #{dance_rollout.41} parent=79 // pred_check_branch
        %2765 = sbr.rel (%p2763) target = $region84
      $region83: #{dance_rollout.41} parent=79 // pred_region
        %p2766 = scmp.lt.s32.totalorder %s25, 1
        %s2767 = scalar_select %p2766, %s25, 1
        %s2768 = smul.addr %s2767, 5
        %s2769 = smul.addr %s2768, 8
        %s2770 = scalar_lea.vmem %s13, %s2769
      $region84: #{dance_rollout.41} parent=79 // pred_fallthru
        _
    $region80: #{dance_rollout.41} parent=5 // pred_fallthru
      _
  $region6: #{dance_rollout.41} parent=0 // loop_footer
    %s23 = sadd.s32 1, %s19
  $region7: #{dance_rollout.41} parent=0 // loop_footer_branch
    %18 = sbr.rel target = $region3
  $region8: #{dance_rollout.41} parent=0 // loop_exit
    _

// kernel: dance_rollout.47
$region0: #{dance_rollout.47}
  #allocation0 [shape = 'u32[]', space=smem, size = 0x4, offset = 0x4, fixed_abs, tag = 'smem constant byte address 0x4 - core index']
  #allocation1 [shape = 'u32[144,128]{1,0:T(1,128)}', space=vmem, size = 0x12000, scoped, tag = 'internal scratch']
  %s0 = inlined_call_operand.vmem [shape: f32[16,64], index: 0, kind: input, shape index: {}]
  %s1 = inlined_call_operand.vmem [shape: f32[64,32], index: 1, kind: input, shape index: {}]
  %s2 = inlined_call_operand.vmem [shape: f32[1,32], index: 2, kind: input, shape index: {}]
  %s3 = inlined_call_operand.vmem [shape: f32[16,32], index: 3, kind: output, shape index: {}]
  %s4 = sld [smem:[#allocation0]]
  $region22: #{dance_rollout.47} parent=0
    _
  %s6 = ssub.s32 1, %s4
  %s7 = scalar_select 0, %s6, %s4
  // Predicated region
  $region2: #{dance_rollout.47} parent=0 // pred_check
    _
  $region3: #{dance_rollout.47} parent=0 // pred_check_branch
    %9 = sbr.rel (0) target = $region5
  $region4: #{dance_rollout.47} parent=0 // pred_region
    _
  $region5: #{dance_rollout.47} parent=0 // pred_fallthru
    _
  // Predicated region
  $region6: #{dance_rollout.47} parent=0 // pred_check
    _
  $region7: #{dance_rollout.47} parent=0 // pred_check_branch
    %11 = sbr.rel (0) target = $region9
  $region8: #{dance_rollout.47} parent=0 // pred_region
    _
  $region9: #{dance_rollout.47} parent=0 // pred_fallthru
    _
  // Predicated region
  $region10: #{dance_rollout.47} parent=0 // pred_check
    _
  $region11: #{dance_rollout.47} parent=0 // pred_check_branch
    %13 = sbr.rel (0) target = $region13
  $region12: #{dance_rollout.47} parent=0 // pred_region
    _
  $region13: #{dance_rollout.47} parent=0 // pred_fallthru
    _
  %v14 = vld [vmem:[%s0] sm:$0xff]
  %v15 = vld [vmem:[%s0 + $0x8] sm:$0xff]
  %v16 = vld [vmem:[%s1] sm:$0xff]
  %v17 = vld [vmem:[%s1 + $0x8] sm:$0xff]
  %v18 = vld [vmem:[%s1 + $0x10] sm:$0xff]
  %v19 = vld [vmem:[%s1 + $0x18] sm:$0xff]
  %v20 = vld [vmem:[%s1 + $0x20] sm:$0xff]
  %v21 = vld [vmem:[%s1 + $0x28] sm:$0xff]
  %v22 = vld [vmem:[%s1 + $0x30] sm:$0xff]
  %v23 = vld [vmem:[%s1 + $0x38] sm:$0xff]
  %v24 = vld [vmem:[%s2] sm:$0x1]
  %v26 = vlaneseq
  %v27 = vshrl.u32 %v26, 7
  %v28 = vsub.s32 0, %v27
  %v29 = vrot.slane %v24, %v28
  %vm31 = vcmask 523264
  %v33 = vsel %vm31, %v14, 0
  %v36 = vsel %vm31, %v15, 0
  %38 = vmatprep.subr.mxu0 0.0
  %39 = vmatpush1.msra.mxu0 0.0
  %40 = vmatprep.subr.mxu0 0.0
  %41 = vmatpush1.msra.mxu0 0.0
  %42 = vmatprep.subr.mxu0 0.0
  %43 = vmatpush1.msra.mxu0 0.0
  %44 = vmatprep.subr.mxu0 0.0
  %45 = vmatpush1.msra.mxu0 0.0
  %46 = vmatprep.subr.mxu0 0.0
  %47 = vmatpush1.msra.mxu0 0.0
  %48 = vmatprep.subr.mxu0 0.0
  %49 = vmatpush1.msra.mxu0 0.0
  %50 = vmatprep.subr.mxu0 0.0
  %51 = vmatpush1.msra.mxu0 0.0
  %52 = vmatprep.subr.mxu0 0.0
  %53 = vmatpush1.msra.mxu0 0.0
  %54 = vmatprep.subr.mxu0 0.0
  %55 = vmatpush1.msra.mxu0 %v23
  %56 = vmatprep.subr.mxu0 0.0
  %57 = vmatpush1.msra.mxu0 %v22
  %58 = vmatprep.subr.mxu0 0.0
  %59 = vmatpush1.msra.mxu0 %v21
  %60 = vmatprep.subr.mxu0 0.0
  %61 = vmatpush1.msra.mxu0 %v20
  %62 = vmatprep.subr.mxu0 0.0
  %63 = vmatpush1.msra.mxu0 %v19
  %64 = vmatprep.subr.mxu0 0.0
  %65 = vmatpush1.msra.mxu0 %v18
  %66 = vmatprep.subr.mxu0 0.0
  %67 = vmatpush1.msra.mxu0 %v17
  %68 = vmatprep.subr.mxu0 0.0
  %69 = vmatpush1.msra.mxu0 %v16
  %70 = vmatprep.subr.mxu0 0.0
  %71 = vmatpush2.msra.mxu0 0.0
  %72 = vmatprep.subr.mxu0 0.0
  %73 = vmatpush2.msra.mxu0 0.0
  %74 = vmatprep.subr.mxu0 0.0
  %75 = vmatpush2.msra.mxu0 0.0
  %76 = vmatprep.subr.mxu0 0.0
  %77 = vmatpush2.msra.mxu0 0.0
  %78 = vmatprep.subr.mxu0 0.0
  %79 = vmatpush2.msra.mxu0 0.0
  %80 = vmatprep.subr.mxu0 0.0
  %81 = vmatpush2.msra.mxu0 0.0
  %82 = vmatprep.subr.mxu0 0.0
  %83 = vmatpush2.msra.mxu0 0.0
  %84 = vmatprep.subr.mxu0 0.0
  %85 = vmatpush2.msra.mxu0 0.0
  %86 = vmatprep.subr.mxu0 0.0
  %87 = vmatpush2.msra.mxu0 0.0
  %88 = vmatprep.subr.mxu0 0.0
  %89 = vmatpush2.msra.mxu0 0.0
  %90 = vmatprep.subr.mxu0 0.0
  %91 = vmatpush2.msra.mxu0 0.0
  %92 = vmatprep.subr.mxu0 0.0
  %93 = vmatpush2.msra.mxu0 0.0
  %94 = vmatprep.subr.mxu0 0.0
  %95 = vmatpush2.msra.mxu0 0.0
  %96 = vmatprep.subr.mxu0 0.0
  %97 = vmatpush2.msra.mxu0 0.0
  %98 = vmatprep.subr.mxu0 0.0
  %99 = vmatpush2.msra.mxu0 0.0
  %100 = vmatprep.subr.mxu0 0.0
  %101 = vmatpush2.msra.mxu0 0.0
  %102 = vmatprep.mubr.f32.mxu0 0.0
  %103 = vmatmul.mubr.f32.gmra.mxu0 %v33
  %v104 = vpop.f32.mrf.mxu0
  %v105 = vadd.f32 %v29, %v104
  %v106 = vpop.f32.mrf.mxu0
  %107 = vmatprep.mubr.f32.mxu0 0.0
  %108 = vmatmul.mubr.f32.gmra.mxu0 %v36
  %v109 = vpop.f32.mrf.mxu0
  %v110 = vadd.f32 %v29, %v109
  %v111 = vpop.f32.mrf.mxu0
  %112 = vdwg.mxu0
  %vm113 = vcmask 261120
  %114 = vst.msk [vmem:[%s3] sm:$0xff] %vm113, %v105
  %115 = vst.msk [vmem:[%s3 + $0x8] sm:$0xff] %vm113, %v110
  // Predicated region
  $region14: #{dance_rollout.47} parent=0 // pred_check
    _
  $region15: #{dance_rollout.47} parent=0 // pred_check_branch
    %117 = sbr.rel (0) target = $region17
  $region16: #{dance_rollout.47} parent=0 // pred_region
    _
  $region17: #{dance_rollout.47} parent=0 // pred_fallthru
    _
  // Predicated region
  $region18: #{dance_rollout.47} parent=0 // pred_check
    _
  $region19: #{dance_rollout.47} parent=0 // pred_check_branch
    %119 = sbr.rel (0) target = $region21
  $region20: #{dance_rollout.47} parent=0 // pred_region
    _
  $region21: #{dance_rollout.47} parent=0 // pred_fallthru
    _

// kernel: dance_rollout.45
$region0: #{dance_rollout.45}
  #allocation0 [shape = 'u32[]', space=smem, size = 0x4, offset = 0x4, fixed_abs, tag = 'smem constant byte address 0x4 - core index']
  #allocation1 [shape = 'u32[144,128]{1,0:T(1,128)}', space=vmem, size = 0x12000, scoped, tag = 'internal scratch']
  %s0 = inlined_call_operand.vmem [shape: f32[2,8,64], index: 0, kind: input, shape index: {}]
  %s1 = inlined_call_operand.vmem [shape: f32[64,192], index: 1, kind: input, shape index: {}]
  %s2 = inlined_call_operand.vmem [shape: f32[1,192], index: 2, kind: input, shape index: {}]
  %s3 = inlined_call_operand.vmem [shape: f32[64,64], index: 3, kind: input, shape index: {}]
  %s4 = inlined_call_operand.vmem [shape: f32[1,64], index: 4, kind: input, shape index: {}]
  %s5 = inlined_call_operand.vmem [shape: f32[64,128], index: 5, kind: input, shape index: {}]
  %s6 = inlined_call_operand.vmem [shape: f32[1,128], index: 6, kind: input, shape index: {}]
  %s7 = inlined_call_operand.vmem [shape: f32[128,64], index: 7, kind: input, shape index: {}]
  %s8 = inlined_call_operand.vmem [shape: f32[1,64], index: 8, kind: input, shape index: {}]
  %s9 = inlined_call_operand.vmem [shape: f32[2,1,64], index: 9, kind: input, shape index: {}]
  %s10 = inlined_call_operand.vmem [shape: f32[2,1,64], index: 10, kind: input, shape index: {}]
  %s11 = inlined_call_operand.vmem [shape: f32[2,1,64], index: 11, kind: input, shape index: {}]
  %s12 = inlined_call_operand.vmem [shape: f32[2,1,64], index: 12, kind: input, shape index: {}]
  %s13 = inlined_call_operand.vmem [shape: f32[2,8,64], index: 13, kind: output, shape index: {}]
  %s14 = sld [smem:[#allocation0]]
  $region85: #{dance_rollout.45} parent=0
    _
  %s16 = ssub.s32 1, %s14
  %s17 = scalar_select 0, %s16, %s14
  loop: start=0, step=1, limit=4
  $region2: #{dance_rollout.45} parent=0 // loop_pre_header
    _
  $region3: #{dance_rollout.45} parent=0 // loop_header
    %s19 = sphi 0, %s23
    %p20 = scmp.ge.s32.totalorder %s19, 4
    %s29 = sphi 0, %s31
    %s32 = sphi 0, %s29
    %s33 = sphi 0, %s32
    %s49 = sphi 0, %s33
    %s53 = sphi 0, %s53
    %s55 = sphi 0, %s53
    %s56 = sphi 0, %s55
    %s70 = sphi 0, %s56
    %s74 = sphi 0, %s74
    %s76 = sphi 0, %s74
    %s77 = sphi 0, %s76
    %s91 = sphi 0, %s77
    %s95 = sphi 0, %s95
    %s97 = sphi 0, %s95
    %s98 = sphi 0, %s97
    %s112 = sphi 0, %s98
    %s116 = sphi 0, %s116
    %s118 = sphi 0, %s116
    %s119 = sphi 0, %s118
    %s133 = sphi 0, %s119
    %s137 = sphi 0, %s137
    %s139 = sphi 0, %s137
    %s140 = sphi 0, %s139
    %s154 = sphi 0, %s140
    %s158 = sphi 0, %s158
    %s160 = sphi 0, %s158
    %s161 = sphi 0, %s160
    %s175 = sphi 0, %s161
    %s179 = sphi 0, %s179
    %s181 = sphi 0, %s179
    %s182 = sphi 0, %s181
    %s196 = sphi 0, %s182
    %s200 = sphi 0, %s200
    %s202 = sphi 0, %s200
    %s203 = sphi 0, %s202
    %s217 = sphi 0, %s203
    %s223 = sphi 0, %s225
    %s226 = sphi 0, %s223
    %s227 = sphi 0, %s226
    %s243 = sphi 0, %s227
    %s249 = sphi 0, %s251
    %s252 = sphi 0, %s249
    %s253 = sphi 0, %s252
    %s269 = sphi 0, %s253
    %s275 = sphi 0, %s277
    %s278 = sphi 0, %s275
    %s279 = sphi 0, %s278
    %s295 = sphi 0, %s279
    %s301 = sphi 0, %s303
    %s304 = sphi 0, %s301
    %s305 = sphi 0, %s304
    %s321 = sphi 0, %s305
    %s327 = sphi 0, %s329
    %s330 = sphi 0, %s327
    %s331 = sphi 0, %s330
    %s347 = sphi 0, %s331
  $region4: #{dance_rollout.45} parent=0 // loop_header_branch
    %22 = sbr.rel (%p20) target = $region8
  $region5: #{dance_rollout.45} parent=0 // loop_body
    %s24 = ssub.s32 %s19, 1
    %s25 = ssub.s32 %s19, 2
    %s26 = sadd.s32 %s19, 1
    %s27 = ssub.s32 %s19, %s26
    %p28 = scmp.eq.s32.totalorder %s27, 0
    %s30 = sadd.s32 %s29, 1
    %s31 = scalar_select %p28, %s29, %s30
    %p34 = pneg %p28
    %p35 = scmp.eq.s32.totalorder %s19, 1
    %p36 = por %p34, %p35
    %p37 = scmp.ne.s32.totalorder %s29, %s32
    %p38 = scmp.eq.s32.totalorder %s19, 0
    %p39 = por %p37, %p38
    %p40 = scmp.ne.s32.totalorder %s29, %s32
    %p41 = scmp.eq.s32.totalorder %s24, 1
    %p42 = por %p40, %p41
    %p43 = scmp.ne.s32.totalorder %s32, %s33
    %p44 = scmp.eq.s32.totalorder %s24, 0
    %p45 = por %p43, %p44
    %p46 = scmp.ne.s32.totalorder %s32, %s33
    %p47 = scmp.eq.s32.totalorder %s25, 1
    %p48 = por %p46, %p47
    %p50 = scmp.ne.s32.totalorder %s33, %s49
    %p51 = scmp.eq.s32.totalorder %s25, 0
    %p52 = por %p50, %p51
    %s54 = sadd.s32 %s53, 1
    %p57 = scmp.eq.s32.totalorder %s19, 1
    %p58 = scmp.ne.s32.totalorder %s53, %s55
    %p59 = scmp.eq.s32.totalorder %s19, 0
    %p60 = por %p58, %p59
    %p61 = scmp.ne.s32.totalorder %s53, %s55
    %p62 = scmp.eq.s32.totalorder %s24, 1
    %p63 = por %p61, %p62
    %p64 = scmp.ne.s32.totalorder %s55, %s56
    %p65 = scmp.eq.s32.totalorder %s24, 0
    %p66 = por %p64, %p65
    %p67 = scmp.ne.s32.totalorder %s55, %s56
    %p68 = scmp.eq.s32.totalorder %s25, 1
    %p69 = por %p67, %p68
    %p71 = scmp.ne.s32.totalorder %s56, %s70
    %p72 = scmp.eq.s32.totalorder %s25, 0
    %p73 = por %p71, %p72
    %s75 = sadd.s32 %s74, 1
    %p78 = scmp.eq.s32.totalorder %s19, 1
    %p79 = scmp.ne.s32.totalorder %s74, %s76
    %p80 = scmp.eq.s32.totalorder %s19, 0
    %p81 = por %p79, %p80
    %p82 = scmp.ne.s32.totalorder %s74, %s76
    %p83 = scmp.eq.s32.totalorder %s24, 1
    %p84 = por %p82, %p83
    %p85 = scmp.ne.s32.totalorder %s76, %s77
    %p86 = scmp.eq.s32.totalorder %s24, 0
    %p87 = por %p85, %p86
    %p88 = scmp.ne.s32.totalorder %s76, %s77
    %p89 = scmp.eq.s32.totalorder %s25, 1
    %p90 = por %p88, %p89
    %p92 = scmp.ne.s32.totalorder %s77, %s91
    %p93 = scmp.eq.s32.totalorder %s25, 0
    %p94 = por %p92, %p93
    %s96 = sadd.s32 %s95, 1
    %p99 = scmp.eq.s32.totalorder %s19, 1
    %p100 = scmp.ne.s32.totalorder %s95, %s97
    %p101 = scmp.eq.s32.totalorder %s19, 0
    %p102 = por %p100, %p101
    %p103 = scmp.ne.s32.totalorder %s95, %s97
    %p104 = scmp.eq.s32.totalorder %s24, 1
    %p105 = por %p103, %p104
    %p106 = scmp.ne.s32.totalorder %s97, %s98
    %p107 = scmp.eq.s32.totalorder %s24, 0
    %p108 = por %p106, %p107
    %p109 = scmp.ne.s32.totalorder %s97, %s98
    %p110 = scmp.eq.s32.totalorder %s25, 1
    %p111 = por %p109, %p110
    %p113 = scmp.ne.s32.totalorder %s98, %s112
    %p114 = scmp.eq.s32.totalorder %s25, 0
    %p115 = por %p113, %p114
    %s117 = sadd.s32 %s116, 1
    %p120 = scmp.eq.s32.totalorder %s19, 1
    %p121 = scmp.ne.s32.totalorder %s116, %s118
    %p122 = scmp.eq.s32.totalorder %s19, 0
    %p123 = por %p121, %p122
    %p124 = scmp.ne.s32.totalorder %s116, %s118
    %p125 = scmp.eq.s32.totalorder %s24, 1
    %p126 = por %p124, %p125
    %p127 = scmp.ne.s32.totalorder %s118, %s119
    %p128 = scmp.eq.s32.totalorder %s24, 0
    %p129 = por %p127, %p128
    %p130 = scmp.ne.s32.totalorder %s118, %s119
    %p131 = scmp.eq.s32.totalorder %s25, 1
    %p132 = por %p130, %p131
    %p134 = scmp.ne.s32.totalorder %s119, %s133
    %p135 = scmp.eq.s32.totalorder %s25, 0
    %p136 = por %p134, %p135
    %s138 = sadd.s32 %s137, 1
    %p141 = scmp.eq.s32.totalorder %s19, 1
    %p142 = scmp.ne.s32.totalorder %s137, %s139
    %p143 = scmp.eq.s32.totalorder %s19, 0
    %p144 = por %p142, %p143
    %p145 = scmp.ne.s32.totalorder %s137, %s139
    %p146 = scmp.eq.s32.totalorder %s24, 1
    %p147 = por %p145, %p146
    %p148 = scmp.ne.s32.totalorder %s139, %s140
    %p149 = scmp.eq.s32.totalorder %s24, 0
    %p150 = por %p148, %p149
    %p151 = scmp.ne.s32.totalorder %s139, %s140
    %p152 = scmp.eq.s32.totalorder %s25, 1
    %p153 = por %p151, %p152
    %p155 = scmp.ne.s32.totalorder %s140, %s154
    %p156 = scmp.eq.s32.totalorder %s25, 0
    %p157 = por %p155, %p156
    %s159 = sadd.s32 %s158, 1
    %p162 = scmp.eq.s32.totalorder %s19, 1
    %p163 = scmp.ne.s32.totalorder %s158, %s160
    %p164 = scmp.eq.s32.totalorder %s19, 0
    %p165 = por %p163, %p164
    %p166 = scmp.ne.s32.totalorder %s158, %s160
    %p167 = scmp.eq.s32.totalorder %s24, 1
    %p168 = por %p166, %p167
    %p169 = scmp.ne.s32.totalorder %s160, %s161
    %p170 = scmp.eq.s32.totalorder %s24, 0
    %p171 = por %p169, %p170
    %p172 = scmp.ne.s32.totalorder %s160, %s161
    %p173 = scmp.eq.s32.totalorder %s25, 1
    %p174 = por %p172, %p173
    %p176 = scmp.ne.s32.totalorder %s161, %s175
    %p177 = scmp.eq.s32.totalorder %s25, 0
    %p178 = por %p176, %p177
    %s180 = sadd.s32 %s179, 1
    %p183 = scmp.eq.s32.totalorder %s19, 1
    %p184 = scmp.ne.s32.totalorder %s179, %s181
    %p185 = scmp.eq.s32.totalorder %s19, 0
    %p186 = por %p184, %p185
    %p187 = scmp.ne.s32.totalorder %s179, %s181
    %p188 = scmp.eq.s32.totalorder %s24, 1
    %p189 = por %p187, %p188
    %p190 = scmp.ne.s32.totalorder %s181, %s182
    %p191 = scmp.eq.s32.totalorder %s24, 0
    %p192 = por %p190, %p191
    %p193 = scmp.ne.s32.totalorder %s181, %s182
    %p194 = scmp.eq.s32.totalorder %s25, 1
    %p195 = por %p193, %p194
    %p197 = scmp.ne.s32.totalorder %s182, %s196
    %p198 = scmp.eq.s32.totalorder %s25, 0
    %p199 = por %p197, %p198
    %s201 = sadd.s32 %s200, 1
    %p204 = scmp.eq.s32.totalorder %s19, 1
    %p205 = scmp.ne.s32.totalorder %s200, %s202
    %p206 = scmp.eq.s32.totalorder %s19, 0
    %p207 = por %p205, %p206
    %p208 = scmp.ne.s32.totalorder %s200, %s202
    %p209 = scmp.eq.s32.totalorder %s24, 1
    %p210 = por %p208, %p209
    %p211 = scmp.ne.s32.totalorder %s202, %s203
    %p212 = scmp.eq.s32.totalorder %s24, 0
    %p213 = por %p211, %p212
    %p214 = scmp.ne.s32.totalorder %s202, %s203
    %p215 = scmp.eq.s32.totalorder %s25, 1
    %p216 = por %p214, %p215
    %p218 = scmp.ne.s32.totalorder %s203, %s217
    %p219 = scmp.eq.s32.totalorder %s25, 0
    %p220 = por %p218, %p219
    %s221 = ssub.s32 %s19, %s26
    %p222 = scmp.eq.s32.totalorder %s221, 0
    %s224 = sadd.s32 %s223, 1
    %s225 = scalar_select %p222, %s223, %s224
    %p228 = pneg %p222
    %p229 = scmp.eq.s32.totalorder %s19, 1
    %p230 = por %p228, %p229
    %p231 = scmp.ne.s32.totalorder %s223, %s226
    %p232 = scmp.eq.s32.totalorder %s19, 0
    %p233 = por %p231, %p232
    %p234 = scmp.ne.s32.totalorder %s223, %s226
    %p235 = scmp.eq.s32.totalorder %s24, 1
    %p236 = por %p234, %p235
    %p237 = scmp.ne.s32.totalorder %s226, %s227
    %p238 = scmp.eq.s32.totalorder %s24, 0
    %p239 = por %p237, %p238
    %p240 = scmp.ne.s32.totalorder %s226, %s227
    %p241 = scmp.eq.s32.totalorder %s25, 1
    %p242 = por %p240, %p241
    %p244 = scmp.ne.s32.totalorder %s227, %s243
    %p245 = scmp.eq.s32.totalorder %s25, 0
    %p246 = por %p244, %p245
    %s247 = ssub.s32 %s19, %s26
    %p248 = scmp.eq.s32.totalorder %s247, 0
    %s250 = sadd.s32 %s249, 1
    %s251 = scalar_select %p248, %s249, %s250
    %p254 = pneg %p248
    %p255 = scmp.eq.s32.totalorder %s19, 1
    %p256 = por %p254, %p255
    %p257 = scmp.ne.s32.totalorder %s249, %s252
    %p258 = scmp.eq.s32.totalorder %s19, 0
    %p259 = por %p257, %p258
    %p260 = scmp.ne.s32.totalorder %s249, %s252
    %p261 = scmp.eq.s32.totalorder %s24, 1
    %p262 = por %p260, %p261
    %p263 = scmp.ne.s32.totalorder %s252, %s253
    %p264 = scmp.eq.s32.totalorder %s24, 0
    %p265 = por %p263, %p264
    %p266 = scmp.ne.s32.totalorder %s252, %s253
    %p267 = scmp.eq.s32.totalorder %s25, 1
    %p268 = por %p266, %p267
    %p270 = scmp.ne.s32.totalorder %s253, %s269
    %p271 = scmp.eq.s32.totalorder %s25, 0
    %p272 = por %p270, %p271
    %s273 = ssub.s32 %s19, %s26
    %p274 = scmp.eq.s32.totalorder %s273, 0
    %s276 = sadd.s32 %s275, 1
    %s277 = scalar_select %p274, %s275, %s276
    %p280 = pneg %p274
    %p281 = scmp.eq.s32.totalorder %s19, 1
    %p282 = por %p280, %p281
    %p283 = scmp.ne.s32.totalorder %s275, %s278
    %p284 = scmp.eq.s32.totalorder %s19, 0
    %p285 = por %p283, %p284
    %p286 = scmp.ne.s32.totalorder %s275, %s278
    %p287 = scmp.eq.s32.totalorder %s24, 1
    %p288 = por %p286, %p287
    %p289 = scmp.ne.s32.totalorder %s278, %s279
    %p290 = scmp.eq.s32.totalorder %s24, 0
    %p291 = por %p289, %p290
    %p292 = scmp.ne.s32.totalorder %s278, %s279
    %p293 = scmp.eq.s32.totalorder %s25, 1
    %p294 = por %p292, %p293
    %p296 = scmp.ne.s32.totalorder %s279, %s295
    %p297 = scmp.eq.s32.totalorder %s25, 0
    %p298 = por %p296, %p297
    %s299 = ssub.s32 %s19, %s26
    %p300 = scmp.eq.s32.totalorder %s299, 0
    %s302 = sadd.s32 %s301, 1
    %s303 = scalar_select %p300, %s301, %s302
    %p306 = pneg %p300
    %p307 = scmp.eq.s32.totalorder %s19, 1
    %p308 = por %p306, %p307
    %p309 = scmp.ne.s32.totalorder %s301, %s304
    %p310 = scmp.eq.s32.totalorder %s19, 0
    %p311 = por %p309, %p310
    %p312 = scmp.ne.s32.totalorder %s301, %s304
    %p313 = scmp.eq.s32.totalorder %s24, 1
    %p314 = por %p312, %p313
    %p315 = scmp.ne.s32.totalorder %s304, %s305
    %p316 = scmp.eq.s32.totalorder %s24, 0
    %p317 = por %p315, %p316
    %p318 = scmp.ne.s32.totalorder %s304, %s305
    %p319 = scmp.eq.s32.totalorder %s25, 1
    %p320 = por %p318, %p319
    %p322 = scmp.ne.s32.totalorder %s305, %s321
    %p323 = scmp.eq.s32.totalorder %s25, 0
    %p324 = por %p322, %p323
    %s325 = ssub.s32 %s19, %s26
    %p326 = scmp.eq.s32.totalorder %s325, 0
    %s328 = sadd.s32 %s327, 1
    %s329 = scalar_select %p326, %s327, %s328
    %p332 = pneg %p326
    %p333 = scmp.eq.s32.totalorder %s19, 1
    %p334 = por %p332, %p333
    %p335 = scmp.ne.s32.totalorder %s327, %s330
    %p336 = scmp.eq.s32.totalorder %s19, 0
    %p337 = por %p335, %p336
    %p338 = scmp.ne.s32.totalorder %s327, %s330
    %p339 = scmp.eq.s32.totalorder %s24, 1
    %p340 = por %p338, %p339
    %p341 = scmp.ne.s32.totalorder %s330, %s331
    %p342 = scmp.eq.s32.totalorder %s24, 0
    %p343 = por %p341, %p342
    %p344 = scmp.ne.s32.totalorder %s330, %s331
    %p345 = scmp.eq.s32.totalorder %s25, 1
    %p346 = por %p344, %p345
    %p348 = scmp.ne.s32.totalorder %s331, %s347
    %p349 = scmp.eq.s32.totalorder %s25, 0
    %p350 = por %p348, %p349
    %p351 = scmp.le.s32.totalorder 1, %s19
    %p352 = scmp.lt.s32.totalorder %s19, 3
    %p353 = pnand %p351, %p352
    %p354 = pneg %p353
    // Predicated region
    $region9: #{dance_rollout.45} parent=5 // pred_check
      _
    $region10: #{dance_rollout.45} parent=5 // pred_check_branch
      %356 = sbr.rel (%p353) target = $region12
    $region11: #{dance_rollout.45} parent=5 // pred_region
      %s357 = ssub.s32 %s19, 1
      // Predicated region
      $region13: #{dance_rollout.45} parent=11 // pred_check
        %p358 = pneg %p66
      $region14: #{dance_rollout.45} parent=11 // pred_check_branch
        %360 = sbr.rel (%p358) target = $region16
      $region15: #{dance_rollout.45} parent=11 // pred_region
        _
      $region16: #{dance_rollout.45} parent=11 // pred_fallthru
        _
      // Predicated region
      $region17: #{dance_rollout.45} parent=11 // pred_check
        %p361 = pneg %p87
      $region18: #{dance_rollout.45} parent=11 // pred_check_branch
        %363 = sbr.rel (%p361) target = $region20
      $region19: #{dance_rollout.45} parent=11 // pred_region
        _
      $region20: #{dance_rollout.45} parent=11 // pred_fallthru
        _
      // Predicated region
      $region21: #{dance_rollout.45} parent=11 // pred_check
        %p364 = pneg %p108
      $region22: #{dance_rollout.45} parent=11 // pred_check_branch
        %366 = sbr.rel (%p364) target = $region24
      $region23: #{dance_rollout.45} parent=11 // pred_region
        _
      $region24: #{dance_rollout.45} parent=11 // pred_fallthru
        _
      // Predicated region
      $region25: #{dance_rollout.45} parent=11 // pred_check
        %p367 = pneg %p129
      $region26: #{dance_rollout.45} parent=11 // pred_check_branch
        %369 = sbr.rel (%p367) target = $region28
      $region27: #{dance_rollout.45} parent=11 // pred_region
        _
      $region28: #{dance_rollout.45} parent=11 // pred_fallthru
        _
      // Predicated region
      $region29: #{dance_rollout.45} parent=11 // pred_check
        %p370 = pneg %p150
      $region30: #{dance_rollout.45} parent=11 // pred_check_branch
        %372 = sbr.rel (%p370) target = $region32
      $region31: #{dance_rollout.45} parent=11 // pred_region
        _
      $region32: #{dance_rollout.45} parent=11 // pred_fallthru
        _
      // Predicated region
      $region33: #{dance_rollout.45} parent=11 // pred_check
        %p373 = pneg %p171
      $region34: #{dance_rollout.45} parent=11 // pred_check_branch
        %375 = sbr.rel (%p373) target = $region36
      $region35: #{dance_rollout.45} parent=11 // pred_region
        _
      $region36: #{dance_rollout.45} parent=11 // pred_fallthru
        _
      // Predicated region
      $region37: #{dance_rollout.45} parent=11 // pred_check
        %p376 = pneg %p192
      $region38: #{dance_rollout.45} parent=11 // pred_check_branch
        %378 = sbr.rel (%p376) target = $region40
      $region39: #{dance_rollout.45} parent=11 // pred_region
        _
      $region40: #{dance_rollout.45} parent=11 // pred_fallthru
        _
      // Predicated region
      $region41: #{dance_rollout.45} parent=11 // pred_check
        %p379 = pneg %p213
      $region42: #{dance_rollout.45} parent=11 // pred_check_branch
        %381 = sbr.rel (%p379) target = $region44
      $region43: #{dance_rollout.45} parent=11 // pred_region
        _
      $region44: #{dance_rollout.45} parent=11 // pred_fallthru
        _
    $region12: #{dance_rollout.45} parent=5 // pred_fallthru
      _
    %p382 = scmp.lt.s32.totalorder %s19, 2
    // Predicated region
    $region45: #{dance_rollout.45} parent=5 // pred_check
      %p383 = pneg %p382
    $region46: #{dance_rollout.45} parent=5 // pred_check_branch
      %385 = sbr.rel (%p383) target = $region48
    $region47: #{dance_rollout.45} parent=5 // pred_region
      // Predicated region
      $region49: #{dance_rollout.45} parent=47 // pred_check
        %p386 = pneg %p39
      $region50: #{dance_rollout.45} parent=47 // pred_check_branch
        %388 = sbr.rel (%p386) target = $region52
      $region51: #{dance_rollout.45} parent=47 // pred_region
        %p389 = scmp.lt.s32.totalorder %s19, 1
        %s390 = scalar_select %p389, %s19, 1
        %s391 = smul.addr %s390, 8
        %s392 = scalar_lea.vmem %s0, %s391
      $region52: #{dance_rollout.45} parent=47 // pred_fallthru
        _
      // Predicated region
      $region53: #{dance_rollout.45} parent=47 // pred_check
        %p393 = pneg %p233
      $region54: #{dance_rollout.45} parent=47 // pred_check_branch
        %395 = sbr.rel (%p393) target = $region56
      $region55: #{dance_rollout.45} parent=47 // pred_region
        %p396 = scmp.lt.s32.totalorder %s19, 1
        %s397 = scalar_select %p396, %s19, 1
        %s398 = scalar_lea.vmem %s9, %s397
      $region56: #{dance_rollout.45} parent=47 // pred_fallthru
        _
      // Predicated region
      $region57: #{dance_rollout.45} parent=47 // pred_check
        %p399 = pneg %p259
      $region58: #{dance_rollout.45} parent=47 // pred_check_branch
        %401 = sbr.rel (%p399) target = $region60
      $region59: #{dance_rollout.45} parent=47 // pred_region
        %p402 = scmp.lt.s32.totalorder %s19, 1
        %s403 = scalar_select %p402, %s19, 1
        %s404 = scalar_lea.vmem %s10, %s403
      $region60: #{dance_rollout.45} parent=47 // pred_fallthru
        _
      // Predicated region
      $region61: #{dance_rollout.45} parent=47 // pred_check
        %p405 = pneg %p285
      $region62: #{dance_rollout.45} parent=47 // pred_check_branch
        %407 = sbr.rel (%p405) target = $region64
      $region63: #{dance_rollout.45} parent=47 // pred_region
        %p408 = scmp.lt.s32.totalorder %s19, 1
        %s409 = scalar_select %p408, %s19, 1
        %s410 = scalar_lea.vmem %s11, %s409
      $region64: #{dance_rollout.45} parent=47 // pred_fallthru
        _
      // Predicated region
      $region65: #{dance_rollout.45} parent=47 // pred_check
        %p411 = pneg %p311
      $region66: #{dance_rollout.45} parent=47 // pred_check_branch
        %413 = sbr.rel (%p411) target = $region68
      $region67: #{dance_rollout.45} parent=47 // pred_region
        %p414 = scmp.lt.s32.totalorder %s19, 1
        %s415 = scalar_select %p414, %s19, 1
        %s416 = scalar_lea.vmem %s12, %s415
      $region68: #{dance_rollout.45} parent=47 // pred_fallthru
        _
    $region48: #{dance_rollout.45} parent=5 // pred_fallthru
      _
    %p417 = scmp.le.s32.totalorder 1, %s19
    %p418 = scmp.lt.s32.totalorder %s19, 3
    %p419 = pnand %p417, %p418
    %p420 = pneg %p419
    // Predicated region
    $region69: #{dance_rollout.45} parent=5 // pred_check
      _
    $region70: #{dance_rollout.45} parent=5 // pred_check_branch
      %422 = sbr.rel (%p419) target = $region72
    $region71: #{dance_rollout.45} parent=5 // pred_region
      %s423 = ssub.s32 %s19, 1
      %p424 = scmp.lt.s32.totalorder %s24, 1
      %s425 = scalar_select %p424, %s24, 1
      %s426 = smul.addr %s425, 8
      %s427 = scalar_lea.vmem %s0, %s426
      %p428 = pneg %p45
      %p429 = pneg %p42
      %p430 = pneg %p66
      %p431 = pneg %p63
      %p432 = pneg %p87
      %p433 = pneg %p84
      %p434 = pneg %p108
      %p435 = pneg %p105
      %p436 = pneg %p129
      %p437 = pneg %p126
      %p438 = pneg %p150
      %p439 = pneg %p147
      %p440 = pneg %p171
      %p441 = pneg %p168
      %p442 = pneg %p192
      %p443 = pneg %p189
      %p444 = pneg %p213
      %p445 = pneg %p210
      %p446 = scmp.lt.s32.totalorder %s24, 1
      %s447 = scalar_select %p446, %s24, 1
      %s448 = scalar_lea.vmem %s9, %s447
      %p449 = pneg %p239
      %p450 = pneg %p236
      %p451 = scmp.lt.s32.totalorder %s24, 1
      %s452 = scalar_select %p451, %s24, 1
      %s453 = scalar_lea.vmem %s10, %s452
      %p454 = pneg %p265
      %p455 = pneg %p262
      %p456 = scmp.lt.s32.totalorder %s24, 1
      %s457 = scalar_select %p456, %s24, 1
      %s458 = scalar_lea.vmem %s11, %s457
      %p459 = pneg %p291
      %p460 = pneg %p288
      %p461 = scmp.lt.s32.totalorder %s24, 1
      %s462 = scalar_select %p461, %s24, 1
      %s463 = scalar_lea.vmem %s12, %s462
      %p464 = pneg %p317
      %p465 = pneg %p314
      %p466 = pneg %p343
      %p467 = pneg %p340
      %p468 = scmp.lt.s32.totalorder %s24, 1
      %s469 = scalar_select %p468, %s24, 1
      %s470 = smul.addr %s469, 8
      %s471 = scalar_lea.vmem %s13, %s470
      %p472 = scmp.lt.s32.totalorder %s24, 1
      %s473 = scalar_select %p472, %s24, 1
      %s474 = smul.addr %s473, 8
      %s475 = scalar_lea.vmem %s0, %s474
      %p476 = scmp.lt.s32.totalorder %s24, 1
      %s477 = scalar_select %p476, %s24, 1
      %s478 = scalar_lea.vmem %s9, %s477
      %p479 = scmp.lt.s32.totalorder %s24, 1
      %s480 = scalar_select %p479, %s24, 1
      %s481 = scalar_lea.vmem %s10, %s480
      %p482 = scmp.lt.s32.totalorder %s24, 1
      %s483 = scalar_select %p482, %s24, 1
      %s484 = scalar_lea.vmem %s11, %s483
      %p485 = scmp.lt.s32.totalorder %s24, 1
      %s486 = scalar_select %p485, %s24, 1
      %s487 = scalar_lea.vmem %s12, %s486
      %p488 = scmp.lt.s32.totalorder %s24, 1
      %s489 = scalar_select %p488, %s24, 1
      %s490 = smul.addr %s489, 8
      %s491 = scalar_lea.vmem %s13, %s490
      %v492 = vld [vmem:[%s475] sm:$0xff]
      %v493 = vld [vmem:[%s1] sm:$0xff]
      %v494 = vld [vmem:[%s1 + $0x8] sm:$0xff]
      %v495 = vld [vmem:[%s1 + $0x10] sm:$0xff]
      %v496 = vld [vmem:[%s1 + $0x18] sm:$0xff]
      %v497 = vld [vmem:[%s1 + $0x20] sm:$0xff]
      %v498 = vld [vmem:[%s1 + $0x28] sm:$0xff]
      %v499 = vld [vmem:[%s1 + $0x30] sm:$0xff]
      %v500 = vld [vmem:[%s1 + $0x38] sm:$0xff]
      %v501 = vld [vmem:[%s1 + $0x40] sm:$0xff]
      %v502 = vld [vmem:[%s1 + $0x48] sm:$0xff]
      %v503 = vld [vmem:[%s1 + $0x50] sm:$0xff]
      %v504 = vld [vmem:[%s1 + $0x58] sm:$0xff]
      %v505 = vld [vmem:[%s1 + $0x60] sm:$0xff]
      %v506 = vld [vmem:[%s1 + $0x68] sm:$0xff]
      %v507 = vld [vmem:[%s1 + $0x70] sm:$0xff]
      %v508 = vld [vmem:[%s1 + $0x78] sm:$0xff]
      %v509 = vld [vmem:[%s2] sm:$0x3]
      %v511 = vlaneseq
      %v512 = vshrl.u32 %v511, 7
      %v513 = vsub.s32 0, %v512
      %v514 = vrot.slane %v509, %v513
      %v515 = vlaneseq
      %v516 = vshrl.u32 %v515, 7
      %v517 = vsub.s32 1, %v516
      %v518 = vrot.slane %v509, %v517
      %vm521 = vcmask 523264
      %v523 = vsel %vm521, %v492, 0
      %525 = vmatprep.subr.mxu0 0.0
      %526 = vmatpush1.msra.mxu0 0.0
      %527 = vmatprep.subr.mxu0 0.0
      %528 = vmatpush1.msra.mxu0 0.0
      %529 = vmatprep.subr.mxu0 0.0
      %530 = vmatpush1.msra.mxu0 0.0
      %531 = vmatprep.subr.mxu0 0.0
      %532 = vmatpush1.msra.mxu0 0.0
      %533 = vmatprep.subr.mxu0 0.0
      %534 = vmatpush1.msra.mxu0 0.0
      %535 = vmatprep.subr.mxu0 0.0
      %536 = vmatpush1.msra.mxu0 0.0
      %537 = vmatprep.subr.mxu0 0.0
      %538 = vmatpush1.msra.mxu0 0.0
      %539 = vmatprep.subr.mxu0 0.0
      %540 = vmatpush1.msra.mxu0 0.0
      %541 = vmatprep.subr.mxu0 %v508
      %542 = vmatpush1.msra.mxu0 %v507
      %543 = vmatprep.subr.mxu0 %v506
      %544 = vmatpush1.msra.mxu0 %v505
      %545 = vmatprep.subr.mxu0 %v504
      %546 = vmatpush1.msra.mxu0 %v503
      %547 = vmatprep.subr.mxu0 %v502
      %548 = vmatpush1.msra.mxu0 %v501
      %549 = vmatprep.subr.mxu0 %v500
      %550 = vmatpush1.msra.mxu0 %v499
      %551 = vmatprep.subr.mxu0 %v498
      %552 = vmatpush1.msra.mxu0 %v497
      %553 = vmatprep.subr.mxu0 %v496
      %554 = vmatpush1.msra.mxu0 %v495
      %555 = vmatprep.subr.mxu0 %v494
      %556 = vmatpush1.msra.mxu0 %v493
      %557 = vmatprep.subr.mxu0 0.0
      %558 = vmatpush2.msra.mxu0 0.0
      %559 = vmatprep.subr.mxu0 0.0
      %560 = vmatpush2.msra.mxu0 0.0
      %561 = vmatprep.subr.mxu0 0.0
      %562 = vmatpush2.msra.mxu0 0.0
      %563 = vmatprep.subr.mxu0 0.0
      %564 = vmatpush2.msra.mxu0 0.0
      %565 = vmatprep.subr.mxu0 0.0
      %566 = vmatpush2.msra.mxu0 0.0
      %567 = vmatprep.subr.mxu0 0.0
      %568 = vmatpush2.msra.mxu0 0.0
      %569 = vmatprep.subr.mxu0 0.0
      %570 = vmatpush2.msra.mxu0 0.0
      %571 = vmatprep.subr.mxu0 0.0
      %572 = vmatpush2.msra.mxu0 0.0
      %573 = vmatprep.subr.mxu0 0.0
      %574 = vmatpush2.msra.mxu0 0.0
      %575 = vmatprep.subr.mxu0 0.0
      %576 = vmatpush2.msra.mxu0 0.0
      %577 = vmatprep.subr.mxu0 0.0
      %578 = vmatpush2.msra.mxu0 0.0
      %579 = vmatprep.subr.mxu0 0.0
      %580 = vmatpush2.msra.mxu0 0.0
      %581 = vmatprep.subr.mxu0 0.0
      %582 = vmatpush2.msra.mxu0 0.0
      %583 = vmatprep.subr.mxu0 0.0
      %584 = vmatpush2.msra.mxu0 0.0
      %585 = vmatprep.subr.mxu0 0.0
      %586 = vmatpush2.msra.mxu0 0.0
      %587 = vmatprep.subr.mxu0 0.0
      %588 = vmatpush2.msra.mxu0 0.0
      %589 = vmatprep.mubr.f32.mxu0 0.0
      %590 = vmatmul.mubr.f32.gmra.mxu0 %v523
      %v591 = vpop.f32.mrf.mxu0
      %v592 = vadd.f32 %v514, %v591
      %v593 = vpop.f32.mrf.mxu0
      %v594 = vadd.f32 %v518, %v593
      %595 = vdwg.mxu0
      %v596 = vld [vmem:[%s3] sm:$0xff]
      %v597 = vld [vmem:[%s3 + $0x8] sm:$0xff]
      %v598 = vld [vmem:[%s3 + $0x10] sm:$0xff]
      %v599 = vld [vmem:[%s3 + $0x18] sm:$0xff]
      %v600 = vld [vmem:[%s3 + $0x20] sm:$0xff]
      %v601 = vld [vmem:[%s3 + $0x28] sm:$0xff]
      %v602 = vld [vmem:[%s3 + $0x30] sm:$0xff]
      %v603 = vld [vmem:[%s3 + $0x38] sm:$0xff]
      %605 = vrot.lane.b32.xlu0 %v592, 64
      %v606 = vpop.permute.xlu0 %605
      %vm607 = vcmask 130048
      %v608 = vsel %vm607, %v592, 0
      %v610 = vsel %vm607, %v606, 0
      %612 = vmatprep.subr.mxu0 0.0
      %613 = vmatpush1.xpose.msra.mxu0 0.0
      %614 = vmatprep.subr.mxu0 0.0
      %615 = vmatpush1.xpose.msra.mxu0 0.0
      %616 = vmatprep.subr.mxu0 0.0
      %617 = vmatpush1.xpose.msra.mxu0 0.0
      %618 = vmatprep.subr.mxu0 0.0
      %619 = vmatpush1.xpose.msra.mxu0 0.0
      %620 = vmatprep.subr.mxu0 0.0
      %621 = vmatpush1.xpose.msra.mxu0 0.0
      %622 = vmatprep.subr.mxu0 0.0
      %623 = vmatpush1.xpose.msra.mxu0 0.0
      %624 = vmatprep.subr.mxu0 0.0
      %625 = vmatpush1.xpose.msra.mxu0 0.0
      %626 = vmatprep.subr.mxu0 0.0
      %627 = vmatpush1.xpose.msra.mxu0 0.0
      %628 = vmatprep.subr.mxu0 0.0
      %629 = vmatpush1.xpose.msra.mxu0 0.0
      %630 = vmatprep.subr.mxu0 0.0
      %631 = vmatpush1.xpose.msra.mxu0 0.0
      %632 = vmatprep.subr.mxu0 0.0
      %633 = vmatpush1.xpose.msra.mxu0 0.0
      %634 = vmatprep.subr.mxu0 0.0
      %635 = vmatpush1.xpose.msra.mxu0 0.0
      %636 = vmatprep.subr.mxu0 0.0
      %637 = vmatpush1.xpose.msra.mxu0 0.0
      %638 = vmatprep.subr.mxu0 0.0
      %639 = vmatpush1.xpose.msra.mxu0 0.0
      %640 = vmatprep.subr.mxu0 0.0
      %641 = vmatpush1.xpose.msra.mxu0 0.0
      %642 = vmatprep.subr.mxu0 0.0
      %643 = vmatpush1.xpose.msra.mxu0 %v610
      %644 = vmatprep.subr.mxu0 0.0
      %645 = vmatpush2.xpose.msra.mxu0 0.0
      %646 = vmatprep.subr.mxu0 0.0
      %647 = vmatpush2.xpose.msra.mxu0 0.0
      %648 = vmatprep.subr.mxu0 0.0
      %649 = vmatpush2.xpose.msra.mxu0 0.0
      %650 = vmatprep.subr.mxu0 0.0
      %651 = vmatpush2.xpose.msra.mxu0 0.0
      %652 = vmatprep.subr.mxu0 0.0
      %653 = vmatpush2.xpose.msra.mxu0 0.0
      %654 = vmatprep.subr.mxu0 0.0
      %655 = vmatpush2.xpose.msra.mxu0 0.0
      %656 = vmatprep.subr.mxu0 0.0
      %657 = vmatpush2.xpose.msra.mxu0 0.0
      %658 = vmatprep.subr.mxu0 0.0
      %659 = vmatpush2.xpose.msra.mxu0 0.0
      %660 = vmatprep.subr.mxu0 0.0
      %661 = vmatpush2.xpose.msra.mxu0 0.0
      %662 = vmatprep.subr.mxu0 0.0
      %663 = vmatpush2.xpose.msra.mxu0 0.0
      %664 = vmatprep.subr.mxu0 0.0
      %665 = vmatpush2.xpose.msra.mxu0 0.0
      %666 = vmatprep.subr.mxu0 0.0
      %667 = vmatpush2.xpose.msra.mxu0 0.0
      %668 = vmatprep.subr.mxu0 0.0
      %669 = vmatpush2.xpose.msra.mxu0 0.0
      %670 = vmatprep.subr.mxu0 0.0
      %671 = vmatpush2.xpose.msra.mxu0 0.0
      %672 = vmatprep.subr.mxu0 0.0
      %673 = vmatpush2.xpose.msra.mxu0 0.0
      %674 = vmatprep.subr.mxu0 0.0
      %675 = vmatpush2.xpose.msra.mxu0 0.0
      %676 = vmatprep.mubr.f32.mxu0 0.0
      %677 = vmatmul.mubr.f32.gmra.mxu0 %v608
      %v678 = vpop.f32.mrf.mxu0
      %v679 = vadd.f32 0.0, %v678
      %v680 = vpop.f32.mrf.mxu0
      %681 = vdwg.mxu0
      %v682 = vmul.f32 %v679, 0.25
      %vm683 = vcmask 64512
      %v684 = vsel %vm683, %v682, -inf
      %685 = vmax.xlane.f32.xlu0 %v684
      %v686 = vpop.xlane.xlu0 %685
      %v687 = vsub.f32 %v682, %v686
      %v688 = vmul.f32 %v687, 1.442695
      %v689 = vpow.pop %v688
      %v690 = vsel %vm683, %v689, 0.0
      %691 = vadd.xlane.f32.xlu0 %v690
      %v692 = vpop.xlane.xlu0 %691
      %v693 = vrcp.pop %v692
      %v694 = vmul.f32 %v689, %v693
      %v696 = vsel %vm683, %v694, 0
      %698 = vmatprep.subr.mxu0 0.0
      %699 = vmatpush1.msra.mxu0 0.0
      %700 = vmatprep.subr.mxu0 0.0
      %701 = vmatpush1.msra.mxu0 0.0
      %702 = vmatprep.subr.mxu0 0.0
      %703 = vmatpush1.msra.mxu0 0.0
      %704 = vmatprep.subr.mxu0 0.0
      %705 = vmatpush1.msra.mxu0 0.0
      %706 = vmatprep.subr.mxu0 0.0
      %707 = vmatpush1.msra.mxu0 0.0
      %708 = vmatprep.subr.mxu0 0.0
      %709 = vmatpush1.msra.mxu0 0.0
      %710 = vmatprep.subr.mxu0 0.0
      %711 = vmatpush1.msra.mxu0 0.0
      %712 = vmatprep.subr.mxu0 0.0
      %713 = vmatpush1.msra.mxu0 0.0
      %714 = vmatprep.subr.mxu0 0.0
      %715 = vmatpush1.msra.mxu0 0.0
      %716 = vmatprep.subr.mxu0 0.0
      %717 = vmatpush1.msra.mxu0 0.0
      %718 = vmatprep.subr.mxu0 0.0
      %719 = vmatpush1.msra.mxu0 0.0
      %720 = vmatprep.subr.mxu0 0.0
      %721 = vmatpush1.msra.mxu0 0.0
      %722 = vmatprep.subr.mxu0 0.0
      %723 = vmatpush1.msra.mxu0 0.0
      %724 = vmatprep.subr.mxu0 0.0
      %725 = vmatpush1.msra.mxu0 0.0
      %726 = vmatprep.subr.mxu0 0.0
      %727 = vmatpush1.msra.mxu0 0.0
      %728 = vmatprep.subr.mxu0 0.0
      %729 = vmatpush1.msra.mxu0 %v594
      %730 = vmatprep.subr.mxu0 0.0
      %731 = vmatpush2.msra.mxu0 0.0
      %732 = vmatprep.subr.mxu0 0.0
      %733 = vmatpush2.msra.mxu0 0.0
      %734 = vmatprep.subr.mxu0 0.0
      %735 = vmatpush2.msra.mxu0 0.0
      %736 = vmatprep.subr.mxu0 0.0
      %737 = vmatpush2.msra.mxu0 0.0
      %738 = vmatprep.subr.mxu0 0.0
      %739 = vmatpush2.msra.mxu0 0.0
      %740 = vmatprep.subr.mxu0 0.0
      %741 = vmatpush2.msra.mxu0 0.0
      %742 = vmatprep.subr.mxu0 0.0
      %743 = vmatpush2.msra.mxu0 0.0
      %744 = vmatprep.subr.mxu0 0.0
      %745 = vmatpush2.msra.mxu0 0.0
      %746 = vmatprep.subr.mxu0 0.0
      %747 = vmatpush2.msra.mxu0 0.0
      %748 = vmatprep.subr.mxu0 0.0
      %749 = vmatpush2.msra.mxu0 0.0
      %750 = vmatprep.subr.mxu0 0.0
      %751 = vmatpush2.msra.mxu0 0.0
      %752 = vmatprep.subr.mxu0 0.0
      %753 = vmatpush2.msra.mxu0 0.0
      %754 = vmatprep.subr.mxu0 0.0
      %755 = vmatpush2.msra.mxu0 0.0
      %756 = vmatprep.subr.mxu0 0.0
      %757 = vmatpush2.msra.mxu0 0.0
      %758 = vmatprep.subr.mxu0 0.0
      %759 = vmatpush2.msra.mxu0 0.0
      %760 = vmatprep.subr.mxu0 0.0
      %761 = vmatpush2.msra.mxu0 0.0
      %762 = vmatprep.mubr.f32.mxu0 0.0
      %763 = vmatmul.mubr.f32.gmra.mxu0 %v696
      %v764 = vpop.f32.mrf.mxu0
      %v765 = vadd.f32 0.0, %v764
      %v766 = vpop.f32.mrf.mxu0
      %767 = vdwg.mxu0
      %768 = vrot.lane.b32.xlu0 %v592, 112
      %v769 = vpop.permute.xlu0 %768
      %770 = vrot.lane.b32.xlu0 %v592, 48
      %v771 = vpop.permute.xlu0 %770
      %v772 = vsel %vm607, %v769, 0
      %v774 = vsel %vm607, %v771, 0
      %776 = vmatprep.subr.mxu0 0.0
      %777 = vmatpush1.xpose.msra.mxu0 0.0
      %778 = vmatprep.subr.mxu0 0.0
      %779 = vmatpush1.xpose.msra.mxu0 0.0
      %780 = vmatprep.subr.mxu0 0.0
      %781 = vmatpush1.xpose.msra.mxu0 0.0
      %782 = vmatprep.subr.mxu0 0.0
      %783 = vmatpush1.xpose.msra.mxu0 0.0
      %784 = vmatprep.subr.mxu0 0.0
      %785 = vmatpush1.xpose.msra.mxu0 0.0
      %786 = vmatprep.subr.mxu0 0.0
      %787 = vmatpush1.xpose.msra.mxu0 0.0
      %788 = vmatprep.subr.mxu0 0.0
      %789 = vmatpush1.xpose.msra.mxu0 0.0
      %790 = vmatprep.subr.mxu0 0.0
      %791 = vmatpush1.xpose.msra.mxu0 0.0
      %792 = vmatprep.subr.mxu0 0.0
      %793 = vmatpush1.xpose.msra.mxu0 0.0
      %794 = vmatprep.subr.mxu0 0.0
      %795 = vmatpush1.xpose.msra.mxu0 0.0
      %796 = vmatprep.subr.mxu0 0.0
      %797 = vmatpush1.xpose.msra.mxu0 0.0
      %798 = vmatprep.subr.mxu0 0.0
      %799 = vmatpush1.xpose.msra.mxu0 0.0
      %800 = vmatprep.subr.mxu0 0.0
      %801 = vmatpush1.xpose.msra.mxu0 0.0
      %802 = vmatprep.subr.mxu0 0.0
      %803 = vmatpush1.xpose.msra.mxu0 0.0
      %804 = vmatprep.subr.mxu0 0.0
      %805 = vmatpush1.xpose.msra.mxu0 0.0
      %806 = vmatprep.subr.mxu0 0.0
      %807 = vmatpush1.xpose.msra.mxu0 %v774
      %808 = vmatprep.subr.mxu0 0.0
      %809 = vmatpush2.xpose.msra.mxu0 0.0
      %810 = vmatprep.subr.mxu0 0.0
      %811 = vmatpush2.xpose.msra.mxu0 0.0
      %812 = vmatprep.subr.mxu0 0.0
      %813 = vmatpush2.xpose.msra.mxu0 0.0
      %814 = vmatprep.subr.mxu0 0.0
      %815 = vmatpush2.xpose.msra.mxu0 0.0
      %816 = vmatprep.subr.mxu0 0.0
      %817 = vmatpush2.xpose.msra.mxu0 0.0
      %818 = vmatprep.subr.mxu0 0.0
      %819 = vmatpush2.xpose.msra.mxu0 0.0
      %820 = vmatprep.subr.mxu0 0.0
      %821 = vmatpush2.xpose.msra.mxu0 0.0
      %822 = vmatprep.subr.mxu0 0.0
      %823 = vmatpush2.xpose.msra.mxu0 0.0
      %824 = vmatprep.subr.mxu0 0.0
      %825 = vmatpush2.xpose.msra.mxu0 0.0
      %826 = vmatprep.subr.mxu0 0.0
      %827 = vmatpush2.xpose.msra.mxu0 0.0
      %828 = vmatprep.subr.mxu0 0.0
      %829 = vmatpush2.xpose.msra.mxu0 0.0
      %830 = vmatprep.subr.mxu0 0.0
      %831 = vmatpush2.xpose.msra.mxu0 0.0
      %832 = vmatprep.subr.mxu0 0.0
      %833 = vmatpush2.xpose.msra.mxu0 0.0
      %834 = vmatprep.subr.mxu0 0.0
      %835 = vmatpush2.xpose.msra.mxu0 0.0
      %836 = vmatprep.subr.mxu0 0.0
      %837 = vmatpush2.xpose.msra.mxu0 0.0
      %838 = vmatprep.subr.mxu0 0.0
      %839 = vmatpush2.xpose.msra.mxu0 0.0
      %840 = vmatprep.mubr.f32.mxu0 0.0
      %841 = vmatmul.mubr.f32.gmra.mxu0 %v772
      %v842 = vpop.f32.mrf.mxu0
      %v843 = vadd.f32 0.0, %v842
      %v844 = vpop.f32.mrf.mxu0
      %845 = vdwg.mxu0
      %v846 = vmul.f32 %v843, 0.25
      %v847 = vsel %vm683, %v846, -inf
      %848 = vmax.xlane.f32.xlu0 %v847
      %v849 = vpop.xlane.xlu0 %848
      %v850 = vsub.f32 %v846, %v849
      %v851 = vmul.f32 %v850, 1.442695
      %v852 = vpow.pop %v851
      %v853 = vsel %vm683, %v852, 0.0
      %854 = vadd.xlane.f32.xlu0 %v853
      %v855 = vpop.xlane.xlu0 %854
      %v856 = vrcp.pop %v855
      %v857 = vmul.f32 %v852, %v856
      %859 = vrot.lane.b32.xlu0 %v594, 112
      %v860 = vpop.permute.xlu0 %859
      %v863 = vsel %vm683, %v857, 0
      %865 = vmatprep.subr.mxu0 0.0
      %866 = vmatpush1.msra.mxu0 0.0
      %867 = vmatprep.subr.mxu0 0.0
      %868 = vmatpush1.msra.mxu0 0.0
      %869 = vmatprep.subr.mxu0 0.0
      %870 = vmatpush1.msra.mxu0 0.0
      %871 = vmatprep.subr.mxu0 0.0
      %872 = vmatpush1.msra.mxu0 0.0
      %873 = vmatprep.subr.mxu0 0.0
      %874 = vmatpush1.msra.mxu0 0.0
      %875 = vmatprep.subr.mxu0 0.0
      %876 = vmatpush1.msra.mxu0 0.0
      %877 = vmatprep.subr.mxu0 0.0
      %878 = vmatpush1.msra.mxu0 0.0
      %879 = vmatprep.subr.mxu0 0.0
      %880 = vmatpush1.msra.mxu0 0.0
      %881 = vmatprep.subr.mxu0 0.0
      %882 = vmatpush1.msra.mxu0 0.0
      %883 = vmatprep.subr.mxu0 0.0
      %884 = vmatpush1.msra.mxu0 0.0
      %885 = vmatprep.subr.mxu0 0.0
      %886 = vmatpush1.msra.mxu0 0.0
      %887 = vmatprep.subr.mxu0 0.0
      %888 = vmatpush1.msra.mxu0 0.0
      %889 = vmatprep.subr.mxu0 0.0
      %890 = vmatpush1.msra.mxu0 0.0
      %891 = vmatprep.subr.mxu0 0.0
      %892 = vmatpush1.msra.mxu0 0.0
      %893 = vmatprep.subr.mxu0 0.0
      %894 = vmatpush1.msra.mxu0 0.0
      %895 = vmatprep.subr.mxu0 0.0
      %896 = vmatpush1.msra.mxu0 %v860
      %897 = vmatprep.subr.mxu0 0.0
      %898 = vmatpush2.msra.mxu0 0.0
      %899 = vmatprep.subr.mxu0 0.0
      %900 = vmatpush2.msra.mxu0 0.0
      %901 = vmatprep.subr.mxu0 0.0
      %902 = vmatpush2.msra.mxu0 0.0
      %903 = vmatprep.subr.mxu0 0.0
      %904 = vmatpush2.msra.mxu0 0.0
      %905 = vmatprep.subr.mxu0 0.0
      %906 = vmatpush2.msra.mxu0 0.0
      %907 = vmatprep.subr.mxu0 0.0
      %908 = vmatpush2.msra.mxu0 0.0
      %909 = vmatprep.subr.mxu0 0.0
      %910 = vmatpush2.msra.mxu0 0.0
      %911 = vmatprep.subr.mxu0 0.0
      %912 = vmatpush2.msra.mxu0 0.0
      %913 = vmatprep.subr.mxu0 0.0
      %914 = vmatpush2.msra.mxu0 0.0
      %915 = vmatprep.subr.mxu0 0.0
      %916 = vmatpush2.msra.mxu0 0.0
      %917 = vmatprep.subr.mxu0 0.0
      %918 = vmatpush2.msra.mxu0 0.0
      %919 = vmatprep.subr.mxu0 0.0
      %920 = vmatpush2.msra.mxu0 0.0
      %921 = vmatprep.subr.mxu0 0.0
      %922 = vmatpush2.msra.mxu0 0.0
      %923 = vmatprep.subr.mxu0 0.0
      %924 = vmatpush2.msra.mxu0 0.0
      %925 = vmatprep.subr.mxu0 0.0
      %926 = vmatpush2.msra.mxu0 0.0
      %927 = vmatprep.subr.mxu0 0.0
      %928 = vmatpush2.msra.mxu0 0.0
      %929 = vmatprep.mubr.f32.mxu0 0.0
      %930 = vmatmul.mubr.f32.gmra.mxu0 %v863
      %v931 = vpop.f32.mrf.mxu0
      %v932 = vadd.f32 0.0, %v931
      %v933 = vpop.f32.mrf.mxu0
      %934 = vdwg.mxu0
      %v936 = vsel %vm607, %v932, 0
      %938 = vmatprep.subr.mxu0 0.0
      %939 = vmatpush1.msra.mxu0 0.0
      %940 = vmatprep.subr.mxu0 0.0
      %941 = vmatpush1.msra.mxu0 0.0
      %942 = vmatprep.subr.mxu0 0.0
      %943 = vmatpush1.msra.mxu0 0.0
      %944 = vmatprep.subr.mxu0 0.0
      %945 = vmatpush1.msra.mxu0 0.0
      %946 = vmatprep.subr.mxu0 0.0
      %947 = vmatpush1.msra.mxu0 0.0
      %948 = vmatprep.subr.mxu0 0.0
      %949 = vmatpush1.msra.mxu0 0.0
      %950 = vmatprep.subr.mxu0 0.0
      %951 = vmatpush1.msra.mxu0 0.0
      %952 = vmatprep.subr.mxu0 0.0
      %953 = vmatpush1.msra.mxu0 0.0
      %954 = vmatprep.subr.mxu0 0.0
      %955 = vmatpush1.msra.mxu0 0.0
      %956 = vmatprep.subr.mxu0 0.0
      %957 = vmatpush1.msra.mxu0 0.0
      %958 = vmatprep.subr.mxu0 0.0
      %959 = vmatpush1.msra.mxu0 0.0
      %960 = vmatprep.subr.mxu0 0.0
      %961 = vmatpush1.msra.mxu0 0.0
      %962 = vmatprep.subr.mxu0 0.0
      %963 = vmatpush1.msra.mxu0 0.0
      %964 = vmatprep.subr.mxu0 0.0
      %965 = vmatpush1.msra.mxu0 0.0
      %966 = vmatprep.subr.mxu0 0.0
      %967 = vmatpush1.msra.mxu0 %v599
      %968 = vmatprep.subr.mxu0 0.0
      %969 = vmatpush1.msra.mxu0 %v598
      %970 = vmatprep.subr.mxu0 0.0
      %971 = vmatpush2.msra.mxu0 0.0
      %972 = vmatprep.subr.mxu0 0.0
      %973 = vmatpush2.msra.mxu0 0.0
      %974 = vmatprep.subr.mxu0 0.0
      %975 = vmatpush2.msra.mxu0 0.0
      %976 = vmatprep.subr.mxu0 0.0
      %977 = vmatpush2.msra.mxu0 0.0
      %978 = vmatprep.subr.mxu0 0.0
      %979 = vmatpush2.msra.mxu0 0.0
      %980 = vmatprep.subr.mxu0 0.0
      %981 = vmatpush2.msra.mxu0 0.0
      %982 = vmatprep.subr.mxu0 0.0
      %983 = vmatpush2.msra.mxu0 0.0
      %984 = vmatprep.subr.mxu0 0.0
      %985 = vmatpush2.msra.mxu0 0.0
      %986 = vmatprep.subr.mxu0 0.0
      %987 = vmatpush2.msra.mxu0 0.0
      %988 = vmatprep.subr.mxu0 0.0
      %989 = vmatpush2.msra.mxu0 0.0
      %990 = vmatprep.subr.mxu0 0.0
      %991 = vmatpush2.msra.mxu0 0.0
      %992 = vmatprep.subr.mxu0 0.0
      %993 = vmatpush2.msra.mxu0 0.0
      %994 = vmatprep.subr.mxu0 0.0
      %995 = vmatpush2.msra.mxu0 0.0
      %996 = vmatprep.subr.mxu0 0.0
      %997 = vmatpush2.msra.mxu0 0.0
      %998 = vmatprep.subr.mxu0 0.0
      %999 = vmatpush2.msra.mxu0 0.0
      %1000 = vmatprep.subr.mxu0 0.0
      %1001 = vmatpush2.msra.mxu0 0.0
      %1002 = vmatprep.mubr.f32.mxu0 0.0
      %1003 = vmatmul.mubr.f32.gmra.mxu0 %v936
      %v1004 = vpop.f32.mrf.mxu0
      %v1005 = vadd.f32 0.0, %v1004
      %v1006 = vpop.f32.mrf.mxu0
      %1007 = vdwg.mxu0
      %v1009 = vsel %vm607, %v765, 0
      %1011 = vmatprep.subr.mxu0 0.0
      %1012 = vmatpush1.msra.mxu0 0.0
      %1013 = vmatprep.subr.mxu0 0.0
      %1014 = vmatpush1.msra.mxu0 0.0
      %1015 = vmatprep.subr.mxu0 0.0
      %1016 = vmatpush1.msra.mxu0 0.0
      %1017 = vmatprep.subr.mxu0 0.0
      %1018 = vmatpush1.msra.mxu0 0.0
      %1019 = vmatprep.subr.mxu0 0.0
      %1020 = vmatpush1.msra.mxu0 0.0
      %1021 = vmatprep.subr.mxu0 0.0
      %1022 = vmatpush1.msra.mxu0 0.0
      %1023 = vmatprep.subr.mxu0 0.0
      %1024 = vmatpush1.msra.mxu0 0.0
      %1025 = vmatprep.subr.mxu0 0.0
      %1026 = vmatpush1.msra.mxu0 0.0
      %1027 = vmatprep.subr.mxu0 0.0
      %1028 = vmatpush1.msra.mxu0 0.0
      %1029 = vmatprep.subr.mxu0 0.0
      %1030 = vmatpush1.msra.mxu0 0.0
      %1031 = vmatprep.subr.mxu0 0.0
      %1032 = vmatpush1.msra.mxu0 0.0
      %1033 = vmatprep.subr.mxu0 0.0
      %1034 = vmatpush1.msra.mxu0 0.0
      %1035 = vmatprep.subr.mxu0 0.0
      %1036 = vmatpush1.msra.mxu0 0.0
      %1037 = vmatprep.subr.mxu0 0.0
      %1038 = vmatpush1.msra.mxu0 0.0
      %1039 = vmatprep.subr.mxu0 0.0
      %1040 = vmatpush1.msra.mxu0 %v597
      %1041 = vmatprep.subr.mxu0 0.0
      %1042 = vmatpush1.msra.mxu0 %v596
      %1043 = vmatprep.subr.mxu0 0.0
      %1044 = vmatpush2.msra.mxu0 0.0
      %1045 = vmatprep.subr.mxu0 0.0
      %1046 = vmatpush2.msra.mxu0 0.0
      %1047 = vmatprep.subr.mxu0 0.0
      %1048 = vmatpush2.msra.mxu0 0.0
      %1049 = vmatprep.subr.mxu0 0.0
      %1050 = vmatpush2.msra.mxu0 0.0
      %1051 = vmatprep.subr.mxu0 0.0
      %1052 = vmatpush2.msra.mxu0 0.0
      %1053 = vmatprep.subr.mxu0 0.0
      %1054 = vmatpush2.msra.mxu0 0.0
      %1055 = vmatprep.subr.mxu0 0.0
      %1056 = vmatpush2.msra.mxu0 0.0
      %1057 = vmatprep.subr.mxu0 0.0
      %1058 = vmatpush2.msra.mxu0 0.0
      %1059 = vmatprep.subr.mxu0 0.0
      %1060 = vmatpush2.msra.mxu0 0.0
      %1061 = vmatprep.subr.mxu0 0.0
      %1062 = vmatpush2.msra.mxu0 0.0
      %1063 = vmatprep.subr.mxu0 0.0
      %1064 = vmatpush2.msra.mxu0 0.0
      %1065 = vmatprep.subr.mxu0 0.0
      %1066 = vmatpush2.msra.mxu0 0.0
      %1067 = vmatprep.subr.mxu0 0.0
      %1068 = vmatpush2.msra.mxu0 0.0
      %1069 = vmatprep.subr.mxu0 0.0
      %1070 = vmatpush2.msra.mxu0 0.0
      %1071 = vmatprep.subr.mxu0 0.0
      %1072 = vmatpush2.msra.mxu0 0.0
      %1073 = vmatprep.subr.mxu0 0.0
      %1074 = vmatpush2.msra.mxu0 0.0
      %1075 = vmatprep.mubr.f32.mxu0 0.0
      %1076 = vmatmul.mubr.f32.gmra.mxu0 %v1009
      %v1077 = vpop.f32.mrf.mxu0
      %v1078 = vadd.f32 %v1005, %v1077
      %v1079 = vpop.f32.mrf.mxu0
      %1080 = vdwg.mxu0
      %1081 = vrot.lane.b32.xlu0 %v592, 96
      %v1082 = vpop.permute.xlu0 %1081
      %1083 = vrot.lane.b32.xlu0 %v592, 32
      %v1084 = vpop.permute.xlu0 %1083
      %v1085 = vsel %vm607, %v1082, 0
      %v1087 = vsel %vm607, %v1084, 0
      %1089 = vmatprep.subr.mxu0 0.0
      %1090 = vmatpush1.xpose.msra.mxu0 0.0
      %1091 = vmatprep.subr.mxu0 0.0
      %1092 = vmatpush1.xpose.msra.mxu0 0.0
      %1093 = vmatprep.subr.mxu0 0.0
      %1094 = vmatpush1.xpose.msra.mxu0 0.0
      %1095 = vmatprep.subr.mxu0 0.0
      %1096 = vmatpush1.xpose.msra.mxu0 0.0
      %1097 = vmatprep.subr.mxu0 0.0
      %1098 = vmatpush1.xpose.msra.mxu0 0.0
      %1099 = vmatprep.subr.mxu0 0.0
      %1100 = vmatpush1.xpose.msra.mxu0 0.0
      %1101 = vmatprep.subr.mxu0 0.0
      %1102 = vmatpush1.xpose.msra.mxu0 0.0
      %1103 = vmatprep.subr.mxu0 0.0
      %1104 = vmatpush1.xpose.msra.mxu0 0.0
      %1105 = vmatprep.subr.mxu0 0.0
      %1106 = vmatpush1.xpose.msra.mxu0 0.0
      %1107 = vmatprep.subr.mxu0 0.0
      %1108 = vmatpush1.xpose.msra.mxu0 0.0
      %1109 = vmatprep.subr.mxu0 0.0
      %1110 = vmatpush1.xpose.msra.mxu0 0.0
      %1111 = vmatprep.subr.mxu0 0.0
      %1112 = vmatpush1.xpose.msra.mxu0 0.0
      %1113 = vmatprep.subr.mxu0 0.0
      %1114 = vmatpush1.xpose.msra.mxu0 0.0
      %1115 = vmatprep.subr.mxu0 0.0
      %1116 = vmatpush1.xpose.msra.mxu0 0.0
      %1117 = vmatprep.subr.mxu0 0.0
      %1118 = vmatpush1.xpose.msra.mxu0 0.0
      %1119 = vmatprep.subr.mxu0 0.0
      %1120 = vmatpush1.xpose.msra.mxu0 %v1087
      %1121 = vmatprep.subr.mxu0 0.0
      %1122 = vmatpush2.xpose.msra.mxu0 0.0
      %1123 = vmatprep.subr.mxu0 0.0
      %1124 = vmatpush2.xpose.msra.mxu0 0.0
      %1125 = vmatprep.subr.mxu0 0.0
      %1126 = vmatpush2.xpose.msra.mxu0 0.0
      %1127 = vmatprep.subr.mxu0 0.0
      %1128 = vmatpush2.xpose.msra.mxu0 0.0
      %1129 = vmatprep.subr.mxu0 0.0
      %1130 = vmatpush2.xpose.msra.mxu0 0.0
      %1131 = vmatprep.subr.mxu0 0.0
      %1132 = vmatpush2.xpose.msra.mxu0 0.0
      %1133 = vmatprep.subr.mxu0 0.0
      %1134 = vmatpush2.xpose.msra.mxu0 0.0
      %1135 = vmatprep.subr.mxu0 0.0
      %1136 = vmatpush2.xpose.msra.mxu0 0.0
      %1137 = vmatprep.subr.mxu0 0.0
      %1138 = vmatpush2.xpose.msra.mxu0 0.0
      %1139 = vmatprep.subr.mxu0 0.0
      %1140 = vmatpush2.xpose.msra.mxu0 0.0
      %1141 = vmatprep.subr.mxu0 0.0
      %1142 = vmatpush2.xpose.msra.mxu0 0.0
      %1143 = vmatprep.subr.mxu0 0.0
      %1144 = vmatpush2.xpose.msra.mxu0 0.0
      %1145 = vmatprep.subr.mxu0 0.0
      %1146 = vmatpush2.xpose.msra.mxu0 0.0
      %1147 = vmatprep.subr.mxu0 0.0
      %1148 = vmatpush2.xpose.msra.mxu0 0.0
      %1149 = vmatprep.subr.mxu0 0.0
      %1150 = vmatpush2.xpose.msra.mxu0 0.0
      %1151 = vmatprep.subr.mxu0 0.0
      %1152 = vmatpush2.xpose.msra.mxu0 0.0
      %1153 = vmatprep.mubr.f32.mxu0 0.0
      %1154 = vmatmul.mubr.f32.gmra.mxu0 %v1085
      %v1155 = vpop.f32.mrf.mxu0
      %v1156 = vadd.f32 0.0, %v1155
      %v1157 = vpop.f32.mrf.mxu0
      %1158 = vdwg.mxu0
      %v1159 = vmul.f32 %v1156, 0.25
      %v1160 = vsel %vm683, %v1159, -inf
      %1161 = vmax.xlane.f32.xlu0 %v1160
      %v1162 = vpop.xlane.xlu0 %1161
      %v1163 = vsub.f32 %v1159, %v1162
      %v1164 = vmul.f32 %v1163, 1.442695
      %v1165 = vpow.pop %v1164
      %v1166 = vsel %vm683, %v1165, 0.0
      %1167 = vadd.xlane.f32.xlu0 %v1166
      %v1168 = vpop.xlane.xlu0 %1167
      %v1169 = vrcp.pop %v1168
      %v1170 = vmul.f32 %v1165, %v1169
      %1171 = vrot.lane.b32.xlu0 %v594, 96
      %v1172 = vpop.permute.xlu0 %1171
      %v1175 = vsel %vm683, %v1170, 0
      %1177 = vmatprep.subr.mxu0 0.0
      %1178 = vmatpush1.msra.mxu0 0.0
      %1179 = vmatprep.subr.mxu0 0.0
      %1180 = vmatpush1.msra.mxu0 0.0
      %1181 = vmatprep.subr.mxu0 0.0
      %1182 = vmatpush1.msra.mxu0 0.0
      %1183 = vmatprep.subr.mxu0 0.0
      %1184 = vmatpush1.msra.mxu0 0.0
      %1185 = vmatprep.subr.mxu0 0.0
      %1186 = vmatpush1.msra.mxu0 0.0
      %1187 = vmatprep.subr.mxu0 0.0
      %1188 = vmatpush1.msra.mxu0 0.0
      %1189 = vmatprep.subr.mxu0 0.0
      %1190 = vmatpush1.msra.mxu0 0.0
      %1191 = vmatprep.subr.mxu0 0.0
      %1192 = vmatpush1.msra.mxu0 0.0
      %1193 = vmatprep.subr.mxu0 0.0
      %1194 = vmatpush1.msra.mxu0 0.0
      %1195 = vmatprep.subr.mxu0 0.0
      %1196 = vmatpush1.msra.mxu0 0.0
      %1197 = vmatprep.subr.mxu0 0.0
      %1198 = vmatpush1.msra.mxu0 0.0
      %1199 = vmatprep.subr.mxu0 0.0
      %1200 = vmatpush1.msra.mxu0 0.0
      %1201 = vmatprep.subr.mxu0 0.0
      %1202 = vmatpush1.msra.mxu0 0.0
      %1203 = vmatprep.subr.mxu0 0.0
      %1204 = vmatpush1.msra.mxu0 0.0
      %1205 = vmatprep.subr.mxu0 0.0
      %1206 = vmatpush1.msra.mxu0 0.0
      %1207 = vmatprep.subr.mxu0 0.0
      %1208 = vmatpush1.msra.mxu0 %v1172
      %1209 = vmatprep.subr.mxu0 0.0
      %1210 = vmatpush2.msra.mxu0 0.0
      %1211 = vmatprep.subr.mxu0 0.0
      %1212 = vmatpush2.msra.mxu0 0.0
      %1213 = vmatprep.subr.mxu0 0.0
      %1214 = vmatpush2.msra.mxu0 0.0
      %1215 = vmatprep.subr.mxu0 0.0
      %1216 = vmatpush2.msra.mxu0 0.0
      %1217 = vmatprep.subr.mxu0 0.0
      %1218 = vmatpush2.msra.mxu0 0.0
      %1219 = vmatprep.subr.mxu0 0.0
      %1220 = vmatpush2.msra.mxu0 0.0
      %1221 = vmatprep.subr.mxu0 0.0
      %1222 = vmatpush2.msra.mxu0 0.0
      %1223 = vmatprep.subr.mxu0 0.0
      %1224 = vmatpush2.msra.mxu0 0.0
      %1225 = vmatprep.subr.mxu0 0.0
      %1226 = vmatpush2.msra.mxu0 0.0
      %1227 = vmatprep.subr.mxu0 0.0
      %1228 = vmatpush2.msra.mxu0 0.0
      %1229 = vmatprep.subr.mxu0 0.0
      %1230 = vmatpush2.msra.mxu0 0.0
      %1231 = vmatprep.subr.mxu0 0.0
      %1232 = vmatpush2.msra.mxu0 0.0
      %1233 = vmatprep.subr.mxu0 0.0
      %1234 = vmatpush2.msra.mxu0 0.0
      %1235 = vmatprep.subr.mxu0 0.0
      %1236 = vmatpush2.msra.mxu0 0.0
      %1237 = vmatprep.subr.mxu0 0.0
      %1238 = vmatpush2.msra.mxu0 0.0
      %1239 = vmatprep.subr.mxu0 0.0
      %1240 = vmatpush2.msra.mxu0 0.0
      %1241 = vmatprep.mubr.f32.mxu0 0.0
      %1242 = vmatmul.mubr.f32.gmra.mxu0 %v1175
      %v1243 = vpop.f32.mrf.mxu0
      %v1244 = vadd.f32 0.0, %v1243
      %v1245 = vpop.f32.mrf.mxu0
      %1246 = vdwg.mxu0
      %v1248 = vsel %vm607, %v1244, 0
      %1250 = vmatprep.subr.mxu0 0.0
      %1251 = vmatpush1.msra.mxu0 0.0
      %1252 = vmatprep.subr.mxu0 0.0
      %1253 = vmatpush1.msra.mxu0 0.0
      %1254 = vmatprep.subr.mxu0 0.0
      %1255 = vmatpush1.msra.mxu0 0.0
      %1256 = vmatprep.subr.mxu0 0.0
      %1257 = vmatpush1.msra.mxu0 0.0
      %1258 = vmatprep.subr.mxu0 0.0
      %1259 = vmatpush1.msra.mxu0 0.0
      %1260 = vmatprep.subr.mxu0 0.0
      %1261 = vmatpush1.msra.mxu0 0.0
      %1262 = vmatprep.subr.mxu0 0.0
      %1263 = vmatpush1.msra.mxu0 0.0
      %1264 = vmatprep.subr.mxu0 0.0
      %1265 = vmatpush1.msra.mxu0 0.0
      %1266 = vmatprep.subr.mxu0 0.0
      %1267 = vmatpush1.msra.mxu0 0.0
      %1268 = vmatprep.subr.mxu0 0.0
      %1269 = vmatpush1.msra.mxu0 0.0
      %1270 = vmatprep.subr.mxu0 0.0
      %1271 = vmatpush1.msra.mxu0 0.0
      %1272 = vmatprep.subr.mxu0 0.0
      %1273 = vmatpush1.msra.mxu0 0.0
      %1274 = vmatprep.subr.mxu0 0.0
      %1275 = vmatpush1.msra.mxu0 0.0
      %1276 = vmatprep.subr.mxu0 0.0
      %1277 = vmatpush1.msra.mxu0 0.0
      %1278 = vmatprep.subr.mxu0 0.0
      %1279 = vmatpush1.msra.mxu0 %v601
      %1280 = vmatprep.subr.mxu0 0.0
      %1281 = vmatpush1.msra.mxu0 %v600
      %1282 = vmatprep.subr.mxu0 0.0
      %1283 = vmatpush2.msra.mxu0 0.0
      %1284 = vmatprep.subr.mxu0 0.0
      %1285 = vmatpush2.msra.mxu0 0.0
      %1286 = vmatprep.subr.mxu0 0.0
      %1287 = vmatpush2.msra.mxu0 0.0
      %1288 = vmatprep.subr.mxu0 0.0
      %1289 = vmatpush2.msra.mxu0 0.0
      %1290 = vmatprep.subr.mxu0 0.0
      %1291 = vmatpush2.msra.mxu0 0.0
      %1292 = vmatprep.subr.mxu0 0.0
      %1293 = vmatpush2.msra.mxu0 0.0
      %1294 = vmatprep.subr.mxu0 0.0
      %1295 = vmatpush2.msra.mxu0 0.0
      %1296 = vmatprep.subr.mxu0 0.0
      %1297 = vmatpush2.msra.mxu0 0.0
      %1298 = vmatprep.subr.mxu0 0.0
      %1299 = vmatpush2.msra.mxu0 0.0
      %1300 = vmatprep.subr.mxu0 0.0
      %1301 = vmatpush2.msra.mxu0 0.0
      %1302 = vmatprep.subr.mxu0 0.0
      %1303 = vmatpush2.msra.mxu0 0.0
      %1304 = vmatprep.subr.mxu0 0.0
      %1305 = vmatpush2.msra.mxu0 0.0
      %1306 = vmatprep.subr.mxu0 0.0
      %1307 = vmatpush2.msra.mxu0 0.0
      %1308 = vmatprep.subr.mxu0 0.0
      %1309 = vmatpush2.msra.mxu0 0.0
      %1310 = vmatprep.subr.mxu0 0.0
      %1311 = vmatpush2.msra.mxu0 0.0
      %1312 = vmatprep.subr.mxu0 0.0
      %1313 = vmatpush2.msra.mxu0 0.0
      %1314 = vmatprep.mubr.f32.mxu0 0.0
      %1315 = vmatmul.mubr.f32.gmra.mxu0 %v1248
      %v1316 = vpop.f32.mrf.mxu0
      %v1317 = vadd.f32 0.0, %v1316
      %v1318 = vpop.f32.mrf.mxu0
      %1319 = vdwg.mxu0
      %v1320 = vadd.f32 %v1078, %v1317
      %1321 = vrot.lane.b32.xlu0 %v592, 80
      %v1322 = vpop.permute.xlu0 %1321
      %1323 = vrot.lane.b32.xlu0 %v592, 16
      %v1324 = vpop.permute.xlu0 %1323
      %v1325 = vsel %vm607, %v1322, 0
      %v1327 = vsel %vm607, %v1324, 0
      %1329 = vmatprep.subr.mxu0 0.0
      %1330 = vmatpush1.xpose.msra.mxu0 0.0
      %1331 = vmatprep.subr.mxu0 0.0
      %1332 = vmatpush1.xpose.msra.mxu0 0.0
      %1333 = vmatprep.subr.mxu0 0.0
      %1334 = vmatpush1.xpose.msra.mxu0 0.0
      %1335 = vmatprep.subr.mxu0 0.0
      %1336 = vmatpush1.xpose.msra.mxu0 0.0
      %1337 = vmatprep.subr.mxu0 0.0
      %1338 = vmatpush1.xpose.msra.mxu0 0.0
      %1339 = vmatprep.subr.mxu0 0.0
      %1340 = vmatpush1.xpose.msra.mxu0 0.0
      %1341 = vmatprep.subr.mxu0 0.0
      %1342 = vmatpush1.xpose.msra.mxu0 0.0
      %1343 = vmatprep.subr.mxu0 0.0
      %1344 = vmatpush1.xpose.msra.mxu0 0.0
      %1345 = vmatprep.subr.mxu0 0.0
      %1346 = vmatpush1.xpose.msra.mxu0 0.0
      %1347 = vmatprep.subr.mxu0 0.0
      %1348 = vmatpush1.xpose.msra.mxu0 0.0
      %1349 = vmatprep.subr.mxu0 0.0
      %1350 = vmatpush1.xpose.msra.mxu0 0.0
      %1351 = vmatprep.subr.mxu0 0.0
      %1352 = vmatpush1.xpose.msra.mxu0 0.0
      %1353 = vmatprep.subr.mxu0 0.0
      %1354 = vmatpush1.xpose.msra.mxu0 0.0
      %1355 = vmatprep.subr.mxu0 0.0
      %1356 = vmatpush1.xpose.msra.mxu0 0.0
      %1357 = vmatprep.subr.mxu0 0.0
      %1358 = vmatpush1.xpose.msra.mxu0 0.0
      %1359 = vmatprep.subr.mxu0 0.0
      %1360 = vmatpush1.xpose.msra.mxu0 %v1327
      %1361 = vmatprep.subr.mxu0 0.0
      %1362 = vmatpush2.xpose.msra.mxu0 0.0
      %1363 = vmatprep.subr.mxu0 0.0
      %1364 = vmatpush2.xpose.msra.mxu0 0.0
      %1365 = vmatprep.subr.mxu0 0.0
      %1366 = vmatpush2.xpose.msra.mxu0 0.0
      %1367 = vmatprep.subr.mxu0 0.0
      %1368 = vmatpush2.xpose.msra.mxu0 0.0
      %1369 = vmatprep.subr.mxu0 0.0
      %1370 = vmatpush2.xpose.msra.mxu0 0.0
      %1371 = vmatprep.subr.mxu0 0.0
      %1372 = vmatpush2.xpose.msra.mxu0 0.0
      %1373 = vmatprep.subr.mxu0 0.0
      %1374 = vmatpush2.xpose.msra.mxu0 0.0
      %1375 = vmatprep.subr.mxu0 0.0
      %1376 = vmatpush2.xpose.msra.mxu0 0.0
      %1377 = vmatprep.subr.mxu0 0.0
      %1378 = vmatpush2.xpose.msra.mxu0 0.0
      %1379 = vmatprep.subr.mxu0 0.0
      %1380 = vmatpush2.xpose.msra.mxu0 0.0
      %1381 = vmatprep.subr.mxu0 0.0
      %1382 = vmatpush2.xpose.msra.mxu0 0.0
      %1383 = vmatprep.subr.mxu0 0.0
      %1384 = vmatpush2.xpose.msra.mxu0 0.0
      %1385 = vmatprep.subr.mxu0 0.0
      %1386 = vmatpush2.xpose.msra.mxu0 0.0
      %1387 = vmatprep.subr.mxu0 0.0
      %1388 = vmatpush2.xpose.msra.mxu0 0.0
      %1389 = vmatprep.subr.mxu0 0.0
      %1390 = vmatpush2.xpose.msra.mxu0 0.0
      %1391 = vmatprep.subr.mxu0 0.0
      %1392 = vmatpush2.xpose.msra.mxu0 0.0
      %1393 = vmatprep.mubr.f32.mxu0 0.0
      %1394 = vmatmul.mubr.f32.gmra.mxu0 %v1325
      %v1395 = vpop.f32.mrf.mxu0
      %v1396 = vadd.f32 0.0, %v1395
      %v1397 = vpop.f32.mrf.mxu0
      %1398 = vdwg.mxu0
      %v1399 = vmul.f32 %v1396, 0.25
      %v1400 = vsel %vm683, %v1399, -inf
      %1401 = vmax.xlane.f32.xlu0 %v1400
      %v1402 = vpop.xlane.xlu0 %1401
      %v1403 = vsub.f32 %v1399, %v1402
      %v1404 = vmul.f32 %v1403, 1.442695
      %v1405 = vpow.pop %v1404
      %v1406 = vsel %vm683, %v1405, 0.0
      %1407 = vadd.xlane.f32.xlu0 %v1406
      %v1408 = vpop.xlane.xlu0 %1407
      %v1409 = vrcp.pop %v1408
      %v1410 = vmul.f32 %v1405, %v1409
      %1411 = vrot.lane.b32.xlu0 %v594, 80
      %v1412 = vpop.permute.xlu0 %1411
      %v1415 = vsel %vm683, %v1410, 0
      %1417 = vmatprep.subr.mxu0 0.0
      %1418 = vmatpush1.msra.mxu0 0.0
      %1419 = vmatprep.subr.mxu0 0.0
      %1420 = vmatpush1.msra.mxu0 0.0
      %1421 = vmatprep.subr.mxu0 0.0
      %1422 = vmatpush1.msra.mxu0 0.0
      %1423 = vmatprep.subr.mxu0 0.0
      %1424 = vmatpush1.msra.mxu0 0.0
      %1425 = vmatprep.subr.mxu0 0.0
      %1426 = vmatpush1.msra.mxu0 0.0
      %1427 = vmatprep.subr.mxu0 0.0
      %1428 = vmatpush1.msra.mxu0 0.0
      %1429 = vmatprep.subr.mxu0 0.0
      %1430 = vmatpush1.msra.mxu0 0.0
      %1431 = vmatprep.subr.mxu0 0.0
      %1432 = vmatpush1.msra.mxu0 0.0
      %1433 = vmatprep.subr.mxu0 0.0
      %1434 = vmatpush1.msra.mxu0 0.0
      %1435 = vmatprep.subr.mxu0 0.0
      %1436 = vmatpush1.msra.mxu0 0.0
      %1437 = vmatprep.subr.mxu0 0.0
      %1438 = vmatpush1.msra.mxu0 0.0
      %1439 = vmatprep.subr.mxu0 0.0
      %1440 = vmatpush1.msra.mxu0 0.0
      %1441 = vmatprep.subr.mxu0 0.0
      %1442 = vmatpush1.msra.mxu0 0.0
      %1443 = vmatprep.subr.mxu0 0.0
      %1444 = vmatpush1.msra.mxu0 0.0
      %1445 = vmatprep.subr.mxu0 0.0
      %1446 = vmatpush1.msra.mxu0 0.0
      %1447 = vmatprep.subr.mxu0 0.0
      %1448 = vmatpush1.msra.mxu0 %v1412
      %1449 = vmatprep.subr.mxu0 0.0
      %1450 = vmatpush2.msra.mxu0 0.0
      %1451 = vmatprep.subr.mxu0 0.0
      %1452 = vmatpush2.msra.mxu0 0.0
      %1453 = vmatprep.subr.mxu0 0.0
      %1454 = vmatpush2.msra.mxu0 0.0
      %1455 = vmatprep.subr.mxu0 0.0
      %1456 = vmatpush2.msra.mxu0 0.0
      %1457 = vmatprep.subr.mxu0 0.0
      %1458 = vmatpush2.msra.mxu0 0.0
      %1459 = vmatprep.subr.mxu0 0.0
      %1460 = vmatpush2.msra.mxu0 0.0
      %1461 = vmatprep.subr.mxu0 0.0
      %1462 = vmatpush2.msra.mxu0 0.0
      %1463 = vmatprep.subr.mxu0 0.0
      %1464 = vmatpush2.msra.mxu0 0.0
      %1465 = vmatprep.subr.mxu0 0.0
      %1466 = vmatpush2.msra.mxu0 0.0
      %1467 = vmatprep.subr.mxu0 0.0
      %1468 = vmatpush2.msra.mxu0 0.0
      %1469 = vmatprep.subr.mxu0 0.0
      %1470 = vmatpush2.msra.mxu0 0.0
      %1471 = vmatprep.subr.mxu0 0.0
      %1472 = vmatpush2.msra.mxu0 0.0
      %1473 = vmatprep.subr.mxu0 0.0
      %1474 = vmatpush2.msra.mxu0 0.0
      %1475 = vmatprep.subr.mxu0 0.0
      %1476 = vmatpush2.msra.mxu0 0.0
      %1477 = vmatprep.subr.mxu0 0.0
      %1478 = vmatpush2.msra.mxu0 0.0
      %1479 = vmatprep.subr.mxu0 0.0
      %1480 = vmatpush2.msra.mxu0 0.0
      %1481 = vmatprep.mubr.f32.mxu0 0.0
      %1482 = vmatmul.mubr.f32.gmra.mxu0 %v1415
      %v1483 = vpop.f32.mrf.mxu0
      %v1484 = vadd.f32 0.0, %v1483
      %v1485 = vpop.f32.mrf.mxu0
      %1486 = vdwg.mxu0
      %v1488 = vsel %vm607, %v1484, 0
      %1490 = vmatprep.subr.mxu0 0.0
      %1491 = vmatpush1.msra.mxu0 0.0
      %1492 = vmatprep.subr.mxu0 0.0
      %1493 = vmatpush1.msra.mxu0 0.0
      %1494 = vmatprep.subr.mxu0 0.0
      %1495 = vmatpush1.msra.mxu0 0.0
      %1496 = vmatprep.subr.mxu0 0.0
      %1497 = vmatpush1.msra.mxu0 0.0
      %1498 = vmatprep.subr.mxu0 0.0
      %1499 = vmatpush1.msra.mxu0 0.0
      %1500 = vmatprep.subr.mxu0 0.0
      %1501 = vmatpush1.msra.mxu0 0.0
      %1502 = vmatprep.subr.mxu0 0.0
      %1503 = vmatpush1.msra.mxu0 0.0
      %1504 = vmatprep.subr.mxu0 0.0
      %1505 = vmatpush1.msra.mxu0 0.0
      %1506 = vmatprep.subr.mxu0 0.0
      %1507 = vmatpush1.msra.mxu0 0.0
      %1508 = vmatprep.subr.mxu0 0.0
      %1509 = vmatpush1.msra.mxu0 0.0
      %1510 = vmatprep.subr.mxu0 0.0
      %1511 = vmatpush1.msra.mxu0 0.0
      %1512 = vmatprep.subr.mxu0 0.0
      %1513 = vmatpush1.msra.mxu0 0.0
      %1514 = vmatprep.subr.mxu0 0.0
      %1515 = vmatpush1.msra.mxu0 0.0
      %1516 = vmatprep.subr.mxu0 0.0
      %1517 = vmatpush1.msra.mxu0 0.0
      %1518 = vmatprep.subr.mxu0 0.0
      %1519 = vmatpush1.msra.mxu0 %v603
      %1520 = vmatprep.subr.mxu0 0.0
      %1521 = vmatpush1.msra.mxu0 %v602
      %1522 = vmatprep.subr.mxu0 0.0
      %1523 = vmatpush2.msra.mxu0 0.0
      %1524 = vmatprep.subr.mxu0 0.0
      %1525 = vmatpush2.msra.mxu0 0.0
      %1526 = vmatprep.subr.mxu0 0.0
      %1527 = vmatpush2.msra.mxu0 0.0
      %1528 = vmatprep.subr.mxu0 0.0
      %1529 = vmatpush2.msra.mxu0 0.0
      %1530 = vmatprep.subr.mxu0 0.0
      %1531 = vmatpush2.msra.mxu0 0.0
      %1532 = vmatprep.subr.mxu0 0.0
      %1533 = vmatpush2.msra.mxu0 0.0
      %1534 = vmatprep.subr.mxu0 0.0
      %1535 = vmatpush2.msra.mxu0 0.0
      %1536 = vmatprep.subr.mxu0 0.0
      %1537 = vmatpush2.msra.mxu0 0.0
      %1538 = vmatprep.subr.mxu0 0.0
      %1539 = vmatpush2.msra.mxu0 0.0
      %1540 = vmatprep.subr.mxu0 0.0
      %1541 = vmatpush2.msra.mxu0 0.0
      %1542 = vmatprep.subr.mxu0 0.0
      %1543 = vmatpush2.msra.mxu0 0.0
      %1544 = vmatprep.subr.mxu0 0.0
      %1545 = vmatpush2.msra.mxu0 0.0
      %1546 = vmatprep.subr.mxu0 0.0
      %1547 = vmatpush2.msra.mxu0 0.0
      %1548 = vmatprep.subr.mxu0 0.0
      %1549 = vmatpush2.msra.mxu0 0.0
      %1550 = vmatprep.subr.mxu0 0.0
      %1551 = vmatpush2.msra.mxu0 0.0
      %1552 = vmatprep.subr.mxu0 0.0
      %1553 = vmatpush2.msra.mxu0 0.0
      %1554 = vmatprep.mubr.f32.mxu0 0.0
      %1555 = vmatmul.mubr.f32.gmra.mxu0 %v1488
      %v1556 = vpop.f32.mrf.mxu0
      %v1557 = vadd.f32 0.0, %v1556
      %v1558 = vpop.f32.mrf.mxu0
      %1559 = vdwg.mxu0
      %v1560 = vadd.f32 %v1320, %v1557
      %v1561 = vld [vmem:[%s4] sm:$0x1]
      %v1563 = vlaneseq
      %v1564 = vshrl.u32 %v1563, 7
      %v1565 = vsub.s32 0, %v1564
      %v1566 = vrot.slane %v1561, %v1565
      %v1568 = vadd.f32 %v1560, %v1566
      %v1569 = vadd.f32 %v1568, %v492
      %v1570 = vsel %vm521, %v1569, 0.0
      %1571 = vadd.xlane.f32.xlu0 %v1570
      %v1572 = vpop.xlane.xlu0 %1571
      %v1573 = vrcp.pop 64.0
      %v1574 = vmul.f32 %v1572, %v1573
      %v1575 = vsub.f32 %v1569, %v1574
      %v1576 = vmul.f32 %v1575, %v1575
      %v1577 = vsel %vm521, %v1576, 0.0
      %1578 = vadd.xlane.f32.xlu0 %v1577
      %v1579 = vpop.xlane.xlu0 %1578
      %v1580 = vmul.f32 %v1579, %v1573
      %v1581 = vadd.f32 %v1580, 1e-06
      %v1582 = vrsqrt.pop %v1581
      %v1583 = vmul.f32 %v1575, %v1582
      %v1584 = vld [vmem:[%s478] sm:$0x1]
      %v1586 = vlaneseq
      %v1587 = vshrl.u32 %v1586, 7
      %v1588 = vsub.s32 0, %v1587
      %v1589 = vrot.slane %v1584, %v1588
      %v1591 = vmul.f32 %v1583, %v1589
      %v1592 = vld [vmem:[%s481] sm:$0x1]
      %v1594 = vlaneseq
      %v1595 = vshrl.u32 %v1594, 7
      %v1596 = vsub.s32 0, %v1595
      %v1597 = vrot.slane %v1592, %v1596
      %v1599 = vadd.f32 %v1591, %v1597
      %v1600 = vld [vmem:[%s5] sm:$0xff]
      %v1601 = vld [vmem:[%s5 + $0x8] sm:$0xff]
      %v1602 = vld [vmem:[%s5 + $0x10] sm:$0xff]
      %v1603 = vld [vmem:[%s5 + $0x18] sm:$0xff]
      %v1604 = vld [vmem:[%s5 + $0x20] sm:$0xff]
      %v1605 = vld [vmem:[%s5 + $0x28] sm:$0xff]
      %v1606 = vld [vmem:[%s5 + $0x30] sm:$0xff]
      %v1607 = vld [vmem:[%s5 + $0x38] sm:$0xff]
      %v1608 = vld [vmem:[%s6] sm:$0x1]
      %v1610 = vlaneseq
      %v1611 = vshrl.u32 %v1610, 7
      %v1612 = vsub.s32 0, %v1611
      %v1613 = vrot.slane %v1608, %v1612
      %v1616 = vsel %vm521, %v1599, 0
      %1618 = vmatprep.subr.mxu0 0.0
      %1619 = vmatpush1.msra.mxu0 0.0
      %1620 = vmatprep.subr.mxu0 0.0
      %1621 = vmatpush1.msra.mxu0 0.0
      %1622 = vmatprep.subr.mxu0 0.0
      %1623 = vmatpush1.msra.mxu0 0.0
      %1624 = vmatprep.subr.mxu0 0.0
      %1625 = vmatpush1.msra.mxu0 0.0
      %1626 = vmatprep.subr.mxu0 0.0
      %1627 = vmatpush1.msra.mxu0 0.0
      %1628 = vmatprep.subr.mxu0 0.0
      %1629 = vmatpush1.msra.mxu0 0.0
      %1630 = vmatprep.subr.mxu0 0.0
      %1631 = vmatpush1.msra.mxu0 0.0
      %1632 = vmatprep.subr.mxu0 0.0
      %1633 = vmatpush1.msra.mxu0 0.0
      %1634 = vmatprep.subr.mxu0 0.0
      %1635 = vmatpush1.msra.mxu0 %v1607
      %1636 = vmatprep.subr.mxu0 0.0
      %1637 = vmatpush1.msra.mxu0 %v1606
      %1638 = vmatprep.subr.mxu0 0.0
      %1639 = vmatpush1.msra.mxu0 %v1605
      %1640 = vmatprep.subr.mxu0 0.0
      %1641 = vmatpush1.msra.mxu0 %v1604
      %1642 = vmatprep.subr.mxu0 0.0
      %1643 = vmatpush1.msra.mxu0 %v1603
      %1644 = vmatprep.subr.mxu0 0.0
      %1645 = vmatpush1.msra.mxu0 %v1602
      %1646 = vmatprep.subr.mxu0 0.0
      %1647 = vmatpush1.msra.mxu0 %v1601
      %1648 = vmatprep.subr.mxu0 0.0
      %1649 = vmatpush1.msra.mxu0 %v1600
      %1650 = vmatprep.subr.mxu0 0.0
      %1651 = vmatpush2.msra.mxu0 0.0
      %1652 = vmatprep.subr.mxu0 0.0
      %1653 = vmatpush2.msra.mxu0 0.0
      %1654 = vmatprep.subr.mxu0 0.0
      %1655 = vmatpush2.msra.mxu0 0.0
      %1656 = vmatprep.subr.mxu0 0.0
      %1657 = vmatpush2.msra.mxu0 0.0
      %1658 = vmatprep.subr.mxu0 0.0
      %1659 = vmatpush2.msra.mxu0 0.0
      %1660 = vmatprep.subr.mxu0 0.0
      %1661 = vmatpush2.msra.mxu0 0.0
      %1662 = vmatprep.subr.mxu0 0.0
      %1663 = vmatpush2.msra.mxu0 0.0
      %1664 = vmatprep.subr.mxu0 0.0
      %1665 = vmatpush2.msra.mxu0 0.0
      %1666 = vmatprep.subr.mxu0 0.0
      %1667 = vmatpush2.msra.mxu0 0.0
      %1668 = vmatprep.subr.mxu0 0.0
      %1669 = vmatpush2.msra.mxu0 0.0
      %1670 = vmatprep.subr.mxu0 0.0
      %1671 = vmatpush2.msra.mxu0 0.0
      %1672 = vmatprep.subr.mxu0 0.0
      %1673 = vmatpush2.msra.mxu0 0.0
      %1674 = vmatprep.subr.mxu0 0.0
      %1675 = vmatpush2.msra.mxu0 0.0
      %1676 = vmatprep.subr.mxu0 0.0
      %1677 = vmatpush2.msra.mxu0 0.0
      %1678 = vmatprep.subr.mxu0 0.0
      %1679 = vmatpush2.msra.mxu0 0.0
      %1680 = vmatprep.subr.mxu0 0.0
      %1681 = vmatpush2.msra.mxu0 0.0
      %1682 = vmatprep.mubr.f32.mxu0 0.0
      %1683 = vmatmul.mubr.f32.gmra.mxu0 %v1616
      %v1684 = vpop.f32.mrf.mxu0
      %v1685 = vadd.f32 %v1613, %v1684
      %v1686 = vpop.f32.mrf.mxu0
      %1687 = vdwg.mxu0
      %v1688 = vmax.f32 %v1685, 0.0
      %v1689 = vld [vmem:[%s7] sm:$0xff]
      %v1690 = vld [vmem:[%s7 + $0x8] sm:$0xff]
      %v1691 = vld [vmem:[%s7 + $0x10] sm:$0xff]
      %v1692 = vld [vmem:[%s7 + $0x18] sm:$0xff]
      %v1693 = vld [vmem:[%s7 + $0x20] sm:$0xff]
      %v1694 = vld [vmem:[%s7 + $0x28] sm:$0xff]
      %v1695 = vld [vmem:[%s7 + $0x30] sm:$0xff]
      %v1696 = vld [vmem:[%s7 + $0x38] sm:$0xff]
      %v1697 = vld [vmem:[%s7 + $0x40] sm:$0xff]
      %v1698 = vld [vmem:[%s7 + $0x48] sm:$0xff]
      %v1699 = vld [vmem:[%s7 + $0x50] sm:$0xff]
      %v1700 = vld [vmem:[%s7 + $0x58] sm:$0xff]
      %v1701 = vld [vmem:[%s7 + $0x60] sm:$0xff]
      %v1702 = vld [vmem:[%s7 + $0x68] sm:$0xff]
      %v1703 = vld [vmem:[%s7 + $0x70] sm:$0xff]
      %v1704 = vld [vmem:[%s7 + $0x78] sm:$0xff]
      %v1705 = vld [vmem:[%s8] sm:$0x1]
      %v1707 = vlaneseq
      %v1708 = vshrl.u32 %v1707, 7
      %v1709 = vsub.s32 0, %v1708
      %v1710 = vrot.slane %v1705, %v1709
      %1712 = vmatprep.subr.mxu0 0.0
      %1713 = vmatpush1.msra.mxu0 %v1704
      %1714 = vmatprep.subr.mxu0 0.0
      %1715 = vmatpush1.msra.mxu0 %v1703
      %1716 = vmatprep.subr.mxu0 0.0
      %1717 = vmatpush1.msra.mxu0 %v1702
      %1718 = vmatprep.subr.mxu0 0.0
      %1719 = vmatpush1.msra.mxu0 %v1701
      %1720 = vmatprep.subr.mxu0 0.0
      %1721 = vmatpush1.msra.mxu0 %v1700
      %1722 = vmatprep.subr.mxu0 0.0
      %1723 = vmatpush1.msra.mxu0 %v1699
      %1724 = vmatprep.subr.mxu0 0.0
      %1725 = vmatpush1.msra.mxu0 %v1698
      %1726 = vmatprep.subr.mxu0 0.0
      %1727 = vmatpush1.msra.mxu0 %v1697
      %1728 = vmatprep.subr.mxu0 0.0
      %1729 = vmatpush1.msra.mxu0 %v1696
      %1730 = vmatprep.subr.mxu0 0.0
      %1731 = vmatpush1.msra.mxu0 %v1695
      %1732 = vmatprep.subr.mxu0 0.0
      %1733 = vmatpush1.msra.mxu0 %v1694
      %1734 = vmatprep.subr.mxu0 0.0
      %1735 = vmatpush1.msra.mxu0 %v1693
      %1736 = vmatprep.subr.mxu0 0.0
      %1737 = vmatpush1.msra.mxu0 %v1692
      %1738 = vmatprep.subr.mxu0 0.0
      %1739 = vmatpush1.msra.mxu0 %v1691
      %1740 = vmatprep.subr.mxu0 0.0
      %1741 = vmatpush1.msra.mxu0 %v1690
      %1742 = vmatprep.subr.mxu0 0.0
      %1743 = vmatpush1.msra.mxu0 %v1689
      %1744 = vmatprep.subr.mxu0 0.0
      %1745 = vmatpush2.msra.mxu0 0.0
      %1746 = vmatprep.subr.mxu0 0.0
      %1747 = vmatpush2.msra.mxu0 0.0
      %1748 = vmatprep.subr.mxu0 0.0
      %1749 = vmatpush2.msra.mxu0 0.0
      %1750 = vmatprep.subr.mxu0 0.0
      %1751 = vmatpush2.msra.mxu0 0.0
      %1752 = vmatprep.subr.mxu0 0.0
      %1753 = vmatpush2.msra.mxu0 0.0
      %1754 = vmatprep.subr.mxu0 0.0
      %1755 = vmatpush2.msra.mxu0 0.0
      %1756 = vmatprep.subr.mxu0 0.0
      %1757 = vmatpush2.msra.mxu0 0.0
      %1758 = vmatprep.subr.mxu0 0.0
      %1759 = vmatpush2.msra.mxu0 0.0
      %1760 = vmatprep.subr.mxu0 0.0
      %1761 = vmatpush2.msra.mxu0 0.0
      %1762 = vmatprep.subr.mxu0 0.0
      %1763 = vmatpush2.msra.mxu0 0.0
      %1764 = vmatprep.subr.mxu0 0.0
      %1765 = vmatpush2.msra.mxu0 0.0
      %1766 = vmatprep.subr.mxu0 0.0
      %1767 = vmatpush2.msra.mxu0 0.0
      %1768 = vmatprep.subr.mxu0 0.0
      %1769 = vmatpush2.msra.mxu0 0.0
      %1770 = vmatprep.subr.mxu0 0.0
      %1771 = vmatpush2.msra.mxu0 0.0
      %1772 = vmatprep.subr.mxu0 0.0
      %1773 = vmatpush2.msra.mxu0 0.0
      %1774 = vmatprep.subr.mxu0 0.0
      %1775 = vmatpush2.msra.mxu0 0.0
      %1776 = vmatprep.mubr.f32.mxu0 0.0
      %1777 = vmatmul.mubr.f32.gmra.mxu0 %v1688
      %v1778 = vpop.f32.mrf.mxu0
      %v1779 = vadd.f32 %v1710, %v1778
      %v1780 = vpop.f32.mrf.mxu0
      %1781 = vdwg.mxu0
      %v1782 = vadd.f32 %v1779, %v1599
      %v1783 = vsel %vm521, %v1782, 0.0
      %1784 = vadd.xlane.f32.xlu0 %v1783
      %v1785 = vpop.xlane.xlu0 %1784
      %v1786 = vmul.f32 %v1785, %v1573
      %v1787 = vsub.f32 %v1782, %v1786
      %v1788 = vmul.f32 %v1787, %v1787
      %v1789 = vsel %vm521, %v1788, 0.0
      %1790 = vadd.xlane.f32.xlu0 %v1789
      %v1791 = vpop.xlane.xlu0 %1790
      %v1792 = vmul.f32 %v1791, %v1573
      %v1793 = vadd.f32 %v1792, 1e-06
      %v1794 = vrsqrt.pop %v1793
      %v1795 = vmul.f32 %v1787, %v1794
      %v1796 = vld [vmem:[%s484] sm:$0x1]
      %v1798 = vlaneseq
      %v1799 = vshrl.u32 %v1798, 7
      %v1800 = vsub.s32 0, %v1799
      %v1801 = vrot.slane %v1796, %v1800
      %v1803 = vmul.f32 %v1795, %v1801
      %v1804 = vld [vmem:[%s487] sm:$0x1]
      %v1806 = vlaneseq
      %v1807 = vshrl.u32 %v1806, 7
      %v1808 = vsub.s32 0, %v1807
      %v1809 = vrot.slane %v1804, %v1808
      %v1811 = vadd.f32 %v1803, %v1809
      %1812 = vst.msk [vmem:[%s491] sm:$0xff] %vm521, %v1811
      %p1813 = scmp.lt.s32.totalorder %s24, 1
      %s1814 = scalar_select %p1813, %s24, 1
      %s1815 = smul.addr %s1814, 8
      %s1816 = scalar_lea.vmem %s13, %s1815
      // Predicated region
      $region73: #{dance_rollout.45} parent=71 // pred_check
        %p1817 = pneg %p340
      $region74: #{dance_rollout.45} parent=71 // pred_check_branch
        %1819 = sbr.rel (%p1817) target = $region76
      $region75: #{dance_rollout.45} parent=71 // pred_region
        _
      $region76: #{dance_rollout.45} parent=71 // pred_fallthru
        _
    $region72: #{dance_rollout.45} parent=5 // pred_fallthru
      _
    %p1820 = scmp.le.s32.totalorder 2, %s19
    // Predicated region
    $region77: #{dance_rollout.45} parent=5 // pred_check
      %p1821 = pneg %p1820
    $region78: #{dance_rollout.45} parent=5 // pred_check_branch
      %1823 = sbr.rel (%p1821) target = $region80
    $region79: #{dance_rollout.45} parent=5 // pred_region
      %s1824 = ssub.s32 %s19, 2
      // Predicated region
      $region81: #{dance_rollout.45} parent=79 // pred_check
        %p1825 = pneg %p346
      $region82: #{dance_rollout.45} parent=79 // pred_check_branch
        %1827 = sbr.rel (%p1825) target = $region84
      $region83: #{dance_rollout.45} parent=79 // pred_region
        %p1828 = scmp.lt.s32.totalorder %s25, 1
        %s1829 = scalar_select %p1828, %s25, 1
        %s1830 = smul.addr %s1829, 8
        %s1831 = scalar_lea.vmem %s13, %s1830
      $region84: #{dance_rollout.45} parent=79 // pred_fallthru
        _
    $region80: #{dance_rollout.45} parent=5 // pred_fallthru
      _
  $region6: #{dance_rollout.45} parent=0 // loop_footer
    %s23 = sadd.s32 1, %s19
  $region7: #{dance_rollout.45} parent=0 // loop_footer_branch
    %18 = sbr.rel target = $region3
  $region8: #{dance_rollout.45} parent=0 // loop_exit
    _

</llo_original>
